<compile_context>
chip_gen: v5e
topology: v5e:2x2
jax: 0.10.0
libtpu: 0.0.40
codegen_flags: <defaults>
</compile_context>

<pallas_src>
import functools

import jax
import jax.numpy as jnp
from jax.experimental import pallas as pl
from jax.experimental.pallas import tpu as pltpu

# Keep the plain-JAX reference matmuls in true f32 so the numerical check below is honest.
jax.config.update("jax_default_matmul_precision", "highest")

# ---------------- model config (small, consistent with the module) ----------------
D_MODEL = 32
N_HEADS = 4
HEAD_DIM = 8
HD = N_HEADS * HEAD_DIM            # 32
FF_HIDDEN = 4 * D_MODEL            # 128 (FusedMLP default hidden = 4*d)
CONV_K = 9                         # odd kernel, 'same' padding
CONV_PAD = (CONV_K - 1) // 2
LN_EPS = 1e-5
BN_EPS = 1e-5
ATT_SCALE = 1.0 / (HEAD_DIM ** 0.5)

# ---------------- packed-parameter layout (shared by kernel and prepare_params) -----------
# WD slab (D_MODEL, C_TOTAL): every matrix whose contraction dim is D, 128-aligned columns.
C_FF1_W1 = 0        # (D, 128)  ff1 up-projection         (LN gamma folded in)
C_VO     = 128      # (D, H*D)  per-head  Wv_h @ Wout_h   (LN gamma folded in)
C_FF2_W1 = 256      # (D, 128)  ff2 up-projection         (LN gamma folded in)
C_QKV    = 384      # (D, 96)   [k | v | q] head-major    (LN gamma folded in)
C_CW1    = 512      # (D, 64)   conv pointwise_conv1      (LN gamma folded in)
C_CW2    = 640      # (D, 32)   conv pointwise_conv2
C_TOTAL  = 672

# W2 slab (2*FF_HIDDEN, D_MODEL): ff1/ff2 down-projections (0.5 Scale folded in), row blocks.
# VEC slab (VEC_ROWS, 128): one row per bias / vector; depthwise taps in rows R_DW..R_DW+8.
(R_FF1_B1, R_FF1_B2, R_QKV_B, R_VO_B, R_CB1, R_DWB, R_CB2,
 R_FF2_B1, R_FF2_B2, R_OUT_G, R_OUT_B, R_DW) = range(12)
VEC_ROWS = 24


# =============================== the fused kernel ===============================
def conformer_layer_kernel(x_ref, wd_ref, w2_ref, vec_ref, o_ref, kv_ref, *, batch, seq):
    f32 = jnp.float32
    bn = batch * seq
    x = x_ref[...].astype(f32)                       # (B*N, D); batch stacked on sublanes
    vec = vec_ref[...]                               # (VEC_ROWS, 128) bias/vector slab

    def ln(v):                                       # LayerNorm; affine folded downstream
        mu = jnp.mean(v, axis=-1, keepdims=True)
        var = jnp.mean((v - mu) ** 2, axis=-1, keepdims=True)
        return (v - mu) * jax.lax.rsqrt(var + LN_EPS)

    def ff(v, c_w1, r_b1, w2_row0, r_b2):            # 0.5 * MLP(LN(v)); 0.5 & LN pre-folded
        h = jnp.dot(ln(v), wd_ref[:, c_w1:c_w1 + FF_HIDDEN], preferred_element_type=f32)
        h = jax.nn.gelu(h + vec[r_b1:r_b1 + 1, :FF_HIDDEN], approximate=True)
        h = jnp.dot(h, w2_ref[w2_row0:w2_row0 + FF_HIDDEN, :], preferred_element_type=f32)
        return h + vec[r_b2:r_b2 + 1, :D_MODEL]

    # ---------------- x = 0.5*FF1(LN(x)) + x ----------------
    x = x + ff(x, C_FF1_W1, R_FF1_B1, 0, R_FF1_B2)

    # ---------------- x = Attention(LN(x)) + x ----------------
    # TODO(synk): attn_mask / pad_mask / cached_kv / rotary_emb_fn / learned position
    # embeddings are None in this configuration (eval mode, fresh cache).
    h = ln(x)
    qkv = (jnp.dot(h, wd_ref[:, C_QKV:C_QKV + 3 * HD], preferred_element_type=f32)
           + vec[R_QKV_B:R_QKV_B + 1, :3 * HD])                       # (B*N, 96)  [k|v|q]
    kv_ref[...] = qkv[:, :2 * HD].astype(kv_ref.dtype)                # lane-offset-0 store
    # V pushed through the output projection per head (Wv_h @ Wout_h folded host-side into
    # one (D, H*D) matrix) so per-head results can simply be SUMMED -> no lane concatenate.
    vproj = (jnp.dot(h, wd_ref[:, C_VO:C_VO + N_HEADS * D_MODEL], preferred_element_type=f32)
             + vec[R_VO_B:R_VO_B + 1, :N_HEADS * D_MODEL])            # (B*N, 128)

    # head-and-batch-batched attention: (B*H) batched matmuls + ONE softmax chain
    def bh_stack(src, col0, width):
        return jnp.stack(
            [src[b * seq:(b + 1) * seq, col0 + i * width:col0 + (i + 1) * width]
             for b in range(batch) for i in range(N_HEADS)], axis=0)

    q_s  = bh_stack(qkv, 2 * HD, HEAD_DIM)            # (B*H, N, Dh)
    k_s  = bh_stack(qkv, 0, HEAD_DIM)                 # (B*H, N, Dh)
    vp_s = bh_stack(vproj, 0, D_MODEL)                # (B*H, N, D)   (already @ Wout_h)

    s = jax.lax.dot_general(q_s, k_s, (((2,), (2,)), ((0,), (0,))),
                            preferred_element_type=f32) * ATT_SCALE   # (B*H, N, N)
    m = jnp.max(s, axis=-1, keepdims=True)
    e = jnp.exp(s - m)
    p = e * pl.reciprocal(jnp.sum(e, axis=-1, keepdims=True), approx=True)
    o = jax.lax.dot_general(p, vp_s, (((2,), (1,)), ((0,), (0,))),
                            preferred_element_type=f32)               # (B*H, N, D)
    attn = jnp.concatenate(
        [jnp.sum(o[b * N_HEADS:(b + 1) * N_HEADS], axis=0) for b in range(batch)], axis=0)
    x = x + attn

    # ---------------- x = ConformerConvolution(LN(x)) + x ----------------
    h = ln(x)
    y = (jnp.dot(h, wd_ref[:, C_CW1:C_CW1 + 2 * D_MODEL], preferred_element_type=f32)
         + vec[R_CB1:R_CB1 + 1, :2 * D_MODEL])                        # (B*N, 2D)
    u = y[:, :D_MODEL] * jax.nn.sigmoid(y[:, D_MODEL:])               # GLU over channels
    # Depthwise 'same' conv over time: register-resident shifted taps + iota boundary mask
    # (no halo scratch / memset / VMEM round trip).  jnp.roll keeps the shift semantics
    # explicit; pltpu.roll is the native single-op alternative for the same XLU work.
    t_row = jax.lax.broadcasted_iota(jnp.int32, (seq, D_MODEL), 0)
    t_idx = jnp.concatenate([t_row] * batch, axis=0)                  # per-row time index
    # TODO(synk): batch_renorm reproduced in eval mode only (running stats folded into taps).
    acc = jnp.zeros((bn, D_MODEL), f32)
    for k in range(CONV_K):
        off = k - CONV_PAD
        tap = u if off == 0 else jnp.roll(u, -off, axis=0)            # row r <- row r+off
        valid = (t_idx + off >= 0) & (t_idx + off < seq)              # stay inside own batch
        acc = acc + jnp.where(valid, tap, 0.0) * vec[R_DW + k, :D_MODEL]
    acc = acc + vec[R_DWB:R_DWB + 1, :D_MODEL]                        # BN-folded bias
    acc = acc * jax.nn.sigmoid(acc)                                   # SiLU / Swish
    x = x + (jnp.dot(acc, wd_ref[:, C_CW2:C_CW2 + D_MODEL], preferred_element_type=f32)
             + vec[R_CB2:R_CB2 + 1, :D_MODEL])

    # ---------------- x = 0.5*FF2(LN(x)) + x ----------------
    x = x + ff(x, C_FF2_W1, R_FF2_B1, FF_HIDDEN, R_FF2_B2)

    # ---------------- final LayerNorm ----------------
    o_ref[...] = (ln(x) * vec[R_OUT_G, :D_MODEL]
                  + vec[R_OUT_B, :D_MODEL]).astype(o_ref.dtype)


# =============================== wrapper ===============================
@jax.jit
def conformer_layer_forward(x, wd, w2, vec):
    B, N, D = x.shape
    assert D == D_MODEL and wd.shape == (D_MODEL, C_TOTAL)
    assert w2.shape == (2 * FF_HIDDEN, D_MODEL) and vec.shape == (VEC_ROWS, 128)

    x2 = x.reshape(B * N, D)                         # batch stacked onto sublanes (free)
    kernel = functools.partial(conformer_layer_kernel, batch=B, seq=N)
    full = lambda shape: pl.BlockSpec(shape, lambda i: (0,) * len(shape))

    # Single grid step (whole problem is a few vregs; avoids a serial grid loop on the
    # single-TensorCore v5e/v6e).  On v7x, grid=(B,) with dimension_semantics=("parallel",)
    # is the alternative worth benchmarking (one batch row per TensorCore).
    out, kv = pl.pallas_call(
        kernel,
        out_shape=(jax.ShapeDtypeStruct((B * N, D_MODEL), x.dtype),
                   jax.ShapeDtypeStruct((B * N, 2 * HD), x.dtype)),
        grid=(1,),
        in_specs=[full((B * N, D_MODEL)), full(wd.shape), full(w2.shape), full(vec.shape)],
        out_specs=(full((B * N, D_MODEL)), full((B * N, 2 * HD))),
        compiler_params=pltpu.CompilerParams(dimension_semantics=("arbitrary",)),
    )(x2, wd, w2, vec)

    # kv columns are [k_heads | v_heads], head-major -> torch cache layout (B, N, 2, H, Dh)
    return out.reshape(B, N, D_MODEL), kv.reshape(B, N, 2, N_HEADS, HEAD_DIM)


# ============== deterministic raw parameters (torch-like, kernel column order) ==============
def init_raw_params(key):
    ks = iter(jax.random.split(key, 32))

    def nrm(shape, scale=0.05):
        return (scale * jax.random.normal(next(ks), shape)).astype(jnp.float32)

    def ln_pair():
        return 1.0 + nrm((D_MODEL,), 0.1), nrm((D_MODEL,), 0.1)

    def ff_params():
        g, b = ln_pair()
        return (g, b, nrm((D_MODEL, FF_HIDDEN)), nrm((FF_HIDDEN,), 0.02),
                nrm((FF_HIDDEN, D_MODEL)), nrm((D_MODEL,), 0.02))

    ff1 = ff_params()
    ff2 = ff_params()

    ag, ab = ln_pair()
    # NOTE: wqkv columns are laid out [k_heads | v_heads | q_heads], head-major / dim-minor.
    # Torch's qkv_proj uses the interleaved '(h d qkv)' layout with (q,k,v) order; the glue
    # that imports torch weights must apply that column permutation (pure relabeling, once).
    attn = (ag, ab, nrm((D_MODEL, 3 * HD)), nrm((HD, D_MODEL)))

    cg, cb = ln_pair()
    conv = (cg, cb,
            nrm((D_MODEL, 2 * D_MODEL)), nrm((2 * D_MODEL,), 0.02),   # pointwise_conv1
            nrm((CONV_K, D_MODEL), 0.1), nrm((D_MODEL,), 0.02),       # depthwise (K, D); torch stores (D,1,K)
            1.0 + nrm((D_MODEL,), 0.1), nrm((D_MODEL,), 0.1),         # batch-renorm gamma / beta
            nrm((D_MODEL,), 0.1), 1.0 + jnp.abs(nrm((D_MODEL,), 0.2)),# running mean / var
            nrm((D_MODEL, D_MODEL)), nrm((D_MODEL,), 0.02))           # pointwise_conv2

    norm_out = ln_pair()
    return {"ff1": ff1, "ff2": ff2, "attn": attn, "conv": conv, "norm_out": norm_out}


# ============== host-side folding + packing into the three lane-dense slabs ==============
def prepare_params(raw):
    def fold_ln_into(g, b, w, bias):                  # (LN(x)*g + b) @ w + bias
        return g[:, None] * w, b @ w + bias

    def fold_ff(p):                                   # fold LN affine and the 0.5 Scale
        g, b, w1, b1, w2, b2 = p
        w1f, b1f = fold_ln_into(g, b, w1, b1)
        return w1f, b1f, 0.5 * w2, 0.5 * b2

    ff1_w1, ff1_b1, ff1_w2, ff1_b2 = fold_ff(raw["ff1"])
    ff2_w1, ff2_b1, ff2_w2, ff2_b2 = fold_ff(raw["ff2"])

    ag, ab, wqkv, wout = raw["attn"]
    wqkv_f, bqkv_f = fold_ln_into(ag, ab, wqkv, jnp.zeros((3 * HD,), jnp.float32))
    vo_blocks, bvo_blocks = [], []
    for h in range(N_HEADS):                          # fold Wv_h @ Wout_h per head
        wv_h = wqkv[:, HD + h * HEAD_DIM: HD + (h + 1) * HEAD_DIM]
        wo_h = wout[h * HEAD_DIM:(h + 1) * HEAD_DIM, :]
        m = wv_h @ wo_h
        vo_blocks.append(ag[:, None] * m)
        bvo_blocks.append(ab @ m)
    wvo = jnp.concatenate(vo_blocks, axis=1)          # (D, H*D)
    bvo = jnp.concatenate(bvo_blocks, axis=0)         # (H*D,)

    cg, cb, cw1, cb1, dw, dwb, bng, bnb, bnm, bnv, cw2, cb2 = raw["conv"]
    cw1_f, cb1_f = fold_ln_into(cg, cb, cw1, cb1)
    s = bng * jax.lax.rsqrt(bnv + BN_EPS)             # eval-mode batch-renorm fold
    dw_f = dw * s                                     # (K, D)
    dwb_f = (dwb - bnm) * s + bnb                     # (D,)

    og, ob = raw["norm_out"]

    wd = jnp.zeros((D_MODEL, C_TOTAL), jnp.float32)
    wd = wd.at[:, C_FF1_W1:C_FF1_W1 + FF_HIDDEN].set(ff1_w1)
    wd = wd.at[:, C_VO:C_VO + N_HEADS * D_MODEL].set(wvo)
    wd = wd.at[:, C_FF2_W1:C_FF2_W1 + FF_HIDDEN].set(ff2_w1)
    wd = wd.at[:, C_QKV:C_QKV + 3 * HD].set(wqkv_f)
    wd = wd.at[:, C_CW1:C_CW1 + 2 * D_MODEL].set(cw1_f)
    wd = wd.at[:, C_CW2:C_CW2 + D_MODEL].set(cw2)

    w2 = jnp.concatenate([ff1_w2, ff2_w2], axis=0)    # (2*FF_HIDDEN, D)

    vec = jnp.zeros((VEC_ROWS, 128), jnp.float32)
    setrow = lambda v, r, val: v.at[r, :val.shape[0]].set(val)
    vec = setrow(vec, R_FF1_B1, ff1_b1)
    vec = setrow(vec, R_FF1_B2, ff1_b2)
    vec = setrow(vec, R_QKV_B, bqkv_f)
    vec = setrow(vec, R_VO_B, bvo)
    vec = setrow(vec, R_CB1, cb1_f)
    vec = setrow(vec, R_DWB, dwb_f)
    vec = setrow(vec, R_CB2, cb2)
    vec = setrow(vec, R_FF2_B1, ff2_b1)
    vec = setrow(vec, R_FF2_B2, ff2_b2)
    vec = setrow(vec, R_OUT_G, og)
    vec = setrow(vec, R_OUT_B, ob)
    for k in range(CONV_K):
        vec = setrow(vec, R_DW + k, dw_f[k])
    return wd, w2, vec


# ============== plain-JAX eval-mode reference of ConformerLayer.forward ==============
def reference_forward(x, raw):
    def ln(v, g, b):
        mu = jnp.mean(v, axis=-1, keepdims=True)
        var = jnp.mean((v - mu) ** 2, axis=-1, keepdims=True)
        return (v - mu) * jax.lax.rsqrt(var + LN_EPS) * g + b

    def mlp(v, p):                                    # Scale(0.5, PreNorm(FusedMLP))
        g, b, w1, b1, w2, b2 = p
        h = jax.nn.gelu(ln(v, g, b) @ w1 + b1, approximate=True)
        return 0.5 * (h @ w2 + b2)

    B, N, D = x.shape
    x = x + mlp(x, raw["ff1"])

    ag, ab, wqkv, wout = raw["attn"]
    h = ln(x, ag, ab)
    qkv = h @ wqkv                                    # [k | v | q], head-major columns
    k = qkv[..., :HD].reshape(B, N, N_HEADS, HEAD_DIM)
    v = qkv[..., HD:2 * HD].reshape(B, N, N_HEADS, HEAD_DIM)
    q = qkv[..., 2 * HD:].reshape(B, N, N_HEADS, HEAD_DIM)
    s = jnp.einsum('bnhd,bmhd->bhnm', q, k) * ATT_SCALE
    p = jax.nn.softmax(s, axis=-1)
    o = jnp.einsum('bhnm,bmhd->bnhd', p, v).reshape(B, N, HD)
    kv_to_cache = jnp.stack([k, v], axis=2)           # (B, N, 2, H, Dh)
    x = x + o @ wout

    cg, cb, cw1, cb1, dw, dwb, bng, bnb, bnm, bnv, cw2, cb2 = raw["conv"]
    h = ln(x, cg, cb)
    y = h @ cw1 + cb1
    u = y[..., :D_MODEL] * jax.nn.sigmoid(y[..., D_MODEL:])
    up = jnp.pad(u, ((0, 0), (CONV_PAD, CONV_PAD), (0, 0)))
    conv = sum(up[:, kk:kk + N, :] * dw[kk] for kk in range(CONV_K)) + dwb
    bn_ = (conv - bnm) * jax.lax.rsqrt(bnv + BN_EPS) * bng + bnb
    x = x + (bn_ * jax.nn.sigmoid(bn_)) @ cw2 + cb2

    x = x + mlp(x, raw["ff2"])
    og, ob = raw["norm_out"]
    return ln(x, og, ob), kv_to_cache


if __name__ == "__main__":
    B, N = 2, 16
    key = jax.random.PRNGKey(0)
    kx, kp = jax.random.split(key)
    x = jax.random.normal(kx, (B, N, D_MODEL), dtype=jnp.float32)
    raw = init_raw_params(kp)
    wd, w2, vec = prepare_params(raw)

    y, kv_to_cache = conformer_layer_forward(x, wd, w2, vec)
    jax.block_until_ready(y)
    jax.block_until_ready(kv_to_cache)

    assert y.shape == (B, N, D_MODEL)
    assert kv_to_cache.shape == (B, N, 2, N_HEADS, HEAD_DIM)

    # eval-mode numerical check against the plain-JAX reference (loose tolerance covers the
    # approximate EUP reciprocal used for the softmax normalization).
    y_exp, kv_exp = reference_forward(x, raw)
    err_y = float(jnp.max(jnp.abs(y - y_exp)))
    err_kv = float(jnp.max(jnp.abs(kv_to_cache - kv_exp)))
    assert err_y < 2e-2 and err_kv < 2e-2, (err_y, err_kv)

    print("KERNEL_OK")
</pallas_src>

<mosaic_0001>
module attributes {stable_mosaic.version = 11 : i64} {
  func.func @conformer_layer_kernel(%arg0: i32, %arg1: memref<32x32xf32, #tpu.memory_space<vmem>>, %arg2: memref<32x672xf32, #tpu.memory_space<vmem>>, %arg3: memref<256x32xf32, #tpu.memory_space<vmem>>, %arg4: memref<24x128xf32, #tpu.memory_space<vmem>>, %arg5: memref<32x32xf32, #tpu.memory_space<vmem>>, %arg6: memref<32x64xf32, #tpu.memory_space<vmem>>) attributes {dimension_semantics = [#tpu.dimension_semantics<arbitrary>], iteration_bounds = array<i64: 1>, scalar_prefetch = 0 : i64, scratch_operands = 0 : i64, tpu.core_type = #tpu.core_type<tc>, window_params = [{pipeline_mode = #tpu.pipeline_mode<synchronous>, transform_indices = @transform_0, window_bounds = array<i64: 32, 32>}, {pipeline_mode = #tpu.pipeline_mode<synchronous>, transform_indices = @transform_1, window_bounds = array<i64: 32, 672>}, {pipeline_mode = #tpu.pipeline_mode<synchronous>, transform_indices = @transform_2, window_bounds = array<i64: 256, 32>}, {pipeline_mode = #tpu.pipeline_mode<synchronous>, transform_indices = @transform_3, window_bounds = array<i64: 24, 128>}, {pipeline_mode = #tpu.pipeline_mode<synchronous>, transform_indices = @transform_4, window_bounds = array<i64: 32, 32>}, {pipeline_mode = #tpu.pipeline_mode<synchronous>, transform_indices = @transform_5, window_bounds = array<i64: 32, 64>}]} {
    %c0 = arith.constant 0 : index
    %c0_0 = arith.constant 0 : index
    %0 = vector.load %arg1[%c0, %c0_0] : memref<32x32xf32, #tpu.memory_space<vmem>>, vector<32x32xf32>
    %c0_1 = arith.constant 0 : index
    %c0_2 = arith.constant 0 : index
    %1 = vector.load %arg4[%c0_1, %c0_2] : memref<24x128xf32, #tpu.memory_space<vmem>>, vector<24x128xf32>
    %cst = arith.constant dense<0.000000e+00> : vector<32xf32>
    %2 = vector.multi_reduction <add>, %0, %cst [1] : vector<32x32xf32> to vector<32xf32>
    %3 = vector.shape_cast %2 : vector<32xf32> to vector<32x1xf32>
    %cst_3 = arith.constant 3.200000e+01 : f32
    %4 = vector.broadcast %cst_3 : f32 to vector<32x1xf32>
    %5 = arith.divf %3, %4 : vector<32x1xf32>
    %6 = vector.broadcast %5 : vector<32x1xf32> to vector<32x32xf32>
    %7 = arith.subf %0, %6 : vector<32x32xf32>
    %8 = arith.mulf %7, %7 : vector<32x32xf32>
    %cst_4 = arith.constant dense<0.000000e+00> : vector<32xf32>
    %9 = vector.multi_reduction <add>, %8, %cst_4 [1] : vector<32x32xf32> to vector<32xf32>
    %10 = vector.shape_cast %9 : vector<32xf32> to vector<32x1xf32>
    %cst_5 = arith.constant 3.200000e+01 : f32
    %11 = vector.broadcast %cst_5 : f32 to vector<32x1xf32>
    %12 = arith.divf %10, %11 : vector<32x1xf32>
    %13 = vector.broadcast %5 : vector<32x1xf32> to vector<32x32xf32>
    %14 = arith.subf %0, %13 : vector<32x32xf32>
    %cst_6 = arith.constant 9.99999974E-6 : f32
    %15 = vector.broadcast %cst_6 : f32 to vector<32x1xf32>
    %16 = arith.addf %12, %15 : vector<32x1xf32>
    %17 = math.rsqrt %16 : vector<32x1xf32>
    %18 = vector.broadcast %17 : vector<32x1xf32> to vector<32x32xf32>
    %19 = arith.mulf %14, %18 : vector<32x32xf32>
    %c0_7 = arith.constant 0 : index
    %c0_8 = arith.constant 0 : index
    %20 = vector.load %arg2[%c0_7, %c0_8] : memref<32x672xf32, #tpu.memory_space<vmem>>, vector<32x128xf32>
    %cst_9 = arith.constant dense<0.000000e+00> : vector<32x128xf32>
    %21 = tpu.matmul %19, %20, %cst_9 {dimension_numbers = #tpu.dot_dimension_numbers<[1], [0], [0], [1], [0, 0, 1, 1], [], []>, precision = #tpu.contract_precision<fp32>} : vector<32x32xf32>, vector<32x128xf32>, vector<32x128xf32> -> vector<32x128xf32>
    %22 = vector.extract_strided_slice %1 {offsets = [0, 0], sizes = [1, 128], strides = [1, 1]} : vector<24x128xf32> to vector<1x128xf32>
    %23 = vector.broadcast %22 : vector<1x128xf32> to vector<32x128xf32>
    %24 = arith.addf %21, %23 : vector<32x128xf32>
    %25 = arith.mulf %24, %24 : vector<32x128xf32>
    %26 = arith.mulf %24, %25 : vector<32x128xf32>
    %cst_10 = arith.constant 4.471500e-02 : f32
    %27 = vector.broadcast %cst_10 : f32 to vector<32x128xf32>
    %28 = arith.mulf %27, %26 : vector<32x128xf32>
    %29 = arith.addf %24, %28 : vector<32x128xf32>
    %cst_11 = arith.constant 0.797884583 : f32
    %30 = vector.broadcast %cst_11 : f32 to vector<32x128xf32>
    %31 = arith.mulf %30, %29 : vector<32x128xf32>
    %32 = math.tanh %31 : vector<32x128xf32>
    %cst_12 = arith.constant 1.000000e+00 : f32
    %33 = vector.broadcast %cst_12 : f32 to vector<32x128xf32>
    %34 = arith.addf %33, %32 : vector<32x128xf32>
    %cst_13 = arith.constant 5.000000e-01 : f32
    %35 = vector.broadcast %cst_13 : f32 to vector<32x128xf32>
    %36 = arith.mulf %35, %34 : vector<32x128xf32>
    %37 = arith.mulf %24, %36 : vector<32x128xf32>
    %c0_14 = arith.constant 0 : index
    %c0_15 = arith.constant 0 : index
    %38 = vector.load %arg3[%c0_14, %c0_15] : memref<256x32xf32, #tpu.memory_space<vmem>>, vector<128x32xf32>
    %cst_16 = arith.constant dense<0.000000e+00> : vector<32x32xf32>
    %39 = tpu.matmul %37, %38, %cst_16 {dimension_numbers = #tpu.dot_dimension_numbers<[1], [0], [0], [1], [0, 0, 1, 1], [], []>, precision = #tpu.contract_precision<fp32>} : vector<32x128xf32>, vector<128x32xf32>, vector<32x32xf32> -> vector<32x32xf32>
    %40 = vector.extract_strided_slice %1 {offsets = [1, 0], sizes = [1, 32], strides = [1, 1]} : vector<24x128xf32> to vector<1x32xf32>
    %41 = vector.broadcast %40 : vector<1x32xf32> to vector<32x32xf32>
    %42 = arith.addf %39, %41 : vector<32x32xf32>
    %43 = arith.addf %0, %42 : vector<32x32xf32>
    %cst_17 = arith.constant dense<0.000000e+00> : vector<32xf32>
    %44 = vector.multi_reduction <add>, %43, %cst_17 [1] : vector<32x32xf32> to vector<32xf32>
    %45 = vector.shape_cast %44 : vector<32xf32> to vector<32x1xf32>
    %cst_18 = arith.constant 3.200000e+01 : f32
    %46 = vector.broadcast %cst_18 : f32 to vector<32x1xf32>
    %47 = arith.divf %45, %46 : vector<32x1xf32>
    %48 = vector.broadcast %47 : vector<32x1xf32> to vector<32x32xf32>
    %49 = arith.subf %43, %48 : vector<32x32xf32>
    %50 = arith.mulf %49, %49 : vector<32x32xf32>
    %cst_19 = arith.constant dense<0.000000e+00> : vector<32xf32>
    %51 = vector.multi_reduction <add>, %50, %cst_19 [1] : vector<32x32xf32> to vector<32xf32>
    %52 = vector.shape_cast %51 : vector<32xf32> to vector<32x1xf32>
    %cst_20 = arith.constant 3.200000e+01 : f32
    %53 = vector.broadcast %cst_20 : f32 to vector<32x1xf32>
    %54 = arith.divf %52, %53 : vector<32x1xf32>
    %55 = vector.broadcast %47 : vector<32x1xf32> to vector<32x32xf32>
    %56 = arith.subf %43, %55 : vector<32x32xf32>
    %cst_21 = arith.constant 9.99999974E-6 : f32
    %57 = vector.broadcast %cst_21 : f32 to vector<32x1xf32>
    %58 = arith.addf %54, %57 : vector<32x1xf32>
    %59 = math.rsqrt %58 : vector<32x1xf32>
    %60 = vector.broadcast %59 : vector<32x1xf32> to vector<32x32xf32>
    %61 = arith.mulf %56, %60 : vector<32x32xf32>
    %c0_22 = arith.constant 0 : index
    %c384 = arith.constant 384 : index
    %62 = vector.load %arg2[%c0_22, %c384] : memref<32x672xf32, #tpu.memory_space<vmem>>, vector<32x96xf32>
    %cst_23 = arith.constant dense<0.000000e+00> : vector<32x96xf32>
    %63 = tpu.matmul %61, %62, %cst_23 {dimension_numbers = #tpu.dot_dimension_numbers<[1], [0], [0], [1], [0, 0, 1, 1], [], []>, precision = #tpu.contract_precision<fp32>} : vector<32x32xf32>, vector<32x96xf32>, vector<32x96xf32> -> vector<32x96xf32>
    %64 = vector.extract_strided_slice %1 {offsets = [2, 0], sizes = [1, 96], strides = [1, 1]} : vector<24x128xf32> to vector<1x96xf32>
    %65 = vector.broadcast %64 : vector<1x96xf32> to vector<32x96xf32>
    %66 = arith.addf %63, %65 : vector<32x96xf32>
    %67 = vector.extract_strided_slice %66 {offsets = [0, 0], sizes = [32, 64], strides = [1, 1]} : vector<32x96xf32> to vector<32x64xf32>
    %c0_24 = arith.constant 0 : index
    %c0_25 = arith.constant 0 : index
    %68 = vector.load %arg6[%c0_24, %c0_25] : memref<32x64xf32, #tpu.memory_space<vmem>>, vector<32x64xf32>
    tpu.vector_store %arg6[%c0_24, %c0_25], %67 {strides = array<i32>} : memref<32x64xf32, #tpu.memory_space<vmem>>, vector<32x64xf32>,
    %c0_26 = arith.constant 0 : index
    %c128 = arith.constant 128 : index
    %69 = vector.load %arg2[%c0_26, %c128] : memref<32x672xf32, #tpu.memory_space<vmem>>, vector<32x128xf32>
    %cst_27 = arith.constant dense<0.000000e+00> : vector<32x128xf32>
    %70 = tpu.matmul %61, %69, %cst_27 {dimension_numbers = #tpu.dot_dimension_numbers<[1], [0], [0], [1], [0, 0, 1, 1], [], []>, precision = #tpu.contract_precision<fp32>} : vector<32x32xf32>, vector<32x128xf32>, vector<32x128xf32> -> vector<32x128xf32>
    %71 = vector.extract_strided_slice %1 {offsets = [3, 0], sizes = [1, 128], strides = [1, 1]} : vector<24x128xf32> to vector<1x128xf32>
    %72 = vector.broadcast %71 : vector<1x128xf32> to vector<32x128xf32>
    %73 = arith.addf %70, %72 : vector<32x128xf32>
    %74 = vector.extract_strided_slice %66 {offsets = [0, 64], sizes = [16, 8], strides = [1, 1]} : vector<32x96xf32> to vector<16x8xf32>
    %75 = vector.extract_strided_slice %66 {offsets = [0, 72], sizes = [16, 8], strides = [1, 1]} : vector<32x96xf32> to vector<16x8xf32>
    %76 = vector.extract_strided_slice %66 {offsets = [0, 80], sizes = [16, 8], strides = [1, 1]} : vector<32x96xf32> to vector<16x8xf32>
    %77 = vector.extract_strided_slice %66 {offsets = [0, 88], sizes = [16, 8], strides = [1, 1]} : vector<32x96xf32> to vector<16x8xf32>
    %78 = vector.extract_strided_slice %66 {offsets = [16, 64], sizes = [16, 8], strides = [1, 1]} : vector<32x96xf32> to vector<16x8xf32>
    %79 = vector.extract_strided_slice %66 {offsets = [16, 72], sizes = [16, 8], strides = [1, 1]} : vector<32x96xf32> to vector<16x8xf32>
    %80 = vector.extract_strided_slice %66 {offsets = [16, 80], sizes = [16, 8], strides = [1, 1]} : vector<32x96xf32> to vector<16x8xf32>
    %81 = vector.extract_strided_slice %66 {offsets = [16, 88], sizes = [16, 8], strides = [1, 1]} : vector<32x96xf32> to vector<16x8xf32>
    %82 = vector.shape_cast %74 : vector<16x8xf32> to vector<1x16x8xf32>
    %83 = vector.shape_cast %75 : vector<16x8xf32> to vector<1x16x8xf32>
    %84 = vector.shape_cast %76 : vector<16x8xf32> to vector<1x16x8xf32>
    %85 = vector.shape_cast %77 : vector<16x8xf32> to vector<1x16x8xf32>
    %86 = vector.shape_cast %78 : vector<16x8xf32> to vector<1x16x8xf32>
    %87 = vector.shape_cast %79 : vector<16x8xf32> to vector<1x16x8xf32>
    %88 = vector.shape_cast %80 : vector<16x8xf32> to vector<1x16x8xf32>
    %89 = vector.shape_cast %81 : vector<16x8xf32> to vector<1x16x8xf32>
    %90 = tpu.concatenate %82, %83, %84, %85, %86, %87, %88, %89 in 0 : vector<1x16x8xf32>, vector<1x16x8xf32>, vector<1x16x8xf32>, vector<1x16x8xf32>, vector<1x16x8xf32>, vector<1x16x8xf32>, vector<1x16x8xf32>, vector<1x16x8xf32> -> vector<8x16x8xf32>
    %91 = vector.extract_strided_slice %66 {offsets = [0, 0], sizes = [16, 8], strides = [1, 1]} : vector<32x96xf32> to vector<16x8xf32>
    %92 = vector.extract_strided_slice %66 {offsets = [0, 8], sizes = [16, 8], strides = [1, 1]} : vector<32x96xf32> to vector<16x8xf32>
    %93 = vector.extract_strided_slice %66 {offsets = [0, 16], sizes = [16, 8], strides = [1, 1]} : vector<32x96xf32> to vector<16x8xf32>
    %94 = vector.extract_strided_slice %66 {offsets = [0, 24], sizes = [16, 8], strides = [1, 1]} : vector<32x96xf32> to vector<16x8xf32>
    %95 = vector.extract_strided_slice %66 {offsets = [16, 0], sizes = [16, 8], strides = [1, 1]} : vector<32x96xf32> to vector<16x8xf32>
    %96 = vector.extract_strided_slice %66 {offsets = [16, 8], sizes = [16, 8], strides = [1, 1]} : vector<32x96xf32> to vector<16x8xf32>
    %97 = vector.extract_strided_slice %66 {offsets = [16, 16], sizes = [16, 8], strides = [1, 1]} : vector<32x96xf32> to vector<16x8xf32>
    %98 = vector.extract_strided_slice %66 {offsets = [16, 24], sizes = [16, 8], strides = [1, 1]} : vector<32x96xf32> to vector<16x8xf32>
    %99 = vector.shape_cast %91 : vector<16x8xf32> to vector<1x16x8xf32>
    %100 = vector.shape_cast %92 : vector<16x8xf32> to vector<1x16x8xf32>
    %101 = vector.shape_cast %93 : vector<16x8xf32> to vector<1x16x8xf32>
    %102 = vector.shape_cast %94 : vector<16x8xf32> to vector<1x16x8xf32>
    %103 = vector.shape_cast %95 : vector<16x8xf32> to vector<1x16x8xf32>
    %104 = vector.shape_cast %96 : vector<16x8xf32> to vector<1x16x8xf32>
    %105 = vector.shape_cast %97 : vector<16x8xf32> to vector<1x16x8xf32>
    %106 = vector.shape_cast %98 : vector<16x8xf32> to vector<1x16x8xf32>
    %107 = tpu.concatenate %99, %100, %101, %102, %103, %104, %105, %106 in 0 : vector<1x16x8xf32>, vector<1x16x8xf32>, vector<1x16x8xf32>, vector<1x16x8xf32>, vector<1x16x8xf32>, vector<1x16x8xf32>, vector<1x16x8xf32>, vector<1x16x8xf32> -> vector<8x16x8xf32>
    %108 = vector.extract_strided_slice %73 {offsets = [0, 0], sizes = [16, 32], strides = [1, 1]} : vector<32x128xf32> to vector<16x32xf32>
    %109 = vector.extract_strided_slice %73 {offsets = [0, 32], sizes = [16, 32], strides = [1, 1]} : vector<32x128xf32> to vector<16x32xf32>
    %110 = vector.extract_strided_slice %73 {offsets = [0, 64], sizes = [16, 32], strides = [1, 1]} : vector<32x128xf32> to vector<16x32xf32>
    %111 = vector.extract_strided_slice %73 {offsets = [0, 96], sizes = [16, 32], strides = [1, 1]} : vector<32x128xf32> to vector<16x32xf32>
    %112 = vector.extract_strided_slice %73 {offsets = [16, 0], sizes = [16, 32], strides = [1, 1]} : vector<32x128xf32> to vector<16x32xf32>
    %113 = vector.extract_strided_slice %73 {offsets = [16, 32], sizes = [16, 32], strides = [1, 1]} : vector<32x128xf32> to vector<16x32xf32>
    %114 = vector.extract_strided_slice %73 {offsets = [16, 64], sizes = [16, 32], strides = [1, 1]} : vector<32x128xf32> to vector<16x32xf32>
    %115 = vector.extract_strided_slice %73 {offsets = [16, 96], sizes = [16, 32], strides = [1, 1]} : vector<32x128xf32> to vector<16x32xf32>
    %116 = vector.shape_cast %108 : vector<16x32xf32> to vector<1x16x32xf32>
    %117 = vector.shape_cast %109 : vector<16x32xf32> to vector<1x16x32xf32>
    %118 = vector.shape_cast %110 : vector<16x32xf32> to vector<1x16x32xf32>
    %119 = vector.shape_cast %111 : vector<16x32xf32> to vector<1x16x32xf32>
    %120 = vector.shape_cast %112 : vector<16x32xf32> to vector<1x16x32xf32>
    %121 = vector.shape_cast %113 : vector<16x32xf32> to vector<1x16x32xf32>
    %122 = vector.shape_cast %114 : vector<16x32xf32> to vector<1x16x32xf32>
    %123 = vector.shape_cast %115 : vector<16x32xf32> to vector<1x16x32xf32>
    %124 = tpu.concatenate %116, %117, %118, %119, %120, %121, %122, %123 in 0 : vector<1x16x32xf32>, vector<1x16x32xf32>, vector<1x16x32xf32>, vector<1x16x32xf32>, vector<1x16x32xf32>, vector<1x16x32xf32>, vector<1x16x32xf32>, vector<1x16x32xf32> -> vector<8x16x32xf32>
    %cst_28 = arith.constant dense<0.000000e+00> : vector<8x16x16xf32>
    %125 = tpu.matmul %90, %107, %cst_28 {dimension_numbers = #tpu.dot_dimension_numbers<[2], [2], [1], [1], [0, 0, 0, 1, 1, 1], [0], [0]>, precision = #tpu.contract_precision<fp32>} : vector<8x16x8xf32>, vector<8x16x8xf32>, vector<8x16x16xf32> -> vector<8x16x16xf32>
    %cst_29 = arith.constant 0.353553385 : f32
    %126 = vector.broadcast %cst_29 : f32 to vector<8x16x16xf32>
    %127 = arith.mulf %125, %126 : vector<8x16x16xf32>
    %cst_30 = arith.constant dense<0xFF800000> : vector<8x16xf32>
    %128 = vector.multi_reduction <maximumf>, %127, %cst_30 [2] : vector<8x16x16xf32> to vector<8x16xf32>
    %129 = vector.shape_cast %128 : vector<8x16xf32> to vector<8x16x1xf32>
    %130 = vector.broadcast %129 : vector<8x16x1xf32> to vector<8x16x16xf32>
    %131 = arith.subf %127, %130 : vector<8x16x16xf32>
    %132 = math.exp %131 : vector<8x16x16xf32>
    %cst_31 = arith.constant dense<0.000000e+00> : vector<8x16xf32>
    %133 = vector.multi_reduction <add>, %132, %cst_31 [2] : vector<8x16x16xf32> to vector<8x16xf32>
    %134 = vector.shape_cast %133 : vector<8x16xf32> to vector<8x16x1xf32>
    %135 = tpu.reciprocal %134 {approx = true} : vector<8x16x1xf32> -> vector<8x16x1xf32>
    %136 = vector.broadcast %135 : vector<8x16x1xf32> to vector<8x16x16xf32>
    %137 = arith.mulf %132, %136 : vector<8x16x16xf32>
    %cst_32 = arith.constant dense<0.000000e+00> : vector<8x16x32xf32>
    %138 = tpu.matmul %137, %124, %cst_32 {dimension_numbers = #tpu.dot_dimension_numbers<[2], [1], [1], [2], [0, 0, 0, 1, 1, 2], [0], [0]>, precision = #tpu.contract_precision<fp32>} : vector<8x16x16xf32>, vector<8x16x32xf32>, vector<8x16x32xf32> -> vector<8x16x32xf32>
    %139 = vector.extract_strided_slice %138 {offsets = [0, 0, 0], sizes = [4, 16, 32], strides = [1, 1, 1]} : vector<8x16x32xf32> to vector<4x16x32xf32>
    %cst_33 = arith.constant dense<0.000000e+00> : vector<16x32xf32>
    %140 = vector.multi_reduction <add>, %139, %cst_33 [0] : vector<4x16x32xf32> to vector<16x32xf32>
    %141 = vector.extract_strided_slice %138 {offsets = [4, 0, 0], sizes = [4, 16, 32], strides = [1, 1, 1]} : vector<8x16x32xf32> to vector<4x16x32xf32>
    %cst_34 = arith.constant dense<0.000000e+00> : vector<16x32xf32>
    %142 = vector.multi_reduction <add>, %141, %cst_34 [0] : vector<4x16x32xf32> to vector<16x32xf32>
    %143 = tpu.concatenate %140, %142 in 0 : vector<16x32xf32>, vector<16x32xf32> -> vector<32x32xf32>
    %144 = arith.addf %43, %143 : vector<32x32xf32>
    %cst_35 = arith.constant dense<0.000000e+00> : vector<32xf32>
    %145 = vector.multi_reduction <add>, %144, %cst_35 [1] : vector<32x32xf32> to vector<32xf32>
    %146 = vector.shape_cast %145 : vector<32xf32> to vector<32x1xf32>
    %cst_36 = arith.constant 3.200000e+01 : f32
    %147 = vector.broadcast %cst_36 : f32 to vector<32x1xf32>
    %148 = arith.divf %146, %147 : vector<32x1xf32>
    %149 = vector.broadcast %148 : vector<32x1xf32> to vector<32x32xf32>
    %150 = arith.subf %144, %149 : vector<32x32xf32>
    %151 = arith.mulf %150, %150 : vector<32x32xf32>
    %cst_37 = arith.constant dense<0.000000e+00> : vector<32xf32>
    %152 = vector.multi_reduction <add>, %151, %cst_37 [1] : vector<32x32xf32> to vector<32xf32>
    %153 = vector.shape_cast %152 : vector<32xf32> to vector<32x1xf32>
    %cst_38 = arith.constant 3.200000e+01 : f32
    %154 = vector.broadcast %cst_38 : f32 to vector<32x1xf32>
    %155 = arith.divf %153, %154 : vector<32x1xf32>
    %156 = vector.broadcast %148 : vector<32x1xf32> to vector<32x32xf32>
    %157 = arith.subf %144, %156 : vector<32x32xf32>
    %cst_39 = arith.constant 9.99999974E-6 : f32
    %158 = vector.broadcast %cst_39 : f32 to vector<32x1xf32>
    %159 = arith.addf %155, %158 : vector<32x1xf32>
    %160 = math.rsqrt %159 : vector<32x1xf32>
    %161 = vector.broadcast %160 : vector<32x1xf32> to vector<32x32xf32>
    %162 = arith.mulf %157, %161 : vector<32x32xf32>
    %c0_40 = arith.constant 0 : index
    %c512 = arith.constant 512 : index
    %163 = vector.load %arg2[%c0_40, %c512] : memref<32x672xf32, #tpu.memory_space<vmem>>, vector<32x64xf32>
    %cst_41 = arith.constant dense<0.000000e+00> : vector<32x64xf32>
    %164 = tpu.matmul %162, %163, %cst_41 {dimension_numbers = #tpu.dot_dimension_numbers<[1], [0], [0], [1], [0, 0, 1, 1], [], []>, precision = #tpu.contract_precision<fp32>} : vector<32x32xf32>, vector<32x64xf32>, vector<32x64xf32> -> vector<32x64xf32>
    %165 = vector.extract_strided_slice %1 {offsets = [4, 0], sizes = [1, 64], strides = [1, 1]} : vector<24x128xf32> to vector<1x64xf32>
    %166 = vector.broadcast %165 : vector<1x64xf32> to vector<32x64xf32>
    %167 = arith.addf %164, %166 : vector<32x64xf32>
    %168 = vector.extract_strided_slice %167 {offsets = [0, 0], sizes = [32, 32], strides = [1, 1]} : vector<32x64xf32> to vector<32x32xf32>
    %169 = vector.extract_strided_slice %167 {offsets = [0, 32], sizes = [32, 32], strides = [1, 1]} : vector<32x64xf32> to vector<32x32xf32>
    %170 = arith.negf %169 : vector<32x32xf32>
    %171 = math.exp %170 : vector<32x32xf32>
    %cst_42 = arith.constant 1.000000e+00 : f32
    %172 = vector.broadcast %cst_42 : f32 to vector<32x32xf32>
    %173 = arith.addf %172, %171 : vector<32x32xf32>
    %174 = arith.divf %172, %173 : vector<32x32xf32>
    %175 = arith.mulf %168, %174 : vector<32x32xf32>
    %176 = tpu.iota {dimensions = array<i32: 0>} : vector<16x32xi32>
    %177 = tpu.concatenate %176, %176 in 0 : vector<16x32xi32>, vector<16x32xi32> -> vector<32x32xi32>
    %cst_43 = arith.constant 0.000000e+00 : f32
    %178 = vector.broadcast %cst_43 : f32 to vector<32x32xf32>
    %179 = vector.extract_strided_slice %175 {offsets = [28, 0], sizes = [4, 32], strides = [1, 1]} : vector<32x32xf32> to vector<4x32xf32>
    %180 = vector.extract_strided_slice %175 {offsets = [0, 0], sizes = [28, 32], strides = [1, 1]} : vector<32x32xf32> to vector<28x32xf32>
    %181 = tpu.concatenate %179, %180 in 0 : vector<4x32xf32>, vector<28x32xf32> -> vector<32x32xf32>
    %c-4_i32 = arith.constant -4 : i32
    %182 = vector.broadcast %c-4_i32 : i32 to vector<32x32xi32>
    %183 = arith.addi %177, %182 : vector<32x32xi32>
    %c0_i32 = arith.constant 0 : i32
    %184 = vector.broadcast %c0_i32 : i32 to vector<32x32xi32>
    %185 = arith.cmpi sge, %183, %184 : vector<32x32xi32>
    %c-4_i32_44 = arith.constant -4 : i32
    %186 = vector.broadcast %c-4_i32_44 : i32 to vector<32x32xi32>
    %187 = arith.addi %177, %186 : vector<32x32xi32>
    %c16_i32 = arith.constant 16 : i32
    %188 = vector.broadcast %c16_i32 : i32 to vector<32x32xi32>
    %189 = arith.cmpi slt, %187, %188 : vector<32x32xi32>
    %190 = arith.andi %185, %189 : vector<32x32xi1>
    %cst_45 = arith.constant 0.000000e+00 : f32
    %191 = vector.broadcast %cst_45 : f32 to vector<32x32xf32>
    %192 = arith.select %190, %181, %191 : vector<32x32xi1>, vector<32x32xf32>
    %193 = vector.extract_strided_slice %1 {offsets = [11, 0], sizes = [1, 32], strides = [1, 1]} : vector<24x128xf32> to vector<1x32xf32>
    %194 = vector.shape_cast %193 : vector<1x32xf32> to vector<32xf32>
    %195 = vector.shape_cast %194 : vector<32xf32> to vector<1x32xf32>
    %196 = vector.broadcast %195 : vector<1x32xf32> to vector<32x32xf32>
    %197 = arith.mulf %192, %196 : vector<32x32xf32>
    %198 = arith.addf %178, %197 : vector<32x32xf32>
    %199 = vector.extract_strided_slice %175 {offsets = [29, 0], sizes = [3, 32], strides = [1, 1]} : vector<32x32xf32> to vector<3x32xf32>
    %200 = vector.extract_strided_slice %175 {offsets = [0, 0], sizes = [29, 32], strides = [1, 1]} : vector<32x32xf32> to vector<29x32xf32>
    %201 = tpu.concatenate %199, %200 in 0 : vector<3x32xf32>, vector<29x32xf32> -> vector<32x32xf32>
    %c-3_i32 = arith.constant -3 : i32
    %202 = vector.broadcast %c-3_i32 : i32 to vector<32x32xi32>
    %203 = arith.addi %177, %202 : vector<32x32xi32>
    %c0_i32_46 = arith.constant 0 : i32
    %204 = vector.broadcast %c0_i32_46 : i32 to vector<32x32xi32>
    %205 = arith.cmpi sge, %203, %204 : vector<32x32xi32>
    %c-3_i32_47 = arith.constant -3 : i32
    %206 = vector.broadcast %c-3_i32_47 : i32 to vector<32x32xi32>
    %207 = arith.addi %177, %206 : vector<32x32xi32>
    %c16_i32_48 = arith.constant 16 : i32
    %208 = vector.broadcast %c16_i32_48 : i32 to vector<32x32xi32>
    %209 = arith.cmpi slt, %207, %208 : vector<32x32xi32>
    %210 = arith.andi %205, %209 : vector<32x32xi1>
    %cst_49 = arith.constant 0.000000e+00 : f32
    %211 = vector.broadcast %cst_49 : f32 to vector<32x32xf32>
    %212 = arith.select %210, %201, %211 : vector<32x32xi1>, vector<32x32xf32>
    %213 = vector.extract_strided_slice %1 {offsets = [12, 0], sizes = [1, 32], strides = [1, 1]} : vector<24x128xf32> to vector<1x32xf32>
    %214 = vector.shape_cast %213 : vector<1x32xf32> to vector<32xf32>
    %215 = vector.shape_cast %214 : vector<32xf32> to vector<1x32xf32>
    %216 = vector.broadcast %215 : vector<1x32xf32> to vector<32x32xf32>
    %217 = arith.mulf %212, %216 : vector<32x32xf32>
    %218 = arith.addf %198, %217 : vector<32x32xf32>
    %219 = vector.extract_strided_slice %175 {offsets = [30, 0], sizes = [2, 32], strides = [1, 1]} : vector<32x32xf32> to vector<2x32xf32>
    %220 = vector.extract_strided_slice %175 {offsets = [0, 0], sizes = [30, 32], strides = [1, 1]} : vector<32x32xf32> to vector<30x32xf32>
    %221 = tpu.concatenate %219, %220 in 0 : vector<2x32xf32>, vector<30x32xf32> -> vector<32x32xf32>
    %c-2_i32 = arith.constant -2 : i32
    %222 = vector.broadcast %c-2_i32 : i32 to vector<32x32xi32>
    %223 = arith.addi %177, %222 : vector<32x32xi32>
    %c0_i32_50 = arith.constant 0 : i32
    %224 = vector.broadcast %c0_i32_50 : i32 to vector<32x32xi32>
    %225 = arith.cmpi sge, %223, %224 : vector<32x32xi32>
    %c-2_i32_51 = arith.constant -2 : i32
    %226 = vector.broadcast %c-2_i32_51 : i32 to vector<32x32xi32>
    %227 = arith.addi %177, %226 : vector<32x32xi32>
    %c16_i32_52 = arith.constant 16 : i32
    %228 = vector.broadcast %c16_i32_52 : i32 to vector<32x32xi32>
    %229 = arith.cmpi slt, %227, %228 : vector<32x32xi32>
    %230 = arith.andi %225, %229 : vector<32x32xi1>
    %cst_53 = arith.constant 0.000000e+00 : f32
    %231 = vector.broadcast %cst_53 : f32 to vector<32x32xf32>
    %232 = arith.select %230, %221, %231 : vector<32x32xi1>, vector<32x32xf32>
    %233 = vector.extract_strided_slice %1 {offsets = [13, 0], sizes = [1, 32], strides = [1, 1]} : vector<24x128xf32> to vector<1x32xf32>
    %234 = vector.shape_cast %233 : vector<1x32xf32> to vector<32xf32>
    %235 = vector.shape_cast %234 : vector<32xf32> to vector<1x32xf32>
    %236 = vector.broadcast %235 : vector<1x32xf32> to vector<32x32xf32>
    %237 = arith.mulf %232, %236 : vector<32x32xf32>
    %238 = arith.addf %218, %237 : vector<32x32xf32>
    %239 = vector.extract_strided_slice %175 {offsets = [31, 0], sizes = [1, 32], strides = [1, 1]} : vector<32x32xf32> to vector<1x32xf32>
    %240 = vector.extract_strided_slice %175 {offsets = [0, 0], sizes = [31, 32], strides = [1, 1]} : vector<32x32xf32> to vector<31x32xf32>
    %241 = tpu.concatenate %239, %240 in 0 : vector<1x32xf32>, vector<31x32xf32> -> vector<32x32xf32>
    %c-1_i32 = arith.constant -1 : i32
    %242 = vector.broadcast %c-1_i32 : i32 to vector<32x32xi32>
    %243 = arith.addi %177, %242 : vector<32x32xi32>
    %c0_i32_54 = arith.constant 0 : i32
    %244 = vector.broadcast %c0_i32_54 : i32 to vector<32x32xi32>
    %245 = arith.cmpi sge, %243, %244 : vector<32x32xi32>
    %c-1_i32_55 = arith.constant -1 : i32
    %246 = vector.broadcast %c-1_i32_55 : i32 to vector<32x32xi32>
    %247 = arith.addi %177, %246 : vector<32x32xi32>
    %c16_i32_56 = arith.constant 16 : i32
    %248 = vector.broadcast %c16_i32_56 : i32 to vector<32x32xi32>
    %249 = arith.cmpi slt, %247, %248 : vector<32x32xi32>
    %250 = arith.andi %245, %249 : vector<32x32xi1>
    %cst_57 = arith.constant 0.000000e+00 : f32
    %251 = vector.broadcast %cst_57 : f32 to vector<32x32xf32>
    %252 = arith.select %250, %241, %251 : vector<32x32xi1>, vector<32x32xf32>
    %253 = vector.extract_strided_slice %1 {offsets = [14, 0], sizes = [1, 32], strides = [1, 1]} : vector<24x128xf32> to vector<1x32xf32>
    %254 = vector.shape_cast %253 : vector<1x32xf32> to vector<32xf32>
    %255 = vector.shape_cast %254 : vector<32xf32> to vector<1x32xf32>
    %256 = vector.broadcast %255 : vector<1x32xf32> to vector<32x32xf32>
    %257 = arith.mulf %252, %256 : vector<32x32xf32>
    %258 = arith.addf %238, %257 : vector<32x32xf32>
    %c0_i32_58 = arith.constant 0 : i32
    %259 = vector.broadcast %c0_i32_58 : i32 to vector<32x32xi32>
    %260 = arith.addi %177, %259 : vector<32x32xi32>
    %c0_i32_59 = arith.constant 0 : i32
    %261 = vector.broadcast %c0_i32_59 : i32 to vector<32x32xi32>
    %262 = arith.cmpi sge, %260, %261 : vector<32x32xi32>
    %c0_i32_60 = arith.constant 0 : i32
    %263 = vector.broadcast %c0_i32_60 : i32 to vector<32x32xi32>
    %264 = arith.addi %177, %263 : vector<32x32xi32>
    %c16_i32_61 = arith.constant 16 : i32
    %265 = vector.broadcast %c16_i32_61 : i32 to vector<32x32xi32>
    %266 = arith.cmpi slt, %264, %265 : vector<32x32xi32>
    %267 = arith.andi %262, %266 : vector<32x32xi1>
    %cst_62 = arith.constant 0.000000e+00 : f32
    %268 = vector.broadcast %cst_62 : f32 to vector<32x32xf32>
    %269 = arith.select %267, %175, %268 : vector<32x32xi1>, vector<32x32xf32>
    %270 = vector.extract_strided_slice %1 {offsets = [15, 0], sizes = [1, 32], strides = [1, 1]} : vector<24x128xf32> to vector<1x32xf32>
    %271 = vector.shape_cast %270 : vector<1x32xf32> to vector<32xf32>
    %272 = vector.shape_cast %271 : vector<32xf32> to vector<1x32xf32>
    %273 = vector.broadcast %272 : vector<1x32xf32> to vector<32x32xf32>
    %274 = arith.mulf %269, %273 : vector<32x32xf32>
    %275 = arith.addf %258, %274 : vector<32x32xf32>
    %276 = vector.extract_strided_slice %175 {offsets = [1, 0], sizes = [31, 32], strides = [1, 1]} : vector<32x32xf32> to vector<31x32xf32>
    %277 = vector.extract_strided_slice %175 {offsets = [0, 0], sizes = [1, 32], strides = [1, 1]} : vector<32x32xf32> to vector<1x32xf32>
    %278 = tpu.concatenate %276, %277 in 0 : vector<31x32xf32>, vector<1x32xf32> -> vector<32x32xf32>
    %c1_i32 = arith.constant 1 : i32
    %279 = vector.broadcast %c1_i32 : i32 to vector<32x32xi32>
    %280 = arith.addi %177, %279 : vector<32x32xi32>
    %c0_i32_63 = arith.constant 0 : i32
    %281 = vector.broadcast %c0_i32_63 : i32 to vector<32x32xi32>
    %282 = arith.cmpi sge, %280, %281 : vector<32x32xi32>
    %c1_i32_64 = arith.constant 1 : i32
    %283 = vector.broadcast %c1_i32_64 : i32 to vector<32x32xi32>
    %284 = arith.addi %177, %283 : vector<32x32xi32>
    %c16_i32_65 = arith.constant 16 : i32
    %285 = vector.broadcast %c16_i32_65 : i32 to vector<32x32xi32>
    %286 = arith.cmpi slt, %284, %285 : vector<32x32xi32>
    %287 = arith.andi %282, %286 : vector<32x32xi1>
    %cst_66 = arith.constant 0.000000e+00 : f32
    %288 = vector.broadcast %cst_66 : f32 to vector<32x32xf32>
    %289 = arith.select %287, %278, %288 : vector<32x32xi1>, vector<32x32xf32>
    %290 = vector.extract_strided_slice %1 {offsets = [16, 0], sizes = [1, 32], strides = [1, 1]} : vector<24x128xf32> to vector<1x32xf32>
    %291 = vector.shape_cast %290 : vector<1x32xf32> to vector<32xf32>
    %292 = vector.shape_cast %291 : vector<32xf32> to vector<1x32xf32>
    %293 = vector.broadcast %292 : vector<1x32xf32> to vector<32x32xf32>
    %294 = arith.mulf %289, %293 : vector<32x32xf32>
    %295 = arith.addf %275, %294 : vector<32x32xf32>
    %296 = vector.extract_strided_slice %175 {offsets = [2, 0], sizes = [30, 32], strides = [1, 1]} : vector<32x32xf32> to vector<30x32xf32>
    %297 = vector.extract_strided_slice %175 {offsets = [0, 0], sizes = [2, 32], strides = [1, 1]} : vector<32x32xf32> to vector<2x32xf32>
    %298 = tpu.concatenate %296, %297 in 0 : vector<30x32xf32>, vector<2x32xf32> -> vector<32x32xf32>
    %c2_i32 = arith.constant 2 : i32
    %299 = vector.broadcast %c2_i32 : i32 to vector<32x32xi32>
    %300 = arith.addi %177, %299 : vector<32x32xi32>
    %c0_i32_67 = arith.constant 0 : i32
    %301 = vector.broadcast %c0_i32_67 : i32 to vector<32x32xi32>
    %302 = arith.cmpi sge, %300, %301 : vector<32x32xi32>
    %c2_i32_68 = arith.constant 2 : i32
    %303 = vector.broadcast %c2_i32_68 : i32 to vector<32x32xi32>
    %304 = arith.addi %177, %303 : vector<32x32xi32>
    %c16_i32_69 = arith.constant 16 : i32
    %305 = vector.broadcast %c16_i32_69 : i32 to vector<32x32xi32>
    %306 = arith.cmpi slt, %304, %305 : vector<32x32xi32>
    %307 = arith.andi %302, %306 : vector<32x32xi1>
    %cst_70 = arith.constant 0.000000e+00 : f32
    %308 = vector.broadcast %cst_70 : f32 to vector<32x32xf32>
    %309 = arith.select %307, %298, %308 : vector<32x32xi1>, vector<32x32xf32>
    %310 = vector.extract_strided_slice %1 {offsets = [17, 0], sizes = [1, 32], strides = [1, 1]} : vector<24x128xf32> to vector<1x32xf32>
    %311 = vector.shape_cast %310 : vector<1x32xf32> to vector<32xf32>
    %312 = vector.shape_cast %311 : vector<32xf32> to vector<1x32xf32>
    %313 = vector.broadcast %312 : vector<1x32xf32> to vector<32x32xf32>
    %314 = arith.mulf %309, %313 : vector<32x32xf32>
    %315 = arith.addf %295, %314 : vector<32x32xf32>
    %316 = vector.extract_strided_slice %175 {offsets = [3, 0], sizes = [29, 32], strides = [1, 1]} : vector<32x32xf32> to vector<29x32xf32>
    %317 = vector.extract_strided_slice %175 {offsets = [0, 0], sizes = [3, 32], strides = [1, 1]} : vector<32x32xf32> to vector<3x32xf32>
    %318 = tpu.concatenate %316, %317 in 0 : vector<29x32xf32>, vector<3x32xf32> -> vector<32x32xf32>
    %c3_i32 = arith.constant 3 : i32
    %319 = vector.broadcast %c3_i32 : i32 to vector<32x32xi32>
    %320 = arith.addi %177, %319 : vector<32x32xi32>
    %c0_i32_71 = arith.constant 0 : i32
    %321 = vector.broadcast %c0_i32_71 : i32 to vector<32x32xi32>
    %322 = arith.cmpi sge, %320, %321 : vector<32x32xi32>
    %c3_i32_72 = arith.constant 3 : i32
    %323 = vector.broadcast %c3_i32_72 : i32 to vector<32x32xi32>
    %324 = arith.addi %177, %323 : vector<32x32xi32>
    %c16_i32_73 = arith.constant 16 : i32
    %325 = vector.broadcast %c16_i32_73 : i32 to vector<32x32xi32>
    %326 = arith.cmpi slt, %324, %325 : vector<32x32xi32>
    %327 = arith.andi %322, %326 : vector<32x32xi1>
    %cst_74 = arith.constant 0.000000e+00 : f32
    %328 = vector.broadcast %cst_74 : f32 to vector<32x32xf32>
    %329 = arith.select %327, %318, %328 : vector<32x32xi1>, vector<32x32xf32>
    %330 = vector.extract_strided_slice %1 {offsets = [18, 0], sizes = [1, 32], strides = [1, 1]} : vector<24x128xf32> to vector<1x32xf32>
    %331 = vector.shape_cast %330 : vector<1x32xf32> to vector<32xf32>
    %332 = vector.shape_cast %331 : vector<32xf32> to vector<1x32xf32>
    %333 = vector.broadcast %332 : vector<1x32xf32> to vector<32x32xf32>
    %334 = arith.mulf %329, %333 : vector<32x32xf32>
    %335 = arith.addf %315, %334 : vector<32x32xf32>
    %336 = vector.extract_strided_slice %175 {offsets = [4, 0], sizes = [28, 32], strides = [1, 1]} : vector<32x32xf32> to vector<28x32xf32>
    %337 = vector.extract_strided_slice %175 {offsets = [0, 0], sizes = [4, 32], strides = [1, 1]} : vector<32x32xf32> to vector<4x32xf32>
    %338 = tpu.concatenate %336, %337 in 0 : vector<28x32xf32>, vector<4x32xf32> -> vector<32x32xf32>
    %c4_i32 = arith.constant 4 : i32
    %339 = vector.broadcast %c4_i32 : i32 to vector<32x32xi32>
    %340 = arith.addi %177, %339 : vector<32x32xi32>
    %c0_i32_75 = arith.constant 0 : i32
    %341 = vector.broadcast %c0_i32_75 : i32 to vector<32x32xi32>
    %342 = arith.cmpi sge, %340, %341 : vector<32x32xi32>
    %c4_i32_76 = arith.constant 4 : i32
    %343 = vector.broadcast %c4_i32_76 : i32 to vector<32x32xi32>
    %344 = arith.addi %177, %343 : vector<32x32xi32>
    %c16_i32_77 = arith.constant 16 : i32
    %345 = vector.broadcast %c16_i32_77 : i32 to vector<32x32xi32>
    %346 = arith.cmpi slt, %344, %345 : vector<32x32xi32>
    %347 = arith.andi %342, %346 : vector<32x32xi1>
    %cst_78 = arith.constant 0.000000e+00 : f32
    %348 = vector.broadcast %cst_78 : f32 to vector<32x32xf32>
    %349 = arith.select %347, %338, %348 : vector<32x32xi1>, vector<32x32xf32>
    %350 = vector.extract_strided_slice %1 {offsets = [19, 0], sizes = [1, 32], strides = [1, 1]} : vector<24x128xf32> to vector<1x32xf32>
    %351 = vector.shape_cast %350 : vector<1x32xf32> to vector<32xf32>
    %352 = vector.shape_cast %351 : vector<32xf32> to vector<1x32xf32>
    %353 = vector.broadcast %352 : vector<1x32xf32> to vector<32x32xf32>
    %354 = arith.mulf %349, %353 : vector<32x32xf32>
    %355 = arith.addf %335, %354 : vector<32x32xf32>
    %356 = vector.extract_strided_slice %1 {offsets = [5, 0], sizes = [1, 32], strides = [1, 1]} : vector<24x128xf32> to vector<1x32xf32>
    %357 = vector.broadcast %356 : vector<1x32xf32> to vector<32x32xf32>
    %358 = arith.addf %355, %357 : vector<32x32xf32>
    %359 = arith.negf %358 : vector<32x32xf32>
    %360 = math.exp %359 : vector<32x32xf32>
    %cst_79 = arith.constant 1.000000e+00 : f32
    %361 = vector.broadcast %cst_79 : f32 to vector<32x32xf32>
    %362 = arith.addf %361, %360 : vector<32x32xf32>
    %363 = arith.divf %361, %362 : vector<32x32xf32>
    %364 = arith.mulf %358, %363 : vector<32x32xf32>
    %c0_80 = arith.constant 0 : index
    %c640 = arith.constant 640 : index
    %365 = vector.load %arg2[%c0_80, %c640] : memref<32x672xf32, #tpu.memory_space<vmem>>, vector<32x32xf32>
    %cst_81 = arith.constant dense<0.000000e+00> : vector<32x32xf32>
    %366 = tpu.matmul %364, %365, %cst_81 {dimension_numbers = #tpu.dot_dimension_numbers<[1], [0], [0], [1], [0, 0, 1, 1], [], []>, precision = #tpu.contract_precision<fp32>} : vector<32x32xf32>, vector<32x32xf32>, vector<32x32xf32> -> vector<32x32xf32>
    %367 = vector.extract_strided_slice %1 {offsets = [6, 0], sizes = [1, 32], strides = [1, 1]} : vector<24x128xf32> to vector<1x32xf32>
    %368 = vector.broadcast %367 : vector<1x32xf32> to vector<32x32xf32>
    %369 = arith.addf %366, %368 : vector<32x32xf32>
    %370 = arith.addf %144, %369 : vector<32x32xf32>
    %cst_82 = arith.constant dense<0.000000e+00> : vector<32xf32>
    %371 = vector.multi_reduction <add>, %370, %cst_82 [1] : vector<32x32xf32> to vector<32xf32>
    %372 = vector.shape_cast %371 : vector<32xf32> to vector<32x1xf32>
    %cst_83 = arith.constant 3.200000e+01 : f32
    %373 = vector.broadcast %cst_83 : f32 to vector<32x1xf32>
    %374 = arith.divf %372, %373 : vector<32x1xf32>
    %375 = vector.broadcast %374 : vector<32x1xf32> to vector<32x32xf32>
    %376 = arith.subf %370, %375 : vector<32x32xf32>
    %377 = arith.mulf %376, %376 : vector<32x32xf32>
    %cst_84 = arith.constant dense<0.000000e+00> : vector<32xf32>
    %378 = vector.multi_reduction <add>, %377, %cst_84 [1] : vector<32x32xf32> to vector<32xf32>
    %379 = vector.shape_cast %378 : vector<32xf32> to vector<32x1xf32>
    %cst_85 = arith.constant 3.200000e+01 : f32
    %380 = vector.broadcast %cst_85 : f32 to vector<32x1xf32>
    %381 = arith.divf %379, %380 : vector<32x1xf32>
    %382 = vector.broadcast %374 : vector<32x1xf32> to vector<32x32xf32>
    %383 = arith.subf %370, %382 : vector<32x32xf32>
    %cst_86 = arith.constant 9.99999974E-6 : f32
    %384 = vector.broadcast %cst_86 : f32 to vector<32x1xf32>
    %385 = arith.addf %381, %384 : vector<32x1xf32>
    %386 = math.rsqrt %385 : vector<32x1xf32>
    %387 = vector.broadcast %386 : vector<32x1xf32> to vector<32x32xf32>
    %388 = arith.mulf %383, %387 : vector<32x32xf32>
    %c0_87 = arith.constant 0 : index
    %c256 = arith.constant 256 : index
    %389 = vector.load %arg2[%c0_87, %c256] : memref<32x672xf32, #tpu.memory_space<vmem>>, vector<32x128xf32>
    %cst_88 = arith.constant dense<0.000000e+00> : vector<32x128xf32>
    %390 = tpu.matmul %388, %389, %cst_88 {dimension_numbers = #tpu.dot_dimension_numbers<[1], [0], [0], [1], [0, 0, 1, 1], [], []>, precision = #tpu.contract_precision<fp32>} : vector<32x32xf32>, vector<32x128xf32>, vector<32x128xf32> -> vector<32x128xf32>
    %391 = vector.extract_strided_slice %1 {offsets = [7, 0], sizes = [1, 128], strides = [1, 1]} : vector<24x128xf32> to vector<1x128xf32>
    %392 = vector.broadcast %391 : vector<1x128xf32> to vector<32x128xf32>
    %393 = arith.addf %390, %392 : vector<32x128xf32>
    %394 = arith.mulf %393, %393 : vector<32x128xf32>
    %395 = arith.mulf %393, %394 : vector<32x128xf32>
    %cst_89 = arith.constant 4.471500e-02 : f32
    %396 = vector.broadcast %cst_89 : f32 to vector<32x128xf32>
    %397 = arith.mulf %396, %395 : vector<32x128xf32>
    %398 = arith.addf %393, %397 : vector<32x128xf32>
    %cst_90 = arith.constant 0.797884583 : f32
    %399 = vector.broadcast %cst_90 : f32 to vector<32x128xf32>
    %400 = arith.mulf %399, %398 : vector<32x128xf32>
    %401 = math.tanh %400 : vector<32x128xf32>
    %cst_91 = arith.constant 1.000000e+00 : f32
    %402 = vector.broadcast %cst_91 : f32 to vector<32x128xf32>
    %403 = arith.addf %402, %401 : vector<32x128xf32>
    %cst_92 = arith.constant 5.000000e-01 : f32
    %404 = vector.broadcast %cst_92 : f32 to vector<32x128xf32>
    %405 = arith.mulf %404, %403 : vector<32x128xf32>
    %406 = arith.mulf %393, %405 : vector<32x128xf32>
    %c128_93 = arith.constant 128 : index
    %c0_94 = arith.constant 0 : index
    %407 = vector.load %arg3[%c128_93, %c0_94] : memref<256x32xf32, #tpu.memory_space<vmem>>, vector<128x32xf32>
    %cst_95 = arith.constant dense<0.000000e+00> : vector<32x32xf32>
    %408 = tpu.matmul %406, %407, %cst_95 {dimension_numbers = #tpu.dot_dimension_numbers<[1], [0], [0], [1], [0, 0, 1, 1], [], []>, precision = #tpu.contract_precision<fp32>} : vector<32x128xf32>, vector<128x32xf32>, vector<32x32xf32> -> vector<32x32xf32>
    %409 = vector.extract_strided_slice %1 {offsets = [8, 0], sizes = [1, 32], strides = [1, 1]} : vector<24x128xf32> to vector<1x32xf32>
    %410 = vector.broadcast %409 : vector<1x32xf32> to vector<32x32xf32>
    %411 = arith.addf %408, %410 : vector<32x32xf32>
    %412 = arith.addf %370, %411 : vector<32x32xf32>
    %cst_96 = arith.constant dense<0.000000e+00> : vector<32xf32>
    %413 = vector.multi_reduction <add>, %412, %cst_96 [1] : vector<32x32xf32> to vector<32xf32>
    %414 = vector.shape_cast %413 : vector<32xf32> to vector<32x1xf32>
    %cst_97 = arith.constant 3.200000e+01 : f32
    %415 = vector.broadcast %cst_97 : f32 to vector<32x1xf32>
    %416 = arith.divf %414, %415 : vector<32x1xf32>
    %417 = vector.broadcast %416 : vector<32x1xf32> to vector<32x32xf32>
    %418 = arith.subf %412, %417 : vector<32x32xf32>
    %419 = arith.mulf %418, %418 : vector<32x32xf32>
    %cst_98 = arith.constant dense<0.000000e+00> : vector<32xf32>
    %420 = vector.multi_reduction <add>, %419, %cst_98 [1] : vector<32x32xf32> to vector<32xf32>
    %421 = vector.shape_cast %420 : vector<32xf32> to vector<32x1xf32>
    %cst_99 = arith.constant 3.200000e+01 : f32
    %422 = vector.broadcast %cst_99 : f32 to vector<32x1xf32>
    %423 = arith.divf %421, %422 : vector<32x1xf32>
    %424 = vector.broadcast %416 : vector<32x1xf32> to vector<32x32xf32>
    %425 = arith.subf %412, %424 : vector<32x32xf32>
    %cst_100 = arith.constant 9.99999974E-6 : f32
    %426 = vector.broadcast %cst_100 : f32 to vector<32x1xf32>
    %427 = arith.addf %423, %426 : vector<32x1xf32>
    %428 = math.rsqrt %427 : vector<32x1xf32>
    %429 = vector.broadcast %428 : vector<32x1xf32> to vector<32x32xf32>
    %430 = arith.mulf %425, %429 : vector<32x32xf32>
    %431 = vector.extract_strided_slice %1 {offsets = [9, 0], sizes = [1, 32], strides = [1, 1]} : vector<24x128xf32> to vector<1x32xf32>
    %432 = vector.shape_cast %431 : vector<1x32xf32> to vector<32xf32>
    %433 = vector.shape_cast %432 : vector<32xf32> to vector<1x32xf32>
    %434 = vector.broadcast %433 : vector<1x32xf32> to vector<32x32xf32>
    %435 = arith.mulf %430, %434 : vector<32x32xf32>
    %436 = vector.extract_strided_slice %1 {offsets = [10, 0], sizes = [1, 32], strides = [1, 1]} : vector<24x128xf32> to vector<1x32xf32>
    %437 = vector.shape_cast %436 : vector<1x32xf32> to vector<32xf32>
    %438 = vector.shape_cast %437 : vector<32xf32> to vector<1x32xf32>
    %439 = vector.broadcast %438 : vector<1x32xf32> to vector<32x32xf32>
    %440 = arith.addf %435, %439 : vector<32x32xf32>
    %c0_101 = arith.constant 0 : index
    %c0_102 = arith.constant 0 : index
    %441 = vector.load %arg5[%c0_101, %c0_102] : memref<32x32xf32, #tpu.memory_space<vmem>>, vector<32x32xf32>
    tpu.vector_store %arg5[%c0_101, %c0_102], %440 {strides = array<i32>} : memref<32x32xf32, #tpu.memory_space<vmem>>, vector<32x32xf32>,
    return
  }
  func.func @transform_0(%arg0: i32) -> (i32, i32) {
    %c0_i32 = arith.constant 0 : i32
    %c0_i32_0 = arith.constant 0 : i32
    %c0_i32_1 = arith.constant 0 : i32
    return %c0_i32, %c0_i32_0 : i32, i32
  }
  func.func @transform_1(%arg0: i32) -> (i32, i32) {
    %c0_i32 = arith.constant 0 : i32
    %c0_i32_0 = arith.constant 0 : i32
    %c0_i32_1 = arith.constant 0 : i32
    return %c0_i32, %c0_i32_0 : i32, i32
  }
  func.func @transform_2(%arg0: i32) -> (i32, i32) {
    %c0_i32 = arith.constant 0 : i32
    %c0_i32_0 = arith.constant 0 : i32
    %c0_i32_1 = arith.constant 0 : i32
    return %c0_i32, %c0_i32_0 : i32, i32
  }
  func.func @transform_3(%arg0: i32) -> (i32, i32) {
    %c0_i32 = arith.constant 0 : i32
    %c0_i32_0 = arith.constant 0 : i32
    %c0_i32_1 = arith.constant 0 : i32
    return %c0_i32, %c0_i32_0 : i32, i32
  }
  func.func @transform_4(%arg0: i32) -> (i32, i32) {
    %c0_i32 = arith.constant 0 : i32
    %c0_i32_0 = arith.constant 0 : i32
    %c0_i32_1 = arith.constant 0 : i32
    return %c0_i32, %c0_i32_0 : i32, i32
  }
  func.func @transform_5(%arg0: i32) -> (i32, i32) {
    %c0_i32 = arith.constant 0 : i32
    %c0_i32_0 = arith.constant 0 : i32
    %c0_i32_1 = arith.constant 0 : i32
    return %c0_i32, %c0_i32_0 : i32, i32
  }
}

</mosaic_0001>

<llo_original>
// kernel: conformer_layer_forward.1
$region0: #{conformer_layer_forward.1}
  #allocation0 [shape = 'u32[]', space=smem, size = 0x4, offset = 0x4, fixed_abs, tag = 'smem constant byte address 0x4 - core index']
  #allocation1 [shape = 'u32[72,128]{1,0:T(1,128)}', space=vmem, size = 0x9000, scoped, tag = 'internal scratch']
  %s0 = inlined_call_operand.vmem [shape: f32[32,32], index: 0, kind: input, shape index: {}]
  %s1 = inlined_call_operand.vmem [shape: f32[32,672], index: 1, kind: input, shape index: {}]
  %s2 = inlined_call_operand.vmem [shape: f32[256,32], index: 2, kind: input, shape index: {}]
  %s3 = inlined_call_operand.vmem [shape: f32[24,128], index: 3, kind: input, shape index: {}]
  %s4 = inlined_call_operand.hbm [shape: f32[32,32], index: 4, kind: output, shape index: {0}]
  %s5 = inlined_call_operand.vmem [shape: f32[32,64], index: 5, kind: output, shape index: {1}]
  %6 = xla_tuple %s4, %s5
  %s7 = sld [smem:[#allocation0]]
  $region34: #{conformer_layer_forward.1} parent=0
    _
  %s9 = ssub.s32 1, %s7
  %s10 = scalar_select 0, %s9, %s7
  $region1: #{conformer_layer_forward.1} parent=0
    #allocation2 [shape = 'u8[16384]{0}', space=vmem, size = 0x4000, scoped, tag = 'output window, operand 0, single buffered']
    #allocation3 [shape = 's32[1]{0}', space=sflag, size = 0x4, scoped, tag = 'scoped memory for conformer_layer_forward.1']
    %11 = vsyncpa [#allocation3], 0
    // Predicated region
    $region2: #{conformer_layer_forward.1} parent=1 // pred_check
      _
    $region3: #{conformer_layer_forward.1} parent=1 // pred_check_branch
      %13 = sbr.rel (0) target = $region5
    $region4: #{conformer_layer_forward.1} parent=1 // pred_region
      _
    $region5: #{conformer_layer_forward.1} parent=1 // pred_fallthru
      _
    // Predicated region
    $region6: #{conformer_layer_forward.1} parent=1 // pred_check
      _
    $region7: #{conformer_layer_forward.1} parent=1 // pred_check_branch
      %15 = sbr.rel (0) target = $region9
    $region8: #{conformer_layer_forward.1} parent=1 // pred_region
      _
    $region9: #{conformer_layer_forward.1} parent=1 // pred_fallthru
      _
    // Predicated region
    $region10: #{conformer_layer_forward.1} parent=1 // pred_check
      _
    $region11: #{conformer_layer_forward.1} parent=1 // pred_check_branch
      %17 = sbr.rel (0) target = $region13
    $region12: #{conformer_layer_forward.1} parent=1 // pred_region
      _
    $region13: #{conformer_layer_forward.1} parent=1 // pred_fallthru
      _
    // Predicated region
    $region14: #{conformer_layer_forward.1} parent=1 // pred_check
      _
    $region15: #{conformer_layer_forward.1} parent=1 // pred_check_branch
      %19 = sbr.rel (0) target = $region17
    $region16: #{conformer_layer_forward.1} parent=1 // pred_region
      _
    $region17: #{conformer_layer_forward.1} parent=1 // pred_fallthru
      _
    %v20 = vld [vmem:[%s0] sm:$0xff]
    %v21 = vld [vmem:[%s0 + $0x8] sm:$0xff]
    %v22 = vld [vmem:[%s0 + $0x10] sm:$0xff]
    %v23 = vld [vmem:[%s0 + $0x18] sm:$0xff]
    %v24 = vld [vmem:[%s3] sm:$0xff]
    %v25 = vld [vmem:[%s3 + $0x8] sm:$0xff]
    %v26 = vld [vmem:[%s3 + $0x10] sm:$0xff]
    %vm27 = vcmask 261120
    %v28 = vsel %vm27, %v20, 0.0
    %29 = vadd.xlane.f32.xlu0 %v28
    %v30 = vpop.xlane.xlu0 %29
    %v31 = vsel %vm27, %v21, 0.0
    %32 = vadd.xlane.f32.xlu0 %v31
    %v33 = vpop.xlane.xlu0 %32
    %v34 = vsel %vm27, %v22, 0.0
    %35 = vadd.xlane.f32.xlu0 %v34
    %v36 = vpop.xlane.xlu0 %35
    %v37 = vsel %vm27, %v23, 0.0
    %38 = vadd.xlane.f32.xlu0 %v37
    %v39 = vpop.xlane.xlu0 %38
    %v40 = vrcp.pop 32.0
    %v41 = vmul.f32 32.0, %v40
    %v42 = vsub.f32 1.0, %v41
    %v43 = vmul.f32 %v40, %v42
    %v44 = vadd.f32 %v40, %v43
    %vm45 = vweird.f32 %v40
    %v46 = vsel %vm45, %v40, %v44
    %v47 = vmul.f32 %v30, %v46
    %v48 = vmul.f32 %v33, %v46
    %v49 = vmul.f32 %v36, %v46
    %v50 = vmul.f32 %v39, %v46
    %v51 = vsub.f32 %v20, %v47
    %v52 = vsub.f32 %v21, %v48
    %v53 = vsub.f32 %v22, %v49
    %v54 = vsub.f32 %v23, %v50
    %v55 = vmul.f32 %v51, %v51
    %v56 = vmul.f32 %v52, %v52
    %v57 = vmul.f32 %v53, %v53
    %v58 = vmul.f32 %v54, %v54
    %v59 = vsel %vm27, %v55, 0.0
    %60 = vadd.xlane.f32.xlu0 %v59
    %v61 = vpop.xlane.xlu0 %60
    %v62 = vsel %vm27, %v56, 0.0
    %63 = vadd.xlane.f32.xlu0 %v62
    %v64 = vpop.xlane.xlu0 %63
    %v65 = vsel %vm27, %v57, 0.0
    %66 = vadd.xlane.f32.xlu0 %v65
    %v67 = vpop.xlane.xlu0 %66
    %v68 = vsel %vm27, %v58, 0.0
    %69 = vadd.xlane.f32.xlu0 %v68
    %v70 = vpop.xlane.xlu0 %69
    %v71 = vmul.f32 %v61, %v46
    %v72 = vmul.f32 %v64, %v46
    %v73 = vmul.f32 %v67, %v46
    %v74 = vmul.f32 %v70, %v46
    %v75 = vadd.f32 %v71, 1e-05
    %v76 = vadd.f32 %v72, 1e-05
    %v77 = vadd.f32 %v73, 1e-05
    %v78 = vadd.f32 %v74, 1e-05
    %v79 = vrsqrt.pop %v75
    %v80 = vmul.f32 %v79, %v75
    %v81 = vmul.f32 %v80, %v79
    %v82 = vmul.f32 0.5, %v81
    %v83 = vsub.f32 1.5, %v82
    %v84 = vmul.f32 %v79, %v83
    %vm85 = vweird.f32 %v75
    %vm86 = vweird.f32 %v79
    %vm87 = vmor %vm85, %vm86
    %v88 = vsel %vm87, %v79, %v84
    %v89 = vrsqrt.pop %v76
    %v90 = vmul.f32 %v89, %v76
    %v91 = vmul.f32 %v90, %v89
    %v92 = vmul.f32 0.5, %v91
    %v93 = vsub.f32 1.5, %v92
    %v94 = vmul.f32 %v89, %v93
    %vm95 = vweird.f32 %v76
    %vm96 = vweird.f32 %v89
    %vm97 = vmor %vm95, %vm96
    %v98 = vsel %vm97, %v89, %v94
    %v99 = vrsqrt.pop %v77
    %v100 = vmul.f32 %v99, %v77
    %v101 = vmul.f32 %v100, %v99
    %v102 = vmul.f32 0.5, %v101
    %v103 = vsub.f32 1.5, %v102
    %v104 = vmul.f32 %v99, %v103
    %vm105 = vweird.f32 %v77
    %vm106 = vweird.f32 %v99
    %vm107 = vmor %vm105, %vm106
    %v108 = vsel %vm107, %v99, %v104
    %v109 = vrsqrt.pop %v78
    %v110 = vmul.f32 %v109, %v78
    %v111 = vmul.f32 %v110, %v109
    %v112 = vmul.f32 0.5, %v111
    %v113 = vsub.f32 1.5, %v112
    %v114 = vmul.f32 %v109, %v113
    %vm115 = vweird.f32 %v78
    %vm116 = vweird.f32 %v109
    %vm117 = vmor %vm115, %vm116
    %v118 = vsel %vm117, %v109, %v114
    %v119 = vmul.f32 %v51, %v88
    %v120 = vmul.f32 %v52, %v98
    %v121 = vmul.f32 %v53, %v108
    %v122 = vmul.f32 %v54, %v118
    %v123 = vld [vmem:[%s1] sm:$0xff]
    %v124 = vld [vmem:[%s1 + $0x30] sm:$0xff]
    %v125 = vld [vmem:[%s1 + $0x60] sm:$0xff]
    %v126 = vld [vmem:[%s1 + $0x90] sm:$0xff]
    %v127 = vperm.slane %v24, 0
    %v129 = vsel %vm27, %v119, 0
    %v132 = vsel %vm27, %v120, 0
    %v135 = vsel %vm27, %v121, 0
    %v138 = vsel %vm27, %v122, 0
    %140 = vmatpush.msra.mxu0 0.0
    %141 = vmatpush.msra.mxu0 0.0
    %142 = vmatpush.msra.mxu0 0.0
    %143 = vmatpush.msra.mxu0 0.0
    %144 = vmatpush.msra.mxu0 0.0
    %145 = vmatpush.msra.mxu0 0.0
    %146 = vmatpush.msra.mxu0 0.0
    %147 = vmatpush.msra.mxu0 0.0
    %148 = vmatpush.msra.mxu0 0.0
    %149 = vmatpush.msra.mxu0 0.0
    %150 = vmatpush.msra.mxu0 0.0
    %151 = vmatpush.msra.mxu0 0.0
    %v152 = vand.u32 %v126, 4294901760
    %153 = vmatpush.msra.mxu0 %v152
    %v154 = vand.u32 %v125, 4294901760
    %155 = vmatpush.msra.mxu0 %v154
    %v156 = vand.u32 %v124, 4294901760
    %157 = vmatpush.msra.mxu0 %v156
    %v158 = vand.u32 %v123, 4294901760
    %159 = vmatpush.msra.mxu0 %v158
    %v160 = vand.u32 %v129, 4294901760
    %v161 = vsub.f32 %v129, %v160
    %v162 = vand.u32 %v161, 4294901760
    %v163 = vsub.f32 %v161, %v162
    %v164 = vand.u32 %v163, 4294901760
    %165 = vmatmul.f32.gmra.mxu0 %v164
    %v166 = vpop.f32.mrf.mxu0
    %v167 = vadd.f32 %v127, %v166
    %v168 = vand.u32 %v132, 4294901760
    %v169 = vsub.f32 %v132, %v168
    %v170 = vand.u32 %v169, 4294901760
    %v171 = vsub.f32 %v169, %v170
    %v172 = vand.u32 %v171, 4294901760
    %173 = vmatmul.f32.gmra.mxu0 %v172
    %v174 = vpop.f32.mrf.mxu0
    %v175 = vadd.f32 %v127, %v174
    %v176 = vand.u32 %v135, 4294901760
    %v177 = vsub.f32 %v135, %v176
    %v178 = vand.u32 %v177, 4294901760
    %v179 = vsub.f32 %v177, %v178
    %v180 = vand.u32 %v179, 4294901760
    %181 = vmatmul.f32.gmra.mxu0 %v180
    %v182 = vpop.f32.mrf.mxu0
    %v183 = vadd.f32 %v127, %v182
    %v184 = vand.u32 %v138, 4294901760
    %v185 = vsub.f32 %v138, %v184
    %v186 = vand.u32 %v185, 4294901760
    %v187 = vsub.f32 %v185, %v186
    %v188 = vand.u32 %v187, 4294901760
    %189 = vmatmul.f32.gmra.mxu0 %v188
    %v190 = vpop.f32.mrf.mxu0
    %v191 = vadd.f32 %v127, %v190
    %192 = vdwg.mxu0
    %193 = vmatpush.msra.mxu0 0.0
    %194 = vmatpush.msra.mxu0 0.0
    %195 = vmatpush.msra.mxu0 0.0
    %196 = vmatpush.msra.mxu0 0.0
    %197 = vmatpush.msra.mxu0 0.0
    %198 = vmatpush.msra.mxu0 0.0
    %199 = vmatpush.msra.mxu0 0.0
    %200 = vmatpush.msra.mxu0 0.0
    %201 = vmatpush.msra.mxu0 0.0
    %202 = vmatpush.msra.mxu0 0.0
    %203 = vmatpush.msra.mxu0 0.0
    %204 = vmatpush.msra.mxu0 0.0
    %v205 = vand.u32 %v126, 4294901760
    %v206 = vsub.f32 %v126, %v205
    %v207 = vand.u32 %v206, 4294901760
    %v208 = vsub.f32 %v206, %v207
    %v209 = vand.u32 %v208, 4294901760
    %210 = vmatpush.msra.mxu0 %v209
    %v211 = vand.u32 %v125, 4294901760
    %v212 = vsub.f32 %v125, %v211
    %v213 = vand.u32 %v212, 4294901760
    %v214 = vsub.f32 %v212, %v213
    %v215 = vand.u32 %v214, 4294901760
    %216 = vmatpush.msra.mxu0 %v215
    %v217 = vand.u32 %v124, 4294901760
    %v218 = vsub.f32 %v124, %v217
    %v219 = vand.u32 %v218, 4294901760
    %v220 = vsub.f32 %v218, %v219
    %v221 = vand.u32 %v220, 4294901760
    %222 = vmatpush.msra.mxu0 %v221
    %v223 = vand.u32 %v123, 4294901760
    %v224 = vsub.f32 %v123, %v223
    %v225 = vand.u32 %v224, 4294901760
    %v226 = vsub.f32 %v224, %v225
    %v227 = vand.u32 %v226, 4294901760
    %228 = vmatpush.msra.mxu0 %v227
    %v229 = vand.u32 %v129, 4294901760
    %230 = vmatmul.f32.gmra.mxu0 %v229
    %v231 = vpop.f32.mrf.mxu0
    %v232 = vadd.f32 %v167, %v231
    %v233 = vand.u32 %v132, 4294901760
    %234 = vmatmul.f32.gmra.mxu0 %v233
    %v235 = vpop.f32.mrf.mxu0
    %v236 = vadd.f32 %v175, %v235
    %v237 = vand.u32 %v135, 4294901760
    %238 = vmatmul.f32.gmra.mxu0 %v237
    %v239 = vpop.f32.mrf.mxu0
    %v240 = vadd.f32 %v183, %v239
    %v241 = vand.u32 %v138, 4294901760
    %242 = vmatmul.f32.gmra.mxu0 %v241
    %v243 = vpop.f32.mrf.mxu0
    %v244 = vadd.f32 %v191, %v243
    %245 = vdwg.mxu0
    %246 = vmatpush.msra.mxu0 0.0
    %247 = vmatpush.msra.mxu0 0.0
    %248 = vmatpush.msra.mxu0 0.0
    %249 = vmatpush.msra.mxu0 0.0
    %250 = vmatpush.msra.mxu0 0.0
    %251 = vmatpush.msra.mxu0 0.0
    %252 = vmatpush.msra.mxu0 0.0
    %253 = vmatpush.msra.mxu0 0.0
    %254 = vmatpush.msra.mxu0 0.0
    %255 = vmatpush.msra.mxu0 0.0
    %256 = vmatpush.msra.mxu0 0.0
    %257 = vmatpush.msra.mxu0 0.0
    %v258 = vand.u32 %v126, 4294901760
    %v259 = vsub.f32 %v126, %v258
    %260 = vmatpush.msra.mxu0 %v259
    %v261 = vand.u32 %v125, 4294901760
    %v262 = vsub.f32 %v125, %v261
    %263 = vmatpush.msra.mxu0 %v262
    %v264 = vand.u32 %v124, 4294901760
    %v265 = vsub.f32 %v124, %v264
    %266 = vmatpush.msra.mxu0 %v265
    %v267 = vand.u32 %v123, 4294901760
    %v268 = vsub.f32 %v123, %v267
    %269 = vmatpush.msra.mxu0 %v268
    %v270 = vand.u32 %v129, 4294901760
    %v271 = vsub.f32 %v129, %v270
    %272 = vmatmul.f32.gmra.mxu0 %v271
    %v273 = vpop.f32.mrf.mxu0
    %v274 = vadd.f32 %v232, %v273
    %v275 = vand.u32 %v132, 4294901760
    %v276 = vsub.f32 %v132, %v275
    %277 = vmatmul.f32.gmra.mxu0 %v276
    %v278 = vpop.f32.mrf.mxu0
    %v279 = vadd.f32 %v236, %v278
    %v280 = vand.u32 %v135, 4294901760
    %v281 = vsub.f32 %v135, %v280
    %282 = vmatmul.f32.gmra.mxu0 %v281
    %v283 = vpop.f32.mrf.mxu0
    %v284 = vadd.f32 %v240, %v283
    %v285 = vand.u32 %v138, 4294901760
    %v286 = vsub.f32 %v138, %v285
    %287 = vmatmul.f32.gmra.mxu0 %v286
    %v288 = vpop.f32.mrf.mxu0
    %v289 = vadd.f32 %v244, %v288
    %290 = vdwg.mxu0
    %291 = vmatpush.msra.mxu0 0.0
    %292 = vmatpush.msra.mxu0 0.0
    %293 = vmatpush.msra.mxu0 0.0
    %294 = vmatpush.msra.mxu0 0.0
    %295 = vmatpush.msra.mxu0 0.0
    %296 = vmatpush.msra.mxu0 0.0
    %297 = vmatpush.msra.mxu0 0.0
    %298 = vmatpush.msra.mxu0 0.0
    %299 = vmatpush.msra.mxu0 0.0
    %300 = vmatpush.msra.mxu0 0.0
    %301 = vmatpush.msra.mxu0 0.0
    %302 = vmatpush.msra.mxu0 0.0
    %v303 = vand.u32 %v126, 4294901760
    %304 = vmatpush.msra.mxu0 %v303
    %v305 = vand.u32 %v125, 4294901760
    %306 = vmatpush.msra.mxu0 %v305
    %v307 = vand.u32 %v124, 4294901760
    %308 = vmatpush.msra.mxu0 %v307
    %v309 = vand.u32 %v123, 4294901760
    %310 = vmatpush.msra.mxu0 %v309
    %v311 = vand.u32 %v129, 4294901760
    %v312 = vsub.f32 %v129, %v311
    %v313 = vand.u32 %v312, 4294901760
    %314 = vmatmul.f32.gmra.mxu0 %v313
    %v315 = vpop.f32.mrf.mxu0
    %v316 = vadd.f32 %v274, %v315
    %v317 = vand.u32 %v132, 4294901760
    %v318 = vsub.f32 %v132, %v317
    %v319 = vand.u32 %v318, 4294901760
    %320 = vmatmul.f32.gmra.mxu0 %v319
    %v321 = vpop.f32.mrf.mxu0
    %v322 = vadd.f32 %v279, %v321
    %v323 = vand.u32 %v135, 4294901760
    %v324 = vsub.f32 %v135, %v323
    %v325 = vand.u32 %v324, 4294901760
    %326 = vmatmul.f32.gmra.mxu0 %v325
    %v327 = vpop.f32.mrf.mxu0
    %v328 = vadd.f32 %v284, %v327
    %v329 = vand.u32 %v138, 4294901760
    %v330 = vsub.f32 %v138, %v329
    %v331 = vand.u32 %v330, 4294901760
    %332 = vmatmul.f32.gmra.mxu0 %v331
    %v333 = vpop.f32.mrf.mxu0
    %v334 = vadd.f32 %v289, %v333
    %335 = vdwg.mxu0
    %336 = vmatpush.msra.mxu0 0.0
    %337 = vmatpush.msra.mxu0 0.0
    %338 = vmatpush.msra.mxu0 0.0
    %339 = vmatpush.msra.mxu0 0.0
    %340 = vmatpush.msra.mxu0 0.0
    %341 = vmatpush.msra.mxu0 0.0
    %342 = vmatpush.msra.mxu0 0.0
    %343 = vmatpush.msra.mxu0 0.0
    %344 = vmatpush.msra.mxu0 0.0
    %345 = vmatpush.msra.mxu0 0.0
    %346 = vmatpush.msra.mxu0 0.0
    %347 = vmatpush.msra.mxu0 0.0
    %v348 = vand.u32 %v126, 4294901760
    %v349 = vsub.f32 %v126, %v348
    %v350 = vand.u32 %v349, 4294901760
    %351 = vmatpush.msra.mxu0 %v350
    %v352 = vand.u32 %v125, 4294901760
    %v353 = vsub.f32 %v125, %v352
    %v354 = vand.u32 %v353, 4294901760
    %355 = vmatpush.msra.mxu0 %v354
    %v356 = vand.u32 %v124, 4294901760
    %v357 = vsub.f32 %v124, %v356
    %v358 = vand.u32 %v357, 4294901760
    %359 = vmatpush.msra.mxu0 %v358
    %v360 = vand.u32 %v123, 4294901760
    %v361 = vsub.f32 %v123, %v360
    %v362 = vand.u32 %v361, 4294901760
    %363 = vmatpush.msra.mxu0 %v362
    %v364 = vand.u32 %v129, 4294901760
    %365 = vmatmul.f32.gmra.mxu0 %v364
    %v366 = vpop.f32.mrf.mxu0
    %v367 = vadd.f32 %v316, %v366
    %v368 = vand.u32 %v132, 4294901760
    %369 = vmatmul.f32.gmra.mxu0 %v368
    %v370 = vpop.f32.mrf.mxu0
    %v371 = vadd.f32 %v322, %v370
    %v372 = vand.u32 %v135, 4294901760
    %373 = vmatmul.f32.gmra.mxu0 %v372
    %v374 = vpop.f32.mrf.mxu0
    %v375 = vadd.f32 %v328, %v374
    %v376 = vand.u32 %v138, 4294901760
    %377 = vmatmul.f32.gmra.mxu0 %v376
    %v378 = vpop.f32.mrf.mxu0
    %v379 = vadd.f32 %v334, %v378
    %380 = vdwg.mxu0
    %381 = vmatpush.msra.mxu0 0.0
    %382 = vmatpush.msra.mxu0 0.0
    %383 = vmatpush.msra.mxu0 0.0
    %384 = vmatpush.msra.mxu0 0.0
    %385 = vmatpush.msra.mxu0 0.0
    %386 = vmatpush.msra.mxu0 0.0
    %387 = vmatpush.msra.mxu0 0.0
    %388 = vmatpush.msra.mxu0 0.0
    %389 = vmatpush.msra.mxu0 0.0
    %390 = vmatpush.msra.mxu0 0.0
    %391 = vmatpush.msra.mxu0 0.0
    %392 = vmatpush.msra.mxu0 0.0
    %v393 = vand.u32 %v126, 4294901760
    %394 = vmatpush.msra.mxu0 %v393
    %v395 = vand.u32 %v125, 4294901760
    %396 = vmatpush.msra.mxu0 %v395
    %v397 = vand.u32 %v124, 4294901760
    %398 = vmatpush.msra.mxu0 %v397
    %v399 = vand.u32 %v123, 4294901760
    %400 = vmatpush.msra.mxu0 %v399
    %v401 = vand.u32 %v129, 4294901760
    %402 = vmatmul.f32.gmra.mxu0 %v401
    %v403 = vpop.f32.mrf.mxu0
    %v404 = vadd.f32 %v367, %v403
    %v405 = vand.u32 %v132, 4294901760
    %406 = vmatmul.f32.gmra.mxu0 %v405
    %v407 = vpop.f32.mrf.mxu0
    %v408 = vadd.f32 %v371, %v407
    %v409 = vand.u32 %v135, 4294901760
    %410 = vmatmul.f32.gmra.mxu0 %v409
    %v411 = vpop.f32.mrf.mxu0
    %v412 = vadd.f32 %v375, %v411
    %v413 = vand.u32 %v138, 4294901760
    %414 = vmatmul.f32.gmra.mxu0 %v413
    %v415 = vpop.f32.mrf.mxu0
    %v416 = vadd.f32 %v379, %v415
    %417 = vdwg.mxu0
    %v418 = vmul.f32 %v404, %v404
    %v419 = vmul.f32 %v408, %v408
    %v420 = vmul.f32 %v412, %v412
    %v421 = vmul.f32 %v416, %v416
    %v422 = vmul.f32 %v404, %v418
    %v423 = vmul.f32 %v408, %v419
    %v424 = vmul.f32 %v412, %v420
    %v425 = vmul.f32 %v416, %v421
    %v426 = vmul.f32 %v422, 0.044715
    %v427 = vmul.f32 %v423, 0.044715
    %v428 = vmul.f32 %v424, 0.044715
    %v429 = vmul.f32 %v425, 0.044715
    %v430 = vadd.f32 %v404, %v426
    %v431 = vadd.f32 %v408, %v427
    %v432 = vadd.f32 %v412, %v428
    %v433 = vadd.f32 %v416, %v429
    %v434 = vmul.f32 %v430, 0.7978846
    %v435 = vmul.f32 %v431, 0.7978846
    %v436 = vmul.f32 %v432, 0.7978846
    %v437 = vmul.f32 %v433, 0.7978846
    %v438 = vtanh.pop %v434
    %v439 = vtanh.pop %v435
    %v440 = vtanh.pop %v436
    %v441 = vtanh.pop %v437
    %v442 = vadd.f32 %v438, 1.0
    %v443 = vadd.f32 %v439, 1.0
    %v444 = vadd.f32 %v440, 1.0
    %v445 = vadd.f32 %v441, 1.0
    %v446 = vmul.f32 %v442, 0.5
    %v447 = vmul.f32 %v443, 0.5
    %v448 = vmul.f32 %v444, 0.5
    %v449 = vmul.f32 %v445, 0.5
    %v450 = vmul.f32 %v404, %v446
    %v451 = vmul.f32 %v408, %v447
    %v452 = vmul.f32 %v412, %v448
    %v453 = vmul.f32 %v416, %v449
    %v454 = vld [vmem:[%s2] sm:$0xff]
    %v455 = vld [vmem:[%s2 + $0x8] sm:$0xff]
    %v456 = vld [vmem:[%s2 + $0x10] sm:$0xff]
    %v457 = vld [vmem:[%s2 + $0x18] sm:$0xff]
    %v458 = vld [vmem:[%s2 + $0x20] sm:$0xff]
    %v459 = vld [vmem:[%s2 + $0x28] sm:$0xff]
    %v460 = vld [vmem:[%s2 + $0x30] sm:$0xff]
    %v461 = vld [vmem:[%s2 + $0x38] sm:$0xff]
    %v462 = vld [vmem:[%s2 + $0x40] sm:$0xff]
    %v463 = vld [vmem:[%s2 + $0x48] sm:$0xff]
    %v464 = vld [vmem:[%s2 + $0x50] sm:$0xff]
    %v465 = vld [vmem:[%s2 + $0x58] sm:$0xff]
    %v466 = vld [vmem:[%s2 + $0x60] sm:$0xff]
    %v467 = vld [vmem:[%s2 + $0x68] sm:$0xff]
    %v468 = vld [vmem:[%s2 + $0x70] sm:$0xff]
    %v469 = vld [vmem:[%s2 + $0x78] sm:$0xff]
    %v470 = vperm.slane %v24, 1
    %v471 = vand.u32 %v469, 4294901760
    %472 = vmatpush.msra.mxu0 %v471
    %v473 = vand.u32 %v468, 4294901760
    %474 = vmatpush.msra.mxu0 %v473
    %v475 = vand.u32 %v467, 4294901760
    %476 = vmatpush.msra.mxu0 %v475
    %v477 = vand.u32 %v466, 4294901760
    %478 = vmatpush.msra.mxu0 %v477
    %v479 = vand.u32 %v465, 4294901760
    %480 = vmatpush.msra.mxu0 %v479
    %v481 = vand.u32 %v464, 4294901760
    %482 = vmatpush.msra.mxu0 %v481
    %v483 = vand.u32 %v463, 4294901760
    %484 = vmatpush.msra.mxu0 %v483
    %v485 = vand.u32 %v462, 4294901760
    %486 = vmatpush.msra.mxu0 %v485
    %v487 = vand.u32 %v461, 4294901760
    %488 = vmatpush.msra.mxu0 %v487
    %v489 = vand.u32 %v460, 4294901760
    %490 = vmatpush.msra.mxu0 %v489
    %v491 = vand.u32 %v459, 4294901760
    %492 = vmatpush.msra.mxu0 %v491
    %v493 = vand.u32 %v458, 4294901760
    %494 = vmatpush.msra.mxu0 %v493
    %v495 = vand.u32 %v457, 4294901760
    %496 = vmatpush.msra.mxu0 %v495
    %v497 = vand.u32 %v456, 4294901760
    %498 = vmatpush.msra.mxu0 %v497
    %v499 = vand.u32 %v455, 4294901760
    %500 = vmatpush.msra.mxu0 %v499
    %v501 = vand.u32 %v454, 4294901760
    %502 = vmatpush.msra.mxu0 %v501
    %v503 = vand.u32 %v450, 4294901760
    %v504 = vsub.f32 %v450, %v503
    %v505 = vand.u32 %v504, 4294901760
    %v506 = vsub.f32 %v504, %v505
    %v507 = vand.u32 %v506, 4294901760
    %508 = vmatmul.f32.gmra.mxu0 %v507
    %v509 = vpop.f32.mrf.mxu0
    %v510 = vadd.f32 %v470, %v509
    %v511 = vand.u32 %v451, 4294901760
    %v512 = vsub.f32 %v451, %v511
    %v513 = vand.u32 %v512, 4294901760
    %v514 = vsub.f32 %v512, %v513
    %v515 = vand.u32 %v514, 4294901760
    %516 = vmatmul.f32.gmra.mxu0 %v515
    %v517 = vpop.f32.mrf.mxu0
    %v518 = vadd.f32 %v470, %v517
    %v519 = vand.u32 %v452, 4294901760
    %v520 = vsub.f32 %v452, %v519
    %v521 = vand.u32 %v520, 4294901760
    %v522 = vsub.f32 %v520, %v521
    %v523 = vand.u32 %v522, 4294901760
    %524 = vmatmul.f32.gmra.mxu0 %v523
    %v525 = vpop.f32.mrf.mxu0
    %v526 = vadd.f32 %v470, %v525
    %v527 = vand.u32 %v453, 4294901760
    %v528 = vsub.f32 %v453, %v527
    %v529 = vand.u32 %v528, 4294901760
    %v530 = vsub.f32 %v528, %v529
    %v531 = vand.u32 %v530, 4294901760
    %532 = vmatmul.f32.gmra.mxu0 %v531
    %v533 = vpop.f32.mrf.mxu0
    %v534 = vadd.f32 %v470, %v533
    %535 = vdwg.mxu0
    %v536 = vand.u32 %v469, 4294901760
    %v537 = vsub.f32 %v469, %v536
    %v538 = vand.u32 %v537, 4294901760
    %v539 = vsub.f32 %v537, %v538
    %v540 = vand.u32 %v539, 4294901760
    %541 = vmatpush.msra.mxu0 %v540
    %v542 = vand.u32 %v468, 4294901760
    %v543 = vsub.f32 %v468, %v542
    %v544 = vand.u32 %v543, 4294901760
    %v545 = vsub.f32 %v543, %v544
    %v546 = vand.u32 %v545, 4294901760
    %547 = vmatpush.msra.mxu0 %v546
    %v548 = vand.u32 %v467, 4294901760
    %v549 = vsub.f32 %v467, %v548
    %v550 = vand.u32 %v549, 4294901760
    %v551 = vsub.f32 %v549, %v550
    %v552 = vand.u32 %v551, 4294901760
    %553 = vmatpush.msra.mxu0 %v552
    %v554 = vand.u32 %v466, 4294901760
    %v555 = vsub.f32 %v466, %v554
    %v556 = vand.u32 %v555, 4294901760
    %v557 = vsub.f32 %v555, %v556
    %v558 = vand.u32 %v557, 4294901760
    %559 = vmatpush.msra.mxu0 %v558
    %v560 = vand.u32 %v465, 4294901760
    %v561 = vsub.f32 %v465, %v560
    %v562 = vand.u32 %v561, 4294901760
    %v563 = vsub.f32 %v561, %v562
    %v564 = vand.u32 %v563, 4294901760
    %565 = vmatpush.msra.mxu0 %v564
    %v566 = vand.u32 %v464, 4294901760
    %v567 = vsub.f32 %v464, %v566
    %v568 = vand.u32 %v567, 4294901760
    %v569 = vsub.f32 %v567, %v568
    %v570 = vand.u32 %v569, 4294901760
    %571 = vmatpush.msra.mxu0 %v570
    %v572 = vand.u32 %v463, 4294901760
    %v573 = vsub.f32 %v463, %v572
    %v574 = vand.u32 %v573, 4294901760
    %v575 = vsub.f32 %v573, %v574
    %v576 = vand.u32 %v575, 4294901760
    %577 = vmatpush.msra.mxu0 %v576
    %v578 = vand.u32 %v462, 4294901760
    %v579 = vsub.f32 %v462, %v578
    %v580 = vand.u32 %v579, 4294901760
    %v581 = vsub.f32 %v579, %v580
    %v582 = vand.u32 %v581, 4294901760
    %583 = vmatpush.msra.mxu0 %v582
    %v584 = vand.u32 %v461, 4294901760
    %v585 = vsub.f32 %v461, %v584
    %v586 = vand.u32 %v585, 4294901760
    %v587 = vsub.f32 %v585, %v586
    %v588 = vand.u32 %v587, 4294901760
    %589 = vmatpush.msra.mxu0 %v588
    %v590 = vand.u32 %v460, 4294901760
    %v591 = vsub.f32 %v460, %v590
    %v592 = vand.u32 %v591, 4294901760
    %v593 = vsub.f32 %v591, %v592
    %v594 = vand.u32 %v593, 4294901760
    %595 = vmatpush.msra.mxu0 %v594
    %v596 = vand.u32 %v459, 4294901760
    %v597 = vsub.f32 %v459, %v596
    %v598 = vand.u32 %v597, 4294901760
    %v599 = vsub.f32 %v597, %v598
    %v600 = vand.u32 %v599, 4294901760
    %601 = vmatpush.msra.mxu0 %v600
    %v602 = vand.u32 %v458, 4294901760
    %v603 = vsub.f32 %v458, %v602
    %v604 = vand.u32 %v603, 4294901760
    %v605 = vsub.f32 %v603, %v604
    %v606 = vand.u32 %v605, 4294901760
    %607 = vmatpush.msra.mxu0 %v606
    %v608 = vand.u32 %v457, 4294901760
    %v609 = vsub.f32 %v457, %v608
    %v610 = vand.u32 %v609, 4294901760
    %v611 = vsub.f32 %v609, %v610
    %v612 = vand.u32 %v611, 4294901760
    %613 = vmatpush.msra.mxu0 %v612
    %v614 = vand.u32 %v456, 4294901760
    %v615 = vsub.f32 %v456, %v614
    %v616 = vand.u32 %v615, 4294901760
    %v617 = vsub.f32 %v615, %v616
    %v618 = vand.u32 %v617, 4294901760
    %619 = vmatpush.msra.mxu0 %v618
    %v620 = vand.u32 %v455, 4294901760
    %v621 = vsub.f32 %v455, %v620
    %v622 = vand.u32 %v621, 4294901760
    %v623 = vsub.f32 %v621, %v622
    %v624 = vand.u32 %v623, 4294901760
    %625 = vmatpush.msra.mxu0 %v624
    %v626 = vand.u32 %v454, 4294901760
    %v627 = vsub.f32 %v454, %v626
    %v628 = vand.u32 %v627, 4294901760
    %v629 = vsub.f32 %v627, %v628
    %v630 = vand.u32 %v629, 4294901760
    %631 = vmatpush.msra.mxu0 %v630
    %v632 = vand.u32 %v450, 4294901760
    %633 = vmatmul.f32.gmra.mxu0 %v632
    %v634 = vpop.f32.mrf.mxu0
    %v635 = vadd.f32 %v510, %v634
    %v636 = vand.u32 %v451, 4294901760
    %637 = vmatmul.f32.gmra.mxu0 %v636
    %v638 = vpop.f32.mrf.mxu0
    %v639 = vadd.f32 %v518, %v638
    %v640 = vand.u32 %v452, 4294901760
    %641 = vmatmul.f32.gmra.mxu0 %v640
    %v642 = vpop.f32.mrf.mxu0
    %v643 = vadd.f32 %v526, %v642
    %v644 = vand.u32 %v453, 4294901760
    %645 = vmatmul.f32.gmra.mxu0 %v644
    %v646 = vpop.f32.mrf.mxu0
    %v647 = vadd.f32 %v534, %v646
    %648 = vdwg.mxu0
    %v649 = vand.u32 %v469, 4294901760
    %v650 = vsub.f32 %v469, %v649
    %651 = vmatpush.msra.mxu0 %v650
    %v652 = vand.u32 %v468, 4294901760
    %v653 = vsub.f32 %v468, %v652
    %654 = vmatpush.msra.mxu0 %v653
    %v655 = vand.u32 %v467, 4294901760
    %v656 = vsub.f32 %v467, %v655
    %657 = vmatpush.msra.mxu0 %v656
    %v658 = vand.u32 %v466, 4294901760
    %v659 = vsub.f32 %v466, %v658
    %660 = vmatpush.msra.mxu0 %v659
    %v661 = vand.u32 %v465, 4294901760
    %v662 = vsub.f32 %v465, %v661
    %663 = vmatpush.msra.mxu0 %v662
    %v664 = vand.u32 %v464, 4294901760
    %v665 = vsub.f32 %v464, %v664
    %666 = vmatpush.msra.mxu0 %v665
    %v667 = vand.u32 %v463, 4294901760
    %v668 = vsub.f32 %v463, %v667
    %669 = vmatpush.msra.mxu0 %v668
    %v670 = vand.u32 %v462, 4294901760
    %v671 = vsub.f32 %v462, %v670
    %672 = vmatpush.msra.mxu0 %v671
    %v673 = vand.u32 %v461, 4294901760
    %v674 = vsub.f32 %v461, %v673
    %675 = vmatpush.msra.mxu0 %v674
    %v676 = vand.u32 %v460, 4294901760
    %v677 = vsub.f32 %v460, %v676
    %678 = vmatpush.msra.mxu0 %v677
    %v679 = vand.u32 %v459, 4294901760
    %v680 = vsub.f32 %v459, %v679
    %681 = vmatpush.msra.mxu0 %v680
    %v682 = vand.u32 %v458, 4294901760
    %v683 = vsub.f32 %v458, %v682
    %684 = vmatpush.msra.mxu0 %v683
    %v685 = vand.u32 %v457, 4294901760
    %v686 = vsub.f32 %v457, %v685
    %687 = vmatpush.msra.mxu0 %v686
    %v688 = vand.u32 %v456, 4294901760
    %v689 = vsub.f32 %v456, %v688
    %690 = vmatpush.msra.mxu0 %v689
    %v691 = vand.u32 %v455, 4294901760
    %v692 = vsub.f32 %v455, %v691
    %693 = vmatpush.msra.mxu0 %v692
    %v694 = vand.u32 %v454, 4294901760
    %v695 = vsub.f32 %v454, %v694
    %696 = vmatpush.msra.mxu0 %v695
    %v697 = vand.u32 %v450, 4294901760
    %v698 = vsub.f32 %v450, %v697
    %699 = vmatmul.f32.gmra.mxu0 %v698
    %v700 = vpop.f32.mrf.mxu0
    %v701 = vadd.f32 %v635, %v700
    %v702 = vand.u32 %v451, 4294901760
    %v703 = vsub.f32 %v451, %v702
    %704 = vmatmul.f32.gmra.mxu0 %v703
    %v705 = vpop.f32.mrf.mxu0
    %v706 = vadd.f32 %v639, %v705
    %v707 = vand.u32 %v452, 4294901760
    %v708 = vsub.f32 %v452, %v707
    %709 = vmatmul.f32.gmra.mxu0 %v708
    %v710 = vpop.f32.mrf.mxu0
    %v711 = vadd.f32 %v643, %v710
    %v712 = vand.u32 %v453, 4294901760
    %v713 = vsub.f32 %v453, %v712
    %714 = vmatmul.f32.gmra.mxu0 %v713
    %v715 = vpop.f32.mrf.mxu0
    %v716 = vadd.f32 %v647, %v715
    %717 = vdwg.mxu0
    %v718 = vand.u32 %v469, 4294901760
    %719 = vmatpush.msra.mxu0 %v718
    %v720 = vand.u32 %v468, 4294901760
    %721 = vmatpush.msra.mxu0 %v720
    %v722 = vand.u32 %v467, 4294901760
    %723 = vmatpush.msra.mxu0 %v722
    %v724 = vand.u32 %v466, 4294901760
    %725 = vmatpush.msra.mxu0 %v724
    %v726 = vand.u32 %v465, 4294901760
    %727 = vmatpush.msra.mxu0 %v726
    %v728 = vand.u32 %v464, 4294901760
    %729 = vmatpush.msra.mxu0 %v728
    %v730 = vand.u32 %v463, 4294901760
    %731 = vmatpush.msra.mxu0 %v730
    %v732 = vand.u32 %v462, 4294901760
    %733 = vmatpush.msra.mxu0 %v732
    %v734 = vand.u32 %v461, 4294901760
    %735 = vmatpush.msra.mxu0 %v734
    %v736 = vand.u32 %v460, 4294901760
    %737 = vmatpush.msra.mxu0 %v736
    %v738 = vand.u32 %v459, 4294901760
    %739 = vmatpush.msra.mxu0 %v738
    %v740 = vand.u32 %v458, 4294901760
    %741 = vmatpush.msra.mxu0 %v740
    %v742 = vand.u32 %v457, 4294901760
    %743 = vmatpush.msra.mxu0 %v742
    %v744 = vand.u32 %v456, 4294901760
    %745 = vmatpush.msra.mxu0 %v744
    %v746 = vand.u32 %v455, 4294901760
    %747 = vmatpush.msra.mxu0 %v746
    %v748 = vand.u32 %v454, 4294901760
    %749 = vmatpush.msra.mxu0 %v748
    %v750 = vand.u32 %v450, 4294901760
    %v751 = vsub.f32 %v450, %v750
    %v752 = vand.u32 %v751, 4294901760
    %753 = vmatmul.f32.gmra.mxu0 %v752
    %v754 = vpop.f32.mrf.mxu0
    %v755 = vadd.f32 %v701, %v754
    %v756 = vand.u32 %v451, 4294901760
    %v757 = vsub.f32 %v451, %v756
    %v758 = vand.u32 %v757, 4294901760
    %759 = vmatmul.f32.gmra.mxu0 %v758
    %v760 = vpop.f32.mrf.mxu0
    %v761 = vadd.f32 %v706, %v760
    %v762 = vand.u32 %v452, 4294901760
    %v763 = vsub.f32 %v452, %v762
    %v764 = vand.u32 %v763, 4294901760
    %765 = vmatmul.f32.gmra.mxu0 %v764
    %v766 = vpop.f32.mrf.mxu0
    %v767 = vadd.f32 %v711, %v766
    %v768 = vand.u32 %v453, 4294901760
    %v769 = vsub.f32 %v453, %v768
    %v770 = vand.u32 %v769, 4294901760
    %771 = vmatmul.f32.gmra.mxu0 %v770
    %v772 = vpop.f32.mrf.mxu0
    %v773 = vadd.f32 %v716, %v772
    %774 = vdwg.mxu0
    %v775 = vand.u32 %v469, 4294901760
    %v776 = vsub.f32 %v469, %v775
    %v777 = vand.u32 %v776, 4294901760
    %778 = vmatpush.msra.mxu0 %v777
    %v779 = vand.u32 %v468, 4294901760
    %v780 = vsub.f32 %v468, %v779
    %v781 = vand.u32 %v780, 4294901760
    %782 = vmatpush.msra.mxu0 %v781
    %v783 = vand.u32 %v467, 4294901760
    %v784 = vsub.f32 %v467, %v783
    %v785 = vand.u32 %v784, 4294901760
    %786 = vmatpush.msra.mxu0 %v785
    %v787 = vand.u32 %v466, 4294901760
    %v788 = vsub.f32 %v466, %v787
    %v789 = vand.u32 %v788, 4294901760
    %790 = vmatpush.msra.mxu0 %v789
    %v791 = vand.u32 %v465, 4294901760
    %v792 = vsub.f32 %v465, %v791
    %v793 = vand.u32 %v792, 4294901760
    %794 = vmatpush.msra.mxu0 %v793
    %v795 = vand.u32 %v464, 4294901760
    %v796 = vsub.f32 %v464, %v795
    %v797 = vand.u32 %v796, 4294901760
    %798 = vmatpush.msra.mxu0 %v797
    %v799 = vand.u32 %v463, 4294901760
    %v800 = vsub.f32 %v463, %v799
    %v801 = vand.u32 %v800, 4294901760
    %802 = vmatpush.msra.mxu0 %v801
    %v803 = vand.u32 %v462, 4294901760
    %v804 = vsub.f32 %v462, %v803
    %v805 = vand.u32 %v804, 4294901760
    %806 = vmatpush.msra.mxu0 %v805
    %v807 = vand.u32 %v461, 4294901760
    %v808 = vsub.f32 %v461, %v807
    %v809 = vand.u32 %v808, 4294901760
    %810 = vmatpush.msra.mxu0 %v809
    %v811 = vand.u32 %v460, 4294901760
    %v812 = vsub.f32 %v460, %v811
    %v813 = vand.u32 %v812, 4294901760
    %814 = vmatpush.msra.mxu0 %v813
    %v815 = vand.u32 %v459, 4294901760
    %v816 = vsub.f32 %v459, %v815
    %v817 = vand.u32 %v816, 4294901760
    %818 = vmatpush.msra.mxu0 %v817
    %v819 = vand.u32 %v458, 4294901760
    %v820 = vsub.f32 %v458, %v819
    %v821 = vand.u32 %v820, 4294901760
    %822 = vmatpush.msra.mxu0 %v821
    %v823 = vand.u32 %v457, 4294901760
    %v824 = vsub.f32 %v457, %v823
    %v825 = vand.u32 %v824, 4294901760
    %826 = vmatpush.msra.mxu0 %v825
    %v827 = vand.u32 %v456, 4294901760
    %v828 = vsub.f32 %v456, %v827
    %v829 = vand.u32 %v828, 4294901760
    %830 = vmatpush.msra.mxu0 %v829
    %v831 = vand.u32 %v455, 4294901760
    %v832 = vsub.f32 %v455, %v831
    %v833 = vand.u32 %v832, 4294901760
    %834 = vmatpush.msra.mxu0 %v833
    %v835 = vand.u32 %v454, 4294901760
    %v836 = vsub.f32 %v454, %v835
    %v837 = vand.u32 %v836, 4294901760
    %838 = vmatpush.msra.mxu0 %v837
    %v839 = vand.u32 %v450, 4294901760
    %840 = vmatmul.f32.gmra.mxu0 %v839
    %v841 = vpop.f32.mrf.mxu0
    %v842 = vadd.f32 %v755, %v841
    %v843 = vand.u32 %v451, 4294901760
    %844 = vmatmul.f32.gmra.mxu0 %v843
    %v845 = vpop.f32.mrf.mxu0
    %v846 = vadd.f32 %v761, %v845
    %v847 = vand.u32 %v452, 4294901760
    %848 = vmatmul.f32.gmra.mxu0 %v847
    %v849 = vpop.f32.mrf.mxu0
    %v850 = vadd.f32 %v767, %v849
    %v851 = vand.u32 %v453, 4294901760
    %852 = vmatmul.f32.gmra.mxu0 %v851
    %v853 = vpop.f32.mrf.mxu0
    %v854 = vadd.f32 %v773, %v853
    %855 = vdwg.mxu0
    %v856 = vand.u32 %v469, 4294901760
    %857 = vmatpush.msra.mxu0 %v856
    %v858 = vand.u32 %v468, 4294901760
    %859 = vmatpush.msra.mxu0 %v858
    %v860 = vand.u32 %v467, 4294901760
    %861 = vmatpush.msra.mxu0 %v860
    %v862 = vand.u32 %v466, 4294901760
    %863 = vmatpush.msra.mxu0 %v862
    %v864 = vand.u32 %v465, 4294901760
    %865 = vmatpush.msra.mxu0 %v864
    %v866 = vand.u32 %v464, 4294901760
    %867 = vmatpush.msra.mxu0 %v866
    %v868 = vand.u32 %v463, 4294901760
    %869 = vmatpush.msra.mxu0 %v868
    %v870 = vand.u32 %v462, 4294901760
    %871 = vmatpush.msra.mxu0 %v870
    %v872 = vand.u32 %v461, 4294901760
    %873 = vmatpush.msra.mxu0 %v872
    %v874 = vand.u32 %v460, 4294901760
    %875 = vmatpush.msra.mxu0 %v874
    %v876 = vand.u32 %v459, 4294901760
    %877 = vmatpush.msra.mxu0 %v876
    %v878 = vand.u32 %v458, 4294901760
    %879 = vmatpush.msra.mxu0 %v878
    %v880 = vand.u32 %v457, 4294901760
    %881 = vmatpush.msra.mxu0 %v880
    %v882 = vand.u32 %v456, 4294901760
    %883 = vmatpush.msra.mxu0 %v882
    %v884 = vand.u32 %v455, 4294901760
    %885 = vmatpush.msra.mxu0 %v884
    %v886 = vand.u32 %v454, 4294901760
    %887 = vmatpush.msra.mxu0 %v886
    %v888 = vand.u32 %v450, 4294901760
    %889 = vmatmul.f32.gmra.mxu0 %v888
    %v890 = vpop.f32.mrf.mxu0
    %v891 = vadd.f32 %v842, %v890
    %v892 = vand.u32 %v451, 4294901760
    %893 = vmatmul.f32.gmra.mxu0 %v892
    %v894 = vpop.f32.mrf.mxu0
    %v895 = vadd.f32 %v846, %v894
    %v896 = vand.u32 %v452, 4294901760
    %897 = vmatmul.f32.gmra.mxu0 %v896
    %v898 = vpop.f32.mrf.mxu0
    %v899 = vadd.f32 %v850, %v898
    %v900 = vand.u32 %v453, 4294901760
    %901 = vmatmul.f32.gmra.mxu0 %v900
    %v902 = vpop.f32.mrf.mxu0
    %v903 = vadd.f32 %v854, %v902
    %904 = vdwg.mxu0
    %v905 = vadd.f32 %v20, %v891
    %v906 = vadd.f32 %v21, %v895
    %v907 = vadd.f32 %v22, %v899
    %v908 = vadd.f32 %v23, %v903
    %v909 = vsel %vm27, %v905, 0.0
    %910 = vadd.xlane.f32.xlu0 %v909
    %v911 = vpop.xlane.xlu0 %910
    %v912 = vsel %vm27, %v906, 0.0
    %913 = vadd.xlane.f32.xlu0 %v912
    %v914 = vpop.xlane.xlu0 %913
    %v915 = vsel %vm27, %v907, 0.0
    %916 = vadd.xlane.f32.xlu0 %v915
    %v917 = vpop.xlane.xlu0 %916
    %v918 = vsel %vm27, %v908, 0.0
    %919 = vadd.xlane.f32.xlu0 %v918
    %v920 = vpop.xlane.xlu0 %919
    %v921 = vmul.f32 %v911, %v46
    %v922 = vmul.f32 %v914, %v46
    %v923 = vmul.f32 %v917, %v46
    %v924 = vmul.f32 %v920, %v46
    %v925 = vsub.f32 %v905, %v921
    %v926 = vsub.f32 %v906, %v922
    %v927 = vsub.f32 %v907, %v923
    %v928 = vsub.f32 %v908, %v924
    %v929 = vmul.f32 %v925, %v925
    %v930 = vmul.f32 %v926, %v926
    %v931 = vmul.f32 %v927, %v927
    %v932 = vmul.f32 %v928, %v928
    %v933 = vsel %vm27, %v929, 0.0
    %934 = vadd.xlane.f32.xlu0 %v933
    %v935 = vpop.xlane.xlu0 %934
    %v936 = vsel %vm27, %v930, 0.0
    %937 = vadd.xlane.f32.xlu0 %v936
    %v938 = vpop.xlane.xlu0 %937
    %v939 = vsel %vm27, %v931, 0.0
    %940 = vadd.xlane.f32.xlu0 %v939
    %v941 = vpop.xlane.xlu0 %940
    %v942 = vsel %vm27, %v932, 0.0
    %943 = vadd.xlane.f32.xlu0 %v942
    %v944 = vpop.xlane.xlu0 %943
    %v945 = vmul.f32 %v935, %v46
    %v946 = vmul.f32 %v938, %v46
    %v947 = vmul.f32 %v941, %v46
    %v948 = vmul.f32 %v944, %v46
    %v949 = vadd.f32 %v945, 1e-05
    %v950 = vadd.f32 %v946, 1e-05
    %v951 = vadd.f32 %v947, 1e-05
    %v952 = vadd.f32 %v948, 1e-05
    %v953 = vrsqrt.pop %v949
    %v954 = vmul.f32 %v953, %v949
    %v955 = vmul.f32 %v954, %v953
    %v956 = vmul.f32 0.5, %v955
    %v957 = vsub.f32 1.5, %v956
    %v958 = vmul.f32 %v953, %v957
    %vm959 = vweird.f32 %v949
    %vm960 = vweird.f32 %v953
    %vm961 = vmor %vm959, %vm960
    %v962 = vsel %vm961, %v953, %v958
    %v963 = vrsqrt.pop %v950
    %v964 = vmul.f32 %v963, %v950
    %v965 = vmul.f32 %v964, %v963
    %v966 = vmul.f32 0.5, %v965
    %v967 = vsub.f32 1.5, %v966
    %v968 = vmul.f32 %v963, %v967
    %vm969 = vweird.f32 %v950
    %vm970 = vweird.f32 %v963
    %vm971 = vmor %vm969, %vm970
    %v972 = vsel %vm971, %v963, %v968
    %v973 = vrsqrt.pop %v951
    %v974 = vmul.f32 %v973, %v951
    %v975 = vmul.f32 %v974, %v973
    %v976 = vmul.f32 0.5, %v975
    %v977 = vsub.f32 1.5, %v976
    %v978 = vmul.f32 %v973, %v977
    %vm979 = vweird.f32 %v951
    %vm980 = vweird.f32 %v973
    %vm981 = vmor %vm979, %vm980
    %v982 = vsel %vm981, %v973, %v978
    %v983 = vrsqrt.pop %v952
    %v984 = vmul.f32 %v983, %v952
    %v985 = vmul.f32 %v984, %v983
    %v986 = vmul.f32 0.5, %v985
    %v987 = vsub.f32 1.5, %v986
    %v988 = vmul.f32 %v983, %v987
    %vm989 = vweird.f32 %v952
    %vm990 = vweird.f32 %v983
    %vm991 = vmor %vm989, %vm990
    %v992 = vsel %vm991, %v983, %v988
    %v993 = vmul.f32 %v925, %v962
    %v994 = vmul.f32 %v926, %v972
    %v995 = vmul.f32 %v927, %v982
    %v996 = vmul.f32 %v928, %v992
    %v997 = vld [vmem:[%s1 + $0x18] sm:$0xff]
    %v998 = vld [vmem:[%s1 + $0x48] sm:$0xff]
    %v999 = vld [vmem:[%s1 + $0x78] sm:$0xff]
    %v1000 = vld [vmem:[%s1 + $0xa8] sm:$0xff]
    %v1001 = vperm.slane %v24, 2
    %v1003 = vsel %vm27, %v993, 0
    %v1006 = vsel %vm27, %v994, 0
    %v1009 = vsel %vm27, %v995, 0
    %v1012 = vsel %vm27, %v996, 0
    %1014 = vmatpush.msra.mxu0 0.0
    %1015 = vmatpush.msra.mxu0 0.0
    %1016 = vmatpush.msra.mxu0 0.0
    %1017 = vmatpush.msra.mxu0 0.0
    %1018 = vmatpush.msra.mxu0 0.0
    %1019 = vmatpush.msra.mxu0 0.0
    %1020 = vmatpush.msra.mxu0 0.0
    %1021 = vmatpush.msra.mxu0 0.0
    %1022 = vmatpush.msra.mxu0 0.0
    %1023 = vmatpush.msra.mxu0 0.0
    %1024 = vmatpush.msra.mxu0 0.0
    %1025 = vmatpush.msra.mxu0 0.0
    %v1026 = vand.u32 %v1000, 4294901760
    %1027 = vmatpush.msra.mxu0 %v1026
    %v1028 = vand.u32 %v999, 4294901760
    %1029 = vmatpush.msra.mxu0 %v1028
    %v1030 = vand.u32 %v998, 4294901760
    %1031 = vmatpush.msra.mxu0 %v1030
    %v1032 = vand.u32 %v997, 4294901760
    %1033 = vmatpush.msra.mxu0 %v1032
    %v1034 = vand.u32 %v1003, 4294901760
    %v1035 = vsub.f32 %v1003, %v1034
    %v1036 = vand.u32 %v1035, 4294901760
    %v1037 = vsub.f32 %v1035, %v1036
    %v1038 = vand.u32 %v1037, 4294901760
    %1039 = vmatmul.f32.gmra.mxu0 %v1038
    %v1040 = vpop.f32.mrf.mxu0
    %v1041 = vadd.f32 %v1001, %v1040
    %v1042 = vand.u32 %v1006, 4294901760
    %v1043 = vsub.f32 %v1006, %v1042
    %v1044 = vand.u32 %v1043, 4294901760
    %v1045 = vsub.f32 %v1043, %v1044
    %v1046 = vand.u32 %v1045, 4294901760
    %1047 = vmatmul.f32.gmra.mxu0 %v1046
    %v1048 = vpop.f32.mrf.mxu0
    %v1049 = vadd.f32 %v1001, %v1048
    %v1050 = vand.u32 %v1009, 4294901760
    %v1051 = vsub.f32 %v1009, %v1050
    %v1052 = vand.u32 %v1051, 4294901760
    %v1053 = vsub.f32 %v1051, %v1052
    %v1054 = vand.u32 %v1053, 4294901760
    %1055 = vmatmul.f32.gmra.mxu0 %v1054
    %v1056 = vpop.f32.mrf.mxu0
    %v1057 = vadd.f32 %v1001, %v1056
    %v1058 = vand.u32 %v1012, 4294901760
    %v1059 = vsub.f32 %v1012, %v1058
    %v1060 = vand.u32 %v1059, 4294901760
    %v1061 = vsub.f32 %v1059, %v1060
    %v1062 = vand.u32 %v1061, 4294901760
    %1063 = vmatmul.f32.gmra.mxu0 %v1062
    %v1064 = vpop.f32.mrf.mxu0
    %v1065 = vadd.f32 %v1001, %v1064
    %1066 = vdwg.mxu0
    %1067 = vmatpush.msra.mxu0 0.0
    %1068 = vmatpush.msra.mxu0 0.0
    %1069 = vmatpush.msra.mxu0 0.0
    %1070 = vmatpush.msra.mxu0 0.0
    %1071 = vmatpush.msra.mxu0 0.0
    %1072 = vmatpush.msra.mxu0 0.0
    %1073 = vmatpush.msra.mxu0 0.0
    %1074 = vmatpush.msra.mxu0 0.0
    %1075 = vmatpush.msra.mxu0 0.0
    %1076 = vmatpush.msra.mxu0 0.0
    %1077 = vmatpush.msra.mxu0 0.0
    %1078 = vmatpush.msra.mxu0 0.0
    %v1079 = vand.u32 %v1000, 4294901760
    %v1080 = vsub.f32 %v1000, %v1079
    %v1081 = vand.u32 %v1080, 4294901760
    %v1082 = vsub.f32 %v1080, %v1081
    %v1083 = vand.u32 %v1082, 4294901760
    %1084 = vmatpush.msra.mxu0 %v1083
    %v1085 = vand.u32 %v999, 4294901760
    %v1086 = vsub.f32 %v999, %v1085
    %v1087 = vand.u32 %v1086, 4294901760
    %v1088 = vsub.f32 %v1086, %v1087
    %v1089 = vand.u32 %v1088, 4294901760
    %1090 = vmatpush.msra.mxu0 %v1089
    %v1091 = vand.u32 %v998, 4294901760
    %v1092 = vsub.f32 %v998, %v1091
    %v1093 = vand.u32 %v1092, 4294901760
    %v1094 = vsub.f32 %v1092, %v1093
    %v1095 = vand.u32 %v1094, 4294901760
    %1096 = vmatpush.msra.mxu0 %v1095
    %v1097 = vand.u32 %v997, 4294901760
    %v1098 = vsub.f32 %v997, %v1097
    %v1099 = vand.u32 %v1098, 4294901760
    %v1100 = vsub.f32 %v1098, %v1099
    %v1101 = vand.u32 %v1100, 4294901760
    %1102 = vmatpush.msra.mxu0 %v1101
    %v1103 = vand.u32 %v1003, 4294901760
    %1104 = vmatmul.f32.gmra.mxu0 %v1103
    %v1105 = vpop.f32.mrf.mxu0
    %v1106 = vadd.f32 %v1041, %v1105
    %v1107 = vand.u32 %v1006, 4294901760
    %1108 = vmatmul.f32.gmra.mxu0 %v1107
    %v1109 = vpop.f32.mrf.mxu0
    %v1110 = vadd.f32 %v1049, %v1109
    %v1111 = vand.u32 %v1009, 4294901760
    %1112 = vmatmul.f32.gmra.mxu0 %v1111
    %v1113 = vpop.f32.mrf.mxu0
    %v1114 = vadd.f32 %v1057, %v1113
    %v1115 = vand.u32 %v1012, 4294901760
    %1116 = vmatmul.f32.gmra.mxu0 %v1115
    %v1117 = vpop.f32.mrf.mxu0
    %v1118 = vadd.f32 %v1065, %v1117
    %1119 = vdwg.mxu0
    %1120 = vmatpush.msra.mxu0 0.0
    %1121 = vmatpush.msra.mxu0 0.0
    %1122 = vmatpush.msra.mxu0 0.0
    %1123 = vmatpush.msra.mxu0 0.0
    %1124 = vmatpush.msra.mxu0 0.0
    %1125 = vmatpush.msra.mxu0 0.0
    %1126 = vmatpush.msra.mxu0 0.0
    %1127 = vmatpush.msra.mxu0 0.0
    %1128 = vmatpush.msra.mxu0 0.0
    %1129 = vmatpush.msra.mxu0 0.0
    %1130 = vmatpush.msra.mxu0 0.0
    %1131 = vmatpush.msra.mxu0 0.0
    %v1132 = vand.u32 %v1000, 4294901760
    %v1133 = vsub.f32 %v1000, %v1132
    %1134 = vmatpush.msra.mxu0 %v1133
    %v1135 = vand.u32 %v999, 4294901760
    %v1136 = vsub.f32 %v999, %v1135
    %1137 = vmatpush.msra.mxu0 %v1136
    %v1138 = vand.u32 %v998, 4294901760
    %v1139 = vsub.f32 %v998, %v1138
    %1140 = vmatpush.msra.mxu0 %v1139
    %v1141 = vand.u32 %v997, 4294901760
    %v1142 = vsub.f32 %v997, %v1141
    %1143 = vmatpush.msra.mxu0 %v1142
    %v1144 = vand.u32 %v1003, 4294901760
    %v1145 = vsub.f32 %v1003, %v1144
    %1146 = vmatmul.f32.gmra.mxu0 %v1145
    %v1147 = vpop.f32.mrf.mxu0
    %v1148 = vadd.f32 %v1106, %v1147
    %v1149 = vand.u32 %v1006, 4294901760
    %v1150 = vsub.f32 %v1006, %v1149
    %1151 = vmatmul.f32.gmra.mxu0 %v1150
    %v1152 = vpop.f32.mrf.mxu0
    %v1153 = vadd.f32 %v1110, %v1152
    %v1154 = vand.u32 %v1009, 4294901760
    %v1155 = vsub.f32 %v1009, %v1154
    %1156 = vmatmul.f32.gmra.mxu0 %v1155
    %v1157 = vpop.f32.mrf.mxu0
    %v1158 = vadd.f32 %v1114, %v1157
    %v1159 = vand.u32 %v1012, 4294901760
    %v1160 = vsub.f32 %v1012, %v1159
    %1161 = vmatmul.f32.gmra.mxu0 %v1160
    %v1162 = vpop.f32.mrf.mxu0
    %v1163 = vadd.f32 %v1118, %v1162
    %1164 = vdwg.mxu0
    %1165 = vmatpush.msra.mxu0 0.0
    %1166 = vmatpush.msra.mxu0 0.0
    %1167 = vmatpush.msra.mxu0 0.0
    %1168 = vmatpush.msra.mxu0 0.0
    %1169 = vmatpush.msra.mxu0 0.0
    %1170 = vmatpush.msra.mxu0 0.0
    %1171 = vmatpush.msra.mxu0 0.0
    %1172 = vmatpush.msra.mxu0 0.0
    %1173 = vmatpush.msra.mxu0 0.0
    %1174 = vmatpush.msra.mxu0 0.0
    %1175 = vmatpush.msra.mxu0 0.0
    %1176 = vmatpush.msra.mxu0 0.0
    %v1177 = vand.u32 %v1000, 4294901760
    %1178 = vmatpush.msra.mxu0 %v1177
    %v1179 = vand.u32 %v999, 4294901760
    %1180 = vmatpush.msra.mxu0 %v1179
    %v1181 = vand.u32 %v998, 4294901760
    %1182 = vmatpush.msra.mxu0 %v1181
    %v1183 = vand.u32 %v997, 4294901760
    %1184 = vmatpush.msra.mxu0 %v1183
    %v1185 = vand.u32 %v1003, 4294901760
    %v1186 = vsub.f32 %v1003, %v1185
    %v1187 = vand.u32 %v1186, 4294901760
    %1188 = vmatmul.f32.gmra.mxu0 %v1187
    %v1189 = vpop.f32.mrf.mxu0
    %v1190 = vadd.f32 %v1148, %v1189
    %v1191 = vand.u32 %v1006, 4294901760
    %v1192 = vsub.f32 %v1006, %v1191
    %v1193 = vand.u32 %v1192, 4294901760
    %1194 = vmatmul.f32.gmra.mxu0 %v1193
    %v1195 = vpop.f32.mrf.mxu0
    %v1196 = vadd.f32 %v1153, %v1195
    %v1197 = vand.u32 %v1009, 4294901760
    %v1198 = vsub.f32 %v1009, %v1197
    %v1199 = vand.u32 %v1198, 4294901760
    %1200 = vmatmul.f32.gmra.mxu0 %v1199
    %v1201 = vpop.f32.mrf.mxu0
    %v1202 = vadd.f32 %v1158, %v1201
    %v1203 = vand.u32 %v1012, 4294901760
    %v1204 = vsub.f32 %v1012, %v1203
    %v1205 = vand.u32 %v1204, 4294901760
    %1206 = vmatmul.f32.gmra.mxu0 %v1205
    %v1207 = vpop.f32.mrf.mxu0
    %v1208 = vadd.f32 %v1163, %v1207
    %1209 = vdwg.mxu0
    %1210 = vmatpush.msra.mxu0 0.0
    %1211 = vmatpush.msra.mxu0 0.0
    %1212 = vmatpush.msra.mxu0 0.0
    %1213 = vmatpush.msra.mxu0 0.0
    %1214 = vmatpush.msra.mxu0 0.0
    %1215 = vmatpush.msra.mxu0 0.0
    %1216 = vmatpush.msra.mxu0 0.0
    %1217 = vmatpush.msra.mxu0 0.0
    %1218 = vmatpush.msra.mxu0 0.0
    %1219 = vmatpush.msra.mxu0 0.0
    %1220 = vmatpush.msra.mxu0 0.0
    %1221 = vmatpush.msra.mxu0 0.0
    %v1222 = vand.u32 %v1000, 4294901760
    %v1223 = vsub.f32 %v1000, %v1222
    %v1224 = vand.u32 %v1223, 4294901760
    %1225 = vmatpush.msra.mxu0 %v1224
    %v1226 = vand.u32 %v999, 4294901760
    %v1227 = vsub.f32 %v999, %v1226
    %v1228 = vand.u32 %v1227, 4294901760
    %1229 = vmatpush.msra.mxu0 %v1228
    %v1230 = vand.u32 %v998, 4294901760
    %v1231 = vsub.f32 %v998, %v1230
    %v1232 = vand.u32 %v1231, 4294901760
    %1233 = vmatpush.msra.mxu0 %v1232
    %v1234 = vand.u32 %v997, 4294901760
    %v1235 = vsub.f32 %v997, %v1234
    %v1236 = vand.u32 %v1235, 4294901760
    %1237 = vmatpush.msra.mxu0 %v1236
    %v1238 = vand.u32 %v1003, 4294901760
    %1239 = vmatmul.f32.gmra.mxu0 %v1238
    %v1240 = vpop.f32.mrf.mxu0
    %v1241 = vadd.f32 %v1190, %v1240
    %v1242 = vand.u32 %v1006, 4294901760
    %1243 = vmatmul.f32.gmra.mxu0 %v1242
    %v1244 = vpop.f32.mrf.mxu0
    %v1245 = vadd.f32 %v1196, %v1244
    %v1246 = vand.u32 %v1009, 4294901760
    %1247 = vmatmul.f32.gmra.mxu0 %v1246
    %v1248 = vpop.f32.mrf.mxu0
    %v1249 = vadd.f32 %v1202, %v1248
    %v1250 = vand.u32 %v1012, 4294901760
    %1251 = vmatmul.f32.gmra.mxu0 %v1250
    %v1252 = vpop.f32.mrf.mxu0
    %v1253 = vadd.f32 %v1208, %v1252
    %1254 = vdwg.mxu0
    %1255 = vmatpush.msra.mxu0 0.0
    %1256 = vmatpush.msra.mxu0 0.0
    %1257 = vmatpush.msra.mxu0 0.0
    %1258 = vmatpush.msra.mxu0 0.0
    %1259 = vmatpush.msra.mxu0 0.0
    %1260 = vmatpush.msra.mxu0 0.0
    %1261 = vmatpush.msra.mxu0 0.0
    %1262 = vmatpush.msra.mxu0 0.0
    %1263 = vmatpush.msra.mxu0 0.0
    %1264 = vmatpush.msra.mxu0 0.0
    %1265 = vmatpush.msra.mxu0 0.0
    %1266 = vmatpush.msra.mxu0 0.0
    %v1267 = vand.u32 %v1000, 4294901760
    %1268 = vmatpush.msra.mxu0 %v1267
    %v1269 = vand.u32 %v999, 4294901760
    %1270 = vmatpush.msra.mxu0 %v1269
    %v1271 = vand.u32 %v998, 4294901760
    %1272 = vmatpush.msra.mxu0 %v1271
    %v1273 = vand.u32 %v997, 4294901760
    %1274 = vmatpush.msra.mxu0 %v1273
    %v1275 = vand.u32 %v1003, 4294901760
    %1276 = vmatmul.f32.gmra.mxu0 %v1275
    %v1277 = vpop.f32.mrf.mxu0
    %v1278 = vadd.f32 %v1241, %v1277
    %v1279 = vand.u32 %v1006, 4294901760
    %1280 = vmatmul.f32.gmra.mxu0 %v1279
    %v1281 = vpop.f32.mrf.mxu0
    %v1282 = vadd.f32 %v1245, %v1281
    %v1283 = vand.u32 %v1009, 4294901760
    %1284 = vmatmul.f32.gmra.mxu0 %v1283
    %v1285 = vpop.f32.mrf.mxu0
    %v1286 = vadd.f32 %v1249, %v1285
    %v1287 = vand.u32 %v1012, 4294901760
    %1288 = vmatmul.f32.gmra.mxu0 %v1287
    %v1289 = vpop.f32.mrf.mxu0
    %v1290 = vadd.f32 %v1253, %v1289
    %1291 = vdwg.mxu0
    %vm1292 = vcmask 523264
    %1293 = vst.msk [vmem:[%s5] sm:$0xff] %vm1292, %v1278
    %1294 = vst.msk [vmem:[%s5 + $0x8] sm:$0xff] %vm1292, %v1282
    %1295 = vst.msk [vmem:[%s5 + $0x10] sm:$0xff] %vm1292, %v1286
    %1296 = vst.msk [vmem:[%s5 + $0x18] sm:$0xff] %vm1292, %v1290
    %v1297 = vld [vmem:[%s1 + $0x8] sm:$0xff]
    %v1298 = vld [vmem:[%s1 + $0x38] sm:$0xff]
    %v1299 = vld [vmem:[%s1 + $0x68] sm:$0xff]
    %v1300 = vld [vmem:[%s1 + $0x98] sm:$0xff]
    %v1301 = vperm.slane %v24, 3
    %1302 = vmatpush.msra.mxu0 0.0
    %1303 = vmatpush.msra.mxu0 0.0
    %1304 = vmatpush.msra.mxu0 0.0
    %1305 = vmatpush.msra.mxu0 0.0
    %1306 = vmatpush.msra.mxu0 0.0
    %1307 = vmatpush.msra.mxu0 0.0
    %1308 = vmatpush.msra.mxu0 0.0
    %1309 = vmatpush.msra.mxu0 0.0
    %1310 = vmatpush.msra.mxu0 0.0
    %1311 = vmatpush.msra.mxu0 0.0
    %1312 = vmatpush.msra.mxu0 0.0
    %1313 = vmatpush.msra.mxu0 0.0
    %v1314 = vand.u32 %v1300, 4294901760
    %1315 = vmatpush.msra.mxu0 %v1314
    %v1316 = vand.u32 %v1299, 4294901760
    %1317 = vmatpush.msra.mxu0 %v1316
    %v1318 = vand.u32 %v1298, 4294901760
    %1319 = vmatpush.msra.mxu0 %v1318
    %v1320 = vand.u32 %v1297, 4294901760
    %1321 = vmatpush.msra.mxu0 %v1320
    %v1322 = vand.u32 %v1003, 4294901760
    %v1323 = vsub.f32 %v1003, %v1322
    %v1324 = vand.u32 %v1323, 4294901760
    %v1325 = vsub.f32 %v1323, %v1324
    %v1326 = vand.u32 %v1325, 4294901760
    %1327 = vmatmul.f32.gmra.mxu0 %v1326
    %v1328 = vpop.f32.mrf.mxu0
    %v1329 = vadd.f32 %v1301, %v1328
    %v1330 = vand.u32 %v1006, 4294901760
    %v1331 = vsub.f32 %v1006, %v1330
    %v1332 = vand.u32 %v1331, 4294901760
    %v1333 = vsub.f32 %v1331, %v1332
    %v1334 = vand.u32 %v1333, 4294901760
    %1335 = vmatmul.f32.gmra.mxu0 %v1334
    %v1336 = vpop.f32.mrf.mxu0
    %v1337 = vadd.f32 %v1301, %v1336
    %v1338 = vand.u32 %v1009, 4294901760
    %v1339 = vsub.f32 %v1009, %v1338
    %v1340 = vand.u32 %v1339, 4294901760
    %v1341 = vsub.f32 %v1339, %v1340
    %v1342 = vand.u32 %v1341, 4294901760
    %1343 = vmatmul.f32.gmra.mxu0 %v1342
    %v1344 = vpop.f32.mrf.mxu0
    %v1345 = vadd.f32 %v1301, %v1344
    %v1346 = vand.u32 %v1012, 4294901760
    %v1347 = vsub.f32 %v1012, %v1346
    %v1348 = vand.u32 %v1347, 4294901760
    %v1349 = vsub.f32 %v1347, %v1348
    %v1350 = vand.u32 %v1349, 4294901760
    %1351 = vmatmul.f32.gmra.mxu0 %v1350
    %v1352 = vpop.f32.mrf.mxu0
    %v1353 = vadd.f32 %v1301, %v1352
    %1354 = vdwg.mxu0
    %1355 = vmatpush.msra.mxu0 0.0
    %1356 = vmatpush.msra.mxu0 0.0
    %1357 = vmatpush.msra.mxu0 0.0
    %1358 = vmatpush.msra.mxu0 0.0
    %1359 = vmatpush.msra.mxu0 0.0
    %1360 = vmatpush.msra.mxu0 0.0
    %1361 = vmatpush.msra.mxu0 0.0
    %1362 = vmatpush.msra.mxu0 0.0
    %1363 = vmatpush.msra.mxu0 0.0
    %1364 = vmatpush.msra.mxu0 0.0
    %1365 = vmatpush.msra.mxu0 0.0
    %1366 = vmatpush.msra.mxu0 0.0
    %v1367 = vand.u32 %v1300, 4294901760
    %v1368 = vsub.f32 %v1300, %v1367
    %v1369 = vand.u32 %v1368, 4294901760
    %v1370 = vsub.f32 %v1368, %v1369
    %v1371 = vand.u32 %v1370, 4294901760
    %1372 = vmatpush.msra.mxu0 %v1371
    %v1373 = vand.u32 %v1299, 4294901760
    %v1374 = vsub.f32 %v1299, %v1373
    %v1375 = vand.u32 %v1374, 4294901760
    %v1376 = vsub.f32 %v1374, %v1375
    %v1377 = vand.u32 %v1376, 4294901760
    %1378 = vmatpush.msra.mxu0 %v1377
    %v1379 = vand.u32 %v1298, 4294901760
    %v1380 = vsub.f32 %v1298, %v1379
    %v1381 = vand.u32 %v1380, 4294901760
    %v1382 = vsub.f32 %v1380, %v1381
    %v1383 = vand.u32 %v1382, 4294901760
    %1384 = vmatpush.msra.mxu0 %v1383
    %v1385 = vand.u32 %v1297, 4294901760
    %v1386 = vsub.f32 %v1297, %v1385
    %v1387 = vand.u32 %v1386, 4294901760
    %v1388 = vsub.f32 %v1386, %v1387
    %v1389 = vand.u32 %v1388, 4294901760
    %1390 = vmatpush.msra.mxu0 %v1389
    %v1391 = vand.u32 %v1003, 4294901760
    %1392 = vmatmul.f32.gmra.mxu0 %v1391
    %v1393 = vpop.f32.mrf.mxu0
    %v1394 = vadd.f32 %v1329, %v1393
    %v1395 = vand.u32 %v1006, 4294901760
    %1396 = vmatmul.f32.gmra.mxu0 %v1395
    %v1397 = vpop.f32.mrf.mxu0
    %v1398 = vadd.f32 %v1337, %v1397
    %v1399 = vand.u32 %v1009, 4294901760
    %1400 = vmatmul.f32.gmra.mxu0 %v1399
    %v1401 = vpop.f32.mrf.mxu0
    %v1402 = vadd.f32 %v1345, %v1401
    %v1403 = vand.u32 %v1012, 4294901760
    %1404 = vmatmul.f32.gmra.mxu0 %v1403
    %v1405 = vpop.f32.mrf.mxu0
    %v1406 = vadd.f32 %v1353, %v1405
    %1407 = vdwg.mxu0
    %1408 = vmatpush.msra.mxu0 0.0
    %1409 = vmatpush.msra.mxu0 0.0
    %1410 = vmatpush.msra.mxu0 0.0
    %1411 = vmatpush.msra.mxu0 0.0
    %1412 = vmatpush.msra.mxu0 0.0
    %1413 = vmatpush.msra.mxu0 0.0
    %1414 = vmatpush.msra.mxu0 0.0
    %1415 = vmatpush.msra.mxu0 0.0
    %1416 = vmatpush.msra.mxu0 0.0
    %1417 = vmatpush.msra.mxu0 0.0
    %1418 = vmatpush.msra.mxu0 0.0
    %1419 = vmatpush.msra.mxu0 0.0
    %v1420 = vand.u32 %v1300, 4294901760
    %v1421 = vsub.f32 %v1300, %v1420
    %1422 = vmatpush.msra.mxu0 %v1421
    %v1423 = vand.u32 %v1299, 4294901760
    %v1424 = vsub.f32 %v1299, %v1423
    %1425 = vmatpush.msra.mxu0 %v1424
    %v1426 = vand.u32 %v1298, 4294901760
    %v1427 = vsub.f32 %v1298, %v1426
    %1428 = vmatpush.msra.mxu0 %v1427
    %v1429 = vand.u32 %v1297, 4294901760
    %v1430 = vsub.f32 %v1297, %v1429
    %1431 = vmatpush.msra.mxu0 %v1430
    %v1432 = vand.u32 %v1003, 4294901760
    %v1433 = vsub.f32 %v1003, %v1432
    %1434 = vmatmul.f32.gmra.mxu0 %v1433
    %v1435 = vpop.f32.mrf.mxu0
    %v1436 = vadd.f32 %v1394, %v1435
    %v1437 = vand.u32 %v1006, 4294901760
    %v1438 = vsub.f32 %v1006, %v1437
    %1439 = vmatmul.f32.gmra.mxu0 %v1438
    %v1440 = vpop.f32.mrf.mxu0
    %v1441 = vadd.f32 %v1398, %v1440
    %v1442 = vand.u32 %v1009, 4294901760
    %v1443 = vsub.f32 %v1009, %v1442
    %1444 = vmatmul.f32.gmra.mxu0 %v1443
    %v1445 = vpop.f32.mrf.mxu0
    %v1446 = vadd.f32 %v1402, %v1445
    %v1447 = vand.u32 %v1012, 4294901760
    %v1448 = vsub.f32 %v1012, %v1447
    %1449 = vmatmul.f32.gmra.mxu0 %v1448
    %v1450 = vpop.f32.mrf.mxu0
    %v1451 = vadd.f32 %v1406, %v1450
    %1452 = vdwg.mxu0
    %1453 = vmatpush.msra.mxu0 0.0
    %1454 = vmatpush.msra.mxu0 0.0
    %1455 = vmatpush.msra.mxu0 0.0
    %1456 = vmatpush.msra.mxu0 0.0
    %1457 = vmatpush.msra.mxu0 0.0
    %1458 = vmatpush.msra.mxu0 0.0
    %1459 = vmatpush.msra.mxu0 0.0
    %1460 = vmatpush.msra.mxu0 0.0
    %1461 = vmatpush.msra.mxu0 0.0
    %1462 = vmatpush.msra.mxu0 0.0
    %1463 = vmatpush.msra.mxu0 0.0
    %1464 = vmatpush.msra.mxu0 0.0
    %v1465 = vand.u32 %v1300, 4294901760
    %1466 = vmatpush.msra.mxu0 %v1465
    %v1467 = vand.u32 %v1299, 4294901760
    %1468 = vmatpush.msra.mxu0 %v1467
    %v1469 = vand.u32 %v1298, 4294901760
    %1470 = vmatpush.msra.mxu0 %v1469
    %v1471 = vand.u32 %v1297, 4294901760
    %1472 = vmatpush.msra.mxu0 %v1471
    %v1473 = vand.u32 %v1003, 4294901760
    %v1474 = vsub.f32 %v1003, %v1473
    %v1475 = vand.u32 %v1474, 4294901760
    %1476 = vmatmul.f32.gmra.mxu0 %v1475
    %v1477 = vpop.f32.mrf.mxu0
    %v1478 = vadd.f32 %v1436, %v1477
    %v1479 = vand.u32 %v1006, 4294901760
    %v1480 = vsub.f32 %v1006, %v1479
    %v1481 = vand.u32 %v1480, 4294901760
    %1482 = vmatmul.f32.gmra.mxu0 %v1481
    %v1483 = vpop.f32.mrf.mxu0
    %v1484 = vadd.f32 %v1441, %v1483
    %v1485 = vand.u32 %v1009, 4294901760
    %v1486 = vsub.f32 %v1009, %v1485
    %v1487 = vand.u32 %v1486, 4294901760
    %1488 = vmatmul.f32.gmra.mxu0 %v1487
    %v1489 = vpop.f32.mrf.mxu0
    %v1490 = vadd.f32 %v1446, %v1489
    %v1491 = vand.u32 %v1012, 4294901760
    %v1492 = vsub.f32 %v1012, %v1491
    %v1493 = vand.u32 %v1492, 4294901760
    %1494 = vmatmul.f32.gmra.mxu0 %v1493
    %v1495 = vpop.f32.mrf.mxu0
    %v1496 = vadd.f32 %v1451, %v1495
    %1497 = vdwg.mxu0
    %1498 = vmatpush.msra.mxu0 0.0
    %1499 = vmatpush.msra.mxu0 0.0
    %1500 = vmatpush.msra.mxu0 0.0
    %1501 = vmatpush.msra.mxu0 0.0
    %1502 = vmatpush.msra.mxu0 0.0
    %1503 = vmatpush.msra.mxu0 0.0
    %1504 = vmatpush.msra.mxu0 0.0
    %1505 = vmatpush.msra.mxu0 0.0
    %1506 = vmatpush.msra.mxu0 0.0
    %1507 = vmatpush.msra.mxu0 0.0
    %1508 = vmatpush.msra.mxu0 0.0
    %1509 = vmatpush.msra.mxu0 0.0
    %v1510 = vand.u32 %v1300, 4294901760
    %v1511 = vsub.f32 %v1300, %v1510
    %v1512 = vand.u32 %v1511, 4294901760
    %1513 = vmatpush.msra.mxu0 %v1512
    %v1514 = vand.u32 %v1299, 4294901760
    %v1515 = vsub.f32 %v1299, %v1514
    %v1516 = vand.u32 %v1515, 4294901760
    %1517 = vmatpush.msra.mxu0 %v1516
    %v1518 = vand.u32 %v1298, 4294901760
    %v1519 = vsub.f32 %v1298, %v1518
    %v1520 = vand.u32 %v1519, 4294901760
    %1521 = vmatpush.msra.mxu0 %v1520
    %v1522 = vand.u32 %v1297, 4294901760
    %v1523 = vsub.f32 %v1297, %v1522
    %v1524 = vand.u32 %v1523, 4294901760
    %1525 = vmatpush.msra.mxu0 %v1524
    %v1526 = vand.u32 %v1003, 4294901760
    %1527 = vmatmul.f32.gmra.mxu0 %v1526
    %v1528 = vpop.f32.mrf.mxu0
    %v1529 = vadd.f32 %v1478, %v1528
    %v1530 = vand.u32 %v1006, 4294901760
    %1531 = vmatmul.f32.gmra.mxu0 %v1530
    %v1532 = vpop.f32.mrf.mxu0
    %v1533 = vadd.f32 %v1484, %v1532
    %v1534 = vand.u32 %v1009, 4294901760
    %1535 = vmatmul.f32.gmra.mxu0 %v1534
    %v1536 = vpop.f32.mrf.mxu0
    %v1537 = vadd.f32 %v1490, %v1536
    %v1538 = vand.u32 %v1012, 4294901760
    %1539 = vmatmul.f32.gmra.mxu0 %v1538
    %v1540 = vpop.f32.mrf.mxu0
    %v1541 = vadd.f32 %v1496, %v1540
    %1542 = vdwg.mxu0
    %1543 = vmatpush.msra.mxu0 0.0
    %1544 = vmatpush.msra.mxu0 0.0
    %1545 = vmatpush.msra.mxu0 0.0
    %1546 = vmatpush.msra.mxu0 0.0
    %1547 = vmatpush.msra.mxu0 0.0
    %1548 = vmatpush.msra.mxu0 0.0
    %1549 = vmatpush.msra.mxu0 0.0
    %1550 = vmatpush.msra.mxu0 0.0
    %1551 = vmatpush.msra.mxu0 0.0
    %1552 = vmatpush.msra.mxu0 0.0
    %1553 = vmatpush.msra.mxu0 0.0
    %1554 = vmatpush.msra.mxu0 0.0
    %v1555 = vand.u32 %v1300, 4294901760
    %1556 = vmatpush.msra.mxu0 %v1555
    %v1557 = vand.u32 %v1299, 4294901760
    %1558 = vmatpush.msra.mxu0 %v1557
    %v1559 = vand.u32 %v1298, 4294901760
    %1560 = vmatpush.msra.mxu0 %v1559
    %v1561 = vand.u32 %v1297, 4294901760
    %1562 = vmatpush.msra.mxu0 %v1561
    %v1563 = vand.u32 %v1003, 4294901760
    %1564 = vmatmul.f32.gmra.mxu0 %v1563
    %v1565 = vpop.f32.mrf.mxu0
    %v1566 = vadd.f32 %v1529, %v1565
    %v1567 = vand.u32 %v1006, 4294901760
    %1568 = vmatmul.f32.gmra.mxu0 %v1567
    %v1569 = vpop.f32.mrf.mxu0
    %v1570 = vadd.f32 %v1533, %v1569
    %v1571 = vand.u32 %v1009, 4294901760
    %1572 = vmatmul.f32.gmra.mxu0 %v1571
    %v1573 = vpop.f32.mrf.mxu0
    %v1574 = vadd.f32 %v1537, %v1573
    %v1575 = vand.u32 %v1012, 4294901760
    %1576 = vmatmul.f32.gmra.mxu0 %v1575
    %v1577 = vpop.f32.mrf.mxu0
    %v1578 = vadd.f32 %v1541, %v1577
    %1579 = vdwg.mxu0
    %1582 = vrot.lane.b32.xlu0 %v1278, 120
    %v1583 = vpop.permute.xlu0 %1582
    %1584 = vrot.lane.b32.xlu0 %v1282, 120
    %v1585 = vpop.permute.xlu0 %1584
    %1586 = vrot.lane.b32.xlu0 %v1278, 112
    %v1587 = vpop.permute.xlu0 %1586
    %1588 = vrot.lane.b32.xlu0 %v1282, 112
    %v1589 = vpop.permute.xlu0 %1588
    %1590 = vrot.lane.b32.xlu0 %v1278, 104
    %v1591 = vpop.permute.xlu0 %1590
    %1592 = vrot.lane.b32.xlu0 %v1282, 104
    %v1593 = vpop.permute.xlu0 %1592
    %1596 = vrot.lane.b32.xlu0 %v1286, 120
    %v1597 = vpop.permute.xlu0 %1596
    %1598 = vrot.lane.b32.xlu0 %v1290, 120
    %v1599 = vpop.permute.xlu0 %1598
    %1600 = vrot.lane.b32.xlu0 %v1286, 112
    %v1601 = vpop.permute.xlu0 %1600
    %1602 = vrot.lane.b32.xlu0 %v1290, 112
    %v1603 = vpop.permute.xlu0 %1602
    %1604 = vrot.lane.b32.xlu0 %v1286, 104
    %v1605 = vpop.permute.xlu0 %1604
    %1606 = vrot.lane.b32.xlu0 %v1290, 104
    %v1607 = vpop.permute.xlu0 %1606
    %1610 = vrot.lane.b32.xlu0 %v1566, 96
    %v1611 = vpop.permute.xlu0 %1610
    %1612 = vrot.lane.b32.xlu0 %v1570, 96
    %v1613 = vpop.permute.xlu0 %1612
    %1616 = vrot.lane.b32.xlu0 %v1566, 64
    %v1617 = vpop.permute.xlu0 %1616
    %1618 = vrot.lane.b32.xlu0 %v1570, 64
    %v1619 = vpop.permute.xlu0 %1618
    %1622 = vrot.lane.b32.xlu0 %v1566, 32
    %v1623 = vpop.permute.xlu0 %1622
    %1624 = vrot.lane.b32.xlu0 %v1570, 32
    %v1625 = vpop.permute.xlu0 %1624
    %1630 = vrot.lane.b32.xlu0 %v1574, 96
    %v1631 = vpop.permute.xlu0 %1630
    %1632 = vrot.lane.b32.xlu0 %v1578, 96
    %v1633 = vpop.permute.xlu0 %1632
    %1636 = vrot.lane.b32.xlu0 %v1574, 64
    %v1637 = vpop.permute.xlu0 %1636
    %1638 = vrot.lane.b32.xlu0 %v1578, 64
    %v1639 = vpop.permute.xlu0 %1638
    %1642 = vrot.lane.b32.xlu0 %v1574, 32
    %v1643 = vpop.permute.xlu0 %1642
    %1644 = vrot.lane.b32.xlu0 %v1578, 32
    %v1645 = vpop.permute.xlu0 %1644
    %1648 = vrot.lane.b32.xlu0 %v1278, 64
    %v1649 = vpop.permute.xlu0 %1648
    %1650 = vrot.lane.b32.xlu0 %v1282, 64
    %v1651 = vpop.permute.xlu0 %1650
    %vm1652 = vcmask 64512
    %v1653 = vsel %vm1652, %v1649, 0
    %v1655 = vsel %vm1652, %v1651, 0
    %v1657 = vsel %vm1652, %v1278, 0
    %v1659 = vsel %vm1652, %v1282, 0
    %1661 = vmatpush.xpose.msra.mxu0 0.0
    %1662 = vmatpush.xpose.msra.mxu0 0.0
    %1663 = vmatpush.xpose.msra.mxu0 0.0
    %1664 = vmatpush.xpose.msra.mxu0 0.0
    %1665 = vmatpush.xpose.msra.mxu0 0.0
    %1666 = vmatpush.xpose.msra.mxu0 0.0
    %1667 = vmatpush.xpose.msra.mxu0 0.0
    %1668 = vmatpush.xpose.msra.mxu0 0.0
    %1669 = vmatpush.xpose.msra.mxu0 0.0
    %1670 = vmatpush.xpose.msra.mxu0 0.0
    %1671 = vmatpush.xpose.msra.mxu0 0.0
    %1672 = vmatpush.xpose.msra.mxu0 0.0
    %1673 = vmatpush.xpose.msra.mxu0 0.0
    %1674 = vmatpush.xpose.msra.mxu0 0.0
    %v1675 = vand.u32 %v1659, 4294901760
    %1676 = vmatpush.xpose.msra.mxu0 %v1675
    %v1677 = vand.u32 %v1657, 4294901760
    %1678 = vmatpush.xpose.msra.mxu0 %v1677
    %v1679 = vand.u32 %v1653, 4294901760
    %v1680 = vsub.f32 %v1653, %v1679
    %v1681 = vand.u32 %v1680, 4294901760
    %v1682 = vsub.f32 %v1680, %v1681
    %v1683 = vand.u32 %v1682, 4294901760
    %1684 = vmatmul.f32.gmra.mxu0 %v1683
    %v1685 = vpop.f32.mrf.mxu0
    %v1686 = vadd.f32 0.0, %v1685
    %v1687 = vand.u32 %v1655, 4294901760
    %v1688 = vsub.f32 %v1655, %v1687
    %v1689 = vand.u32 %v1688, 4294901760
    %v1690 = vsub.f32 %v1688, %v1689
    %v1691 = vand.u32 %v1690, 4294901760
    %1692 = vmatmul.f32.gmra.mxu0 %v1691
    %v1693 = vpop.f32.mrf.mxu0
    %v1694 = vadd.f32 0.0, %v1693
    %1695 = vdwg.mxu0
    %1696 = vmatpush.xpose.msra.mxu0 0.0
    %1697 = vmatpush.xpose.msra.mxu0 0.0
    %1698 = vmatpush.xpose.msra.mxu0 0.0
    %1699 = vmatpush.xpose.msra.mxu0 0.0
    %1700 = vmatpush.xpose.msra.mxu0 0.0
    %1701 = vmatpush.xpose.msra.mxu0 0.0
    %1702 = vmatpush.xpose.msra.mxu0 0.0
    %1703 = vmatpush.xpose.msra.mxu0 0.0
    %1704 = vmatpush.xpose.msra.mxu0 0.0
    %1705 = vmatpush.xpose.msra.mxu0 0.0
    %1706 = vmatpush.xpose.msra.mxu0 0.0
    %1707 = vmatpush.xpose.msra.mxu0 0.0
    %1708 = vmatpush.xpose.msra.mxu0 0.0
    %1709 = vmatpush.xpose.msra.mxu0 0.0
    %v1710 = vand.u32 %v1659, 4294901760
    %v1711 = vsub.f32 %v1659, %v1710
    %v1712 = vand.u32 %v1711, 4294901760
    %v1713 = vsub.f32 %v1711, %v1712
    %v1714 = vand.u32 %v1713, 4294901760
    %1715 = vmatpush.xpose.msra.mxu0 %v1714
    %v1716 = vand.u32 %v1657, 4294901760
    %v1717 = vsub.f32 %v1657, %v1716
    %v1718 = vand.u32 %v1717, 4294901760
    %v1719 = vsub.f32 %v1717, %v1718
    %v1720 = vand.u32 %v1719, 4294901760
    %1721 = vmatpush.xpose.msra.mxu0 %v1720
    %v1722 = vand.u32 %v1653, 4294901760
    %1723 = vmatmul.f32.gmra.mxu0 %v1722
    %v1724 = vpop.f32.mrf.mxu0
    %v1725 = vadd.f32 %v1686, %v1724
    %v1726 = vand.u32 %v1655, 4294901760
    %1727 = vmatmul.f32.gmra.mxu0 %v1726
    %v1728 = vpop.f32.mrf.mxu0
    %v1729 = vadd.f32 %v1694, %v1728
    %1730 = vdwg.mxu0
    %1731 = vmatpush.xpose.msra.mxu0 0.0
    %1732 = vmatpush.xpose.msra.mxu0 0.0
    %1733 = vmatpush.xpose.msra.mxu0 0.0
    %1734 = vmatpush.xpose.msra.mxu0 0.0
    %1735 = vmatpush.xpose.msra.mxu0 0.0
    %1736 = vmatpush.xpose.msra.mxu0 0.0
    %1737 = vmatpush.xpose.msra.mxu0 0.0
    %1738 = vmatpush.xpose.msra.mxu0 0.0
    %1739 = vmatpush.xpose.msra.mxu0 0.0
    %1740 = vmatpush.xpose.msra.mxu0 0.0
    %1741 = vmatpush.xpose.msra.mxu0 0.0
    %1742 = vmatpush.xpose.msra.mxu0 0.0
    %1743 = vmatpush.xpose.msra.mxu0 0.0
    %1744 = vmatpush.xpose.msra.mxu0 0.0
    %v1745 = vand.u32 %v1659, 4294901760
    %v1746 = vsub.f32 %v1659, %v1745
    %1747 = vmatpush.xpose.msra.mxu0 %v1746
    %v1748 = vand.u32 %v1657, 4294901760
    %v1749 = vsub.f32 %v1657, %v1748
    %1750 = vmatpush.xpose.msra.mxu0 %v1749
    %v1751 = vand.u32 %v1653, 4294901760
    %v1752 = vsub.f32 %v1653, %v1751
    %1753 = vmatmul.f32.gmra.mxu0 %v1752
    %v1754 = vpop.f32.mrf.mxu0
    %v1755 = vadd.f32 %v1725, %v1754
    %v1756 = vand.u32 %v1655, 4294901760
    %v1757 = vsub.f32 %v1655, %v1756
    %1758 = vmatmul.f32.gmra.mxu0 %v1757
    %v1759 = vpop.f32.mrf.mxu0
    %v1760 = vadd.f32 %v1729, %v1759
    %1761 = vdwg.mxu0
    %1762 = vmatpush.xpose.msra.mxu0 0.0
    %1763 = vmatpush.xpose.msra.mxu0 0.0
    %1764 = vmatpush.xpose.msra.mxu0 0.0
    %1765 = vmatpush.xpose.msra.mxu0 0.0
    %1766 = vmatpush.xpose.msra.mxu0 0.0
    %1767 = vmatpush.xpose.msra.mxu0 0.0
    %1768 = vmatpush.xpose.msra.mxu0 0.0
    %1769 = vmatpush.xpose.msra.mxu0 0.0
    %1770 = vmatpush.xpose.msra.mxu0 0.0
    %1771 = vmatpush.xpose.msra.mxu0 0.0
    %1772 = vmatpush.xpose.msra.mxu0 0.0
    %1773 = vmatpush.xpose.msra.mxu0 0.0
    %1774 = vmatpush.xpose.msra.mxu0 0.0
    %1775 = vmatpush.xpose.msra.mxu0 0.0
    %v1776 = vand.u32 %v1659, 4294901760
    %1777 = vmatpush.xpose.msra.mxu0 %v1776
    %v1778 = vand.u32 %v1657, 4294901760
    %1779 = vmatpush.xpose.msra.mxu0 %v1778
    %v1780 = vand.u32 %v1653, 4294901760
    %v1781 = vsub.f32 %v1653, %v1780
    %v1782 = vand.u32 %v1781, 4294901760
    %1783 = vmatmul.f32.gmra.mxu0 %v1782
    %v1784 = vpop.f32.mrf.mxu0
    %v1785 = vadd.f32 %v1755, %v1784
    %v1786 = vand.u32 %v1655, 4294901760
    %v1787 = vsub.f32 %v1655, %v1786
    %v1788 = vand.u32 %v1787, 4294901760
    %1789 = vmatmul.f32.gmra.mxu0 %v1788
    %v1790 = vpop.f32.mrf.mxu0
    %v1791 = vadd.f32 %v1760, %v1790
    %1792 = vdwg.mxu0
    %1793 = vmatpush.xpose.msra.mxu0 0.0
    %1794 = vmatpush.xpose.msra.mxu0 0.0
    %1795 = vmatpush.xpose.msra.mxu0 0.0
    %1796 = vmatpush.xpose.msra.mxu0 0.0
    %1797 = vmatpush.xpose.msra.mxu0 0.0
    %1798 = vmatpush.xpose.msra.mxu0 0.0
    %1799 = vmatpush.xpose.msra.mxu0 0.0
    %1800 = vmatpush.xpose.msra.mxu0 0.0
    %1801 = vmatpush.xpose.msra.mxu0 0.0
    %1802 = vmatpush.xpose.msra.mxu0 0.0
    %1803 = vmatpush.xpose.msra.mxu0 0.0
    %1804 = vmatpush.xpose.msra.mxu0 0.0
    %1805 = vmatpush.xpose.msra.mxu0 0.0
    %1806 = vmatpush.xpose.msra.mxu0 0.0
    %v1807 = vand.u32 %v1659, 4294901760
    %v1808 = vsub.f32 %v1659, %v1807
    %v1809 = vand.u32 %v1808, 4294901760
    %1810 = vmatpush.xpose.msra.mxu0 %v1809
    %v1811 = vand.u32 %v1657, 4294901760
    %v1812 = vsub.f32 %v1657, %v1811
    %v1813 = vand.u32 %v1812, 4294901760
    %1814 = vmatpush.xpose.msra.mxu0 %v1813
    %v1815 = vand.u32 %v1653, 4294901760
    %1816 = vmatmul.f32.gmra.mxu0 %v1815
    %v1817 = vpop.f32.mrf.mxu0
    %v1818 = vadd.f32 %v1785, %v1817
    %v1819 = vand.u32 %v1655, 4294901760
    %1820 = vmatmul.f32.gmra.mxu0 %v1819
    %v1821 = vpop.f32.mrf.mxu0
    %v1822 = vadd.f32 %v1791, %v1821
    %1823 = vdwg.mxu0
    %1824 = vmatpush.xpose.msra.mxu0 0.0
    %1825 = vmatpush.xpose.msra.mxu0 0.0
    %1826 = vmatpush.xpose.msra.mxu0 0.0
    %1827 = vmatpush.xpose.msra.mxu0 0.0
    %1828 = vmatpush.xpose.msra.mxu0 0.0
    %1829 = vmatpush.xpose.msra.mxu0 0.0
    %1830 = vmatpush.xpose.msra.mxu0 0.0
    %1831 = vmatpush.xpose.msra.mxu0 0.0
    %1832 = vmatpush.xpose.msra.mxu0 0.0
    %1833 = vmatpush.xpose.msra.mxu0 0.0
    %1834 = vmatpush.xpose.msra.mxu0 0.0
    %1835 = vmatpush.xpose.msra.mxu0 0.0
    %1836 = vmatpush.xpose.msra.mxu0 0.0
    %1837 = vmatpush.xpose.msra.mxu0 0.0
    %v1838 = vand.u32 %v1659, 4294901760
    %1839 = vmatpush.xpose.msra.mxu0 %v1838
    %v1840 = vand.u32 %v1657, 4294901760
    %1841 = vmatpush.xpose.msra.mxu0 %v1840
    %v1842 = vand.u32 %v1653, 4294901760
    %1843 = vmatmul.f32.gmra.mxu0 %v1842
    %v1844 = vpop.f32.mrf.mxu0
    %v1845 = vadd.f32 %v1818, %v1844
    %v1846 = vand.u32 %v1655, 4294901760
    %1847 = vmatmul.f32.gmra.mxu0 %v1846
    %v1848 = vpop.f32.mrf.mxu0
    %v1849 = vadd.f32 %v1822, %v1848
    %1850 = vdwg.mxu0
    %1851 = vrot.lane.b32.xlu0 %v1583, 64
    %v1852 = vpop.permute.xlu0 %1851
    %1853 = vrot.lane.b32.xlu0 %v1585, 64
    %v1854 = vpop.permute.xlu0 %1853
    %v1855 = vsel %vm1652, %v1852, 0
    %v1857 = vsel %vm1652, %v1854, 0
    %v1859 = vsel %vm1652, %v1583, 0
    %v1861 = vsel %vm1652, %v1585, 0
    %1863 = vmatpush.xpose.msra.mxu0 0.0
    %1864 = vmatpush.xpose.msra.mxu0 0.0
    %1865 = vmatpush.xpose.msra.mxu0 0.0
    %1866 = vmatpush.xpose.msra.mxu0 0.0
    %1867 = vmatpush.xpose.msra.mxu0 0.0
    %1868 = vmatpush.xpose.msra.mxu0 0.0
    %1869 = vmatpush.xpose.msra.mxu0 0.0
    %1870 = vmatpush.xpose.msra.mxu0 0.0
    %1871 = vmatpush.xpose.msra.mxu0 0.0
    %1872 = vmatpush.xpose.msra.mxu0 0.0
    %1873 = vmatpush.xpose.msra.mxu0 0.0
    %1874 = vmatpush.xpose.msra.mxu0 0.0
    %1875 = vmatpush.xpose.msra.mxu0 0.0
    %1876 = vmatpush.xpose.msra.mxu0 0.0
    %v1877 = vand.u32 %v1861, 4294901760
    %1878 = vmatpush.xpose.msra.mxu0 %v1877
    %v1879 = vand.u32 %v1859, 4294901760
    %1880 = vmatpush.xpose.msra.mxu0 %v1879
    %v1881 = vand.u32 %v1855, 4294901760
    %v1882 = vsub.f32 %v1855, %v1881
    %v1883 = vand.u32 %v1882, 4294901760
    %v1884 = vsub.f32 %v1882, %v1883
    %v1885 = vand.u32 %v1884, 4294901760
    %1886 = vmatmul.f32.gmra.mxu0 %v1885
    %v1887 = vpop.f32.mrf.mxu0
    %v1888 = vadd.f32 0.0, %v1887
    %v1889 = vand.u32 %v1857, 4294901760
    %v1890 = vsub.f32 %v1857, %v1889
    %v1891 = vand.u32 %v1890, 4294901760
    %v1892 = vsub.f32 %v1890, %v1891
    %v1893 = vand.u32 %v1892, 4294901760
    %1894 = vmatmul.f32.gmra.mxu0 %v1893
    %v1895 = vpop.f32.mrf.mxu0
    %v1896 = vadd.f32 0.0, %v1895
    %1897 = vdwg.mxu0
    %1898 = vmatpush.xpose.msra.mxu0 0.0
    %1899 = vmatpush.xpose.msra.mxu0 0.0
    %1900 = vmatpush.xpose.msra.mxu0 0.0
    %1901 = vmatpush.xpose.msra.mxu0 0.0
    %1902 = vmatpush.xpose.msra.mxu0 0.0
    %1903 = vmatpush.xpose.msra.mxu0 0.0
    %1904 = vmatpush.xpose.msra.mxu0 0.0
    %1905 = vmatpush.xpose.msra.mxu0 0.0
    %1906 = vmatpush.xpose.msra.mxu0 0.0
    %1907 = vmatpush.xpose.msra.mxu0 0.0
    %1908 = vmatpush.xpose.msra.mxu0 0.0
    %1909 = vmatpush.xpose.msra.mxu0 0.0
    %1910 = vmatpush.xpose.msra.mxu0 0.0
    %1911 = vmatpush.xpose.msra.mxu0 0.0
    %v1912 = vand.u32 %v1861, 4294901760
    %v1913 = vsub.f32 %v1861, %v1912
    %v1914 = vand.u32 %v1913, 4294901760
    %v1915 = vsub.f32 %v1913, %v1914
    %v1916 = vand.u32 %v1915, 4294901760
    %1917 = vmatpush.xpose.msra.mxu0 %v1916
    %v1918 = vand.u32 %v1859, 4294901760
    %v1919 = vsub.f32 %v1859, %v1918
    %v1920 = vand.u32 %v1919, 4294901760
    %v1921 = vsub.f32 %v1919, %v1920
    %v1922 = vand.u32 %v1921, 4294901760
    %1923 = vmatpush.xpose.msra.mxu0 %v1922
    %v1924 = vand.u32 %v1855, 4294901760
    %1925 = vmatmul.f32.gmra.mxu0 %v1924
    %v1926 = vpop.f32.mrf.mxu0
    %v1927 = vadd.f32 %v1888, %v1926
    %v1928 = vand.u32 %v1857, 4294901760
    %1929 = vmatmul.f32.gmra.mxu0 %v1928
    %v1930 = vpop.f32.mrf.mxu0
    %v1931 = vadd.f32 %v1896, %v1930
    %1932 = vdwg.mxu0
    %1933 = vmatpush.xpose.msra.mxu0 0.0
    %1934 = vmatpush.xpose.msra.mxu0 0.0
    %1935 = vmatpush.xpose.msra.mxu0 0.0
    %1936 = vmatpush.xpose.msra.mxu0 0.0
    %1937 = vmatpush.xpose.msra.mxu0 0.0
    %1938 = vmatpush.xpose.msra.mxu0 0.0
    %1939 = vmatpush.xpose.msra.mxu0 0.0
    %1940 = vmatpush.xpose.msra.mxu0 0.0
    %1941 = vmatpush.xpose.msra.mxu0 0.0
    %1942 = vmatpush.xpose.msra.mxu0 0.0
    %1943 = vmatpush.xpose.msra.mxu0 0.0
    %1944 = vmatpush.xpose.msra.mxu0 0.0
    %1945 = vmatpush.xpose.msra.mxu0 0.0
    %1946 = vmatpush.xpose.msra.mxu0 0.0
    %v1947 = vand.u32 %v1861, 4294901760
    %v1948 = vsub.f32 %v1861, %v1947
    %1949 = vmatpush.xpose.msra.mxu0 %v1948
    %v1950 = vand.u32 %v1859, 4294901760
    %v1951 = vsub.f32 %v1859, %v1950
    %1952 = vmatpush.xpose.msra.mxu0 %v1951
    %v1953 = vand.u32 %v1855, 4294901760
    %v1954 = vsub.f32 %v1855, %v1953
    %1955 = vmatmul.f32.gmra.mxu0 %v1954
    %v1956 = vpop.f32.mrf.mxu0
    %v1957 = vadd.f32 %v1927, %v1956
    %v1958 = vand.u32 %v1857, 4294901760
    %v1959 = vsub.f32 %v1857, %v1958
    %1960 = vmatmul.f32.gmra.mxu0 %v1959
    %v1961 = vpop.f32.mrf.mxu0
    %v1962 = vadd.f32 %v1931, %v1961
    %1963 = vdwg.mxu0
    %1964 = vmatpush.xpose.msra.mxu0 0.0
    %1965 = vmatpush.xpose.msra.mxu0 0.0
    %1966 = vmatpush.xpose.msra.mxu0 0.0
    %1967 = vmatpush.xpose.msra.mxu0 0.0
    %1968 = vmatpush.xpose.msra.mxu0 0.0
    %1969 = vmatpush.xpose.msra.mxu0 0.0
    %1970 = vmatpush.xpose.msra.mxu0 0.0
    %1971 = vmatpush.xpose.msra.mxu0 0.0
    %1972 = vmatpush.xpose.msra.mxu0 0.0
    %1973 = vmatpush.xpose.msra.mxu0 0.0
    %1974 = vmatpush.xpose.msra.mxu0 0.0
    %1975 = vmatpush.xpose.msra.mxu0 0.0
    %1976 = vmatpush.xpose.msra.mxu0 0.0
    %1977 = vmatpush.xpose.msra.mxu0 0.0
    %v1978 = vand.u32 %v1861, 4294901760
    %1979 = vmatpush.xpose.msra.mxu0 %v1978
    %v1980 = vand.u32 %v1859, 4294901760
    %1981 = vmatpush.xpose.msra.mxu0 %v1980
    %v1982 = vand.u32 %v1855, 4294901760
    %v1983 = vsub.f32 %v1855, %v1982
    %v1984 = vand.u32 %v1983, 4294901760
    %1985 = vmatmul.f32.gmra.mxu0 %v1984
    %v1986 = vpop.f32.mrf.mxu0
    %v1987 = vadd.f32 %v1957, %v1986
    %v1988 = vand.u32 %v1857, 4294901760
    %v1989 = vsub.f32 %v1857, %v1988
    %v1990 = vand.u32 %v1989, 4294901760
    %1991 = vmatmul.f32.gmra.mxu0 %v1990
    %v1992 = vpop.f32.mrf.mxu0
    %v1993 = vadd.f32 %v1962, %v1992
    %1994 = vdwg.mxu0
    %1995 = vmatpush.xpose.msra.mxu0 0.0
    %1996 = vmatpush.xpose.msra.mxu0 0.0
    %1997 = vmatpush.xpose.msra.mxu0 0.0
    %1998 = vmatpush.xpose.msra.mxu0 0.0
    %1999 = vmatpush.xpose.msra.mxu0 0.0
    %2000 = vmatpush.xpose.msra.mxu0 0.0
    %2001 = vmatpush.xpose.msra.mxu0 0.0
    %2002 = vmatpush.xpose.msra.mxu0 0.0
    %2003 = vmatpush.xpose.msra.mxu0 0.0
    %2004 = vmatpush.xpose.msra.mxu0 0.0
    %2005 = vmatpush.xpose.msra.mxu0 0.0
    %2006 = vmatpush.xpose.msra.mxu0 0.0
    %2007 = vmatpush.xpose.msra.mxu0 0.0
    %2008 = vmatpush.xpose.msra.mxu0 0.0
    %v2009 = vand.u32 %v1861, 4294901760
    %v2010 = vsub.f32 %v1861, %v2009
    %v2011 = vand.u32 %v2010, 4294901760
    %2012 = vmatpush.xpose.msra.mxu0 %v2011
    %v2013 = vand.u32 %v1859, 4294901760
    %v2014 = vsub.f32 %v1859, %v2013
    %v2015 = vand.u32 %v2014, 4294901760
    %2016 = vmatpush.xpose.msra.mxu0 %v2015
    %v2017 = vand.u32 %v1855, 4294901760
    %2018 = vmatmul.f32.gmra.mxu0 %v2017
    %v2019 = vpop.f32.mrf.mxu0
    %v2020 = vadd.f32 %v1987, %v2019
    %v2021 = vand.u32 %v1857, 4294901760
    %2022 = vmatmul.f32.gmra.mxu0 %v2021
    %v2023 = vpop.f32.mrf.mxu0
    %v2024 = vadd.f32 %v1993, %v2023
    %2025 = vdwg.mxu0
    %2026 = vmatpush.xpose.msra.mxu0 0.0
    %2027 = vmatpush.xpose.msra.mxu0 0.0
    %2028 = vmatpush.xpose.msra.mxu0 0.0
    %2029 = vmatpush.xpose.msra.mxu0 0.0
    %2030 = vmatpush.xpose.msra.mxu0 0.0
    %2031 = vmatpush.xpose.msra.mxu0 0.0
    %2032 = vmatpush.xpose.msra.mxu0 0.0
    %2033 = vmatpush.xpose.msra.mxu0 0.0
    %2034 = vmatpush.xpose.msra.mxu0 0.0
    %2035 = vmatpush.xpose.msra.mxu0 0.0
    %2036 = vmatpush.xpose.msra.mxu0 0.0
    %2037 = vmatpush.xpose.msra.mxu0 0.0
    %2038 = vmatpush.xpose.msra.mxu0 0.0
    %2039 = vmatpush.xpose.msra.mxu0 0.0
    %v2040 = vand.u32 %v1861, 4294901760
    %2041 = vmatpush.xpose.msra.mxu0 %v2040
    %v2042 = vand.u32 %v1859, 4294901760
    %2043 = vmatpush.xpose.msra.mxu0 %v2042
    %v2044 = vand.u32 %v1855, 4294901760
    %2045 = vmatmul.f32.gmra.mxu0 %v2044
    %v2046 = vpop.f32.mrf.mxu0
    %v2047 = vadd.f32 %v2020, %v2046
    %v2048 = vand.u32 %v1857, 4294901760
    %2049 = vmatmul.f32.gmra.mxu0 %v2048
    %v2050 = vpop.f32.mrf.mxu0
    %v2051 = vadd.f32 %v2024, %v2050
    %2052 = vdwg.mxu0
    %2053 = vrot.lane.b32.xlu0 %v1587, 64
    %v2054 = vpop.permute.xlu0 %2053
    %2055 = vrot.lane.b32.xlu0 %v1589, 64
    %v2056 = vpop.permute.xlu0 %2055
    %v2057 = vsel %vm1652, %v2054, 0
    %v2059 = vsel %vm1652, %v2056, 0
    %v2061 = vsel %vm1652, %v1587, 0
    %v2063 = vsel %vm1652, %v1589, 0
    %2065 = vmatpush.xpose.msra.mxu0 0.0
    %2066 = vmatpush.xpose.msra.mxu0 0.0
    %2067 = vmatpush.xpose.msra.mxu0 0.0
    %2068 = vmatpush.xpose.msra.mxu0 0.0
    %2069 = vmatpush.xpose.msra.mxu0 0.0
    %2070 = vmatpush.xpose.msra.mxu0 0.0
    %2071 = vmatpush.xpose.msra.mxu0 0.0
    %2072 = vmatpush.xpose.msra.mxu0 0.0
    %2073 = vmatpush.xpose.msra.mxu0 0.0
    %2074 = vmatpush.xpose.msra.mxu0 0.0
    %2075 = vmatpush.xpose.msra.mxu0 0.0
    %2076 = vmatpush.xpose.msra.mxu0 0.0
    %2077 = vmatpush.xpose.msra.mxu0 0.0
    %2078 = vmatpush.xpose.msra.mxu0 0.0
    %v2079 = vand.u32 %v2063, 4294901760
    %2080 = vmatpush.xpose.msra.mxu0 %v2079
    %v2081 = vand.u32 %v2061, 4294901760
    %2082 = vmatpush.xpose.msra.mxu0 %v2081
    %v2083 = vand.u32 %v2057, 4294901760
    %v2084 = vsub.f32 %v2057, %v2083
    %v2085 = vand.u32 %v2084, 4294901760
    %v2086 = vsub.f32 %v2084, %v2085
    %v2087 = vand.u32 %v2086, 4294901760
    %2088 = vmatmul.f32.gmra.mxu0 %v2087
    %v2089 = vpop.f32.mrf.mxu0
    %v2090 = vadd.f32 0.0, %v2089
    %v2091 = vand.u32 %v2059, 4294901760
    %v2092 = vsub.f32 %v2059, %v2091
    %v2093 = vand.u32 %v2092, 4294901760
    %v2094 = vsub.f32 %v2092, %v2093
    %v2095 = vand.u32 %v2094, 4294901760
    %2096 = vmatmul.f32.gmra.mxu0 %v2095
    %v2097 = vpop.f32.mrf.mxu0
    %v2098 = vadd.f32 0.0, %v2097
    %2099 = vdwg.mxu0
    %2100 = vmatpush.xpose.msra.mxu0 0.0
    %2101 = vmatpush.xpose.msra.mxu0 0.0
    %2102 = vmatpush.xpose.msra.mxu0 0.0
    %2103 = vmatpush.xpose.msra.mxu0 0.0
    %2104 = vmatpush.xpose.msra.mxu0 0.0
    %2105 = vmatpush.xpose.msra.mxu0 0.0
    %2106 = vmatpush.xpose.msra.mxu0 0.0
    %2107 = vmatpush.xpose.msra.mxu0 0.0
    %2108 = vmatpush.xpose.msra.mxu0 0.0
    %2109 = vmatpush.xpose.msra.mxu0 0.0
    %2110 = vmatpush.xpose.msra.mxu0 0.0
    %2111 = vmatpush.xpose.msra.mxu0 0.0
    %2112 = vmatpush.xpose.msra.mxu0 0.0
    %2113 = vmatpush.xpose.msra.mxu0 0.0
    %v2114 = vand.u32 %v2063, 4294901760
    %v2115 = vsub.f32 %v2063, %v2114
    %v2116 = vand.u32 %v2115, 4294901760
    %v2117 = vsub.f32 %v2115, %v2116
    %v2118 = vand.u32 %v2117, 4294901760
    %2119 = vmatpush.xpose.msra.mxu0 %v2118
    %v2120 = vand.u32 %v2061, 4294901760
    %v2121 = vsub.f32 %v2061, %v2120
    %v2122 = vand.u32 %v2121, 4294901760
    %v2123 = vsub.f32 %v2121, %v2122
    %v2124 = vand.u32 %v2123, 4294901760
    %2125 = vmatpush.xpose.msra.mxu0 %v2124
    %v2126 = vand.u32 %v2057, 4294901760
    %2127 = vmatmul.f32.gmra.mxu0 %v2126
    %v2128 = vpop.f32.mrf.mxu0
    %v2129 = vadd.f32 %v2090, %v2128
    %v2130 = vand.u32 %v2059, 4294901760
    %2131 = vmatmul.f32.gmra.mxu0 %v2130
    %v2132 = vpop.f32.mrf.mxu0
    %v2133 = vadd.f32 %v2098, %v2132
    %2134 = vdwg.mxu0
    %2135 = vmatpush.xpose.msra.mxu0 0.0
    %2136 = vmatpush.xpose.msra.mxu0 0.0
    %2137 = vmatpush.xpose.msra.mxu0 0.0
    %2138 = vmatpush.xpose.msra.mxu0 0.0
    %2139 = vmatpush.xpose.msra.mxu0 0.0
    %2140 = vmatpush.xpose.msra.mxu0 0.0
    %2141 = vmatpush.xpose.msra.mxu0 0.0
    %2142 = vmatpush.xpose.msra.mxu0 0.0
    %2143 = vmatpush.xpose.msra.mxu0 0.0
    %2144 = vmatpush.xpose.msra.mxu0 0.0
    %2145 = vmatpush.xpose.msra.mxu0 0.0
    %2146 = vmatpush.xpose.msra.mxu0 0.0
    %2147 = vmatpush.xpose.msra.mxu0 0.0
    %2148 = vmatpush.xpose.msra.mxu0 0.0
    %v2149 = vand.u32 %v2063, 4294901760
    %v2150 = vsub.f32 %v2063, %v2149
    %2151 = vmatpush.xpose.msra.mxu0 %v2150
    %v2152 = vand.u32 %v2061, 4294901760
    %v2153 = vsub.f32 %v2061, %v2152
    %2154 = vmatpush.xpose.msra.mxu0 %v2153
    %v2155 = vand.u32 %v2057, 4294901760
    %v2156 = vsub.f32 %v2057, %v2155
    %2157 = vmatmul.f32.gmra.mxu0 %v2156
    %v2158 = vpop.f32.mrf.mxu0
    %v2159 = vadd.f32 %v2129, %v2158
    %v2160 = vand.u32 %v2059, 4294901760
    %v2161 = vsub.f32 %v2059, %v2160
    %2162 = vmatmul.f32.gmra.mxu0 %v2161
    %v2163 = vpop.f32.mrf.mxu0
    %v2164 = vadd.f32 %v2133, %v2163
    %2165 = vdwg.mxu0
    %2166 = vmatpush.xpose.msra.mxu0 0.0
    %2167 = vmatpush.xpose.msra.mxu0 0.0
    %2168 = vmatpush.xpose.msra.mxu0 0.0
    %2169 = vmatpush.xpose.msra.mxu0 0.0
    %2170 = vmatpush.xpose.msra.mxu0 0.0
    %2171 = vmatpush.xpose.msra.mxu0 0.0
    %2172 = vmatpush.xpose.msra.mxu0 0.0
    %2173 = vmatpush.xpose.msra.mxu0 0.0
    %2174 = vmatpush.xpose.msra.mxu0 0.0
    %2175 = vmatpush.xpose.msra.mxu0 0.0
    %2176 = vmatpush.xpose.msra.mxu0 0.0
    %2177 = vmatpush.xpose.msra.mxu0 0.0
    %2178 = vmatpush.xpose.msra.mxu0 0.0
    %2179 = vmatpush.xpose.msra.mxu0 0.0
    %v2180 = vand.u32 %v2063, 4294901760
    %2181 = vmatpush.xpose.msra.mxu0 %v2180
    %v2182 = vand.u32 %v2061, 4294901760
    %2183 = vmatpush.xpose.msra.mxu0 %v2182
    %v2184 = vand.u32 %v2057, 4294901760
    %v2185 = vsub.f32 %v2057, %v2184
    %v2186 = vand.u32 %v2185, 4294901760
    %2187 = vmatmul.f32.gmra.mxu0 %v2186
    %v2188 = vpop.f32.mrf.mxu0
    %v2189 = vadd.f32 %v2159, %v2188
    %v2190 = vand.u32 %v2059, 4294901760
    %v2191 = vsub.f32 %v2059, %v2190
    %v2192 = vand.u32 %v2191, 4294901760
    %2193 = vmatmul.f32.gmra.mxu0 %v2192
    %v2194 = vpop.f32.mrf.mxu0
    %v2195 = vadd.f32 %v2164, %v2194
    %2196 = vdwg.mxu0
    %2197 = vmatpush.xpose.msra.mxu0 0.0
    %2198 = vmatpush.xpose.msra.mxu0 0.0
    %2199 = vmatpush.xpose.msra.mxu0 0.0
    %2200 = vmatpush.xpose.msra.mxu0 0.0
    %2201 = vmatpush.xpose.msra.mxu0 0.0
    %2202 = vmatpush.xpose.msra.mxu0 0.0
    %2203 = vmatpush.xpose.msra.mxu0 0.0
    %2204 = vmatpush.xpose.msra.mxu0 0.0
    %2205 = vmatpush.xpose.msra.mxu0 0.0
    %2206 = vmatpush.xpose.msra.mxu0 0.0
    %2207 = vmatpush.xpose.msra.mxu0 0.0
    %2208 = vmatpush.xpose.msra.mxu0 0.0
    %2209 = vmatpush.xpose.msra.mxu0 0.0
    %2210 = vmatpush.xpose.msra.mxu0 0.0
    %v2211 = vand.u32 %v2063, 4294901760
    %v2212 = vsub.f32 %v2063, %v2211
    %v2213 = vand.u32 %v2212, 4294901760
    %2214 = vmatpush.xpose.msra.mxu0 %v2213
    %v2215 = vand.u32 %v2061, 4294901760
    %v2216 = vsub.f32 %v2061, %v2215
    %v2217 = vand.u32 %v2216, 4294901760
    %2218 = vmatpush.xpose.msra.mxu0 %v2217
    %v2219 = vand.u32 %v2057, 4294901760
    %2220 = vmatmul.f32.gmra.mxu0 %v2219
    %v2221 = vpop.f32.mrf.mxu0
    %v2222 = vadd.f32 %v2189, %v2221
    %v2223 = vand.u32 %v2059, 4294901760
    %2224 = vmatmul.f32.gmra.mxu0 %v2223
    %v2225 = vpop.f32.mrf.mxu0
    %v2226 = vadd.f32 %v2195, %v2225
    %2227 = vdwg.mxu0
    %2228 = vmatpush.xpose.msra.mxu0 0.0
    %2229 = vmatpush.xpose.msra.mxu0 0.0
    %2230 = vmatpush.xpose.msra.mxu0 0.0
    %2231 = vmatpush.xpose.msra.mxu0 0.0
    %2232 = vmatpush.xpose.msra.mxu0 0.0
    %2233 = vmatpush.xpose.msra.mxu0 0.0
    %2234 = vmatpush.xpose.msra.mxu0 0.0
    %2235 = vmatpush.xpose.msra.mxu0 0.0
    %2236 = vmatpush.xpose.msra.mxu0 0.0
    %2237 = vmatpush.xpose.msra.mxu0 0.0
    %2238 = vmatpush.xpose.msra.mxu0 0.0
    %2239 = vmatpush.xpose.msra.mxu0 0.0
    %2240 = vmatpush.xpose.msra.mxu0 0.0
    %2241 = vmatpush.xpose.msra.mxu0 0.0
    %v2242 = vand.u32 %v2063, 4294901760
    %2243 = vmatpush.xpose.msra.mxu0 %v2242
    %v2244 = vand.u32 %v2061, 4294901760
    %2245 = vmatpush.xpose.msra.mxu0 %v2244
    %v2246 = vand.u32 %v2057, 4294901760
    %2247 = vmatmul.f32.gmra.mxu0 %v2246
    %v2248 = vpop.f32.mrf.mxu0
    %v2249 = vadd.f32 %v2222, %v2248
    %v2250 = vand.u32 %v2059, 4294901760
    %2251 = vmatmul.f32.gmra.mxu0 %v2250
    %v2252 = vpop.f32.mrf.mxu0
    %v2253 = vadd.f32 %v2226, %v2252
    %2254 = vdwg.mxu0
    %2255 = vrot.lane.b32.xlu0 %v1591, 64
    %v2256 = vpop.permute.xlu0 %2255
    %2257 = vrot.lane.b32.xlu0 %v1593, 64
    %v2258 = vpop.permute.xlu0 %2257
    %v2259 = vsel %vm1652, %v2256, 0
    %v2261 = vsel %vm1652, %v2258, 0
    %v2263 = vsel %vm1652, %v1591, 0
    %v2265 = vsel %vm1652, %v1593, 0
    %2267 = vmatpush.xpose.msra.mxu0 0.0
    %2268 = vmatpush.xpose.msra.mxu0 0.0
    %2269 = vmatpush.xpose.msra.mxu0 0.0
    %2270 = vmatpush.xpose.msra.mxu0 0.0
    %2271 = vmatpush.xpose.msra.mxu0 0.0
    %2272 = vmatpush.xpose.msra.mxu0 0.0
    %2273 = vmatpush.xpose.msra.mxu0 0.0
    %2274 = vmatpush.xpose.msra.mxu0 0.0
    %2275 = vmatpush.xpose.msra.mxu0 0.0
    %2276 = vmatpush.xpose.msra.mxu0 0.0
    %2277 = vmatpush.xpose.msra.mxu0 0.0
    %2278 = vmatpush.xpose.msra.mxu0 0.0
    %2279 = vmatpush.xpose.msra.mxu0 0.0
    %2280 = vmatpush.xpose.msra.mxu0 0.0
    %v2281 = vand.u32 %v2265, 4294901760
    %2282 = vmatpush.xpose.msra.mxu0 %v2281
    %v2283 = vand.u32 %v2263, 4294901760
    %2284 = vmatpush.xpose.msra.mxu0 %v2283
    %v2285 = vand.u32 %v2259, 4294901760
    %v2286 = vsub.f32 %v2259, %v2285
    %v2287 = vand.u32 %v2286, 4294901760
    %v2288 = vsub.f32 %v2286, %v2287
    %v2289 = vand.u32 %v2288, 4294901760
    %2290 = vmatmul.f32.gmra.mxu0 %v2289
    %v2291 = vpop.f32.mrf.mxu0
    %v2292 = vadd.f32 0.0, %v2291
    %v2293 = vand.u32 %v2261, 4294901760
    %v2294 = vsub.f32 %v2261, %v2293
    %v2295 = vand.u32 %v2294, 4294901760
    %v2296 = vsub.f32 %v2294, %v2295
    %v2297 = vand.u32 %v2296, 4294901760
    %2298 = vmatmul.f32.gmra.mxu0 %v2297
    %v2299 = vpop.f32.mrf.mxu0
    %v2300 = vadd.f32 0.0, %v2299
    %2301 = vdwg.mxu0
    %2302 = vmatpush.xpose.msra.mxu0 0.0
    %2303 = vmatpush.xpose.msra.mxu0 0.0
    %2304 = vmatpush.xpose.msra.mxu0 0.0
    %2305 = vmatpush.xpose.msra.mxu0 0.0
    %2306 = vmatpush.xpose.msra.mxu0 0.0
    %2307 = vmatpush.xpose.msra.mxu0 0.0
    %2308 = vmatpush.xpose.msra.mxu0 0.0
    %2309 = vmatpush.xpose.msra.mxu0 0.0
    %2310 = vmatpush.xpose.msra.mxu0 0.0
    %2311 = vmatpush.xpose.msra.mxu0 0.0
    %2312 = vmatpush.xpose.msra.mxu0 0.0
    %2313 = vmatpush.xpose.msra.mxu0 0.0
    %2314 = vmatpush.xpose.msra.mxu0 0.0
    %2315 = vmatpush.xpose.msra.mxu0 0.0
    %v2316 = vand.u32 %v2265, 4294901760
    %v2317 = vsub.f32 %v2265, %v2316
    %v2318 = vand.u32 %v2317, 4294901760
    %v2319 = vsub.f32 %v2317, %v2318
    %v2320 = vand.u32 %v2319, 4294901760
    %2321 = vmatpush.xpose.msra.mxu0 %v2320
    %v2322 = vand.u32 %v2263, 4294901760
    %v2323 = vsub.f32 %v2263, %v2322
    %v2324 = vand.u32 %v2323, 4294901760
    %v2325 = vsub.f32 %v2323, %v2324
    %v2326 = vand.u32 %v2325, 4294901760
    %2327 = vmatpush.xpose.msra.mxu0 %v2326
    %v2328 = vand.u32 %v2259, 4294901760
    %2329 = vmatmul.f32.gmra.mxu0 %v2328
    %v2330 = vpop.f32.mrf.mxu0
    %v2331 = vadd.f32 %v2292, %v2330
    %v2332 = vand.u32 %v2261, 4294901760
    %2333 = vmatmul.f32.gmra.mxu0 %v2332
    %v2334 = vpop.f32.mrf.mxu0
    %v2335 = vadd.f32 %v2300, %v2334
    %2336 = vdwg.mxu0
    %2337 = vmatpush.xpose.msra.mxu0 0.0
    %2338 = vmatpush.xpose.msra.mxu0 0.0
    %2339 = vmatpush.xpose.msra.mxu0 0.0
    %2340 = vmatpush.xpose.msra.mxu0 0.0
    %2341 = vmatpush.xpose.msra.mxu0 0.0
    %2342 = vmatpush.xpose.msra.mxu0 0.0
    %2343 = vmatpush.xpose.msra.mxu0 0.0
    %2344 = vmatpush.xpose.msra.mxu0 0.0
    %2345 = vmatpush.xpose.msra.mxu0 0.0
    %2346 = vmatpush.xpose.msra.mxu0 0.0
    %2347 = vmatpush.xpose.msra.mxu0 0.0
    %2348 = vmatpush.xpose.msra.mxu0 0.0
    %2349 = vmatpush.xpose.msra.mxu0 0.0
    %2350 = vmatpush.xpose.msra.mxu0 0.0
    %v2351 = vand.u32 %v2265, 4294901760
    %v2352 = vsub.f32 %v2265, %v2351
    %2353 = vmatpush.xpose.msra.mxu0 %v2352
    %v2354 = vand.u32 %v2263, 4294901760
    %v2355 = vsub.f32 %v2263, %v2354
    %2356 = vmatpush.xpose.msra.mxu0 %v2355
    %v2357 = vand.u32 %v2259, 4294901760
    %v2358 = vsub.f32 %v2259, %v2357
    %2359 = vmatmul.f32.gmra.mxu0 %v2358
    %v2360 = vpop.f32.mrf.mxu0
    %v2361 = vadd.f32 %v2331, %v2360
    %v2362 = vand.u32 %v2261, 4294901760
    %v2363 = vsub.f32 %v2261, %v2362
    %2364 = vmatmul.f32.gmra.mxu0 %v2363
    %v2365 = vpop.f32.mrf.mxu0
    %v2366 = vadd.f32 %v2335, %v2365
    %2367 = vdwg.mxu0
    %2368 = vmatpush.xpose.msra.mxu0 0.0
    %2369 = vmatpush.xpose.msra.mxu0 0.0
    %2370 = vmatpush.xpose.msra.mxu0 0.0
    %2371 = vmatpush.xpose.msra.mxu0 0.0
    %2372 = vmatpush.xpose.msra.mxu0 0.0
    %2373 = vmatpush.xpose.msra.mxu0 0.0
    %2374 = vmatpush.xpose.msra.mxu0 0.0
    %2375 = vmatpush.xpose.msra.mxu0 0.0
    %2376 = vmatpush.xpose.msra.mxu0 0.0
    %2377 = vmatpush.xpose.msra.mxu0 0.0
    %2378 = vmatpush.xpose.msra.mxu0 0.0
    %2379 = vmatpush.xpose.msra.mxu0 0.0
    %2380 = vmatpush.xpose.msra.mxu0 0.0
    %2381 = vmatpush.xpose.msra.mxu0 0.0
    %v2382 = vand.u32 %v2265, 4294901760
    %2383 = vmatpush.xpose.msra.mxu0 %v2382
    %v2384 = vand.u32 %v2263, 4294901760
    %2385 = vmatpush.xpose.msra.mxu0 %v2384
    %v2386 = vand.u32 %v2259, 4294901760
    %v2387 = vsub.f32 %v2259, %v2386
    %v2388 = vand.u32 %v2387, 4294901760
    %2389 = vmatmul.f32.gmra.mxu0 %v2388
    %v2390 = vpop.f32.mrf.mxu0
    %v2391 = vadd.f32 %v2361, %v2390
    %v2392 = vand.u32 %v2261, 4294901760
    %v2393 = vsub.f32 %v2261, %v2392
    %v2394 = vand.u32 %v2393, 4294901760
    %2395 = vmatmul.f32.gmra.mxu0 %v2394
    %v2396 = vpop.f32.mrf.mxu0
    %v2397 = vadd.f32 %v2366, %v2396
    %2398 = vdwg.mxu0
    %2399 = vmatpush.xpose.msra.mxu0 0.0
    %2400 = vmatpush.xpose.msra.mxu0 0.0
    %2401 = vmatpush.xpose.msra.mxu0 0.0
    %2402 = vmatpush.xpose.msra.mxu0 0.0
    %2403 = vmatpush.xpose.msra.mxu0 0.0
    %2404 = vmatpush.xpose.msra.mxu0 0.0
    %2405 = vmatpush.xpose.msra.mxu0 0.0
    %2406 = vmatpush.xpose.msra.mxu0 0.0
    %2407 = vmatpush.xpose.msra.mxu0 0.0
    %2408 = vmatpush.xpose.msra.mxu0 0.0
    %2409 = vmatpush.xpose.msra.mxu0 0.0
    %2410 = vmatpush.xpose.msra.mxu0 0.0
    %2411 = vmatpush.xpose.msra.mxu0 0.0
    %2412 = vmatpush.xpose.msra.mxu0 0.0
    %v2413 = vand.u32 %v2265, 4294901760
    %v2414 = vsub.f32 %v2265, %v2413
    %v2415 = vand.u32 %v2414, 4294901760
    %2416 = vmatpush.xpose.msra.mxu0 %v2415
    %v2417 = vand.u32 %v2263, 4294901760
    %v2418 = vsub.f32 %v2263, %v2417
    %v2419 = vand.u32 %v2418, 4294901760
    %2420 = vmatpush.xpose.msra.mxu0 %v2419
    %v2421 = vand.u32 %v2259, 4294901760
    %2422 = vmatmul.f32.gmra.mxu0 %v2421
    %v2423 = vpop.f32.mrf.mxu0
    %v2424 = vadd.f32 %v2391, %v2423
    %v2425 = vand.u32 %v2261, 4294901760
    %2426 = vmatmul.f32.gmra.mxu0 %v2425
    %v2427 = vpop.f32.mrf.mxu0
    %v2428 = vadd.f32 %v2397, %v2427
    %2429 = vdwg.mxu0
    %2430 = vmatpush.xpose.msra.mxu0 0.0
    %2431 = vmatpush.xpose.msra.mxu0 0.0
    %2432 = vmatpush.xpose.msra.mxu0 0.0
    %2433 = vmatpush.xpose.msra.mxu0 0.0
    %2434 = vmatpush.xpose.msra.mxu0 0.0
    %2435 = vmatpush.xpose.msra.mxu0 0.0
    %2436 = vmatpush.xpose.msra.mxu0 0.0
    %2437 = vmatpush.xpose.msra.mxu0 0.0
    %2438 = vmatpush.xpose.msra.mxu0 0.0
    %2439 = vmatpush.xpose.msra.mxu0 0.0
    %2440 = vmatpush.xpose.msra.mxu0 0.0
    %2441 = vmatpush.xpose.msra.mxu0 0.0
    %2442 = vmatpush.xpose.msra.mxu0 0.0
    %2443 = vmatpush.xpose.msra.mxu0 0.0
    %v2444 = vand.u32 %v2265, 4294901760
    %2445 = vmatpush.xpose.msra.mxu0 %v2444
    %v2446 = vand.u32 %v2263, 4294901760
    %2447 = vmatpush.xpose.msra.mxu0 %v2446
    %v2448 = vand.u32 %v2259, 4294901760
    %2449 = vmatmul.f32.gmra.mxu0 %v2448
    %v2450 = vpop.f32.mrf.mxu0
    %v2451 = vadd.f32 %v2424, %v2450
    %v2452 = vand.u32 %v2261, 4294901760
    %2453 = vmatmul.f32.gmra.mxu0 %v2452
    %v2454 = vpop.f32.mrf.mxu0
    %v2455 = vadd.f32 %v2428, %v2454
    %2456 = vdwg.mxu0
    %2457 = vrot.lane.b32.xlu0 %v1286, 64
    %v2458 = vpop.permute.xlu0 %2457
    %2459 = vrot.lane.b32.xlu0 %v1290, 64
    %v2460 = vpop.permute.xlu0 %2459
    %v2461 = vsel %vm1652, %v2458, 0
    %v2463 = vsel %vm1652, %v2460, 0
    %v2465 = vsel %vm1652, %v1286, 0
    %v2467 = vsel %vm1652, %v1290, 0
    %2469 = vmatpush.xpose.msra.mxu0 0.0
    %2470 = vmatpush.xpose.msra.mxu0 0.0
    %2471 = vmatpush.xpose.msra.mxu0 0.0
    %2472 = vmatpush.xpose.msra.mxu0 0.0
    %2473 = vmatpush.xpose.msra.mxu0 0.0
    %2474 = vmatpush.xpose.msra.mxu0 0.0
    %2475 = vmatpush.xpose.msra.mxu0 0.0
    %2476 = vmatpush.xpose.msra.mxu0 0.0
    %2477 = vmatpush.xpose.msra.mxu0 0.0
    %2478 = vmatpush.xpose.msra.mxu0 0.0
    %2479 = vmatpush.xpose.msra.mxu0 0.0
    %2480 = vmatpush.xpose.msra.mxu0 0.0
    %2481 = vmatpush.xpose.msra.mxu0 0.0
    %2482 = vmatpush.xpose.msra.mxu0 0.0
    %v2483 = vand.u32 %v2467, 4294901760
    %2484 = vmatpush.xpose.msra.mxu0 %v2483
    %v2485 = vand.u32 %v2465, 4294901760
    %2486 = vmatpush.xpose.msra.mxu0 %v2485
    %v2487 = vand.u32 %v2461, 4294901760
    %v2488 = vsub.f32 %v2461, %v2487
    %v2489 = vand.u32 %v2488, 4294901760
    %v2490 = vsub.f32 %v2488, %v2489
    %v2491 = vand.u32 %v2490, 4294901760
    %2492 = vmatmul.f32.gmra.mxu0 %v2491
    %v2493 = vpop.f32.mrf.mxu0
    %v2494 = vadd.f32 0.0, %v2493
    %v2495 = vand.u32 %v2463, 4294901760
    %v2496 = vsub.f32 %v2463, %v2495
    %v2497 = vand.u32 %v2496, 4294901760
    %v2498 = vsub.f32 %v2496, %v2497
    %v2499 = vand.u32 %v2498, 4294901760
    %2500 = vmatmul.f32.gmra.mxu0 %v2499
    %v2501 = vpop.f32.mrf.mxu0
    %v2502 = vadd.f32 0.0, %v2501
    %2503 = vdwg.mxu0
    %2504 = vmatpush.xpose.msra.mxu0 0.0
    %2505 = vmatpush.xpose.msra.mxu0 0.0
    %2506 = vmatpush.xpose.msra.mxu0 0.0
    %2507 = vmatpush.xpose.msra.mxu0 0.0
    %2508 = vmatpush.xpose.msra.mxu0 0.0
    %2509 = vmatpush.xpose.msra.mxu0 0.0
    %2510 = vmatpush.xpose.msra.mxu0 0.0
    %2511 = vmatpush.xpose.msra.mxu0 0.0
    %2512 = vmatpush.xpose.msra.mxu0 0.0
    %2513 = vmatpush.xpose.msra.mxu0 0.0
    %2514 = vmatpush.xpose.msra.mxu0 0.0
    %2515 = vmatpush.xpose.msra.mxu0 0.0
    %2516 = vmatpush.xpose.msra.mxu0 0.0
    %2517 = vmatpush.xpose.msra.mxu0 0.0
    %v2518 = vand.u32 %v2467, 4294901760
    %v2519 = vsub.f32 %v2467, %v2518
    %v2520 = vand.u32 %v2519, 4294901760
    %v2521 = vsub.f32 %v2519, %v2520
    %v2522 = vand.u32 %v2521, 4294901760
    %2523 = vmatpush.xpose.msra.mxu0 %v2522
    %v2524 = vand.u32 %v2465, 4294901760
    %v2525 = vsub.f32 %v2465, %v2524
    %v2526 = vand.u32 %v2525, 4294901760
    %v2527 = vsub.f32 %v2525, %v2526
    %v2528 = vand.u32 %v2527, 4294901760
    %2529 = vmatpush.xpose.msra.mxu0 %v2528
    %v2530 = vand.u32 %v2461, 4294901760
    %2531 = vmatmul.f32.gmra.mxu0 %v2530
    %v2532 = vpop.f32.mrf.mxu0
    %v2533 = vadd.f32 %v2494, %v2532
    %v2534 = vand.u32 %v2463, 4294901760
    %2535 = vmatmul.f32.gmra.mxu0 %v2534
    %v2536 = vpop.f32.mrf.mxu0
    %v2537 = vadd.f32 %v2502, %v2536
    %2538 = vdwg.mxu0
    %2539 = vmatpush.xpose.msra.mxu0 0.0
    %2540 = vmatpush.xpose.msra.mxu0 0.0
    %2541 = vmatpush.xpose.msra.mxu0 0.0
    %2542 = vmatpush.xpose.msra.mxu0 0.0
    %2543 = vmatpush.xpose.msra.mxu0 0.0
    %2544 = vmatpush.xpose.msra.mxu0 0.0
    %2545 = vmatpush.xpose.msra.mxu0 0.0
    %2546 = vmatpush.xpose.msra.mxu0 0.0
    %2547 = vmatpush.xpose.msra.mxu0 0.0
    %2548 = vmatpush.xpose.msra.mxu0 0.0
    %2549 = vmatpush.xpose.msra.mxu0 0.0
    %2550 = vmatpush.xpose.msra.mxu0 0.0
    %2551 = vmatpush.xpose.msra.mxu0 0.0
    %2552 = vmatpush.xpose.msra.mxu0 0.0
    %v2553 = vand.u32 %v2467, 4294901760
    %v2554 = vsub.f32 %v2467, %v2553
    %2555 = vmatpush.xpose.msra.mxu0 %v2554
    %v2556 = vand.u32 %v2465, 4294901760
    %v2557 = vsub.f32 %v2465, %v2556
    %2558 = vmatpush.xpose.msra.mxu0 %v2557
    %v2559 = vand.u32 %v2461, 4294901760
    %v2560 = vsub.f32 %v2461, %v2559
    %2561 = vmatmul.f32.gmra.mxu0 %v2560
    %v2562 = vpop.f32.mrf.mxu0
    %v2563 = vadd.f32 %v2533, %v2562
    %v2564 = vand.u32 %v2463, 4294901760
    %v2565 = vsub.f32 %v2463, %v2564
    %2566 = vmatmul.f32.gmra.mxu0 %v2565
    %v2567 = vpop.f32.mrf.mxu0
    %v2568 = vadd.f32 %v2537, %v2567
    %2569 = vdwg.mxu0
    %2570 = vmatpush.xpose.msra.mxu0 0.0
    %2571 = vmatpush.xpose.msra.mxu0 0.0
    %2572 = vmatpush.xpose.msra.mxu0 0.0
    %2573 = vmatpush.xpose.msra.mxu0 0.0
    %2574 = vmatpush.xpose.msra.mxu0 0.0
    %2575 = vmatpush.xpose.msra.mxu0 0.0
    %2576 = vmatpush.xpose.msra.mxu0 0.0
    %2577 = vmatpush.xpose.msra.mxu0 0.0
    %2578 = vmatpush.xpose.msra.mxu0 0.0
    %2579 = vmatpush.xpose.msra.mxu0 0.0
    %2580 = vmatpush.xpose.msra.mxu0 0.0
    %2581 = vmatpush.xpose.msra.mxu0 0.0
    %2582 = vmatpush.xpose.msra.mxu0 0.0
    %2583 = vmatpush.xpose.msra.mxu0 0.0
    %v2584 = vand.u32 %v2467, 4294901760
    %2585 = vmatpush.xpose.msra.mxu0 %v2584
    %v2586 = vand.u32 %v2465, 4294901760
    %2587 = vmatpush.xpose.msra.mxu0 %v2586
    %v2588 = vand.u32 %v2461, 4294901760
    %v2589 = vsub.f32 %v2461, %v2588
    %v2590 = vand.u32 %v2589, 4294901760
    %2591 = vmatmul.f32.gmra.mxu0 %v2590
    %v2592 = vpop.f32.mrf.mxu0
    %v2593 = vadd.f32 %v2563, %v2592
    %v2594 = vand.u32 %v2463, 4294901760
    %v2595 = vsub.f32 %v2463, %v2594
    %v2596 = vand.u32 %v2595, 4294901760
    %2597 = vmatmul.f32.gmra.mxu0 %v2596
    %v2598 = vpop.f32.mrf.mxu0
    %v2599 = vadd.f32 %v2568, %v2598
    %2600 = vdwg.mxu0
    %2601 = vmatpush.xpose.msra.mxu0 0.0
    %2602 = vmatpush.xpose.msra.mxu0 0.0
    %2603 = vmatpush.xpose.msra.mxu0 0.0
    %2604 = vmatpush.xpose.msra.mxu0 0.0
    %2605 = vmatpush.xpose.msra.mxu0 0.0
    %2606 = vmatpush.xpose.msra.mxu0 0.0
    %2607 = vmatpush.xpose.msra.mxu0 0.0
    %2608 = vmatpush.xpose.msra.mxu0 0.0
    %2609 = vmatpush.xpose.msra.mxu0 0.0
    %2610 = vmatpush.xpose.msra.mxu0 0.0
    %2611 = vmatpush.xpose.msra.mxu0 0.0
    %2612 = vmatpush.xpose.msra.mxu0 0.0
    %2613 = vmatpush.xpose.msra.mxu0 0.0
    %2614 = vmatpush.xpose.msra.mxu0 0.0
    %v2615 = vand.u32 %v2467, 4294901760
    %v2616 = vsub.f32 %v2467, %v2615
    %v2617 = vand.u32 %v2616, 4294901760
    %2618 = vmatpush.xpose.msra.mxu0 %v2617
    %v2619 = vand.u32 %v2465, 4294901760
    %v2620 = vsub.f32 %v2465, %v2619
    %v2621 = vand.u32 %v2620, 4294901760
    %2622 = vmatpush.xpose.msra.mxu0 %v2621
    %v2623 = vand.u32 %v2461, 4294901760
    %2624 = vmatmul.f32.gmra.mxu0 %v2623
    %v2625 = vpop.f32.mrf.mxu0
    %v2626 = vadd.f32 %v2593, %v2625
    %v2627 = vand.u32 %v2463, 4294901760
    %2628 = vmatmul.f32.gmra.mxu0 %v2627
    %v2629 = vpop.f32.mrf.mxu0
    %v2630 = vadd.f32 %v2599, %v2629
    %2631 = vdwg.mxu0
    %2632 = vmatpush.xpose.msra.mxu0 0.0
    %2633 = vmatpush.xpose.msra.mxu0 0.0
    %2634 = vmatpush.xpose.msra.mxu0 0.0
    %2635 = vmatpush.xpose.msra.mxu0 0.0
    %2636 = vmatpush.xpose.msra.mxu0 0.0
    %2637 = vmatpush.xpose.msra.mxu0 0.0
    %2638 = vmatpush.xpose.msra.mxu0 0.0
    %2639 = vmatpush.xpose.msra.mxu0 0.0
    %2640 = vmatpush.xpose.msra.mxu0 0.0
    %2641 = vmatpush.xpose.msra.mxu0 0.0
    %2642 = vmatpush.xpose.msra.mxu0 0.0
    %2643 = vmatpush.xpose.msra.mxu0 0.0
    %2644 = vmatpush.xpose.msra.mxu0 0.0
    %2645 = vmatpush.xpose.msra.mxu0 0.0
    %v2646 = vand.u32 %v2467, 4294901760
    %2647 = vmatpush.xpose.msra.mxu0 %v2646
    %v2648 = vand.u32 %v2465, 4294901760
    %2649 = vmatpush.xpose.msra.mxu0 %v2648
    %v2650 = vand.u32 %v2461, 4294901760
    %2651 = vmatmul.f32.gmra.mxu0 %v2650
    %v2652 = vpop.f32.mrf.mxu0
    %v2653 = vadd.f32 %v2626, %v2652
    %v2654 = vand.u32 %v2463, 4294901760
    %2655 = vmatmul.f32.gmra.mxu0 %v2654
    %v2656 = vpop.f32.mrf.mxu0
    %v2657 = vadd.f32 %v2630, %v2656
    %2658 = vdwg.mxu0
    %2659 = vrot.lane.b32.xlu0 %v1597, 64
    %v2660 = vpop.permute.xlu0 %2659
    %2661 = vrot.lane.b32.xlu0 %v1599, 64
    %v2662 = vpop.permute.xlu0 %2661
    %v2663 = vsel %vm1652, %v2660, 0
    %v2665 = vsel %vm1652, %v2662, 0
    %v2667 = vsel %vm1652, %v1597, 0
    %v2669 = vsel %vm1652, %v1599, 0
    %2671 = vmatpush.xpose.msra.mxu0 0.0
    %2672 = vmatpush.xpose.msra.mxu0 0.0
    %2673 = vmatpush.xpose.msra.mxu0 0.0
    %2674 = vmatpush.xpose.msra.mxu0 0.0
    %2675 = vmatpush.xpose.msra.mxu0 0.0
    %2676 = vmatpush.xpose.msra.mxu0 0.0
    %2677 = vmatpush.xpose.msra.mxu0 0.0
    %2678 = vmatpush.xpose.msra.mxu0 0.0
    %2679 = vmatpush.xpose.msra.mxu0 0.0
    %2680 = vmatpush.xpose.msra.mxu0 0.0
    %2681 = vmatpush.xpose.msra.mxu0 0.0
    %2682 = vmatpush.xpose.msra.mxu0 0.0
    %2683 = vmatpush.xpose.msra.mxu0 0.0
    %2684 = vmatpush.xpose.msra.mxu0 0.0
    %v2685 = vand.u32 %v2669, 4294901760
    %2686 = vmatpush.xpose.msra.mxu0 %v2685
    %v2687 = vand.u32 %v2667, 4294901760
    %2688 = vmatpush.xpose.msra.mxu0 %v2687
    %v2689 = vand.u32 %v2663, 4294901760
    %v2690 = vsub.f32 %v2663, %v2689
    %v2691 = vand.u32 %v2690, 4294901760
    %v2692 = vsub.f32 %v2690, %v2691
    %v2693 = vand.u32 %v2692, 4294901760
    %2694 = vmatmul.f32.gmra.mxu0 %v2693
    %v2695 = vpop.f32.mrf.mxu0
    %v2696 = vadd.f32 0.0, %v2695
    %v2697 = vand.u32 %v2665, 4294901760
    %v2698 = vsub.f32 %v2665, %v2697
    %v2699 = vand.u32 %v2698, 4294901760
    %v2700 = vsub.f32 %v2698, %v2699
    %v2701 = vand.u32 %v2700, 4294901760
    %2702 = vmatmul.f32.gmra.mxu0 %v2701
    %v2703 = vpop.f32.mrf.mxu0
    %v2704 = vadd.f32 0.0, %v2703
    %2705 = vdwg.mxu0
    %2706 = vmatpush.xpose.msra.mxu0 0.0
    %2707 = vmatpush.xpose.msra.mxu0 0.0
    %2708 = vmatpush.xpose.msra.mxu0 0.0
    %2709 = vmatpush.xpose.msra.mxu0 0.0
    %2710 = vmatpush.xpose.msra.mxu0 0.0
    %2711 = vmatpush.xpose.msra.mxu0 0.0
    %2712 = vmatpush.xpose.msra.mxu0 0.0
    %2713 = vmatpush.xpose.msra.mxu0 0.0
    %2714 = vmatpush.xpose.msra.mxu0 0.0
    %2715 = vmatpush.xpose.msra.mxu0 0.0
    %2716 = vmatpush.xpose.msra.mxu0 0.0
    %2717 = vmatpush.xpose.msra.mxu0 0.0
    %2718 = vmatpush.xpose.msra.mxu0 0.0
    %2719 = vmatpush.xpose.msra.mxu0 0.0
    %v2720 = vand.u32 %v2669, 4294901760
    %v2721 = vsub.f32 %v2669, %v2720
    %v2722 = vand.u32 %v2721, 4294901760
    %v2723 = vsub.f32 %v2721, %v2722
    %v2724 = vand.u32 %v2723, 4294901760
    %2725 = vmatpush.xpose.msra.mxu0 %v2724
    %v2726 = vand.u32 %v2667, 4294901760
    %v2727 = vsub.f32 %v2667, %v2726
    %v2728 = vand.u32 %v2727, 4294901760
    %v2729 = vsub.f32 %v2727, %v2728
    %v2730 = vand.u32 %v2729, 4294901760
    %2731 = vmatpush.xpose.msra.mxu0 %v2730
    %v2732 = vand.u32 %v2663, 4294901760
    %2733 = vmatmul.f32.gmra.mxu0 %v2732
    %v2734 = vpop.f32.mrf.mxu0
    %v2735 = vadd.f32 %v2696, %v2734
    %v2736 = vand.u32 %v2665, 4294901760
    %2737 = vmatmul.f32.gmra.mxu0 %v2736
    %v2738 = vpop.f32.mrf.mxu0
    %v2739 = vadd.f32 %v2704, %v2738
    %2740 = vdwg.mxu0
    %2741 = vmatpush.xpose.msra.mxu0 0.0
    %2742 = vmatpush.xpose.msra.mxu0 0.0
    %2743 = vmatpush.xpose.msra.mxu0 0.0
    %2744 = vmatpush.xpose.msra.mxu0 0.0
    %2745 = vmatpush.xpose.msra.mxu0 0.0
    %2746 = vmatpush.xpose.msra.mxu0 0.0
    %2747 = vmatpush.xpose.msra.mxu0 0.0
    %2748 = vmatpush.xpose.msra.mxu0 0.0
    %2749 = vmatpush.xpose.msra.mxu0 0.0
    %2750 = vmatpush.xpose.msra.mxu0 0.0
    %2751 = vmatpush.xpose.msra.mxu0 0.0
    %2752 = vmatpush.xpose.msra.mxu0 0.0
    %2753 = vmatpush.xpose.msra.mxu0 0.0
    %2754 = vmatpush.xpose.msra.mxu0 0.0
    %v2755 = vand.u32 %v2669, 4294901760
    %v2756 = vsub.f32 %v2669, %v2755
    %2757 = vmatpush.xpose.msra.mxu0 %v2756
    %v2758 = vand.u32 %v2667, 4294901760
    %v2759 = vsub.f32 %v2667, %v2758
    %2760 = vmatpush.xpose.msra.mxu0 %v2759
    %v2761 = vand.u32 %v2663, 4294901760
    %v2762 = vsub.f32 %v2663, %v2761
    %2763 = vmatmul.f32.gmra.mxu0 %v2762
    %v2764 = vpop.f32.mrf.mxu0
    %v2765 = vadd.f32 %v2735, %v2764
    %v2766 = vand.u32 %v2665, 4294901760
    %v2767 = vsub.f32 %v2665, %v2766
    %2768 = vmatmul.f32.gmra.mxu0 %v2767
    %v2769 = vpop.f32.mrf.mxu0
    %v2770 = vadd.f32 %v2739, %v2769
    %2771 = vdwg.mxu0
    %2772 = vmatpush.xpose.msra.mxu0 0.0
    %2773 = vmatpush.xpose.msra.mxu0 0.0
    %2774 = vmatpush.xpose.msra.mxu0 0.0
    %2775 = vmatpush.xpose.msra.mxu0 0.0
    %2776 = vmatpush.xpose.msra.mxu0 0.0
    %2777 = vmatpush.xpose.msra.mxu0 0.0
    %2778 = vmatpush.xpose.msra.mxu0 0.0
    %2779 = vmatpush.xpose.msra.mxu0 0.0
    %2780 = vmatpush.xpose.msra.mxu0 0.0
    %2781 = vmatpush.xpose.msra.mxu0 0.0
    %2782 = vmatpush.xpose.msra.mxu0 0.0
    %2783 = vmatpush.xpose.msra.mxu0 0.0
    %2784 = vmatpush.xpose.msra.mxu0 0.0
    %2785 = vmatpush.xpose.msra.mxu0 0.0
    %v2786 = vand.u32 %v2669, 4294901760
    %2787 = vmatpush.xpose.msra.mxu0 %v2786
    %v2788 = vand.u32 %v2667, 4294901760
    %2789 = vmatpush.xpose.msra.mxu0 %v2788
    %v2790 = vand.u32 %v2663, 4294901760
    %v2791 = vsub.f32 %v2663, %v2790
    %v2792 = vand.u32 %v2791, 4294901760
    %2793 = vmatmul.f32.gmra.mxu0 %v2792
    %v2794 = vpop.f32.mrf.mxu0
    %v2795 = vadd.f32 %v2765, %v2794
    %v2796 = vand.u32 %v2665, 4294901760
    %v2797 = vsub.f32 %v2665, %v2796
    %v2798 = vand.u32 %v2797, 4294901760
    %2799 = vmatmul.f32.gmra.mxu0 %v2798
    %v2800 = vpop.f32.mrf.mxu0
    %v2801 = vadd.f32 %v2770, %v2800
    %2802 = vdwg.mxu0
    %2803 = vmatpush.xpose.msra.mxu0 0.0
    %2804 = vmatpush.xpose.msra.mxu0 0.0
    %2805 = vmatpush.xpose.msra.mxu0 0.0
    %2806 = vmatpush.xpose.msra.mxu0 0.0
    %2807 = vmatpush.xpose.msra.mxu0 0.0
    %2808 = vmatpush.xpose.msra.mxu0 0.0
    %2809 = vmatpush.xpose.msra.mxu0 0.0
    %2810 = vmatpush.xpose.msra.mxu0 0.0
    %2811 = vmatpush.xpose.msra.mxu0 0.0
    %2812 = vmatpush.xpose.msra.mxu0 0.0
    %2813 = vmatpush.xpose.msra.mxu0 0.0
    %2814 = vmatpush.xpose.msra.mxu0 0.0
    %2815 = vmatpush.xpose.msra.mxu0 0.0
    %2816 = vmatpush.xpose.msra.mxu0 0.0
    %v2817 = vand.u32 %v2669, 4294901760
    %v2818 = vsub.f32 %v2669, %v2817
    %v2819 = vand.u32 %v2818, 4294901760
    %2820 = vmatpush.xpose.msra.mxu0 %v2819
    %v2821 = vand.u32 %v2667, 4294901760
    %v2822 = vsub.f32 %v2667, %v2821
    %v2823 = vand.u32 %v2822, 4294901760
    %2824 = vmatpush.xpose.msra.mxu0 %v2823
    %v2825 = vand.u32 %v2663, 4294901760
    %2826 = vmatmul.f32.gmra.mxu0 %v2825
    %v2827 = vpop.f32.mrf.mxu0
    %v2828 = vadd.f32 %v2795, %v2827
    %v2829 = vand.u32 %v2665, 4294901760
    %2830 = vmatmul.f32.gmra.mxu0 %v2829
    %v2831 = vpop.f32.mrf.mxu0
    %v2832 = vadd.f32 %v2801, %v2831
    %2833 = vdwg.mxu0
    %2834 = vmatpush.xpose.msra.mxu0 0.0
    %2835 = vmatpush.xpose.msra.mxu0 0.0
    %2836 = vmatpush.xpose.msra.mxu0 0.0
    %2837 = vmatpush.xpose.msra.mxu0 0.0
    %2838 = vmatpush.xpose.msra.mxu0 0.0
    %2839 = vmatpush.xpose.msra.mxu0 0.0
    %2840 = vmatpush.xpose.msra.mxu0 0.0
    %2841 = vmatpush.xpose.msra.mxu0 0.0
    %2842 = vmatpush.xpose.msra.mxu0 0.0
    %2843 = vmatpush.xpose.msra.mxu0 0.0
    %2844 = vmatpush.xpose.msra.mxu0 0.0
    %2845 = vmatpush.xpose.msra.mxu0 0.0
    %2846 = vmatpush.xpose.msra.mxu0 0.0
    %2847 = vmatpush.xpose.msra.mxu0 0.0
    %v2848 = vand.u32 %v2669, 4294901760
    %2849 = vmatpush.xpose.msra.mxu0 %v2848
    %v2850 = vand.u32 %v2667, 4294901760
    %2851 = vmatpush.xpose.msra.mxu0 %v2850
    %v2852 = vand.u32 %v2663, 4294901760
    %2853 = vmatmul.f32.gmra.mxu0 %v2852
    %v2854 = vpop.f32.mrf.mxu0
    %v2855 = vadd.f32 %v2828, %v2854
    %v2856 = vand.u32 %v2665, 4294901760
    %2857 = vmatmul.f32.gmra.mxu0 %v2856
    %v2858 = vpop.f32.mrf.mxu0
    %v2859 = vadd.f32 %v2832, %v2858
    %2860 = vdwg.mxu0
    %2861 = vrot.lane.b32.xlu0 %v1601, 64
    %v2862 = vpop.permute.xlu0 %2861
    %2863 = vrot.lane.b32.xlu0 %v1603, 64
    %v2864 = vpop.permute.xlu0 %2863
    %v2865 = vsel %vm1652, %v2862, 0
    %v2867 = vsel %vm1652, %v2864, 0
    %v2869 = vsel %vm1652, %v1601, 0
    %v2871 = vsel %vm1652, %v1603, 0
    %2873 = vmatpush.xpose.msra.mxu0 0.0
    %2874 = vmatpush.xpose.msra.mxu0 0.0
    %2875 = vmatpush.xpose.msra.mxu0 0.0
    %2876 = vmatpush.xpose.msra.mxu0 0.0
    %2877 = vmatpush.xpose.msra.mxu0 0.0
    %2878 = vmatpush.xpose.msra.mxu0 0.0
    %2879 = vmatpush.xpose.msra.mxu0 0.0
    %2880 = vmatpush.xpose.msra.mxu0 0.0
    %2881 = vmatpush.xpose.msra.mxu0 0.0
    %2882 = vmatpush.xpose.msra.mxu0 0.0
    %2883 = vmatpush.xpose.msra.mxu0 0.0
    %2884 = vmatpush.xpose.msra.mxu0 0.0
    %2885 = vmatpush.xpose.msra.mxu0 0.0
    %2886 = vmatpush.xpose.msra.mxu0 0.0
    %v2887 = vand.u32 %v2871, 4294901760
    %2888 = vmatpush.xpose.msra.mxu0 %v2887
    %v2889 = vand.u32 %v2869, 4294901760
    %2890 = vmatpush.xpose.msra.mxu0 %v2889
    %v2891 = vand.u32 %v2865, 4294901760
    %v2892 = vsub.f32 %v2865, %v2891
    %v2893 = vand.u32 %v2892, 4294901760
    %v2894 = vsub.f32 %v2892, %v2893
    %v2895 = vand.u32 %v2894, 4294901760
    %2896 = vmatmul.f32.gmra.mxu0 %v2895
    %v2897 = vpop.f32.mrf.mxu0
    %v2898 = vadd.f32 0.0, %v2897
    %v2899 = vand.u32 %v2867, 4294901760
    %v2900 = vsub.f32 %v2867, %v2899
    %v2901 = vand.u32 %v2900, 4294901760
    %v2902 = vsub.f32 %v2900, %v2901
    %v2903 = vand.u32 %v2902, 4294901760
    %2904 = vmatmul.f32.gmra.mxu0 %v2903
    %v2905 = vpop.f32.mrf.mxu0
    %v2906 = vadd.f32 0.0, %v2905
    %2907 = vdwg.mxu0
    %2908 = vmatpush.xpose.msra.mxu0 0.0
    %2909 = vmatpush.xpose.msra.mxu0 0.0
    %2910 = vmatpush.xpose.msra.mxu0 0.0
    %2911 = vmatpush.xpose.msra.mxu0 0.0
    %2912 = vmatpush.xpose.msra.mxu0 0.0
    %2913 = vmatpush.xpose.msra.mxu0 0.0
    %2914 = vmatpush.xpose.msra.mxu0 0.0
    %2915 = vmatpush.xpose.msra.mxu0 0.0
    %2916 = vmatpush.xpose.msra.mxu0 0.0
    %2917 = vmatpush.xpose.msra.mxu0 0.0
    %2918 = vmatpush.xpose.msra.mxu0 0.0
    %2919 = vmatpush.xpose.msra.mxu0 0.0
    %2920 = vmatpush.xpose.msra.mxu0 0.0
    %2921 = vmatpush.xpose.msra.mxu0 0.0
    %v2922 = vand.u32 %v2871, 4294901760
    %v2923 = vsub.f32 %v2871, %v2922
    %v2924 = vand.u32 %v2923, 4294901760
    %v2925 = vsub.f32 %v2923, %v2924
    %v2926 = vand.u32 %v2925, 4294901760
    %2927 = vmatpush.xpose.msra.mxu0 %v2926
    %v2928 = vand.u32 %v2869, 4294901760
    %v2929 = vsub.f32 %v2869, %v2928
    %v2930 = vand.u32 %v2929, 4294901760
    %v2931 = vsub.f32 %v2929, %v2930
    %v2932 = vand.u32 %v2931, 4294901760
    %2933 = vmatpush.xpose.msra.mxu0 %v2932
    %v2934 = vand.u32 %v2865, 4294901760
    %2935 = vmatmul.f32.gmra.mxu0 %v2934
    %v2936 = vpop.f32.mrf.mxu0
    %v2937 = vadd.f32 %v2898, %v2936
    %v2938 = vand.u32 %v2867, 4294901760
    %2939 = vmatmul.f32.gmra.mxu0 %v2938
    %v2940 = vpop.f32.mrf.mxu0
    %v2941 = vadd.f32 %v2906, %v2940
    %2942 = vdwg.mxu0
    %2943 = vmatpush.xpose.msra.mxu0 0.0
    %2944 = vmatpush.xpose.msra.mxu0 0.0
    %2945 = vmatpush.xpose.msra.mxu0 0.0
    %2946 = vmatpush.xpose.msra.mxu0 0.0
    %2947 = vmatpush.xpose.msra.mxu0 0.0
    %2948 = vmatpush.xpose.msra.mxu0 0.0
    %2949 = vmatpush.xpose.msra.mxu0 0.0
    %2950 = vmatpush.xpose.msra.mxu0 0.0
    %2951 = vmatpush.xpose.msra.mxu0 0.0
    %2952 = vmatpush.xpose.msra.mxu0 0.0
    %2953 = vmatpush.xpose.msra.mxu0 0.0
    %2954 = vmatpush.xpose.msra.mxu0 0.0
    %2955 = vmatpush.xpose.msra.mxu0 0.0
    %2956 = vmatpush.xpose.msra.mxu0 0.0
    %v2957 = vand.u32 %v2871, 4294901760
    %v2958 = vsub.f32 %v2871, %v2957
    %2959 = vmatpush.xpose.msra.mxu0 %v2958
    %v2960 = vand.u32 %v2869, 4294901760
    %v2961 = vsub.f32 %v2869, %v2960
    %2962 = vmatpush.xpose.msra.mxu0 %v2961
    %v2963 = vand.u32 %v2865, 4294901760
    %v2964 = vsub.f32 %v2865, %v2963
    %2965 = vmatmul.f32.gmra.mxu0 %v2964
    %v2966 = vpop.f32.mrf.mxu0
    %v2967 = vadd.f32 %v2937, %v2966
    %v2968 = vand.u32 %v2867, 4294901760
    %v2969 = vsub.f32 %v2867, %v2968
    %2970 = vmatmul.f32.gmra.mxu0 %v2969
    %v2971 = vpop.f32.mrf.mxu0
    %v2972 = vadd.f32 %v2941, %v2971
    %2973 = vdwg.mxu0
    %2974 = vmatpush.xpose.msra.mxu0 0.0
    %2975 = vmatpush.xpose.msra.mxu0 0.0
    %2976 = vmatpush.xpose.msra.mxu0 0.0
    %2977 = vmatpush.xpose.msra.mxu0 0.0
    %2978 = vmatpush.xpose.msra.mxu0 0.0
    %2979 = vmatpush.xpose.msra.mxu0 0.0
    %2980 = vmatpush.xpose.msra.mxu0 0.0
    %2981 = vmatpush.xpose.msra.mxu0 0.0
    %2982 = vmatpush.xpose.msra.mxu0 0.0
    %2983 = vmatpush.xpose.msra.mxu0 0.0
    %2984 = vmatpush.xpose.msra.mxu0 0.0
    %2985 = vmatpush.xpose.msra.mxu0 0.0
    %2986 = vmatpush.xpose.msra.mxu0 0.0
    %2987 = vmatpush.xpose.msra.mxu0 0.0
    %v2988 = vand.u32 %v2871, 4294901760
    %2989 = vmatpush.xpose.msra.mxu0 %v2988
    %v2990 = vand.u32 %v2869, 4294901760
    %2991 = vmatpush.xpose.msra.mxu0 %v2990
    %v2992 = vand.u32 %v2865, 4294901760
    %v2993 = vsub.f32 %v2865, %v2992
    %v2994 = vand.u32 %v2993, 4294901760
    %2995 = vmatmul.f32.gmra.mxu0 %v2994
    %v2996 = vpop.f32.mrf.mxu0
    %v2997 = vadd.f32 %v2967, %v2996
    %v2998 = vand.u32 %v2867, 4294901760
    %v2999 = vsub.f32 %v2867, %v2998
    %v3000 = vand.u32 %v2999, 4294901760
    %3001 = vmatmul.f32.gmra.mxu0 %v3000
    %v3002 = vpop.f32.mrf.mxu0
    %v3003 = vadd.f32 %v2972, %v3002
    %3004 = vdwg.mxu0
    %3005 = vmatpush.xpose.msra.mxu0 0.0
    %3006 = vmatpush.xpose.msra.mxu0 0.0
    %3007 = vmatpush.xpose.msra.mxu0 0.0
    %3008 = vmatpush.xpose.msra.mxu0 0.0
    %3009 = vmatpush.xpose.msra.mxu0 0.0
    %3010 = vmatpush.xpose.msra.mxu0 0.0
    %3011 = vmatpush.xpose.msra.mxu0 0.0
    %3012 = vmatpush.xpose.msra.mxu0 0.0
    %3013 = vmatpush.xpose.msra.mxu0 0.0
    %3014 = vmatpush.xpose.msra.mxu0 0.0
    %3015 = vmatpush.xpose.msra.mxu0 0.0
    %3016 = vmatpush.xpose.msra.mxu0 0.0
    %3017 = vmatpush.xpose.msra.mxu0 0.0
    %3018 = vmatpush.xpose.msra.mxu0 0.0
    %v3019 = vand.u32 %v2871, 4294901760
    %v3020 = vsub.f32 %v2871, %v3019
    %v3021 = vand.u32 %v3020, 4294901760
    %3022 = vmatpush.xpose.msra.mxu0 %v3021
    %v3023 = vand.u32 %v2869, 4294901760
    %v3024 = vsub.f32 %v2869, %v3023
    %v3025 = vand.u32 %v3024, 4294901760
    %3026 = vmatpush.xpose.msra.mxu0 %v3025
    %v3027 = vand.u32 %v2865, 4294901760
    %3028 = vmatmul.f32.gmra.mxu0 %v3027
    %v3029 = vpop.f32.mrf.mxu0
    %v3030 = vadd.f32 %v2997, %v3029
    %v3031 = vand.u32 %v2867, 4294901760
    %3032 = vmatmul.f32.gmra.mxu0 %v3031
    %v3033 = vpop.f32.mrf.mxu0
    %v3034 = vadd.f32 %v3003, %v3033
    %3035 = vdwg.mxu0
    %3036 = vmatpush.xpose.msra.mxu0 0.0
    %3037 = vmatpush.xpose.msra.mxu0 0.0
    %3038 = vmatpush.xpose.msra.mxu0 0.0
    %3039 = vmatpush.xpose.msra.mxu0 0.0
    %3040 = vmatpush.xpose.msra.mxu0 0.0
    %3041 = vmatpush.xpose.msra.mxu0 0.0
    %3042 = vmatpush.xpose.msra.mxu0 0.0
    %3043 = vmatpush.xpose.msra.mxu0 0.0
    %3044 = vmatpush.xpose.msra.mxu0 0.0
    %3045 = vmatpush.xpose.msra.mxu0 0.0
    %3046 = vmatpush.xpose.msra.mxu0 0.0
    %3047 = vmatpush.xpose.msra.mxu0 0.0
    %3048 = vmatpush.xpose.msra.mxu0 0.0
    %3049 = vmatpush.xpose.msra.mxu0 0.0
    %v3050 = vand.u32 %v2871, 4294901760
    %3051 = vmatpush.xpose.msra.mxu0 %v3050
    %v3052 = vand.u32 %v2869, 4294901760
    %3053 = vmatpush.xpose.msra.mxu0 %v3052
    %v3054 = vand.u32 %v2865, 4294901760
    %3055 = vmatmul.f32.gmra.mxu0 %v3054
    %v3056 = vpop.f32.mrf.mxu0
    %v3057 = vadd.f32 %v3030, %v3056
    %v3058 = vand.u32 %v2867, 4294901760
    %3059 = vmatmul.f32.gmra.mxu0 %v3058
    %v3060 = vpop.f32.mrf.mxu0
    %v3061 = vadd.f32 %v3034, %v3060
    %3062 = vdwg.mxu0
    %3063 = vrot.lane.b32.xlu0 %v1605, 64
    %v3064 = vpop.permute.xlu0 %3063
    %3065 = vrot.lane.b32.xlu0 %v1607, 64
    %v3066 = vpop.permute.xlu0 %3065
    %v3067 = vsel %vm1652, %v3064, 0
    %v3069 = vsel %vm1652, %v3066, 0
    %v3071 = vsel %vm1652, %v1605, 0
    %v3073 = vsel %vm1652, %v1607, 0
    %3075 = vmatpush.xpose.msra.mxu0 0.0
    %3076 = vmatpush.xpose.msra.mxu0 0.0
    %3077 = vmatpush.xpose.msra.mxu0 0.0
    %3078 = vmatpush.xpose.msra.mxu0 0.0
    %3079 = vmatpush.xpose.msra.mxu0 0.0
    %3080 = vmatpush.xpose.msra.mxu0 0.0
    %3081 = vmatpush.xpose.msra.mxu0 0.0
    %3082 = vmatpush.xpose.msra.mxu0 0.0
    %3083 = vmatpush.xpose.msra.mxu0 0.0
    %3084 = vmatpush.xpose.msra.mxu0 0.0
    %3085 = vmatpush.xpose.msra.mxu0 0.0
    %3086 = vmatpush.xpose.msra.mxu0 0.0
    %3087 = vmatpush.xpose.msra.mxu0 0.0
    %3088 = vmatpush.xpose.msra.mxu0 0.0
    %v3089 = vand.u32 %v3073, 4294901760
    %3090 = vmatpush.xpose.msra.mxu0 %v3089
    %v3091 = vand.u32 %v3071, 4294901760
    %3092 = vmatpush.xpose.msra.mxu0 %v3091
    %v3093 = vand.u32 %v3067, 4294901760
    %v3094 = vsub.f32 %v3067, %v3093
    %v3095 = vand.u32 %v3094, 4294901760
    %v3096 = vsub.f32 %v3094, %v3095
    %v3097 = vand.u32 %v3096, 4294901760
    %3098 = vmatmul.f32.gmra.mxu0 %v3097
    %v3099 = vpop.f32.mrf.mxu0
    %v3100 = vadd.f32 0.0, %v3099
    %v3101 = vand.u32 %v3069, 4294901760
    %v3102 = vsub.f32 %v3069, %v3101
    %v3103 = vand.u32 %v3102, 4294901760
    %v3104 = vsub.f32 %v3102, %v3103
    %v3105 = vand.u32 %v3104, 4294901760
    %3106 = vmatmul.f32.gmra.mxu0 %v3105
    %v3107 = vpop.f32.mrf.mxu0
    %v3108 = vadd.f32 0.0, %v3107
    %3109 = vdwg.mxu0
    %3110 = vmatpush.xpose.msra.mxu0 0.0
    %3111 = vmatpush.xpose.msra.mxu0 0.0
    %3112 = vmatpush.xpose.msra.mxu0 0.0
    %3113 = vmatpush.xpose.msra.mxu0 0.0
    %3114 = vmatpush.xpose.msra.mxu0 0.0
    %3115 = vmatpush.xpose.msra.mxu0 0.0
    %3116 = vmatpush.xpose.msra.mxu0 0.0
    %3117 = vmatpush.xpose.msra.mxu0 0.0
    %3118 = vmatpush.xpose.msra.mxu0 0.0
    %3119 = vmatpush.xpose.msra.mxu0 0.0
    %3120 = vmatpush.xpose.msra.mxu0 0.0
    %3121 = vmatpush.xpose.msra.mxu0 0.0
    %3122 = vmatpush.xpose.msra.mxu0 0.0
    %3123 = vmatpush.xpose.msra.mxu0 0.0
    %v3124 = vand.u32 %v3073, 4294901760
    %v3125 = vsub.f32 %v3073, %v3124
    %v3126 = vand.u32 %v3125, 4294901760
    %v3127 = vsub.f32 %v3125, %v3126
    %v3128 = vand.u32 %v3127, 4294901760
    %3129 = vmatpush.xpose.msra.mxu0 %v3128
    %v3130 = vand.u32 %v3071, 4294901760
    %v3131 = vsub.f32 %v3071, %v3130
    %v3132 = vand.u32 %v3131, 4294901760
    %v3133 = vsub.f32 %v3131, %v3132
    %v3134 = vand.u32 %v3133, 4294901760
    %3135 = vmatpush.xpose.msra.mxu0 %v3134
    %v3136 = vand.u32 %v3067, 4294901760
    %3137 = vmatmul.f32.gmra.mxu0 %v3136
    %v3138 = vpop.f32.mrf.mxu0
    %v3139 = vadd.f32 %v3100, %v3138
    %v3140 = vand.u32 %v3069, 4294901760
    %3141 = vmatmul.f32.gmra.mxu0 %v3140
    %v3142 = vpop.f32.mrf.mxu0
    %v3143 = vadd.f32 %v3108, %v3142
    %3144 = vdwg.mxu0
    %3145 = vmatpush.xpose.msra.mxu0 0.0
    %3146 = vmatpush.xpose.msra.mxu0 0.0
    %3147 = vmatpush.xpose.msra.mxu0 0.0
    %3148 = vmatpush.xpose.msra.mxu0 0.0
    %3149 = vmatpush.xpose.msra.mxu0 0.0
    %3150 = vmatpush.xpose.msra.mxu0 0.0
    %3151 = vmatpush.xpose.msra.mxu0 0.0
    %3152 = vmatpush.xpose.msra.mxu0 0.0
    %3153 = vmatpush.xpose.msra.mxu0 0.0
    %3154 = vmatpush.xpose.msra.mxu0 0.0
    %3155 = vmatpush.xpose.msra.mxu0 0.0
    %3156 = vmatpush.xpose.msra.mxu0 0.0
    %3157 = vmatpush.xpose.msra.mxu0 0.0
    %3158 = vmatpush.xpose.msra.mxu0 0.0
    %v3159 = vand.u32 %v3073, 4294901760
    %v3160 = vsub.f32 %v3073, %v3159
    %3161 = vmatpush.xpose.msra.mxu0 %v3160
    %v3162 = vand.u32 %v3071, 4294901760
    %v3163 = vsub.f32 %v3071, %v3162
    %3164 = vmatpush.xpose.msra.mxu0 %v3163
    %v3165 = vand.u32 %v3067, 4294901760
    %v3166 = vsub.f32 %v3067, %v3165
    %3167 = vmatmul.f32.gmra.mxu0 %v3166
    %v3168 = vpop.f32.mrf.mxu0
    %v3169 = vadd.f32 %v3139, %v3168
    %v3170 = vand.u32 %v3069, 4294901760
    %v3171 = vsub.f32 %v3069, %v3170
    %3172 = vmatmul.f32.gmra.mxu0 %v3171
    %v3173 = vpop.f32.mrf.mxu0
    %v3174 = vadd.f32 %v3143, %v3173
    %3175 = vdwg.mxu0
    %3176 = vmatpush.xpose.msra.mxu0 0.0
    %3177 = vmatpush.xpose.msra.mxu0 0.0
    %3178 = vmatpush.xpose.msra.mxu0 0.0
    %3179 = vmatpush.xpose.msra.mxu0 0.0
    %3180 = vmatpush.xpose.msra.mxu0 0.0
    %3181 = vmatpush.xpose.msra.mxu0 0.0
    %3182 = vmatpush.xpose.msra.mxu0 0.0
    %3183 = vmatpush.xpose.msra.mxu0 0.0
    %3184 = vmatpush.xpose.msra.mxu0 0.0
    %3185 = vmatpush.xpose.msra.mxu0 0.0
    %3186 = vmatpush.xpose.msra.mxu0 0.0
    %3187 = vmatpush.xpose.msra.mxu0 0.0
    %3188 = vmatpush.xpose.msra.mxu0 0.0
    %3189 = vmatpush.xpose.msra.mxu0 0.0
    %v3190 = vand.u32 %v3073, 4294901760
    %3191 = vmatpush.xpose.msra.mxu0 %v3190
    %v3192 = vand.u32 %v3071, 4294901760
    %3193 = vmatpush.xpose.msra.mxu0 %v3192
    %v3194 = vand.u32 %v3067, 4294901760
    %v3195 = vsub.f32 %v3067, %v3194
    %v3196 = vand.u32 %v3195, 4294901760
    %3197 = vmatmul.f32.gmra.mxu0 %v3196
    %v3198 = vpop.f32.mrf.mxu0
    %v3199 = vadd.f32 %v3169, %v3198
    %v3200 = vand.u32 %v3069, 4294901760
    %v3201 = vsub.f32 %v3069, %v3200
    %v3202 = vand.u32 %v3201, 4294901760
    %3203 = vmatmul.f32.gmra.mxu0 %v3202
    %v3204 = vpop.f32.mrf.mxu0
    %v3205 = vadd.f32 %v3174, %v3204
    %3206 = vdwg.mxu0
    %3207 = vmatpush.xpose.msra.mxu0 0.0
    %3208 = vmatpush.xpose.msra.mxu0 0.0
    %3209 = vmatpush.xpose.msra.mxu0 0.0
    %3210 = vmatpush.xpose.msra.mxu0 0.0
    %3211 = vmatpush.xpose.msra.mxu0 0.0
    %3212 = vmatpush.xpose.msra.mxu0 0.0
    %3213 = vmatpush.xpose.msra.mxu0 0.0
    %3214 = vmatpush.xpose.msra.mxu0 0.0
    %3215 = vmatpush.xpose.msra.mxu0 0.0
    %3216 = vmatpush.xpose.msra.mxu0 0.0
    %3217 = vmatpush.xpose.msra.mxu0 0.0
    %3218 = vmatpush.xpose.msra.mxu0 0.0
    %3219 = vmatpush.xpose.msra.mxu0 0.0
    %3220 = vmatpush.xpose.msra.mxu0 0.0
    %v3221 = vand.u32 %v3073, 4294901760
    %v3222 = vsub.f32 %v3073, %v3221
    %v3223 = vand.u32 %v3222, 4294901760
    %3224 = vmatpush.xpose.msra.mxu0 %v3223
    %v3225 = vand.u32 %v3071, 4294901760
    %v3226 = vsub.f32 %v3071, %v3225
    %v3227 = vand.u32 %v3226, 4294901760
    %3228 = vmatpush.xpose.msra.mxu0 %v3227
    %v3229 = vand.u32 %v3067, 4294901760
    %3230 = vmatmul.f32.gmra.mxu0 %v3229
    %v3231 = vpop.f32.mrf.mxu0
    %v3232 = vadd.f32 %v3199, %v3231
    %v3233 = vand.u32 %v3069, 4294901760
    %3234 = vmatmul.f32.gmra.mxu0 %v3233
    %v3235 = vpop.f32.mrf.mxu0
    %v3236 = vadd.f32 %v3205, %v3235
    %3237 = vdwg.mxu0
    %3238 = vmatpush.xpose.msra.mxu0 0.0
    %3239 = vmatpush.xpose.msra.mxu0 0.0
    %3240 = vmatpush.xpose.msra.mxu0 0.0
    %3241 = vmatpush.xpose.msra.mxu0 0.0
    %3242 = vmatpush.xpose.msra.mxu0 0.0
    %3243 = vmatpush.xpose.msra.mxu0 0.0
    %3244 = vmatpush.xpose.msra.mxu0 0.0
    %3245 = vmatpush.xpose.msra.mxu0 0.0
    %3246 = vmatpush.xpose.msra.mxu0 0.0
    %3247 = vmatpush.xpose.msra.mxu0 0.0
    %3248 = vmatpush.xpose.msra.mxu0 0.0
    %3249 = vmatpush.xpose.msra.mxu0 0.0
    %3250 = vmatpush.xpose.msra.mxu0 0.0
    %3251 = vmatpush.xpose.msra.mxu0 0.0
    %v3252 = vand.u32 %v3073, 4294901760
    %3253 = vmatpush.xpose.msra.mxu0 %v3252
    %v3254 = vand.u32 %v3071, 4294901760
    %3255 = vmatpush.xpose.msra.mxu0 %v3254
    %v3256 = vand.u32 %v3067, 4294901760
    %3257 = vmatmul.f32.gmra.mxu0 %v3256
    %v3258 = vpop.f32.mrf.mxu0
    %v3259 = vadd.f32 %v3232, %v3258
    %v3260 = vand.u32 %v3069, 4294901760
    %3261 = vmatmul.f32.gmra.mxu0 %v3260
    %v3262 = vpop.f32.mrf.mxu0
    %v3263 = vadd.f32 %v3236, %v3262
    %3264 = vdwg.mxu0
    %v3265 = vmul.f32 %v1845, 0.35355338
    %v3266 = vmul.f32 %v1849, 0.35355338
    %v3267 = vmul.f32 %v2047, 0.35355338
    %v3268 = vmul.f32 %v2051, 0.35355338
    %v3269 = vmul.f32 %v2249, 0.35355338
    %v3270 = vmul.f32 %v2253, 0.35355338
    %v3271 = vmul.f32 %v2451, 0.35355338
    %v3272 = vmul.f32 %v2455, 0.35355338
    %v3273 = vmul.f32 %v2653, 0.35355338
    %v3274 = vmul.f32 %v2657, 0.35355338
    %v3275 = vmul.f32 %v2855, 0.35355338
    %v3276 = vmul.f32 %v2859, 0.35355338
    %v3277 = vmul.f32 %v3057, 0.35355338
    %v3278 = vmul.f32 %v3061, 0.35355338
    %v3279 = vmul.f32 %v3259, 0.35355338
    %v3280 = vmul.f32 %v3263, 0.35355338
    %vm3281 = vcmask 130048
    %v3282 = vsel %vm3281, %v3265, -inf
    %3283 = vmax.xlane.f32.xlu0 %v3282
    %v3284 = vpop.xlane.xlu0 %3283
    %v3285 = vsel %vm3281, %v3266, -inf
    %3286 = vmax.xlane.f32.xlu0 %v3285
    %v3287 = vpop.xlane.xlu0 %3286
    %v3288 = vsel %vm3281, %v3267, -inf
    %3289 = vmax.xlane.f32.xlu0 %v3288
    %v3290 = vpop.xlane.xlu0 %3289
    %v3291 = vsel %vm3281, %v3268, -inf
    %3292 = vmax.xlane.f32.xlu0 %v3291
    %v3293 = vpop.xlane.xlu0 %3292
    %v3294 = vsel %vm3281, %v3269, -inf
    %3295 = vmax.xlane.f32.xlu0 %v3294
    %v3296 = vpop.xlane.xlu0 %3295
    %v3297 = vsel %vm3281, %v3270, -inf
    %3298 = vmax.xlane.f32.xlu0 %v3297
    %v3299 = vpop.xlane.xlu0 %3298
    %v3300 = vsel %vm3281, %v3271, -inf
    %3301 = vmax.xlane.f32.xlu0 %v3300
    %v3302 = vpop.xlane.xlu0 %3301
    %v3303 = vsel %vm3281, %v3272, -inf
    %3304 = vmax.xlane.f32.xlu0 %v3303
    %v3305 = vpop.xlane.xlu0 %3304
    %v3306 = vsel %vm3281, %v3273, -inf
    %3307 = vmax.xlane.f32.xlu0 %v3306
    %v3308 = vpop.xlane.xlu0 %3307
    %v3309 = vsel %vm3281, %v3274, -inf
    %3310 = vmax.xlane.f32.xlu0 %v3309
    %v3311 = vpop.xlane.xlu0 %3310
    %v3312 = vsel %vm3281, %v3275, -inf
    %3313 = vmax.xlane.f32.xlu0 %v3312
    %v3314 = vpop.xlane.xlu0 %3313
    %v3315 = vsel %vm3281, %v3276, -inf
    %3316 = vmax.xlane.f32.xlu0 %v3315
    %v3317 = vpop.xlane.xlu0 %3316
    %v3318 = vsel %vm3281, %v3277, -inf
    %3319 = vmax.xlane.f32.xlu0 %v3318
    %v3320 = vpop.xlane.xlu0 %3319
    %v3321 = vsel %vm3281, %v3278, -inf
    %3322 = vmax.xlane.f32.xlu0 %v3321
    %v3323 = vpop.xlane.xlu0 %3322
    %v3324 = vsel %vm3281, %v3279, -inf
    %3325 = vmax.xlane.f32.xlu0 %v3324
    %v3326 = vpop.xlane.xlu0 %3325
    %v3327 = vsel %vm3281, %v3280, -inf
    %3328 = vmax.xlane.f32.xlu0 %v3327
    %v3329 = vpop.xlane.xlu0 %3328
    %v3330 = vsub.f32 %v3265, %v3284
    %v3331 = vsub.f32 %v3266, %v3287
    %v3332 = vsub.f32 %v3267, %v3290
    %v3333 = vsub.f32 %v3268, %v3293
    %v3334 = vsub.f32 %v3269, %v3296
    %v3335 = vsub.f32 %v3270, %v3299
    %v3336 = vsub.f32 %v3271, %v3302
    %v3337 = vsub.f32 %v3272, %v3305
    %v3338 = vsub.f32 %v3273, %v3308
    %v3339 = vsub.f32 %v3274, %v3311
    %v3340 = vsub.f32 %v3275, %v3314
    %v3341 = vsub.f32 %v3276, %v3317
    %v3342 = vsub.f32 %v3277, %v3320
    %v3343 = vsub.f32 %v3278, %v3323
    %v3344 = vsub.f32 %v3279, %v3326
    %v3345 = vsub.f32 %v3280, %v3329
    %v3346 = vmul.f32 %v3330, 1.442695
    %v3347 = vpow.pop %v3346
    %v3348 = vmul.f32 %v3331, 1.442695
    %v3349 = vpow.pop %v3348
    %v3350 = vmul.f32 %v3332, 1.442695
    %v3351 = vpow.pop %v3350
    %v3352 = vmul.f32 %v3333, 1.442695
    %v3353 = vpow.pop %v3352
    %v3354 = vmul.f32 %v3334, 1.442695
    %v3355 = vpow.pop %v3354
    %v3356 = vmul.f32 %v3335, 1.442695
    %v3357 = vpow.pop %v3356
    %v3358 = vmul.f32 %v3336, 1.442695
    %v3359 = vpow.pop %v3358
    %v3360 = vmul.f32 %v3337, 1.442695
    %v3361 = vpow.pop %v3360
    %v3362 = vmul.f32 %v3338, 1.442695
    %v3363 = vpow.pop %v3362
    %v3364 = vmul.f32 %v3339, 1.442695
    %v3365 = vpow.pop %v3364
    %v3366 = vmul.f32 %v3340, 1.442695
    %v3367 = vpow.pop %v3366
    %v3368 = vmul.f32 %v3341, 1.442695
    %v3369 = vpow.pop %v3368
    %v3370 = vmul.f32 %v3342, 1.442695
    %v3371 = vpow.pop %v3370
    %v3372 = vmul.f32 %v3343, 1.442695
    %v3373 = vpow.pop %v3372
    %v3374 = vmul.f32 %v3344, 1.442695
    %v3375 = vpow.pop %v3374
    %v3376 = vmul.f32 %v3345, 1.442695
    %v3377 = vpow.pop %v3376
    %v3378 = vsel %vm3281, %v3347, 0.0
    %3379 = vadd.xlane.f32.xlu0 %v3378
    %v3380 = vpop.xlane.xlu0 %3379
    %v3381 = vsel %vm3281, %v3349, 0.0
    %3382 = vadd.xlane.f32.xlu0 %v3381
    %v3383 = vpop.xlane.xlu0 %3382
    %v3384 = vsel %vm3281, %v3351, 0.0
    %3385 = vadd.xlane.f32.xlu0 %v3384
    %v3386 = vpop.xlane.xlu0 %3385
    %v3387 = vsel %vm3281, %v3353, 0.0
    %3388 = vadd.xlane.f32.xlu0 %v3387
    %v3389 = vpop.xlane.xlu0 %3388
    %v3390 = vsel %vm3281, %v3355, 0.0
    %3391 = vadd.xlane.f32.xlu0 %v3390
    %v3392 = vpop.xlane.xlu0 %3391
    %v3393 = vsel %vm3281, %v3357, 0.0
    %3394 = vadd.xlane.f32.xlu0 %v3393
    %v3395 = vpop.xlane.xlu0 %3394
    %v3396 = vsel %vm3281, %v3359, 0.0
    %3397 = vadd.xlane.f32.xlu0 %v3396
    %v3398 = vpop.xlane.xlu0 %3397
    %v3399 = vsel %vm3281, %v3361, 0.0
    %3400 = vadd.xlane.f32.xlu0 %v3399
    %v3401 = vpop.xlane.xlu0 %3400
    %v3402 = vsel %vm3281, %v3363, 0.0
    %3403 = vadd.xlane.f32.xlu0 %v3402
    %v3404 = vpop.xlane.xlu0 %3403
    %v3405 = vsel %vm3281, %v3365, 0.0
    %3406 = vadd.xlane.f32.xlu0 %v3405
    %v3407 = vpop.xlane.xlu0 %3406
    %v3408 = vsel %vm3281, %v3367, 0.0
    %3409 = vadd.xlane.f32.xlu0 %v3408
    %v3410 = vpop.xlane.xlu0 %3409
    %v3411 = vsel %vm3281, %v3369, 0.0
    %3412 = vadd.xlane.f32.xlu0 %v3411
    %v3413 = vpop.xlane.xlu0 %3412
    %v3414 = vsel %vm3281, %v3371, 0.0
    %3415 = vadd.xlane.f32.xlu0 %v3414
    %v3416 = vpop.xlane.xlu0 %3415
    %v3417 = vsel %vm3281, %v3373, 0.0
    %3418 = vadd.xlane.f32.xlu0 %v3417
    %v3419 = vpop.xlane.xlu0 %3418
    %v3420 = vsel %vm3281, %v3375, 0.0
    %3421 = vadd.xlane.f32.xlu0 %v3420
    %v3422 = vpop.xlane.xlu0 %3421
    %v3423 = vsel %vm3281, %v3377, 0.0
    %3424 = vadd.xlane.f32.xlu0 %v3423
    %v3425 = vpop.xlane.xlu0 %3424
    %v3426 = vrcp.pop %v3380
    %v3427 = vrcp.pop %v3383
    %v3428 = vrcp.pop %v3386
    %v3429 = vrcp.pop %v3389
    %v3430 = vrcp.pop %v3392
    %v3431 = vrcp.pop %v3395
    %v3432 = vrcp.pop %v3398
    %v3433 = vrcp.pop %v3401
    %v3434 = vrcp.pop %v3404
    %v3435 = vrcp.pop %v3407
    %v3436 = vrcp.pop %v3410
    %v3437 = vrcp.pop %v3413
    %v3438 = vrcp.pop %v3416
    %v3439 = vrcp.pop %v3419
    %v3440 = vrcp.pop %v3422
    %v3441 = vrcp.pop %v3425
    %v3442 = vmul.f32 %v3347, %v3426
    %v3443 = vmul.f32 %v3349, %v3427
    %v3444 = vmul.f32 %v3351, %v3428
    %v3445 = vmul.f32 %v3353, %v3429
    %v3446 = vmul.f32 %v3355, %v3430
    %v3447 = vmul.f32 %v3357, %v3431
    %v3448 = vmul.f32 %v3359, %v3432
    %v3449 = vmul.f32 %v3361, %v3433
    %v3450 = vmul.f32 %v3363, %v3434
    %v3451 = vmul.f32 %v3365, %v3435
    %v3452 = vmul.f32 %v3367, %v3436
    %v3453 = vmul.f32 %v3369, %v3437
    %v3454 = vmul.f32 %v3371, %v3438
    %v3455 = vmul.f32 %v3373, %v3439
    %v3456 = vmul.f32 %v3375, %v3440
    %v3457 = vmul.f32 %v3377, %v3441
    %v3459 = vsel %vm3281, %v3442, 0
    %v3462 = vsel %vm3281, %v3443, 0
    %3464 = vmatpush.msra.mxu0 0.0
    %3465 = vmatpush.msra.mxu0 0.0
    %3466 = vmatpush.msra.mxu0 0.0
    %3467 = vmatpush.msra.mxu0 0.0
    %3468 = vmatpush.msra.mxu0 0.0
    %3469 = vmatpush.msra.mxu0 0.0
    %3470 = vmatpush.msra.mxu0 0.0
    %3471 = vmatpush.msra.mxu0 0.0
    %3472 = vmatpush.msra.mxu0 0.0
    %3473 = vmatpush.msra.mxu0 0.0
    %3474 = vmatpush.msra.mxu0 0.0
    %3475 = vmatpush.msra.mxu0 0.0
    %3476 = vmatpush.msra.mxu0 0.0
    %3477 = vmatpush.msra.mxu0 0.0
    %v3478 = vand.u32 %v1570, 4294901760
    %3479 = vmatpush.msra.mxu0 %v3478
    %v3480 = vand.u32 %v1566, 4294901760
    %3481 = vmatpush.msra.mxu0 %v3480
    %v3482 = vand.u32 %v3459, 4294901760
    %v3483 = vsub.f32 %v3459, %v3482
    %v3484 = vand.u32 %v3483, 4294901760
    %v3485 = vsub.f32 %v3483, %v3484
    %v3486 = vand.u32 %v3485, 4294901760
    %3487 = vmatmul.f32.gmra.mxu0 %v3486
    %v3488 = vpop.f32.mrf.mxu0
    %v3489 = vadd.f32 0.0, %v3488
    %v3490 = vand.u32 %v3462, 4294901760
    %v3491 = vsub.f32 %v3462, %v3490
    %v3492 = vand.u32 %v3491, 4294901760
    %v3493 = vsub.f32 %v3491, %v3492
    %v3494 = vand.u32 %v3493, 4294901760
    %3495 = vmatmul.f32.gmra.mxu0 %v3494
    %v3496 = vpop.f32.mrf.mxu0
    %v3497 = vadd.f32 0.0, %v3496
    %3498 = vdwg.mxu0
    %3499 = vmatpush.msra.mxu0 0.0
    %3500 = vmatpush.msra.mxu0 0.0
    %3501 = vmatpush.msra.mxu0 0.0
    %3502 = vmatpush.msra.mxu0 0.0
    %3503 = vmatpush.msra.mxu0 0.0
    %3504 = vmatpush.msra.mxu0 0.0
    %3505 = vmatpush.msra.mxu0 0.0
    %3506 = vmatpush.msra.mxu0 0.0
    %3507 = vmatpush.msra.mxu0 0.0
    %3508 = vmatpush.msra.mxu0 0.0
    %3509 = vmatpush.msra.mxu0 0.0
    %3510 = vmatpush.msra.mxu0 0.0
    %3511 = vmatpush.msra.mxu0 0.0
    %3512 = vmatpush.msra.mxu0 0.0
    %v3513 = vand.u32 %v1570, 4294901760
    %v3514 = vsub.f32 %v1570, %v3513
    %v3515 = vand.u32 %v3514, 4294901760
    %v3516 = vsub.f32 %v3514, %v3515
    %v3517 = vand.u32 %v3516, 4294901760
    %3518 = vmatpush.msra.mxu0 %v3517
    %v3519 = vand.u32 %v1566, 4294901760
    %v3520 = vsub.f32 %v1566, %v3519
    %v3521 = vand.u32 %v3520, 4294901760
    %v3522 = vsub.f32 %v3520, %v3521
    %v3523 = vand.u32 %v3522, 4294901760
    %3524 = vmatpush.msra.mxu0 %v3523
    %v3525 = vand.u32 %v3459, 4294901760
    %3526 = vmatmul.f32.gmra.mxu0 %v3525
    %v3527 = vpop.f32.mrf.mxu0
    %v3528 = vadd.f32 %v3489, %v3527
    %v3529 = vand.u32 %v3462, 4294901760
    %3530 = vmatmul.f32.gmra.mxu0 %v3529
    %v3531 = vpop.f32.mrf.mxu0
    %v3532 = vadd.f32 %v3497, %v3531
    %3533 = vdwg.mxu0
    %3534 = vmatpush.msra.mxu0 0.0
    %3535 = vmatpush.msra.mxu0 0.0
    %3536 = vmatpush.msra.mxu0 0.0
    %3537 = vmatpush.msra.mxu0 0.0
    %3538 = vmatpush.msra.mxu0 0.0
    %3539 = vmatpush.msra.mxu0 0.0
    %3540 = vmatpush.msra.mxu0 0.0
    %3541 = vmatpush.msra.mxu0 0.0
    %3542 = vmatpush.msra.mxu0 0.0
    %3543 = vmatpush.msra.mxu0 0.0
    %3544 = vmatpush.msra.mxu0 0.0
    %3545 = vmatpush.msra.mxu0 0.0
    %3546 = vmatpush.msra.mxu0 0.0
    %3547 = vmatpush.msra.mxu0 0.0
    %v3548 = vand.u32 %v1570, 4294901760
    %v3549 = vsub.f32 %v1570, %v3548
    %3550 = vmatpush.msra.mxu0 %v3549
    %v3551 = vand.u32 %v1566, 4294901760
    %v3552 = vsub.f32 %v1566, %v3551
    %3553 = vmatpush.msra.mxu0 %v3552
    %v3554 = vand.u32 %v3459, 4294901760
    %v3555 = vsub.f32 %v3459, %v3554
    %3556 = vmatmul.f32.gmra.mxu0 %v3555
    %v3557 = vpop.f32.mrf.mxu0
    %v3558 = vadd.f32 %v3528, %v3557
    %v3559 = vand.u32 %v3462, 4294901760
    %v3560 = vsub.f32 %v3462, %v3559
    %3561 = vmatmul.f32.gmra.mxu0 %v3560
    %v3562 = vpop.f32.mrf.mxu0
    %v3563 = vadd.f32 %v3532, %v3562
    %3564 = vdwg.mxu0
    %3565 = vmatpush.msra.mxu0 0.0
    %3566 = vmatpush.msra.mxu0 0.0
    %3567 = vmatpush.msra.mxu0 0.0
    %3568 = vmatpush.msra.mxu0 0.0
    %3569 = vmatpush.msra.mxu0 0.0
    %3570 = vmatpush.msra.mxu0 0.0
    %3571 = vmatpush.msra.mxu0 0.0
    %3572 = vmatpush.msra.mxu0 0.0
    %3573 = vmatpush.msra.mxu0 0.0
    %3574 = vmatpush.msra.mxu0 0.0
    %3575 = vmatpush.msra.mxu0 0.0
    %3576 = vmatpush.msra.mxu0 0.0
    %3577 = vmatpush.msra.mxu0 0.0
    %3578 = vmatpush.msra.mxu0 0.0
    %v3579 = vand.u32 %v1570, 4294901760
    %3580 = vmatpush.msra.mxu0 %v3579
    %v3581 = vand.u32 %v1566, 4294901760
    %3582 = vmatpush.msra.mxu0 %v3581
    %v3583 = vand.u32 %v3459, 4294901760
    %v3584 = vsub.f32 %v3459, %v3583
    %v3585 = vand.u32 %v3584, 4294901760
    %3586 = vmatmul.f32.gmra.mxu0 %v3585
    %v3587 = vpop.f32.mrf.mxu0
    %v3588 = vadd.f32 %v3558, %v3587
    %v3589 = vand.u32 %v3462, 4294901760
    %v3590 = vsub.f32 %v3462, %v3589
    %v3591 = vand.u32 %v3590, 4294901760
    %3592 = vmatmul.f32.gmra.mxu0 %v3591
    %v3593 = vpop.f32.mrf.mxu0
    %v3594 = vadd.f32 %v3563, %v3593
    %3595 = vdwg.mxu0
    %3596 = vmatpush.msra.mxu0 0.0
    %3597 = vmatpush.msra.mxu0 0.0
    %3598 = vmatpush.msra.mxu0 0.0
    %3599 = vmatpush.msra.mxu0 0.0
    %3600 = vmatpush.msra.mxu0 0.0
    %3601 = vmatpush.msra.mxu0 0.0
    %3602 = vmatpush.msra.mxu0 0.0
    %3603 = vmatpush.msra.mxu0 0.0
    %3604 = vmatpush.msra.mxu0 0.0
    %3605 = vmatpush.msra.mxu0 0.0
    %3606 = vmatpush.msra.mxu0 0.0
    %3607 = vmatpush.msra.mxu0 0.0
    %3608 = vmatpush.msra.mxu0 0.0
    %3609 = vmatpush.msra.mxu0 0.0
    %v3610 = vand.u32 %v1570, 4294901760
    %v3611 = vsub.f32 %v1570, %v3610
    %v3612 = vand.u32 %v3611, 4294901760
    %3613 = vmatpush.msra.mxu0 %v3612
    %v3614 = vand.u32 %v1566, 4294901760
    %v3615 = vsub.f32 %v1566, %v3614
    %v3616 = vand.u32 %v3615, 4294901760
    %3617 = vmatpush.msra.mxu0 %v3616
    %v3618 = vand.u32 %v3459, 4294901760
    %3619 = vmatmul.f32.gmra.mxu0 %v3618
    %v3620 = vpop.f32.mrf.mxu0
    %v3621 = vadd.f32 %v3588, %v3620
    %v3622 = vand.u32 %v3462, 4294901760
    %3623 = vmatmul.f32.gmra.mxu0 %v3622
    %v3624 = vpop.f32.mrf.mxu0
    %v3625 = vadd.f32 %v3594, %v3624
    %3626 = vdwg.mxu0
    %3627 = vmatpush.msra.mxu0 0.0
    %3628 = vmatpush.msra.mxu0 0.0
    %3629 = vmatpush.msra.mxu0 0.0
    %3630 = vmatpush.msra.mxu0 0.0
    %3631 = vmatpush.msra.mxu0 0.0
    %3632 = vmatpush.msra.mxu0 0.0
    %3633 = vmatpush.msra.mxu0 0.0
    %3634 = vmatpush.msra.mxu0 0.0
    %3635 = vmatpush.msra.mxu0 0.0
    %3636 = vmatpush.msra.mxu0 0.0
    %3637 = vmatpush.msra.mxu0 0.0
    %3638 = vmatpush.msra.mxu0 0.0
    %3639 = vmatpush.msra.mxu0 0.0
    %3640 = vmatpush.msra.mxu0 0.0
    %v3641 = vand.u32 %v1570, 4294901760
    %3642 = vmatpush.msra.mxu0 %v3641
    %v3643 = vand.u32 %v1566, 4294901760
    %3644 = vmatpush.msra.mxu0 %v3643
    %v3645 = vand.u32 %v3459, 4294901760
    %3646 = vmatmul.f32.gmra.mxu0 %v3645
    %v3647 = vpop.f32.mrf.mxu0
    %v3648 = vadd.f32 %v3621, %v3647
    %v3649 = vand.u32 %v3462, 4294901760
    %3650 = vmatmul.f32.gmra.mxu0 %v3649
    %v3651 = vpop.f32.mrf.mxu0
    %v3652 = vadd.f32 %v3625, %v3651
    %3653 = vdwg.mxu0
    %v3655 = vsel %vm3281, %v3444, 0
    %v3658 = vsel %vm3281, %v3445, 0
    %3660 = vmatpush.msra.mxu0 0.0
    %3661 = vmatpush.msra.mxu0 0.0
    %3662 = vmatpush.msra.mxu0 0.0
    %3663 = vmatpush.msra.mxu0 0.0
    %3664 = vmatpush.msra.mxu0 0.0
    %3665 = vmatpush.msra.mxu0 0.0
    %3666 = vmatpush.msra.mxu0 0.0
    %3667 = vmatpush.msra.mxu0 0.0
    %3668 = vmatpush.msra.mxu0 0.0
    %3669 = vmatpush.msra.mxu0 0.0
    %3670 = vmatpush.msra.mxu0 0.0
    %3671 = vmatpush.msra.mxu0 0.0
    %3672 = vmatpush.msra.mxu0 0.0
    %3673 = vmatpush.msra.mxu0 0.0
    %v3674 = vand.u32 %v1613, 4294901760
    %3675 = vmatpush.msra.mxu0 %v3674
    %v3676 = vand.u32 %v1611, 4294901760
    %3677 = vmatpush.msra.mxu0 %v3676
    %v3678 = vand.u32 %v3655, 4294901760
    %v3679 = vsub.f32 %v3655, %v3678
    %v3680 = vand.u32 %v3679, 4294901760
    %v3681 = vsub.f32 %v3679, %v3680
    %v3682 = vand.u32 %v3681, 4294901760
    %3683 = vmatmul.f32.gmra.mxu0 %v3682
    %v3684 = vpop.f32.mrf.mxu0
    %v3685 = vadd.f32 0.0, %v3684
    %v3686 = vand.u32 %v3658, 4294901760
    %v3687 = vsub.f32 %v3658, %v3686
    %v3688 = vand.u32 %v3687, 4294901760
    %v3689 = vsub.f32 %v3687, %v3688
    %v3690 = vand.u32 %v3689, 4294901760
    %3691 = vmatmul.f32.gmra.mxu0 %v3690
    %v3692 = vpop.f32.mrf.mxu0
    %v3693 = vadd.f32 0.0, %v3692
    %3694 = vdwg.mxu0
    %3695 = vmatpush.msra.mxu0 0.0
    %3696 = vmatpush.msra.mxu0 0.0
    %3697 = vmatpush.msra.mxu0 0.0
    %3698 = vmatpush.msra.mxu0 0.0
    %3699 = vmatpush.msra.mxu0 0.0
    %3700 = vmatpush.msra.mxu0 0.0
    %3701 = vmatpush.msra.mxu0 0.0
    %3702 = vmatpush.msra.mxu0 0.0
    %3703 = vmatpush.msra.mxu0 0.0
    %3704 = vmatpush.msra.mxu0 0.0
    %3705 = vmatpush.msra.mxu0 0.0
    %3706 = vmatpush.msra.mxu0 0.0
    %3707 = vmatpush.msra.mxu0 0.0
    %3708 = vmatpush.msra.mxu0 0.0
    %v3709 = vand.u32 %v1613, 4294901760
    %v3710 = vsub.f32 %v1613, %v3709
    %v3711 = vand.u32 %v3710, 4294901760
    %v3712 = vsub.f32 %v3710, %v3711
    %v3713 = vand.u32 %v3712, 4294901760
    %3714 = vmatpush.msra.mxu0 %v3713
    %v3715 = vand.u32 %v1611, 4294901760
    %v3716 = vsub.f32 %v1611, %v3715
    %v3717 = vand.u32 %v3716, 4294901760
    %v3718 = vsub.f32 %v3716, %v3717
    %v3719 = vand.u32 %v3718, 4294901760
    %3720 = vmatpush.msra.mxu0 %v3719
    %v3721 = vand.u32 %v3655, 4294901760
    %3722 = vmatmul.f32.gmra.mxu0 %v3721
    %v3723 = vpop.f32.mrf.mxu0
    %v3724 = vadd.f32 %v3685, %v3723
    %v3725 = vand.u32 %v3658, 4294901760
    %3726 = vmatmul.f32.gmra.mxu0 %v3725
    %v3727 = vpop.f32.mrf.mxu0
    %v3728 = vadd.f32 %v3693, %v3727
    %3729 = vdwg.mxu0
    %3730 = vmatpush.msra.mxu0 0.0
    %3731 = vmatpush.msra.mxu0 0.0
    %3732 = vmatpush.msra.mxu0 0.0
    %3733 = vmatpush.msra.mxu0 0.0
    %3734 = vmatpush.msra.mxu0 0.0
    %3735 = vmatpush.msra.mxu0 0.0
    %3736 = vmatpush.msra.mxu0 0.0
    %3737 = vmatpush.msra.mxu0 0.0
    %3738 = vmatpush.msra.mxu0 0.0
    %3739 = vmatpush.msra.mxu0 0.0
    %3740 = vmatpush.msra.mxu0 0.0
    %3741 = vmatpush.msra.mxu0 0.0
    %3742 = vmatpush.msra.mxu0 0.0
    %3743 = vmatpush.msra.mxu0 0.0
    %v3744 = vand.u32 %v1613, 4294901760
    %v3745 = vsub.f32 %v1613, %v3744
    %3746 = vmatpush.msra.mxu0 %v3745
    %v3747 = vand.u32 %v1611, 4294901760
    %v3748 = vsub.f32 %v1611, %v3747
    %3749 = vmatpush.msra.mxu0 %v3748
    %v3750 = vand.u32 %v3655, 4294901760
    %v3751 = vsub.f32 %v3655, %v3750
    %3752 = vmatmul.f32.gmra.mxu0 %v3751
    %v3753 = vpop.f32.mrf.mxu0
    %v3754 = vadd.f32 %v3724, %v3753
    %v3755 = vand.u32 %v3658, 4294901760
    %v3756 = vsub.f32 %v3658, %v3755
    %3757 = vmatmul.f32.gmra.mxu0 %v3756
    %v3758 = vpop.f32.mrf.mxu0
    %v3759 = vadd.f32 %v3728, %v3758
    %3760 = vdwg.mxu0
    %3761 = vmatpush.msra.mxu0 0.0
    %3762 = vmatpush.msra.mxu0 0.0
    %3763 = vmatpush.msra.mxu0 0.0
    %3764 = vmatpush.msra.mxu0 0.0
    %3765 = vmatpush.msra.mxu0 0.0
    %3766 = vmatpush.msra.mxu0 0.0
    %3767 = vmatpush.msra.mxu0 0.0
    %3768 = vmatpush.msra.mxu0 0.0
    %3769 = vmatpush.msra.mxu0 0.0
    %3770 = vmatpush.msra.mxu0 0.0
    %3771 = vmatpush.msra.mxu0 0.0
    %3772 = vmatpush.msra.mxu0 0.0
    %3773 = vmatpush.msra.mxu0 0.0
    %3774 = vmatpush.msra.mxu0 0.0
    %v3775 = vand.u32 %v1613, 4294901760
    %3776 = vmatpush.msra.mxu0 %v3775
    %v3777 = vand.u32 %v1611, 4294901760
    %3778 = vmatpush.msra.mxu0 %v3777
    %v3779 = vand.u32 %v3655, 4294901760
    %v3780 = vsub.f32 %v3655, %v3779
    %v3781 = vand.u32 %v3780, 4294901760
    %3782 = vmatmul.f32.gmra.mxu0 %v3781
    %v3783 = vpop.f32.mrf.mxu0
    %v3784 = vadd.f32 %v3754, %v3783
    %v3785 = vand.u32 %v3658, 4294901760
    %v3786 = vsub.f32 %v3658, %v3785
    %v3787 = vand.u32 %v3786, 4294901760
    %3788 = vmatmul.f32.gmra.mxu0 %v3787
    %v3789 = vpop.f32.mrf.mxu0
    %v3790 = vadd.f32 %v3759, %v3789
    %3791 = vdwg.mxu0
    %3792 = vmatpush.msra.mxu0 0.0
    %3793 = vmatpush.msra.mxu0 0.0
    %3794 = vmatpush.msra.mxu0 0.0
    %3795 = vmatpush.msra.mxu0 0.0
    %3796 = vmatpush.msra.mxu0 0.0
    %3797 = vmatpush.msra.mxu0 0.0
    %3798 = vmatpush.msra.mxu0 0.0
    %3799 = vmatpush.msra.mxu0 0.0
    %3800 = vmatpush.msra.mxu0 0.0
    %3801 = vmatpush.msra.mxu0 0.0
    %3802 = vmatpush.msra.mxu0 0.0
    %3803 = vmatpush.msra.mxu0 0.0
    %3804 = vmatpush.msra.mxu0 0.0
    %3805 = vmatpush.msra.mxu0 0.0
    %v3806 = vand.u32 %v1613, 4294901760
    %v3807 = vsub.f32 %v1613, %v3806
    %v3808 = vand.u32 %v3807, 4294901760
    %3809 = vmatpush.msra.mxu0 %v3808
    %v3810 = vand.u32 %v1611, 4294901760
    %v3811 = vsub.f32 %v1611, %v3810
    %v3812 = vand.u32 %v3811, 4294901760
    %3813 = vmatpush.msra.mxu0 %v3812
    %v3814 = vand.u32 %v3655, 4294901760
    %3815 = vmatmul.f32.gmra.mxu0 %v3814
    %v3816 = vpop.f32.mrf.mxu0
    %v3817 = vadd.f32 %v3784, %v3816
    %v3818 = vand.u32 %v3658, 4294901760
    %3819 = vmatmul.f32.gmra.mxu0 %v3818
    %v3820 = vpop.f32.mrf.mxu0
    %v3821 = vadd.f32 %v3790, %v3820
    %3822 = vdwg.mxu0
    %3823 = vmatpush.msra.mxu0 0.0
    %3824 = vmatpush.msra.mxu0 0.0
    %3825 = vmatpush.msra.mxu0 0.0
    %3826 = vmatpush.msra.mxu0 0.0
    %3827 = vmatpush.msra.mxu0 0.0
    %3828 = vmatpush.msra.mxu0 0.0
    %3829 = vmatpush.msra.mxu0 0.0
    %3830 = vmatpush.msra.mxu0 0.0
    %3831 = vmatpush.msra.mxu0 0.0
    %3832 = vmatpush.msra.mxu0 0.0
    %3833 = vmatpush.msra.mxu0 0.0
    %3834 = vmatpush.msra.mxu0 0.0
    %3835 = vmatpush.msra.mxu0 0.0
    %3836 = vmatpush.msra.mxu0 0.0
    %v3837 = vand.u32 %v1613, 4294901760
    %3838 = vmatpush.msra.mxu0 %v3837
    %v3839 = vand.u32 %v1611, 4294901760
    %3840 = vmatpush.msra.mxu0 %v3839
    %v3841 = vand.u32 %v3655, 4294901760
    %3842 = vmatmul.f32.gmra.mxu0 %v3841
    %v3843 = vpop.f32.mrf.mxu0
    %v3844 = vadd.f32 %v3817, %v3843
    %v3845 = vand.u32 %v3658, 4294901760
    %3846 = vmatmul.f32.gmra.mxu0 %v3845
    %v3847 = vpop.f32.mrf.mxu0
    %v3848 = vadd.f32 %v3821, %v3847
    %3849 = vdwg.mxu0
    %v3851 = vsel %vm3281, %v3446, 0
    %v3854 = vsel %vm3281, %v3447, 0
    %3856 = vmatpush.msra.mxu0 0.0
    %3857 = vmatpush.msra.mxu0 0.0
    %3858 = vmatpush.msra.mxu0 0.0
    %3859 = vmatpush.msra.mxu0 0.0
    %3860 = vmatpush.msra.mxu0 0.0
    %3861 = vmatpush.msra.mxu0 0.0
    %3862 = vmatpush.msra.mxu0 0.0
    %3863 = vmatpush.msra.mxu0 0.0
    %3864 = vmatpush.msra.mxu0 0.0
    %3865 = vmatpush.msra.mxu0 0.0
    %3866 = vmatpush.msra.mxu0 0.0
    %3867 = vmatpush.msra.mxu0 0.0
    %3868 = vmatpush.msra.mxu0 0.0
    %3869 = vmatpush.msra.mxu0 0.0
    %v3870 = vand.u32 %v1619, 4294901760
    %3871 = vmatpush.msra.mxu0 %v3870
    %v3872 = vand.u32 %v1617, 4294901760
    %3873 = vmatpush.msra.mxu0 %v3872
    %v3874 = vand.u32 %v3851, 4294901760
    %v3875 = vsub.f32 %v3851, %v3874
    %v3876 = vand.u32 %v3875, 4294901760
    %v3877 = vsub.f32 %v3875, %v3876
    %v3878 = vand.u32 %v3877, 4294901760
    %3879 = vmatmul.f32.gmra.mxu0 %v3878
    %v3880 = vpop.f32.mrf.mxu0
    %v3881 = vadd.f32 0.0, %v3880
    %v3882 = vand.u32 %v3854, 4294901760
    %v3883 = vsub.f32 %v3854, %v3882
    %v3884 = vand.u32 %v3883, 4294901760
    %v3885 = vsub.f32 %v3883, %v3884
    %v3886 = vand.u32 %v3885, 4294901760
    %3887 = vmatmul.f32.gmra.mxu0 %v3886
    %v3888 = vpop.f32.mrf.mxu0
    %v3889 = vadd.f32 0.0, %v3888
    %3890 = vdwg.mxu0
    %3891 = vmatpush.msra.mxu0 0.0
    %3892 = vmatpush.msra.mxu0 0.0
    %3893 = vmatpush.msra.mxu0 0.0
    %3894 = vmatpush.msra.mxu0 0.0
    %3895 = vmatpush.msra.mxu0 0.0
    %3896 = vmatpush.msra.mxu0 0.0
    %3897 = vmatpush.msra.mxu0 0.0
    %3898 = vmatpush.msra.mxu0 0.0
    %3899 = vmatpush.msra.mxu0 0.0
    %3900 = vmatpush.msra.mxu0 0.0
    %3901 = vmatpush.msra.mxu0 0.0
    %3902 = vmatpush.msra.mxu0 0.0
    %3903 = vmatpush.msra.mxu0 0.0
    %3904 = vmatpush.msra.mxu0 0.0
    %v3905 = vand.u32 %v1619, 4294901760
    %v3906 = vsub.f32 %v1619, %v3905
    %v3907 = vand.u32 %v3906, 4294901760
    %v3908 = vsub.f32 %v3906, %v3907
    %v3909 = vand.u32 %v3908, 4294901760
    %3910 = vmatpush.msra.mxu0 %v3909
    %v3911 = vand.u32 %v1617, 4294901760
    %v3912 = vsub.f32 %v1617, %v3911
    %v3913 = vand.u32 %v3912, 4294901760
    %v3914 = vsub.f32 %v3912, %v3913
    %v3915 = vand.u32 %v3914, 4294901760
    %3916 = vmatpush.msra.mxu0 %v3915
    %v3917 = vand.u32 %v3851, 4294901760
    %3918 = vmatmul.f32.gmra.mxu0 %v3917
    %v3919 = vpop.f32.mrf.mxu0
    %v3920 = vadd.f32 %v3881, %v3919
    %v3921 = vand.u32 %v3854, 4294901760
    %3922 = vmatmul.f32.gmra.mxu0 %v3921
    %v3923 = vpop.f32.mrf.mxu0
    %v3924 = vadd.f32 %v3889, %v3923
    %3925 = vdwg.mxu0
    %3926 = vmatpush.msra.mxu0 0.0
    %3927 = vmatpush.msra.mxu0 0.0
    %3928 = vmatpush.msra.mxu0 0.0
    %3929 = vmatpush.msra.mxu0 0.0
    %3930 = vmatpush.msra.mxu0 0.0
    %3931 = vmatpush.msra.mxu0 0.0
    %3932 = vmatpush.msra.mxu0 0.0
    %3933 = vmatpush.msra.mxu0 0.0
    %3934 = vmatpush.msra.mxu0 0.0
    %3935 = vmatpush.msra.mxu0 0.0
    %3936 = vmatpush.msra.mxu0 0.0
    %3937 = vmatpush.msra.mxu0 0.0
    %3938 = vmatpush.msra.mxu0 0.0
    %3939 = vmatpush.msra.mxu0 0.0
    %v3940 = vand.u32 %v1619, 4294901760
    %v3941 = vsub.f32 %v1619, %v3940
    %3942 = vmatpush.msra.mxu0 %v3941
    %v3943 = vand.u32 %v1617, 4294901760
    %v3944 = vsub.f32 %v1617, %v3943
    %3945 = vmatpush.msra.mxu0 %v3944
    %v3946 = vand.u32 %v3851, 4294901760
    %v3947 = vsub.f32 %v3851, %v3946
    %3948 = vmatmul.f32.gmra.mxu0 %v3947
    %v3949 = vpop.f32.mrf.mxu0
    %v3950 = vadd.f32 %v3920, %v3949
    %v3951 = vand.u32 %v3854, 4294901760
    %v3952 = vsub.f32 %v3854, %v3951
    %3953 = vmatmul.f32.gmra.mxu0 %v3952
    %v3954 = vpop.f32.mrf.mxu0
    %v3955 = vadd.f32 %v3924, %v3954
    %3956 = vdwg.mxu0
    %3957 = vmatpush.msra.mxu0 0.0
    %3958 = vmatpush.msra.mxu0 0.0
    %3959 = vmatpush.msra.mxu0 0.0
    %3960 = vmatpush.msra.mxu0 0.0
    %3961 = vmatpush.msra.mxu0 0.0
    %3962 = vmatpush.msra.mxu0 0.0
    %3963 = vmatpush.msra.mxu0 0.0
    %3964 = vmatpush.msra.mxu0 0.0
    %3965 = vmatpush.msra.mxu0 0.0
    %3966 = vmatpush.msra.mxu0 0.0
    %3967 = vmatpush.msra.mxu0 0.0
    %3968 = vmatpush.msra.mxu0 0.0
    %3969 = vmatpush.msra.mxu0 0.0
    %3970 = vmatpush.msra.mxu0 0.0
    %v3971 = vand.u32 %v1619, 4294901760
    %3972 = vmatpush.msra.mxu0 %v3971
    %v3973 = vand.u32 %v1617, 4294901760
    %3974 = vmatpush.msra.mxu0 %v3973
    %v3975 = vand.u32 %v3851, 4294901760
    %v3976 = vsub.f32 %v3851, %v3975
    %v3977 = vand.u32 %v3976, 4294901760
    %3978 = vmatmul.f32.gmra.mxu0 %v3977
    %v3979 = vpop.f32.mrf.mxu0
    %v3980 = vadd.f32 %v3950, %v3979
    %v3981 = vand.u32 %v3854, 4294901760
    %v3982 = vsub.f32 %v3854, %v3981
    %v3983 = vand.u32 %v3982, 4294901760
    %3984 = vmatmul.f32.gmra.mxu0 %v3983
    %v3985 = vpop.f32.mrf.mxu0
    %v3986 = vadd.f32 %v3955, %v3985
    %3987 = vdwg.mxu0
    %3988 = vmatpush.msra.mxu0 0.0
    %3989 = vmatpush.msra.mxu0 0.0
    %3990 = vmatpush.msra.mxu0 0.0
    %3991 = vmatpush.msra.mxu0 0.0
    %3992 = vmatpush.msra.mxu0 0.0
    %3993 = vmatpush.msra.mxu0 0.0
    %3994 = vmatpush.msra.mxu0 0.0
    %3995 = vmatpush.msra.mxu0 0.0
    %3996 = vmatpush.msra.mxu0 0.0
    %3997 = vmatpush.msra.mxu0 0.0
    %3998 = vmatpush.msra.mxu0 0.0
    %3999 = vmatpush.msra.mxu0 0.0
    %4000 = vmatpush.msra.mxu0 0.0
    %4001 = vmatpush.msra.mxu0 0.0
    %v4002 = vand.u32 %v1619, 4294901760
    %v4003 = vsub.f32 %v1619, %v4002
    %v4004 = vand.u32 %v4003, 4294901760
    %4005 = vmatpush.msra.mxu0 %v4004
    %v4006 = vand.u32 %v1617, 4294901760
    %v4007 = vsub.f32 %v1617, %v4006
    %v4008 = vand.u32 %v4007, 4294901760
    %4009 = vmatpush.msra.mxu0 %v4008
    %v4010 = vand.u32 %v3851, 4294901760
    %4011 = vmatmul.f32.gmra.mxu0 %v4010
    %v4012 = vpop.f32.mrf.mxu0
    %v4013 = vadd.f32 %v3980, %v4012
    %v4014 = vand.u32 %v3854, 4294901760
    %4015 = vmatmul.f32.gmra.mxu0 %v4014
    %v4016 = vpop.f32.mrf.mxu0
    %v4017 = vadd.f32 %v3986, %v4016
    %4018 = vdwg.mxu0
    %4019 = vmatpush.msra.mxu0 0.0
    %4020 = vmatpush.msra.mxu0 0.0
    %4021 = vmatpush.msra.mxu0 0.0
    %4022 = vmatpush.msra.mxu0 0.0
    %4023 = vmatpush.msra.mxu0 0.0
    %4024 = vmatpush.msra.mxu0 0.0
    %4025 = vmatpush.msra.mxu0 0.0
    %4026 = vmatpush.msra.mxu0 0.0
    %4027 = vmatpush.msra.mxu0 0.0
    %4028 = vmatpush.msra.mxu0 0.0
    %4029 = vmatpush.msra.mxu0 0.0
    %4030 = vmatpush.msra.mxu0 0.0
    %4031 = vmatpush.msra.mxu0 0.0
    %4032 = vmatpush.msra.mxu0 0.0
    %v4033 = vand.u32 %v1619, 4294901760
    %4034 = vmatpush.msra.mxu0 %v4033
    %v4035 = vand.u32 %v1617, 4294901760
    %4036 = vmatpush.msra.mxu0 %v4035
    %v4037 = vand.u32 %v3851, 4294901760
    %4038 = vmatmul.f32.gmra.mxu0 %v4037
    %v4039 = vpop.f32.mrf.mxu0
    %v4040 = vadd.f32 %v4013, %v4039
    %v4041 = vand.u32 %v3854, 4294901760
    %4042 = vmatmul.f32.gmra.mxu0 %v4041
    %v4043 = vpop.f32.mrf.mxu0
    %v4044 = vadd.f32 %v4017, %v4043
    %4045 = vdwg.mxu0
    %v4047 = vsel %vm3281, %v3448, 0
    %v4050 = vsel %vm3281, %v3449, 0
    %4052 = vmatpush.msra.mxu0 0.0
    %4053 = vmatpush.msra.mxu0 0.0
    %4054 = vmatpush.msra.mxu0 0.0
    %4055 = vmatpush.msra.mxu0 0.0
    %4056 = vmatpush.msra.mxu0 0.0
    %4057 = vmatpush.msra.mxu0 0.0
    %4058 = vmatpush.msra.mxu0 0.0
    %4059 = vmatpush.msra.mxu0 0.0
    %4060 = vmatpush.msra.mxu0 0.0
    %4061 = vmatpush.msra.mxu0 0.0
    %4062 = vmatpush.msra.mxu0 0.0
    %4063 = vmatpush.msra.mxu0 0.0
    %4064 = vmatpush.msra.mxu0 0.0
    %4065 = vmatpush.msra.mxu0 0.0
    %v4066 = vand.u32 %v1625, 4294901760
    %4067 = vmatpush.msra.mxu0 %v4066
    %v4068 = vand.u32 %v1623, 4294901760
    %4069 = vmatpush.msra.mxu0 %v4068
    %v4070 = vand.u32 %v4047, 4294901760
    %v4071 = vsub.f32 %v4047, %v4070
    %v4072 = vand.u32 %v4071, 4294901760
    %v4073 = vsub.f32 %v4071, %v4072
    %v4074 = vand.u32 %v4073, 4294901760
    %4075 = vmatmul.f32.gmra.mxu0 %v4074
    %v4076 = vpop.f32.mrf.mxu0
    %v4077 = vadd.f32 0.0, %v4076
    %v4078 = vand.u32 %v4050, 4294901760
    %v4079 = vsub.f32 %v4050, %v4078
    %v4080 = vand.u32 %v4079, 4294901760
    %v4081 = vsub.f32 %v4079, %v4080
    %v4082 = vand.u32 %v4081, 4294901760
    %4083 = vmatmul.f32.gmra.mxu0 %v4082
    %v4084 = vpop.f32.mrf.mxu0
    %v4085 = vadd.f32 0.0, %v4084
    %4086 = vdwg.mxu0
    %4087 = vmatpush.msra.mxu0 0.0
    %4088 = vmatpush.msra.mxu0 0.0
    %4089 = vmatpush.msra.mxu0 0.0
    %4090 = vmatpush.msra.mxu0 0.0
    %4091 = vmatpush.msra.mxu0 0.0
    %4092 = vmatpush.msra.mxu0 0.0
    %4093 = vmatpush.msra.mxu0 0.0
    %4094 = vmatpush.msra.mxu0 0.0
    %4095 = vmatpush.msra.mxu0 0.0
    %4096 = vmatpush.msra.mxu0 0.0
    %4097 = vmatpush.msra.mxu0 0.0
    %4098 = vmatpush.msra.mxu0 0.0
    %4099 = vmatpush.msra.mxu0 0.0
    %4100 = vmatpush.msra.mxu0 0.0
    %v4101 = vand.u32 %v1625, 4294901760
    %v4102 = vsub.f32 %v1625, %v4101
    %v4103 = vand.u32 %v4102, 4294901760
    %v4104 = vsub.f32 %v4102, %v4103
    %v4105 = vand.u32 %v4104, 4294901760
    %4106 = vmatpush.msra.mxu0 %v4105
    %v4107 = vand.u32 %v1623, 4294901760
    %v4108 = vsub.f32 %v1623, %v4107
    %v4109 = vand.u32 %v4108, 4294901760
    %v4110 = vsub.f32 %v4108, %v4109
    %v4111 = vand.u32 %v4110, 4294901760
    %4112 = vmatpush.msra.mxu0 %v4111
    %v4113 = vand.u32 %v4047, 4294901760
    %4114 = vmatmul.f32.gmra.mxu0 %v4113
    %v4115 = vpop.f32.mrf.mxu0
    %v4116 = vadd.f32 %v4077, %v4115
    %v4117 = vand.u32 %v4050, 4294901760
    %4118 = vmatmul.f32.gmra.mxu0 %v4117
    %v4119 = vpop.f32.mrf.mxu0
    %v4120 = vadd.f32 %v4085, %v4119
    %4121 = vdwg.mxu0
    %4122 = vmatpush.msra.mxu0 0.0
    %4123 = vmatpush.msra.mxu0 0.0
    %4124 = vmatpush.msra.mxu0 0.0
    %4125 = vmatpush.msra.mxu0 0.0
    %4126 = vmatpush.msra.mxu0 0.0
    %4127 = vmatpush.msra.mxu0 0.0
    %4128 = vmatpush.msra.mxu0 0.0
    %4129 = vmatpush.msra.mxu0 0.0
    %4130 = vmatpush.msra.mxu0 0.0
    %4131 = vmatpush.msra.mxu0 0.0
    %4132 = vmatpush.msra.mxu0 0.0
    %4133 = vmatpush.msra.mxu0 0.0
    %4134 = vmatpush.msra.mxu0 0.0
    %4135 = vmatpush.msra.mxu0 0.0
    %v4136 = vand.u32 %v1625, 4294901760
    %v4137 = vsub.f32 %v1625, %v4136
    %4138 = vmatpush.msra.mxu0 %v4137
    %v4139 = vand.u32 %v1623, 4294901760
    %v4140 = vsub.f32 %v1623, %v4139
    %4141 = vmatpush.msra.mxu0 %v4140
    %v4142 = vand.u32 %v4047, 4294901760
    %v4143 = vsub.f32 %v4047, %v4142
    %4144 = vmatmul.f32.gmra.mxu0 %v4143
    %v4145 = vpop.f32.mrf.mxu0
    %v4146 = vadd.f32 %v4116, %v4145
    %v4147 = vand.u32 %v4050, 4294901760
    %v4148 = vsub.f32 %v4050, %v4147
    %4149 = vmatmul.f32.gmra.mxu0 %v4148
    %v4150 = vpop.f32.mrf.mxu0
    %v4151 = vadd.f32 %v4120, %v4150
    %4152 = vdwg.mxu0
    %4153 = vmatpush.msra.mxu0 0.0
    %4154 = vmatpush.msra.mxu0 0.0
    %4155 = vmatpush.msra.mxu0 0.0
    %4156 = vmatpush.msra.mxu0 0.0
    %4157 = vmatpush.msra.mxu0 0.0
    %4158 = vmatpush.msra.mxu0 0.0
    %4159 = vmatpush.msra.mxu0 0.0
    %4160 = vmatpush.msra.mxu0 0.0
    %4161 = vmatpush.msra.mxu0 0.0
    %4162 = vmatpush.msra.mxu0 0.0
    %4163 = vmatpush.msra.mxu0 0.0
    %4164 = vmatpush.msra.mxu0 0.0
    %4165 = vmatpush.msra.mxu0 0.0
    %4166 = vmatpush.msra.mxu0 0.0
    %v4167 = vand.u32 %v1625, 4294901760
    %4168 = vmatpush.msra.mxu0 %v4167
    %v4169 = vand.u32 %v1623, 4294901760
    %4170 = vmatpush.msra.mxu0 %v4169
    %v4171 = vand.u32 %v4047, 4294901760
    %v4172 = vsub.f32 %v4047, %v4171
    %v4173 = vand.u32 %v4172, 4294901760
    %4174 = vmatmul.f32.gmra.mxu0 %v4173
    %v4175 = vpop.f32.mrf.mxu0
    %v4176 = vadd.f32 %v4146, %v4175
    %v4177 = vand.u32 %v4050, 4294901760
    %v4178 = vsub.f32 %v4050, %v4177
    %v4179 = vand.u32 %v4178, 4294901760
    %4180 = vmatmul.f32.gmra.mxu0 %v4179
    %v4181 = vpop.f32.mrf.mxu0
    %v4182 = vadd.f32 %v4151, %v4181
    %4183 = vdwg.mxu0
    %4184 = vmatpush.msra.mxu0 0.0
    %4185 = vmatpush.msra.mxu0 0.0
    %4186 = vmatpush.msra.mxu0 0.0
    %4187 = vmatpush.msra.mxu0 0.0
    %4188 = vmatpush.msra.mxu0 0.0
    %4189 = vmatpush.msra.mxu0 0.0
    %4190 = vmatpush.msra.mxu0 0.0
    %4191 = vmatpush.msra.mxu0 0.0
    %4192 = vmatpush.msra.mxu0 0.0
    %4193 = vmatpush.msra.mxu0 0.0
    %4194 = vmatpush.msra.mxu0 0.0
    %4195 = vmatpush.msra.mxu0 0.0
    %4196 = vmatpush.msra.mxu0 0.0
    %4197 = vmatpush.msra.mxu0 0.0
    %v4198 = vand.u32 %v1625, 4294901760
    %v4199 = vsub.f32 %v1625, %v4198
    %v4200 = vand.u32 %v4199, 4294901760
    %4201 = vmatpush.msra.mxu0 %v4200
    %v4202 = vand.u32 %v1623, 4294901760
    %v4203 = vsub.f32 %v1623, %v4202
    %v4204 = vand.u32 %v4203, 4294901760
    %4205 = vmatpush.msra.mxu0 %v4204
    %v4206 = vand.u32 %v4047, 4294901760
    %4207 = vmatmul.f32.gmra.mxu0 %v4206
    %v4208 = vpop.f32.mrf.mxu0
    %v4209 = vadd.f32 %v4176, %v4208
    %v4210 = vand.u32 %v4050, 4294901760
    %4211 = vmatmul.f32.gmra.mxu0 %v4210
    %v4212 = vpop.f32.mrf.mxu0
    %v4213 = vadd.f32 %v4182, %v4212
    %4214 = vdwg.mxu0
    %4215 = vmatpush.msra.mxu0 0.0
    %4216 = vmatpush.msra.mxu0 0.0
    %4217 = vmatpush.msra.mxu0 0.0
    %4218 = vmatpush.msra.mxu0 0.0
    %4219 = vmatpush.msra.mxu0 0.0
    %4220 = vmatpush.msra.mxu0 0.0
    %4221 = vmatpush.msra.mxu0 0.0
    %4222 = vmatpush.msra.mxu0 0.0
    %4223 = vmatpush.msra.mxu0 0.0
    %4224 = vmatpush.msra.mxu0 0.0
    %4225 = vmatpush.msra.mxu0 0.0
    %4226 = vmatpush.msra.mxu0 0.0
    %4227 = vmatpush.msra.mxu0 0.0
    %4228 = vmatpush.msra.mxu0 0.0
    %v4229 = vand.u32 %v1625, 4294901760
    %4230 = vmatpush.msra.mxu0 %v4229
    %v4231 = vand.u32 %v1623, 4294901760
    %4232 = vmatpush.msra.mxu0 %v4231
    %v4233 = vand.u32 %v4047, 4294901760
    %4234 = vmatmul.f32.gmra.mxu0 %v4233
    %v4235 = vpop.f32.mrf.mxu0
    %v4236 = vadd.f32 %v4209, %v4235
    %v4237 = vand.u32 %v4050, 4294901760
    %4238 = vmatmul.f32.gmra.mxu0 %v4237
    %v4239 = vpop.f32.mrf.mxu0
    %v4240 = vadd.f32 %v4213, %v4239
    %4241 = vdwg.mxu0
    %v4243 = vsel %vm3281, %v3450, 0
    %v4246 = vsel %vm3281, %v3451, 0
    %4248 = vmatpush.msra.mxu0 0.0
    %4249 = vmatpush.msra.mxu0 0.0
    %4250 = vmatpush.msra.mxu0 0.0
    %4251 = vmatpush.msra.mxu0 0.0
    %4252 = vmatpush.msra.mxu0 0.0
    %4253 = vmatpush.msra.mxu0 0.0
    %4254 = vmatpush.msra.mxu0 0.0
    %4255 = vmatpush.msra.mxu0 0.0
    %4256 = vmatpush.msra.mxu0 0.0
    %4257 = vmatpush.msra.mxu0 0.0
    %4258 = vmatpush.msra.mxu0 0.0
    %4259 = vmatpush.msra.mxu0 0.0
    %4260 = vmatpush.msra.mxu0 0.0
    %4261 = vmatpush.msra.mxu0 0.0
    %v4262 = vand.u32 %v1578, 4294901760
    %4263 = vmatpush.msra.mxu0 %v4262
    %v4264 = vand.u32 %v1574, 4294901760
    %4265 = vmatpush.msra.mxu0 %v4264
    %v4266 = vand.u32 %v4243, 4294901760
    %v4267 = vsub.f32 %v4243, %v4266
    %v4268 = vand.u32 %v4267, 4294901760
    %v4269 = vsub.f32 %v4267, %v4268
    %v4270 = vand.u32 %v4269, 4294901760
    %4271 = vmatmul.f32.gmra.mxu0 %v4270
    %v4272 = vpop.f32.mrf.mxu0
    %v4273 = vadd.f32 0.0, %v4272
    %v4274 = vand.u32 %v4246, 4294901760
    %v4275 = vsub.f32 %v4246, %v4274
    %v4276 = vand.u32 %v4275, 4294901760
    %v4277 = vsub.f32 %v4275, %v4276
    %v4278 = vand.u32 %v4277, 4294901760
    %4279 = vmatmul.f32.gmra.mxu0 %v4278
    %v4280 = vpop.f32.mrf.mxu0
    %v4281 = vadd.f32 0.0, %v4280
    %4282 = vdwg.mxu0
    %4283 = vmatpush.msra.mxu0 0.0
    %4284 = vmatpush.msra.mxu0 0.0
    %4285 = vmatpush.msra.mxu0 0.0
    %4286 = vmatpush.msra.mxu0 0.0
    %4287 = vmatpush.msra.mxu0 0.0
    %4288 = vmatpush.msra.mxu0 0.0
    %4289 = vmatpush.msra.mxu0 0.0
    %4290 = vmatpush.msra.mxu0 0.0
    %4291 = vmatpush.msra.mxu0 0.0
    %4292 = vmatpush.msra.mxu0 0.0
    %4293 = vmatpush.msra.mxu0 0.0
    %4294 = vmatpush.msra.mxu0 0.0
    %4295 = vmatpush.msra.mxu0 0.0
    %4296 = vmatpush.msra.mxu0 0.0
    %v4297 = vand.u32 %v1578, 4294901760
    %v4298 = vsub.f32 %v1578, %v4297
    %v4299 = vand.u32 %v4298, 4294901760
    %v4300 = vsub.f32 %v4298, %v4299
    %v4301 = vand.u32 %v4300, 4294901760
    %4302 = vmatpush.msra.mxu0 %v4301
    %v4303 = vand.u32 %v1574, 4294901760
    %v4304 = vsub.f32 %v1574, %v4303
    %v4305 = vand.u32 %v4304, 4294901760
    %v4306 = vsub.f32 %v4304, %v4305
    %v4307 = vand.u32 %v4306, 4294901760
    %4308 = vmatpush.msra.mxu0 %v4307
    %v4309 = vand.u32 %v4243, 4294901760
    %4310 = vmatmul.f32.gmra.mxu0 %v4309
    %v4311 = vpop.f32.mrf.mxu0
    %v4312 = vadd.f32 %v4273, %v4311
    %v4313 = vand.u32 %v4246, 4294901760
    %4314 = vmatmul.f32.gmra.mxu0 %v4313
    %v4315 = vpop.f32.mrf.mxu0
    %v4316 = vadd.f32 %v4281, %v4315
    %4317 = vdwg.mxu0
    %4318 = vmatpush.msra.mxu0 0.0
    %4319 = vmatpush.msra.mxu0 0.0
    %4320 = vmatpush.msra.mxu0 0.0
    %4321 = vmatpush.msra.mxu0 0.0
    %4322 = vmatpush.msra.mxu0 0.0
    %4323 = vmatpush.msra.mxu0 0.0
    %4324 = vmatpush.msra.mxu0 0.0
    %4325 = vmatpush.msra.mxu0 0.0
    %4326 = vmatpush.msra.mxu0 0.0
    %4327 = vmatpush.msra.mxu0 0.0
    %4328 = vmatpush.msra.mxu0 0.0
    %4329 = vmatpush.msra.mxu0 0.0
    %4330 = vmatpush.msra.mxu0 0.0
    %4331 = vmatpush.msra.mxu0 0.0
    %v4332 = vand.u32 %v1578, 4294901760
    %v4333 = vsub.f32 %v1578, %v4332
    %4334 = vmatpush.msra.mxu0 %v4333
    %v4335 = vand.u32 %v1574, 4294901760
    %v4336 = vsub.f32 %v1574, %v4335
    %4337 = vmatpush.msra.mxu0 %v4336
    %v4338 = vand.u32 %v4243, 4294901760
    %v4339 = vsub.f32 %v4243, %v4338
    %4340 = vmatmul.f32.gmra.mxu0 %v4339
    %v4341 = vpop.f32.mrf.mxu0
    %v4342 = vadd.f32 %v4312, %v4341
    %v4343 = vand.u32 %v4246, 4294901760
    %v4344 = vsub.f32 %v4246, %v4343
    %4345 = vmatmul.f32.gmra.mxu0 %v4344
    %v4346 = vpop.f32.mrf.mxu0
    %v4347 = vadd.f32 %v4316, %v4346
    %4348 = vdwg.mxu0
    %4349 = vmatpush.msra.mxu0 0.0
    %4350 = vmatpush.msra.mxu0 0.0
    %4351 = vmatpush.msra.mxu0 0.0
    %4352 = vmatpush.msra.mxu0 0.0
    %4353 = vmatpush.msra.mxu0 0.0
    %4354 = vmatpush.msra.mxu0 0.0
    %4355 = vmatpush.msra.mxu0 0.0
    %4356 = vmatpush.msra.mxu0 0.0
    %4357 = vmatpush.msra.mxu0 0.0
    %4358 = vmatpush.msra.mxu0 0.0
    %4359 = vmatpush.msra.mxu0 0.0
    %4360 = vmatpush.msra.mxu0 0.0
    %4361 = vmatpush.msra.mxu0 0.0
    %4362 = vmatpush.msra.mxu0 0.0
    %v4363 = vand.u32 %v1578, 4294901760
    %4364 = vmatpush.msra.mxu0 %v4363
    %v4365 = vand.u32 %v1574, 4294901760
    %4366 = vmatpush.msra.mxu0 %v4365
    %v4367 = vand.u32 %v4243, 4294901760
    %v4368 = vsub.f32 %v4243, %v4367
    %v4369 = vand.u32 %v4368, 4294901760
    %4370 = vmatmul.f32.gmra.mxu0 %v4369
    %v4371 = vpop.f32.mrf.mxu0
    %v4372 = vadd.f32 %v4342, %v4371
    %v4373 = vand.u32 %v4246, 4294901760
    %v4374 = vsub.f32 %v4246, %v4373
    %v4375 = vand.u32 %v4374, 4294901760
    %4376 = vmatmul.f32.gmra.mxu0 %v4375
    %v4377 = vpop.f32.mrf.mxu0
    %v4378 = vadd.f32 %v4347, %v4377
    %4379 = vdwg.mxu0
    %4380 = vmatpush.msra.mxu0 0.0
    %4381 = vmatpush.msra.mxu0 0.0
    %4382 = vmatpush.msra.mxu0 0.0
    %4383 = vmatpush.msra.mxu0 0.0
    %4384 = vmatpush.msra.mxu0 0.0
    %4385 = vmatpush.msra.mxu0 0.0
    %4386 = vmatpush.msra.mxu0 0.0
    %4387 = vmatpush.msra.mxu0 0.0
    %4388 = vmatpush.msra.mxu0 0.0
    %4389 = vmatpush.msra.mxu0 0.0
    %4390 = vmatpush.msra.mxu0 0.0
    %4391 = vmatpush.msra.mxu0 0.0
    %4392 = vmatpush.msra.mxu0 0.0
    %4393 = vmatpush.msra.mxu0 0.0
    %v4394 = vand.u32 %v1578, 4294901760
    %v4395 = vsub.f32 %v1578, %v4394
    %v4396 = vand.u32 %v4395, 4294901760
    %4397 = vmatpush.msra.mxu0 %v4396
    %v4398 = vand.u32 %v1574, 4294901760
    %v4399 = vsub.f32 %v1574, %v4398
    %v4400 = vand.u32 %v4399, 4294901760
    %4401 = vmatpush.msra.mxu0 %v4400
    %v4402 = vand.u32 %v4243, 4294901760
    %4403 = vmatmul.f32.gmra.mxu0 %v4402
    %v4404 = vpop.f32.mrf.mxu0
    %v4405 = vadd.f32 %v4372, %v4404
    %v4406 = vand.u32 %v4246, 4294901760
    %4407 = vmatmul.f32.gmra.mxu0 %v4406
    %v4408 = vpop.f32.mrf.mxu0
    %v4409 = vadd.f32 %v4378, %v4408
    %4410 = vdwg.mxu0
    %4411 = vmatpush.msra.mxu0 0.0
    %4412 = vmatpush.msra.mxu0 0.0
    %4413 = vmatpush.msra.mxu0 0.0
    %4414 = vmatpush.msra.mxu0 0.0
    %4415 = vmatpush.msra.mxu0 0.0
    %4416 = vmatpush.msra.mxu0 0.0
    %4417 = vmatpush.msra.mxu0 0.0
    %4418 = vmatpush.msra.mxu0 0.0
    %4419 = vmatpush.msra.mxu0 0.0
    %4420 = vmatpush.msra.mxu0 0.0
    %4421 = vmatpush.msra.mxu0 0.0
    %4422 = vmatpush.msra.mxu0 0.0
    %4423 = vmatpush.msra.mxu0 0.0
    %4424 = vmatpush.msra.mxu0 0.0
    %v4425 = vand.u32 %v1578, 4294901760
    %4426 = vmatpush.msra.mxu0 %v4425
    %v4427 = vand.u32 %v1574, 4294901760
    %4428 = vmatpush.msra.mxu0 %v4427
    %v4429 = vand.u32 %v4243, 4294901760
    %4430 = vmatmul.f32.gmra.mxu0 %v4429
    %v4431 = vpop.f32.mrf.mxu0
    %v4432 = vadd.f32 %v4405, %v4431
    %v4433 = vand.u32 %v4246, 4294901760
    %4434 = vmatmul.f32.gmra.mxu0 %v4433
    %v4435 = vpop.f32.mrf.mxu0
    %v4436 = vadd.f32 %v4409, %v4435
    %4437 = vdwg.mxu0
    %v4439 = vsel %vm3281, %v3452, 0
    %v4442 = vsel %vm3281, %v3453, 0
    %4444 = vmatpush.msra.mxu0 0.0
    %4445 = vmatpush.msra.mxu0 0.0
    %4446 = vmatpush.msra.mxu0 0.0
    %4447 = vmatpush.msra.mxu0 0.0
    %4448 = vmatpush.msra.mxu0 0.0
    %4449 = vmatpush.msra.mxu0 0.0
    %4450 = vmatpush.msra.mxu0 0.0
    %4451 = vmatpush.msra.mxu0 0.0
    %4452 = vmatpush.msra.mxu0 0.0
    %4453 = vmatpush.msra.mxu0 0.0
    %4454 = vmatpush.msra.mxu0 0.0
    %4455 = vmatpush.msra.mxu0 0.0
    %4456 = vmatpush.msra.mxu0 0.0
    %4457 = vmatpush.msra.mxu0 0.0
    %v4458 = vand.u32 %v1633, 4294901760
    %4459 = vmatpush.msra.mxu0 %v4458
    %v4460 = vand.u32 %v1631, 4294901760
    %4461 = vmatpush.msra.mxu0 %v4460
    %v4462 = vand.u32 %v4439, 4294901760
    %v4463 = vsub.f32 %v4439, %v4462
    %v4464 = vand.u32 %v4463, 4294901760
    %v4465 = vsub.f32 %v4463, %v4464
    %v4466 = vand.u32 %v4465, 4294901760
    %4467 = vmatmul.f32.gmra.mxu0 %v4466
    %v4468 = vpop.f32.mrf.mxu0
    %v4469 = vadd.f32 0.0, %v4468
    %v4470 = vand.u32 %v4442, 4294901760
    %v4471 = vsub.f32 %v4442, %v4470
    %v4472 = vand.u32 %v4471, 4294901760
    %v4473 = vsub.f32 %v4471, %v4472
    %v4474 = vand.u32 %v4473, 4294901760
    %4475 = vmatmul.f32.gmra.mxu0 %v4474
    %v4476 = vpop.f32.mrf.mxu0
    %v4477 = vadd.f32 0.0, %v4476
    %4478 = vdwg.mxu0
    %4479 = vmatpush.msra.mxu0 0.0
    %4480 = vmatpush.msra.mxu0 0.0
    %4481 = vmatpush.msra.mxu0 0.0
    %4482 = vmatpush.msra.mxu0 0.0
    %4483 = vmatpush.msra.mxu0 0.0
    %4484 = vmatpush.msra.mxu0 0.0
    %4485 = vmatpush.msra.mxu0 0.0
    %4486 = vmatpush.msra.mxu0 0.0
    %4487 = vmatpush.msra.mxu0 0.0
    %4488 = vmatpush.msra.mxu0 0.0
    %4489 = vmatpush.msra.mxu0 0.0
    %4490 = vmatpush.msra.mxu0 0.0
    %4491 = vmatpush.msra.mxu0 0.0
    %4492 = vmatpush.msra.mxu0 0.0
    %v4493 = vand.u32 %v1633, 4294901760
    %v4494 = vsub.f32 %v1633, %v4493
    %v4495 = vand.u32 %v4494, 4294901760
    %v4496 = vsub.f32 %v4494, %v4495
    %v4497 = vand.u32 %v4496, 4294901760
    %4498 = vmatpush.msra.mxu0 %v4497
    %v4499 = vand.u32 %v1631, 4294901760
    %v4500 = vsub.f32 %v1631, %v4499
    %v4501 = vand.u32 %v4500, 4294901760
    %v4502 = vsub.f32 %v4500, %v4501
    %v4503 = vand.u32 %v4502, 4294901760
    %4504 = vmatpush.msra.mxu0 %v4503
    %v4505 = vand.u32 %v4439, 4294901760
    %4506 = vmatmul.f32.gmra.mxu0 %v4505
    %v4507 = vpop.f32.mrf.mxu0
    %v4508 = vadd.f32 %v4469, %v4507
    %v4509 = vand.u32 %v4442, 4294901760
    %4510 = vmatmul.f32.gmra.mxu0 %v4509
    %v4511 = vpop.f32.mrf.mxu0
    %v4512 = vadd.f32 %v4477, %v4511
    %4513 = vdwg.mxu0
    %4514 = vmatpush.msra.mxu0 0.0
    %4515 = vmatpush.msra.mxu0 0.0
    %4516 = vmatpush.msra.mxu0 0.0
    %4517 = vmatpush.msra.mxu0 0.0
    %4518 = vmatpush.msra.mxu0 0.0
    %4519 = vmatpush.msra.mxu0 0.0
    %4520 = vmatpush.msra.mxu0 0.0
    %4521 = vmatpush.msra.mxu0 0.0
    %4522 = vmatpush.msra.mxu0 0.0
    %4523 = vmatpush.msra.mxu0 0.0
    %4524 = vmatpush.msra.mxu0 0.0
    %4525 = vmatpush.msra.mxu0 0.0
    %4526 = vmatpush.msra.mxu0 0.0
    %4527 = vmatpush.msra.mxu0 0.0
    %v4528 = vand.u32 %v1633, 4294901760
    %v4529 = vsub.f32 %v1633, %v4528
    %4530 = vmatpush.msra.mxu0 %v4529
    %v4531 = vand.u32 %v1631, 4294901760
    %v4532 = vsub.f32 %v1631, %v4531
    %4533 = vmatpush.msra.mxu0 %v4532
    %v4534 = vand.u32 %v4439, 4294901760
    %v4535 = vsub.f32 %v4439, %v4534
    %4536 = vmatmul.f32.gmra.mxu0 %v4535
    %v4537 = vpop.f32.mrf.mxu0
    %v4538 = vadd.f32 %v4508, %v4537
    %v4539 = vand.u32 %v4442, 4294901760
    %v4540 = vsub.f32 %v4442, %v4539
    %4541 = vmatmul.f32.gmra.mxu0 %v4540
    %v4542 = vpop.f32.mrf.mxu0
    %v4543 = vadd.f32 %v4512, %v4542
    %4544 = vdwg.mxu0
    %4545 = vmatpush.msra.mxu0 0.0
    %4546 = vmatpush.msra.mxu0 0.0
    %4547 = vmatpush.msra.mxu0 0.0
    %4548 = vmatpush.msra.mxu0 0.0
    %4549 = vmatpush.msra.mxu0 0.0
    %4550 = vmatpush.msra.mxu0 0.0
    %4551 = vmatpush.msra.mxu0 0.0
    %4552 = vmatpush.msra.mxu0 0.0
    %4553 = vmatpush.msra.mxu0 0.0
    %4554 = vmatpush.msra.mxu0 0.0
    %4555 = vmatpush.msra.mxu0 0.0
    %4556 = vmatpush.msra.mxu0 0.0
    %4557 = vmatpush.msra.mxu0 0.0
    %4558 = vmatpush.msra.mxu0 0.0
    %v4559 = vand.u32 %v1633, 4294901760
    %4560 = vmatpush.msra.mxu0 %v4559
    %v4561 = vand.u32 %v1631, 4294901760
    %4562 = vmatpush.msra.mxu0 %v4561
    %v4563 = vand.u32 %v4439, 4294901760
    %v4564 = vsub.f32 %v4439, %v4563
    %v4565 = vand.u32 %v4564, 4294901760
    %4566 = vmatmul.f32.gmra.mxu0 %v4565
    %v4567 = vpop.f32.mrf.mxu0
    %v4568 = vadd.f32 %v4538, %v4567
    %v4569 = vand.u32 %v4442, 4294901760
    %v4570 = vsub.f32 %v4442, %v4569
    %v4571 = vand.u32 %v4570, 4294901760
    %4572 = vmatmul.f32.gmra.mxu0 %v4571
    %v4573 = vpop.f32.mrf.mxu0
    %v4574 = vadd.f32 %v4543, %v4573
    %4575 = vdwg.mxu0
    %4576 = vmatpush.msra.mxu0 0.0
    %4577 = vmatpush.msra.mxu0 0.0
    %4578 = vmatpush.msra.mxu0 0.0
    %4579 = vmatpush.msra.mxu0 0.0
    %4580 = vmatpush.msra.mxu0 0.0
    %4581 = vmatpush.msra.mxu0 0.0
    %4582 = vmatpush.msra.mxu0 0.0
    %4583 = vmatpush.msra.mxu0 0.0
    %4584 = vmatpush.msra.mxu0 0.0
    %4585 = vmatpush.msra.mxu0 0.0
    %4586 = vmatpush.msra.mxu0 0.0
    %4587 = vmatpush.msra.mxu0 0.0
    %4588 = vmatpush.msra.mxu0 0.0
    %4589 = vmatpush.msra.mxu0 0.0
    %v4590 = vand.u32 %v1633, 4294901760
    %v4591 = vsub.f32 %v1633, %v4590
    %v4592 = vand.u32 %v4591, 4294901760
    %4593 = vmatpush.msra.mxu0 %v4592
    %v4594 = vand.u32 %v1631, 4294901760
    %v4595 = vsub.f32 %v1631, %v4594
    %v4596 = vand.u32 %v4595, 4294901760
    %4597 = vmatpush.msra.mxu0 %v4596
    %v4598 = vand.u32 %v4439, 4294901760
    %4599 = vmatmul.f32.gmra.mxu0 %v4598
    %v4600 = vpop.f32.mrf.mxu0
    %v4601 = vadd.f32 %v4568, %v4600
    %v4602 = vand.u32 %v4442, 4294901760
    %4603 = vmatmul.f32.gmra.mxu0 %v4602
    %v4604 = vpop.f32.mrf.mxu0
    %v4605 = vadd.f32 %v4574, %v4604
    %4606 = vdwg.mxu0
    %4607 = vmatpush.msra.mxu0 0.0
    %4608 = vmatpush.msra.mxu0 0.0
    %4609 = vmatpush.msra.mxu0 0.0
    %4610 = vmatpush.msra.mxu0 0.0
    %4611 = vmatpush.msra.mxu0 0.0
    %4612 = vmatpush.msra.mxu0 0.0
    %4613 = vmatpush.msra.mxu0 0.0
    %4614 = vmatpush.msra.mxu0 0.0
    %4615 = vmatpush.msra.mxu0 0.0
    %4616 = vmatpush.msra.mxu0 0.0
    %4617 = vmatpush.msra.mxu0 0.0
    %4618 = vmatpush.msra.mxu0 0.0
    %4619 = vmatpush.msra.mxu0 0.0
    %4620 = vmatpush.msra.mxu0 0.0
    %v4621 = vand.u32 %v1633, 4294901760
    %4622 = vmatpush.msra.mxu0 %v4621
    %v4623 = vand.u32 %v1631, 4294901760
    %4624 = vmatpush.msra.mxu0 %v4623
    %v4625 = vand.u32 %v4439, 4294901760
    %4626 = vmatmul.f32.gmra.mxu0 %v4625
    %v4627 = vpop.f32.mrf.mxu0
    %v4628 = vadd.f32 %v4601, %v4627
    %v4629 = vand.u32 %v4442, 4294901760
    %4630 = vmatmul.f32.gmra.mxu0 %v4629
    %v4631 = vpop.f32.mrf.mxu0
    %v4632 = vadd.f32 %v4605, %v4631
    %4633 = vdwg.mxu0
    %v4635 = vsel %vm3281, %v3454, 0
    %v4638 = vsel %vm3281, %v3455, 0
    %4640 = vmatpush.msra.mxu0 0.0
    %4641 = vmatpush.msra.mxu0 0.0
    %4642 = vmatpush.msra.mxu0 0.0
    %4643 = vmatpush.msra.mxu0 0.0
    %4644 = vmatpush.msra.mxu0 0.0
    %4645 = vmatpush.msra.mxu0 0.0
    %4646 = vmatpush.msra.mxu0 0.0
    %4647 = vmatpush.msra.mxu0 0.0
    %4648 = vmatpush.msra.mxu0 0.0
    %4649 = vmatpush.msra.mxu0 0.0
    %4650 = vmatpush.msra.mxu0 0.0
    %4651 = vmatpush.msra.mxu0 0.0
    %4652 = vmatpush.msra.mxu0 0.0
    %4653 = vmatpush.msra.mxu0 0.0
    %v4654 = vand.u32 %v1639, 4294901760
    %4655 = vmatpush.msra.mxu0 %v4654
    %v4656 = vand.u32 %v1637, 4294901760
    %4657 = vmatpush.msra.mxu0 %v4656
    %v4658 = vand.u32 %v4635, 4294901760
    %v4659 = vsub.f32 %v4635, %v4658
    %v4660 = vand.u32 %v4659, 4294901760
    %v4661 = vsub.f32 %v4659, %v4660
    %v4662 = vand.u32 %v4661, 4294901760
    %4663 = vmatmul.f32.gmra.mxu0 %v4662
    %v4664 = vpop.f32.mrf.mxu0
    %v4665 = vadd.f32 0.0, %v4664
    %v4666 = vand.u32 %v4638, 4294901760
    %v4667 = vsub.f32 %v4638, %v4666
    %v4668 = vand.u32 %v4667, 4294901760
    %v4669 = vsub.f32 %v4667, %v4668
    %v4670 = vand.u32 %v4669, 4294901760
    %4671 = vmatmul.f32.gmra.mxu0 %v4670
    %v4672 = vpop.f32.mrf.mxu0
    %v4673 = vadd.f32 0.0, %v4672
    %4674 = vdwg.mxu0
    %4675 = vmatpush.msra.mxu0 0.0
    %4676 = vmatpush.msra.mxu0 0.0
    %4677 = vmatpush.msra.mxu0 0.0
    %4678 = vmatpush.msra.mxu0 0.0
    %4679 = vmatpush.msra.mxu0 0.0
    %4680 = vmatpush.msra.mxu0 0.0
    %4681 = vmatpush.msra.mxu0 0.0
    %4682 = vmatpush.msra.mxu0 0.0
    %4683 = vmatpush.msra.mxu0 0.0
    %4684 = vmatpush.msra.mxu0 0.0
    %4685 = vmatpush.msra.mxu0 0.0
    %4686 = vmatpush.msra.mxu0 0.0
    %4687 = vmatpush.msra.mxu0 0.0
    %4688 = vmatpush.msra.mxu0 0.0
    %v4689 = vand.u32 %v1639, 4294901760
    %v4690 = vsub.f32 %v1639, %v4689
    %v4691 = vand.u32 %v4690, 4294901760
    %v4692 = vsub.f32 %v4690, %v4691
    %v4693 = vand.u32 %v4692, 4294901760
    %4694 = vmatpush.msra.mxu0 %v4693
    %v4695 = vand.u32 %v1637, 4294901760
    %v4696 = vsub.f32 %v1637, %v4695
    %v4697 = vand.u32 %v4696, 4294901760
    %v4698 = vsub.f32 %v4696, %v4697
    %v4699 = vand.u32 %v4698, 4294901760
    %4700 = vmatpush.msra.mxu0 %v4699
    %v4701 = vand.u32 %v4635, 4294901760
    %4702 = vmatmul.f32.gmra.mxu0 %v4701
    %v4703 = vpop.f32.mrf.mxu0
    %v4704 = vadd.f32 %v4665, %v4703
    %v4705 = vand.u32 %v4638, 4294901760
    %4706 = vmatmul.f32.gmra.mxu0 %v4705
    %v4707 = vpop.f32.mrf.mxu0
    %v4708 = vadd.f32 %v4673, %v4707
    %4709 = vdwg.mxu0
    %4710 = vmatpush.msra.mxu0 0.0
    %4711 = vmatpush.msra.mxu0 0.0
    %4712 = vmatpush.msra.mxu0 0.0
    %4713 = vmatpush.msra.mxu0 0.0
    %4714 = vmatpush.msra.mxu0 0.0
    %4715 = vmatpush.msra.mxu0 0.0
    %4716 = vmatpush.msra.mxu0 0.0
    %4717 = vmatpush.msra.mxu0 0.0
    %4718 = vmatpush.msra.mxu0 0.0
    %4719 = vmatpush.msra.mxu0 0.0
    %4720 = vmatpush.msra.mxu0 0.0
    %4721 = vmatpush.msra.mxu0 0.0
    %4722 = vmatpush.msra.mxu0 0.0
    %4723 = vmatpush.msra.mxu0 0.0
    %v4724 = vand.u32 %v1639, 4294901760
    %v4725 = vsub.f32 %v1639, %v4724
    %4726 = vmatpush.msra.mxu0 %v4725
    %v4727 = vand.u32 %v1637, 4294901760
    %v4728 = vsub.f32 %v1637, %v4727
    %4729 = vmatpush.msra.mxu0 %v4728
    %v4730 = vand.u32 %v4635, 4294901760
    %v4731 = vsub.f32 %v4635, %v4730
    %4732 = vmatmul.f32.gmra.mxu0 %v4731
    %v4733 = vpop.f32.mrf.mxu0
    %v4734 = vadd.f32 %v4704, %v4733
    %v4735 = vand.u32 %v4638, 4294901760
    %v4736 = vsub.f32 %v4638, %v4735
    %4737 = vmatmul.f32.gmra.mxu0 %v4736
    %v4738 = vpop.f32.mrf.mxu0
    %v4739 = vadd.f32 %v4708, %v4738
    %4740 = vdwg.mxu0
    %4741 = vmatpush.msra.mxu0 0.0
    %4742 = vmatpush.msra.mxu0 0.0
    %4743 = vmatpush.msra.mxu0 0.0
    %4744 = vmatpush.msra.mxu0 0.0
    %4745 = vmatpush.msra.mxu0 0.0
    %4746 = vmatpush.msra.mxu0 0.0
    %4747 = vmatpush.msra.mxu0 0.0
    %4748 = vmatpush.msra.mxu0 0.0
    %4749 = vmatpush.msra.mxu0 0.0
    %4750 = vmatpush.msra.mxu0 0.0
    %4751 = vmatpush.msra.mxu0 0.0
    %4752 = vmatpush.msra.mxu0 0.0
    %4753 = vmatpush.msra.mxu0 0.0
    %4754 = vmatpush.msra.mxu0 0.0
    %v4755 = vand.u32 %v1639, 4294901760
    %4756 = vmatpush.msra.mxu0 %v4755
    %v4757 = vand.u32 %v1637, 4294901760
    %4758 = vmatpush.msra.mxu0 %v4757
    %v4759 = vand.u32 %v4635, 4294901760
    %v4760 = vsub.f32 %v4635, %v4759
    %v4761 = vand.u32 %v4760, 4294901760
    %4762 = vmatmul.f32.gmra.mxu0 %v4761
    %v4763 = vpop.f32.mrf.mxu0
    %v4764 = vadd.f32 %v4734, %v4763
    %v4765 = vand.u32 %v4638, 4294901760
    %v4766 = vsub.f32 %v4638, %v4765
    %v4767 = vand.u32 %v4766, 4294901760
    %4768 = vmatmul.f32.gmra.mxu0 %v4767
    %v4769 = vpop.f32.mrf.mxu0
    %v4770 = vadd.f32 %v4739, %v4769
    %4771 = vdwg.mxu0
    %4772 = vmatpush.msra.mxu0 0.0
    %4773 = vmatpush.msra.mxu0 0.0
    %4774 = vmatpush.msra.mxu0 0.0
    %4775 = vmatpush.msra.mxu0 0.0
    %4776 = vmatpush.msra.mxu0 0.0
    %4777 = vmatpush.msra.mxu0 0.0
    %4778 = vmatpush.msra.mxu0 0.0
    %4779 = vmatpush.msra.mxu0 0.0
    %4780 = vmatpush.msra.mxu0 0.0
    %4781 = vmatpush.msra.mxu0 0.0
    %4782 = vmatpush.msra.mxu0 0.0
    %4783 = vmatpush.msra.mxu0 0.0
    %4784 = vmatpush.msra.mxu0 0.0
    %4785 = vmatpush.msra.mxu0 0.0
    %v4786 = vand.u32 %v1639, 4294901760
    %v4787 = vsub.f32 %v1639, %v4786
    %v4788 = vand.u32 %v4787, 4294901760
    %4789 = vmatpush.msra.mxu0 %v4788
    %v4790 = vand.u32 %v1637, 4294901760
    %v4791 = vsub.f32 %v1637, %v4790
    %v4792 = vand.u32 %v4791, 4294901760
    %4793 = vmatpush.msra.mxu0 %v4792
    %v4794 = vand.u32 %v4635, 4294901760
    %4795 = vmatmul.f32.gmra.mxu0 %v4794
    %v4796 = vpop.f32.mrf.mxu0
    %v4797 = vadd.f32 %v4764, %v4796
    %v4798 = vand.u32 %v4638, 4294901760
    %4799 = vmatmul.f32.gmra.mxu0 %v4798
    %v4800 = vpop.f32.mrf.mxu0
    %v4801 = vadd.f32 %v4770, %v4800
    %4802 = vdwg.mxu0
    %4803 = vmatpush.msra.mxu0 0.0
    %4804 = vmatpush.msra.mxu0 0.0
    %4805 = vmatpush.msra.mxu0 0.0
    %4806 = vmatpush.msra.mxu0 0.0
    %4807 = vmatpush.msra.mxu0 0.0
    %4808 = vmatpush.msra.mxu0 0.0
    %4809 = vmatpush.msra.mxu0 0.0
    %4810 = vmatpush.msra.mxu0 0.0
    %4811 = vmatpush.msra.mxu0 0.0
    %4812 = vmatpush.msra.mxu0 0.0
    %4813 = vmatpush.msra.mxu0 0.0
    %4814 = vmatpush.msra.mxu0 0.0
    %4815 = vmatpush.msra.mxu0 0.0
    %4816 = vmatpush.msra.mxu0 0.0
    %v4817 = vand.u32 %v1639, 4294901760
    %4818 = vmatpush.msra.mxu0 %v4817
    %v4819 = vand.u32 %v1637, 4294901760
    %4820 = vmatpush.msra.mxu0 %v4819
    %v4821 = vand.u32 %v4635, 4294901760
    %4822 = vmatmul.f32.gmra.mxu0 %v4821
    %v4823 = vpop.f32.mrf.mxu0
    %v4824 = vadd.f32 %v4797, %v4823
    %v4825 = vand.u32 %v4638, 4294901760
    %4826 = vmatmul.f32.gmra.mxu0 %v4825
    %v4827 = vpop.f32.mrf.mxu0
    %v4828 = vadd.f32 %v4801, %v4827
    %4829 = vdwg.mxu0
    %v4831 = vsel %vm3281, %v3456, 0
    %v4834 = vsel %vm3281, %v3457, 0
    %4836 = vmatpush.msra.mxu0 0.0
    %4837 = vmatpush.msra.mxu0 0.0
    %4838 = vmatpush.msra.mxu0 0.0
    %4839 = vmatpush.msra.mxu0 0.0
    %4840 = vmatpush.msra.mxu0 0.0
    %4841 = vmatpush.msra.mxu0 0.0
    %4842 = vmatpush.msra.mxu0 0.0
    %4843 = vmatpush.msra.mxu0 0.0
    %4844 = vmatpush.msra.mxu0 0.0
    %4845 = vmatpush.msra.mxu0 0.0
    %4846 = vmatpush.msra.mxu0 0.0
    %4847 = vmatpush.msra.mxu0 0.0
    %4848 = vmatpush.msra.mxu0 0.0
    %4849 = vmatpush.msra.mxu0 0.0
    %v4850 = vand.u32 %v1645, 4294901760
    %4851 = vmatpush.msra.mxu0 %v4850
    %v4852 = vand.u32 %v1643, 4294901760
    %4853 = vmatpush.msra.mxu0 %v4852
    %v4854 = vand.u32 %v4831, 4294901760
    %v4855 = vsub.f32 %v4831, %v4854
    %v4856 = vand.u32 %v4855, 4294901760
    %v4857 = vsub.f32 %v4855, %v4856
    %v4858 = vand.u32 %v4857, 4294901760
    %4859 = vmatmul.f32.gmra.mxu0 %v4858
    %v4860 = vpop.f32.mrf.mxu0
    %v4861 = vadd.f32 0.0, %v4860
    %v4862 = vand.u32 %v4834, 4294901760
    %v4863 = vsub.f32 %v4834, %v4862
    %v4864 = vand.u32 %v4863, 4294901760
    %v4865 = vsub.f32 %v4863, %v4864
    %v4866 = vand.u32 %v4865, 4294901760
    %4867 = vmatmul.f32.gmra.mxu0 %v4866
    %v4868 = vpop.f32.mrf.mxu0
    %v4869 = vadd.f32 0.0, %v4868
    %4870 = vdwg.mxu0
    %4871 = vmatpush.msra.mxu0 0.0
    %4872 = vmatpush.msra.mxu0 0.0
    %4873 = vmatpush.msra.mxu0 0.0
    %4874 = vmatpush.msra.mxu0 0.0
    %4875 = vmatpush.msra.mxu0 0.0
    %4876 = vmatpush.msra.mxu0 0.0
    %4877 = vmatpush.msra.mxu0 0.0
    %4878 = vmatpush.msra.mxu0 0.0
    %4879 = vmatpush.msra.mxu0 0.0
    %4880 = vmatpush.msra.mxu0 0.0
    %4881 = vmatpush.msra.mxu0 0.0
    %4882 = vmatpush.msra.mxu0 0.0
    %4883 = vmatpush.msra.mxu0 0.0
    %4884 = vmatpush.msra.mxu0 0.0
    %v4885 = vand.u32 %v1645, 4294901760
    %v4886 = vsub.f32 %v1645, %v4885
    %v4887 = vand.u32 %v4886, 4294901760
    %v4888 = vsub.f32 %v4886, %v4887
    %v4889 = vand.u32 %v4888, 4294901760
    %4890 = vmatpush.msra.mxu0 %v4889
    %v4891 = vand.u32 %v1643, 4294901760
    %v4892 = vsub.f32 %v1643, %v4891
    %v4893 = vand.u32 %v4892, 4294901760
    %v4894 = vsub.f32 %v4892, %v4893
    %v4895 = vand.u32 %v4894, 4294901760
    %4896 = vmatpush.msra.mxu0 %v4895
    %v4897 = vand.u32 %v4831, 4294901760
    %4898 = vmatmul.f32.gmra.mxu0 %v4897
    %v4899 = vpop.f32.mrf.mxu0
    %v4900 = vadd.f32 %v4861, %v4899
    %v4901 = vand.u32 %v4834, 4294901760
    %4902 = vmatmul.f32.gmra.mxu0 %v4901
    %v4903 = vpop.f32.mrf.mxu0
    %v4904 = vadd.f32 %v4869, %v4903
    %4905 = vdwg.mxu0
    %4906 = vmatpush.msra.mxu0 0.0
    %4907 = vmatpush.msra.mxu0 0.0
    %4908 = vmatpush.msra.mxu0 0.0
    %4909 = vmatpush.msra.mxu0 0.0
    %4910 = vmatpush.msra.mxu0 0.0
    %4911 = vmatpush.msra.mxu0 0.0
    %4912 = vmatpush.msra.mxu0 0.0
    %4913 = vmatpush.msra.mxu0 0.0
    %4914 = vmatpush.msra.mxu0 0.0
    %4915 = vmatpush.msra.mxu0 0.0
    %4916 = vmatpush.msra.mxu0 0.0
    %4917 = vmatpush.msra.mxu0 0.0
    %4918 = vmatpush.msra.mxu0 0.0
    %4919 = vmatpush.msra.mxu0 0.0
    %v4920 = vand.u32 %v1645, 4294901760
    %v4921 = vsub.f32 %v1645, %v4920
    %4922 = vmatpush.msra.mxu0 %v4921
    %v4923 = vand.u32 %v1643, 4294901760
    %v4924 = vsub.f32 %v1643, %v4923
    %4925 = vmatpush.msra.mxu0 %v4924
    %v4926 = vand.u32 %v4831, 4294901760
    %v4927 = vsub.f32 %v4831, %v4926
    %4928 = vmatmul.f32.gmra.mxu0 %v4927
    %v4929 = vpop.f32.mrf.mxu0
    %v4930 = vadd.f32 %v4900, %v4929
    %v4931 = vand.u32 %v4834, 4294901760
    %v4932 = vsub.f32 %v4834, %v4931
    %4933 = vmatmul.f32.gmra.mxu0 %v4932
    %v4934 = vpop.f32.mrf.mxu0
    %v4935 = vadd.f32 %v4904, %v4934
    %4936 = vdwg.mxu0
    %4937 = vmatpush.msra.mxu0 0.0
    %4938 = vmatpush.msra.mxu0 0.0
    %4939 = vmatpush.msra.mxu0 0.0
    %4940 = vmatpush.msra.mxu0 0.0
    %4941 = vmatpush.msra.mxu0 0.0
    %4942 = vmatpush.msra.mxu0 0.0
    %4943 = vmatpush.msra.mxu0 0.0
    %4944 = vmatpush.msra.mxu0 0.0
    %4945 = vmatpush.msra.mxu0 0.0
    %4946 = vmatpush.msra.mxu0 0.0
    %4947 = vmatpush.msra.mxu0 0.0
    %4948 = vmatpush.msra.mxu0 0.0
    %4949 = vmatpush.msra.mxu0 0.0
    %4950 = vmatpush.msra.mxu0 0.0
    %v4951 = vand.u32 %v1645, 4294901760
    %4952 = vmatpush.msra.mxu0 %v4951
    %v4953 = vand.u32 %v1643, 4294901760
    %4954 = vmatpush.msra.mxu0 %v4953
    %v4955 = vand.u32 %v4831, 4294901760
    %v4956 = vsub.f32 %v4831, %v4955
    %v4957 = vand.u32 %v4956, 4294901760
    %4958 = vmatmul.f32.gmra.mxu0 %v4957
    %v4959 = vpop.f32.mrf.mxu0
    %v4960 = vadd.f32 %v4930, %v4959
    %v4961 = vand.u32 %v4834, 4294901760
    %v4962 = vsub.f32 %v4834, %v4961
    %v4963 = vand.u32 %v4962, 4294901760
    %4964 = vmatmul.f32.gmra.mxu0 %v4963
    %v4965 = vpop.f32.mrf.mxu0
    %v4966 = vadd.f32 %v4935, %v4965
    %4967 = vdwg.mxu0
    %4968 = vmatpush.msra.mxu0 0.0
    %4969 = vmatpush.msra.mxu0 0.0
    %4970 = vmatpush.msra.mxu0 0.0
    %4971 = vmatpush.msra.mxu0 0.0
    %4972 = vmatpush.msra.mxu0 0.0
    %4973 = vmatpush.msra.mxu0 0.0
    %4974 = vmatpush.msra.mxu0 0.0
    %4975 = vmatpush.msra.mxu0 0.0
    %4976 = vmatpush.msra.mxu0 0.0
    %4977 = vmatpush.msra.mxu0 0.0
    %4978 = vmatpush.msra.mxu0 0.0
    %4979 = vmatpush.msra.mxu0 0.0
    %4980 = vmatpush.msra.mxu0 0.0
    %4981 = vmatpush.msra.mxu0 0.0
    %v4982 = vand.u32 %v1645, 4294901760
    %v4983 = vsub.f32 %v1645, %v4982
    %v4984 = vand.u32 %v4983, 4294901760
    %4985 = vmatpush.msra.mxu0 %v4984
    %v4986 = vand.u32 %v1643, 4294901760
    %v4987 = vsub.f32 %v1643, %v4986
    %v4988 = vand.u32 %v4987, 4294901760
    %4989 = vmatpush.msra.mxu0 %v4988
    %v4990 = vand.u32 %v4831, 4294901760
    %4991 = vmatmul.f32.gmra.mxu0 %v4990
    %v4992 = vpop.f32.mrf.mxu0
    %v4993 = vadd.f32 %v4960, %v4992
    %v4994 = vand.u32 %v4834, 4294901760
    %4995 = vmatmul.f32.gmra.mxu0 %v4994
    %v4996 = vpop.f32.mrf.mxu0
    %v4997 = vadd.f32 %v4966, %v4996
    %4998 = vdwg.mxu0
    %4999 = vmatpush.msra.mxu0 0.0
    %5000 = vmatpush.msra.mxu0 0.0
    %5001 = vmatpush.msra.mxu0 0.0
    %5002 = vmatpush.msra.mxu0 0.0
    %5003 = vmatpush.msra.mxu0 0.0
    %5004 = vmatpush.msra.mxu0 0.0
    %5005 = vmatpush.msra.mxu0 0.0
    %5006 = vmatpush.msra.mxu0 0.0
    %5007 = vmatpush.msra.mxu0 0.0
    %5008 = vmatpush.msra.mxu0 0.0
    %5009 = vmatpush.msra.mxu0 0.0
    %5010 = vmatpush.msra.mxu0 0.0
    %5011 = vmatpush.msra.mxu0 0.0
    %5012 = vmatpush.msra.mxu0 0.0
    %v5013 = vand.u32 %v1645, 4294901760
    %5014 = vmatpush.msra.mxu0 %v5013
    %v5015 = vand.u32 %v1643, 4294901760
    %5016 = vmatpush.msra.mxu0 %v5015
    %v5017 = vand.u32 %v4831, 4294901760
    %5018 = vmatmul.f32.gmra.mxu0 %v5017
    %v5019 = vpop.f32.mrf.mxu0
    %v5020 = vadd.f32 %v4993, %v5019
    %v5021 = vand.u32 %v4834, 4294901760
    %5022 = vmatmul.f32.gmra.mxu0 %v5021
    %v5023 = vpop.f32.mrf.mxu0
    %v5024 = vadd.f32 %v4997, %v5023
    %5025 = vdwg.mxu0
    %v5026 = vsel %vm27, %v3648, 0.0
    %v5027 = vsel %vm27, %v3844, 0.0
    %v5028 = vadd.f32 %v5026, %v5027
    %v5029 = vsel %vm27, %v4040, 0.0
    %v5030 = vadd.f32 %v5028, %v5029
    %v5031 = vsel %vm27, %v4236, 0.0
    %v5032 = vadd.f32 %v5030, %v5031
    %v5033 = vsel %vm27, %v3652, 0.0
    %v5034 = vsel %vm27, %v3848, 0.0
    %v5035 = vadd.f32 %v5033, %v5034
    %v5036 = vsel %vm27, %v4044, 0.0
    %v5037 = vadd.f32 %v5035, %v5036
    %v5038 = vsel %vm27, %v4240, 0.0
    %v5039 = vadd.f32 %v5037, %v5038
    %v5040 = vsel %vm27, %v4432, 0.0
    %v5041 = vsel %vm27, %v4628, 0.0
    %v5042 = vadd.f32 %v5040, %v5041
    %v5043 = vsel %vm27, %v4824, 0.0
    %v5044 = vadd.f32 %v5042, %v5043
    %v5045 = vsel %vm27, %v5020, 0.0
    %v5046 = vadd.f32 %v5044, %v5045
    %v5047 = vsel %vm27, %v4436, 0.0
    %v5048 = vsel %vm27, %v4632, 0.0
    %v5049 = vadd.f32 %v5047, %v5048
    %v5050 = vsel %vm27, %v4828, 0.0
    %v5051 = vadd.f32 %v5049, %v5050
    %v5052 = vsel %vm27, %v5024, 0.0
    %v5053 = vadd.f32 %v5051, %v5052
    %v5054 = vadd.f32 %v905, %v5032
    %v5055 = vadd.f32 %v906, %v5039
    %v5056 = vadd.f32 %v907, %v5046
    %v5057 = vadd.f32 %v908, %v5053
    %v5058 = vsel %vm27, %v5054, 0.0
    %5059 = vadd.xlane.f32.xlu0 %v5058
    %v5060 = vpop.xlane.xlu0 %5059
    %v5061 = vsel %vm27, %v5055, 0.0
    %5062 = vadd.xlane.f32.xlu0 %v5061
    %v5063 = vpop.xlane.xlu0 %5062
    %v5064 = vsel %vm27, %v5056, 0.0
    %5065 = vadd.xlane.f32.xlu0 %v5064
    %v5066 = vpop.xlane.xlu0 %5065
    %v5067 = vsel %vm27, %v5057, 0.0
    %5068 = vadd.xlane.f32.xlu0 %v5067
    %v5069 = vpop.xlane.xlu0 %5068
    %v5070 = vmul.f32 %v5060, %v46
    %v5071 = vmul.f32 %v5063, %v46
    %v5072 = vmul.f32 %v5066, %v46
    %v5073 = vmul.f32 %v5069, %v46
    %v5074 = vsub.f32 %v5054, %v5070
    %v5075 = vsub.f32 %v5055, %v5071
    %v5076 = vsub.f32 %v5056, %v5072
    %v5077 = vsub.f32 %v5057, %v5073
    %v5078 = vmul.f32 %v5074, %v5074
    %v5079 = vmul.f32 %v5075, %v5075
    %v5080 = vmul.f32 %v5076, %v5076
    %v5081 = vmul.f32 %v5077, %v5077
    %v5082 = vsel %vm27, %v5078, 0.0
    %5083 = vadd.xlane.f32.xlu0 %v5082
    %v5084 = vpop.xlane.xlu0 %5083
    %v5085 = vsel %vm27, %v5079, 0.0
    %5086 = vadd.xlane.f32.xlu0 %v5085
    %v5087 = vpop.xlane.xlu0 %5086
    %v5088 = vsel %vm27, %v5080, 0.0
    %5089 = vadd.xlane.f32.xlu0 %v5088
    %v5090 = vpop.xlane.xlu0 %5089
    %v5091 = vsel %vm27, %v5081, 0.0
    %5092 = vadd.xlane.f32.xlu0 %v5091
    %v5093 = vpop.xlane.xlu0 %5092
    %v5094 = vmul.f32 %v5084, %v46
    %v5095 = vmul.f32 %v5087, %v46
    %v5096 = vmul.f32 %v5090, %v46
    %v5097 = vmul.f32 %v5093, %v46
    %v5098 = vadd.f32 %v5094, 1e-05
    %v5099 = vadd.f32 %v5095, 1e-05
    %v5100 = vadd.f32 %v5096, 1e-05
    %v5101 = vadd.f32 %v5097, 1e-05
    %v5102 = vrsqrt.pop %v5098
    %v5103 = vmul.f32 %v5102, %v5098
    %v5104 = vmul.f32 %v5103, %v5102
    %v5105 = vmul.f32 0.5, %v5104
    %v5106 = vsub.f32 1.5, %v5105
    %v5107 = vmul.f32 %v5102, %v5106
    %vm5108 = vweird.f32 %v5098
    %vm5109 = vweird.f32 %v5102
    %vm5110 = vmor %vm5108, %vm5109
    %v5111 = vsel %vm5110, %v5102, %v5107
    %v5112 = vrsqrt.pop %v5099
    %v5113 = vmul.f32 %v5112, %v5099
    %v5114 = vmul.f32 %v5113, %v5112
    %v5115 = vmul.f32 0.5, %v5114
    %v5116 = vsub.f32 1.5, %v5115
    %v5117 = vmul.f32 %v5112, %v5116
    %vm5118 = vweird.f32 %v5099
    %vm5119 = vweird.f32 %v5112
    %vm5120 = vmor %vm5118, %vm5119
    %v5121 = vsel %vm5120, %v5112, %v5117
    %v5122 = vrsqrt.pop %v5100
    %v5123 = vmul.f32 %v5122, %v5100
    %v5124 = vmul.f32 %v5123, %v5122
    %v5125 = vmul.f32 0.5, %v5124
    %v5126 = vsub.f32 1.5, %v5125
    %v5127 = vmul.f32 %v5122, %v5126
    %vm5128 = vweird.f32 %v5100
    %vm5129 = vweird.f32 %v5122
    %vm5130 = vmor %vm5128, %vm5129
    %v5131 = vsel %vm5130, %v5122, %v5127
    %v5132 = vrsqrt.pop %v5101
    %v5133 = vmul.f32 %v5132, %v5101
    %v5134 = vmul.f32 %v5133, %v5132
    %v5135 = vmul.f32 0.5, %v5134
    %v5136 = vsub.f32 1.5, %v5135
    %v5137 = vmul.f32 %v5132, %v5136
    %vm5138 = vweird.f32 %v5101
    %vm5139 = vweird.f32 %v5132
    %vm5140 = vmor %vm5138, %vm5139
    %v5141 = vsel %vm5140, %v5132, %v5137
    %v5142 = vmul.f32 %v5074, %v5111
    %v5143 = vmul.f32 %v5075, %v5121
    %v5144 = vmul.f32 %v5076, %v5131
    %v5145 = vmul.f32 %v5077, %v5141
    %v5146 = vld [vmem:[%s1 + $0x20] sm:$0xff]
    %v5147 = vld [vmem:[%s1 + $0x50] sm:$0xff]
    %v5148 = vld [vmem:[%s1 + $0x80] sm:$0xff]
    %v5149 = vld [vmem:[%s1 + $0xb0] sm:$0xff]
    %v5150 = vperm.slane %v24, 4
    %v5152 = vsel %vm27, %v5142, 0
    %v5155 = vsel %vm27, %v5143, 0
    %v5158 = vsel %vm27, %v5144, 0
    %v5161 = vsel %vm27, %v5145, 0
    %5163 = vmatpush.msra.mxu0 0.0
    %5164 = vmatpush.msra.mxu0 0.0
    %5165 = vmatpush.msra.mxu0 0.0
    %5166 = vmatpush.msra.mxu0 0.0
    %5167 = vmatpush.msra.mxu0 0.0
    %5168 = vmatpush.msra.mxu0 0.0
    %5169 = vmatpush.msra.mxu0 0.0
    %5170 = vmatpush.msra.mxu0 0.0
    %5171 = vmatpush.msra.mxu0 0.0
    %5172 = vmatpush.msra.mxu0 0.0
    %5173 = vmatpush.msra.mxu0 0.0
    %5174 = vmatpush.msra.mxu0 0.0
    %v5175 = vand.u32 %v5149, 4294901760
    %5176 = vmatpush.msra.mxu0 %v5175
    %v5177 = vand.u32 %v5148, 4294901760
    %5178 = vmatpush.msra.mxu0 %v5177
    %v5179 = vand.u32 %v5147, 4294901760
    %5180 = vmatpush.msra.mxu0 %v5179
    %v5181 = vand.u32 %v5146, 4294901760
    %5182 = vmatpush.msra.mxu0 %v5181
    %v5183 = vand.u32 %v5152, 4294901760
    %v5184 = vsub.f32 %v5152, %v5183
    %v5185 = vand.u32 %v5184, 4294901760
    %v5186 = vsub.f32 %v5184, %v5185
    %v5187 = vand.u32 %v5186, 4294901760
    %5188 = vmatmul.f32.gmra.mxu0 %v5187
    %v5189 = vpop.f32.mrf.mxu0
    %v5190 = vadd.f32 %v5150, %v5189
    %v5191 = vand.u32 %v5155, 4294901760
    %v5192 = vsub.f32 %v5155, %v5191
    %v5193 = vand.u32 %v5192, 4294901760
    %v5194 = vsub.f32 %v5192, %v5193
    %v5195 = vand.u32 %v5194, 4294901760
    %5196 = vmatmul.f32.gmra.mxu0 %v5195
    %v5197 = vpop.f32.mrf.mxu0
    %v5198 = vadd.f32 %v5150, %v5197
    %v5199 = vand.u32 %v5158, 4294901760
    %v5200 = vsub.f32 %v5158, %v5199
    %v5201 = vand.u32 %v5200, 4294901760
    %v5202 = vsub.f32 %v5200, %v5201
    %v5203 = vand.u32 %v5202, 4294901760
    %5204 = vmatmul.f32.gmra.mxu0 %v5203
    %v5205 = vpop.f32.mrf.mxu0
    %v5206 = vadd.f32 %v5150, %v5205
    %v5207 = vand.u32 %v5161, 4294901760
    %v5208 = vsub.f32 %v5161, %v5207
    %v5209 = vand.u32 %v5208, 4294901760
    %v5210 = vsub.f32 %v5208, %v5209
    %v5211 = vand.u32 %v5210, 4294901760
    %5212 = vmatmul.f32.gmra.mxu0 %v5211
    %v5213 = vpop.f32.mrf.mxu0
    %v5214 = vadd.f32 %v5150, %v5213
    %5215 = vdwg.mxu0
    %5216 = vmatpush.msra.mxu0 0.0
    %5217 = vmatpush.msra.mxu0 0.0
    %5218 = vmatpush.msra.mxu0 0.0
    %5219 = vmatpush.msra.mxu0 0.0
    %5220 = vmatpush.msra.mxu0 0.0
    %5221 = vmatpush.msra.mxu0 0.0
    %5222 = vmatpush.msra.mxu0 0.0
    %5223 = vmatpush.msra.mxu0 0.0
    %5224 = vmatpush.msra.mxu0 0.0
    %5225 = vmatpush.msra.mxu0 0.0
    %5226 = vmatpush.msra.mxu0 0.0
    %5227 = vmatpush.msra.mxu0 0.0
    %v5228 = vand.u32 %v5149, 4294901760
    %v5229 = vsub.f32 %v5149, %v5228
    %v5230 = vand.u32 %v5229, 4294901760
    %v5231 = vsub.f32 %v5229, %v5230
    %v5232 = vand.u32 %v5231, 4294901760
    %5233 = vmatpush.msra.mxu0 %v5232
    %v5234 = vand.u32 %v5148, 4294901760
    %v5235 = vsub.f32 %v5148, %v5234
    %v5236 = vand.u32 %v5235, 4294901760
    %v5237 = vsub.f32 %v5235, %v5236
    %v5238 = vand.u32 %v5237, 4294901760
    %5239 = vmatpush.msra.mxu0 %v5238
    %v5240 = vand.u32 %v5147, 4294901760
    %v5241 = vsub.f32 %v5147, %v5240
    %v5242 = vand.u32 %v5241, 4294901760
    %v5243 = vsub.f32 %v5241, %v5242
    %v5244 = vand.u32 %v5243, 4294901760
    %5245 = vmatpush.msra.mxu0 %v5244
    %v5246 = vand.u32 %v5146, 4294901760
    %v5247 = vsub.f32 %v5146, %v5246
    %v5248 = vand.u32 %v5247, 4294901760
    %v5249 = vsub.f32 %v5247, %v5248
    %v5250 = vand.u32 %v5249, 4294901760
    %5251 = vmatpush.msra.mxu0 %v5250
    %v5252 = vand.u32 %v5152, 4294901760
    %5253 = vmatmul.f32.gmra.mxu0 %v5252
    %v5254 = vpop.f32.mrf.mxu0
    %v5255 = vadd.f32 %v5190, %v5254
    %v5256 = vand.u32 %v5155, 4294901760
    %5257 = vmatmul.f32.gmra.mxu0 %v5256
    %v5258 = vpop.f32.mrf.mxu0
    %v5259 = vadd.f32 %v5198, %v5258
    %v5260 = vand.u32 %v5158, 4294901760
    %5261 = vmatmul.f32.gmra.mxu0 %v5260
    %v5262 = vpop.f32.mrf.mxu0
    %v5263 = vadd.f32 %v5206, %v5262
    %v5264 = vand.u32 %v5161, 4294901760
    %5265 = vmatmul.f32.gmra.mxu0 %v5264
    %v5266 = vpop.f32.mrf.mxu0
    %v5267 = vadd.f32 %v5214, %v5266
    %5268 = vdwg.mxu0
    %5269 = vmatpush.msra.mxu0 0.0
    %5270 = vmatpush.msra.mxu0 0.0
    %5271 = vmatpush.msra.mxu0 0.0
    %5272 = vmatpush.msra.mxu0 0.0
    %5273 = vmatpush.msra.mxu0 0.0
    %5274 = vmatpush.msra.mxu0 0.0
    %5275 = vmatpush.msra.mxu0 0.0
    %5276 = vmatpush.msra.mxu0 0.0
    %5277 = vmatpush.msra.mxu0 0.0
    %5278 = vmatpush.msra.mxu0 0.0
    %5279 = vmatpush.msra.mxu0 0.0
    %5280 = vmatpush.msra.mxu0 0.0
    %v5281 = vand.u32 %v5149, 4294901760
    %v5282 = vsub.f32 %v5149, %v5281
    %5283 = vmatpush.msra.mxu0 %v5282
    %v5284 = vand.u32 %v5148, 4294901760
    %v5285 = vsub.f32 %v5148, %v5284
    %5286 = vmatpush.msra.mxu0 %v5285
    %v5287 = vand.u32 %v5147, 4294901760
    %v5288 = vsub.f32 %v5147, %v5287
    %5289 = vmatpush.msra.mxu0 %v5288
    %v5290 = vand.u32 %v5146, 4294901760
    %v5291 = vsub.f32 %v5146, %v5290
    %5292 = vmatpush.msra.mxu0 %v5291
    %v5293 = vand.u32 %v5152, 4294901760
    %v5294 = vsub.f32 %v5152, %v5293
    %5295 = vmatmul.f32.gmra.mxu0 %v5294
    %v5296 = vpop.f32.mrf.mxu0
    %v5297 = vadd.f32 %v5255, %v5296
    %v5298 = vand.u32 %v5155, 4294901760
    %v5299 = vsub.f32 %v5155, %v5298
    %5300 = vmatmul.f32.gmra.mxu0 %v5299
    %v5301 = vpop.f32.mrf.mxu0
    %v5302 = vadd.f32 %v5259, %v5301
    %v5303 = vand.u32 %v5158, 4294901760
    %v5304 = vsub.f32 %v5158, %v5303
    %5305 = vmatmul.f32.gmra.mxu0 %v5304
    %v5306 = vpop.f32.mrf.mxu0
    %v5307 = vadd.f32 %v5263, %v5306
    %v5308 = vand.u32 %v5161, 4294901760
    %v5309 = vsub.f32 %v5161, %v5308
    %5310 = vmatmul.f32.gmra.mxu0 %v5309
    %v5311 = vpop.f32.mrf.mxu0
    %v5312 = vadd.f32 %v5267, %v5311
    %5313 = vdwg.mxu0
    %5314 = vmatpush.msra.mxu0 0.0
    %5315 = vmatpush.msra.mxu0 0.0
    %5316 = vmatpush.msra.mxu0 0.0
    %5317 = vmatpush.msra.mxu0 0.0
    %5318 = vmatpush.msra.mxu0 0.0
    %5319 = vmatpush.msra.mxu0 0.0
    %5320 = vmatpush.msra.mxu0 0.0
    %5321 = vmatpush.msra.mxu0 0.0
    %5322 = vmatpush.msra.mxu0 0.0
    %5323 = vmatpush.msra.mxu0 0.0
    %5324 = vmatpush.msra.mxu0 0.0
    %5325 = vmatpush.msra.mxu0 0.0
    %v5326 = vand.u32 %v5149, 4294901760
    %5327 = vmatpush.msra.mxu0 %v5326
    %v5328 = vand.u32 %v5148, 4294901760
    %5329 = vmatpush.msra.mxu0 %v5328
    %v5330 = vand.u32 %v5147, 4294901760
    %5331 = vmatpush.msra.mxu0 %v5330
    %v5332 = vand.u32 %v5146, 4294901760
    %5333 = vmatpush.msra.mxu0 %v5332
    %v5334 = vand.u32 %v5152, 4294901760
    %v5335 = vsub.f32 %v5152, %v5334
    %v5336 = vand.u32 %v5335, 4294901760
    %5337 = vmatmul.f32.gmra.mxu0 %v5336
    %v5338 = vpop.f32.mrf.mxu0
    %v5339 = vadd.f32 %v5297, %v5338
    %v5340 = vand.u32 %v5155, 4294901760
    %v5341 = vsub.f32 %v5155, %v5340
    %v5342 = vand.u32 %v5341, 4294901760
    %5343 = vmatmul.f32.gmra.mxu0 %v5342
    %v5344 = vpop.f32.mrf.mxu0
    %v5345 = vadd.f32 %v5302, %v5344
    %v5346 = vand.u32 %v5158, 4294901760
    %v5347 = vsub.f32 %v5158, %v5346
    %v5348 = vand.u32 %v5347, 4294901760
    %5349 = vmatmul.f32.gmra.mxu0 %v5348
    %v5350 = vpop.f32.mrf.mxu0
    %v5351 = vadd.f32 %v5307, %v5350
    %v5352 = vand.u32 %v5161, 4294901760
    %v5353 = vsub.f32 %v5161, %v5352
    %v5354 = vand.u32 %v5353, 4294901760
    %5355 = vmatmul.f32.gmra.mxu0 %v5354
    %v5356 = vpop.f32.mrf.mxu0
    %v5357 = vadd.f32 %v5312, %v5356
    %5358 = vdwg.mxu0
    %5359 = vmatpush.msra.mxu0 0.0
    %5360 = vmatpush.msra.mxu0 0.0
    %5361 = vmatpush.msra.mxu0 0.0
    %5362 = vmatpush.msra.mxu0 0.0
    %5363 = vmatpush.msra.mxu0 0.0
    %5364 = vmatpush.msra.mxu0 0.0
    %5365 = vmatpush.msra.mxu0 0.0
    %5366 = vmatpush.msra.mxu0 0.0
    %5367 = vmatpush.msra.mxu0 0.0
    %5368 = vmatpush.msra.mxu0 0.0
    %5369 = vmatpush.msra.mxu0 0.0
    %5370 = vmatpush.msra.mxu0 0.0
    %v5371 = vand.u32 %v5149, 4294901760
    %v5372 = vsub.f32 %v5149, %v5371
    %v5373 = vand.u32 %v5372, 4294901760
    %5374 = vmatpush.msra.mxu0 %v5373
    %v5375 = vand.u32 %v5148, 4294901760
    %v5376 = vsub.f32 %v5148, %v5375
    %v5377 = vand.u32 %v5376, 4294901760
    %5378 = vmatpush.msra.mxu0 %v5377
    %v5379 = vand.u32 %v5147, 4294901760
    %v5380 = vsub.f32 %v5147, %v5379
    %v5381 = vand.u32 %v5380, 4294901760
    %5382 = vmatpush.msra.mxu0 %v5381
    %v5383 = vand.u32 %v5146, 4294901760
    %v5384 = vsub.f32 %v5146, %v5383
    %v5385 = vand.u32 %v5384, 4294901760
    %5386 = vmatpush.msra.mxu0 %v5385
    %v5387 = vand.u32 %v5152, 4294901760
    %5388 = vmatmul.f32.gmra.mxu0 %v5387
    %v5389 = vpop.f32.mrf.mxu0
    %v5390 = vadd.f32 %v5339, %v5389
    %v5391 = vand.u32 %v5155, 4294901760
    %5392 = vmatmul.f32.gmra.mxu0 %v5391
    %v5393 = vpop.f32.mrf.mxu0
    %v5394 = vadd.f32 %v5345, %v5393
    %v5395 = vand.u32 %v5158, 4294901760
    %5396 = vmatmul.f32.gmra.mxu0 %v5395
    %v5397 = vpop.f32.mrf.mxu0
    %v5398 = vadd.f32 %v5351, %v5397
    %v5399 = vand.u32 %v5161, 4294901760
    %5400 = vmatmul.f32.gmra.mxu0 %v5399
    %v5401 = vpop.f32.mrf.mxu0
    %v5402 = vadd.f32 %v5357, %v5401
    %5403 = vdwg.mxu0
    %5404 = vmatpush.msra.mxu0 0.0
    %5405 = vmatpush.msra.mxu0 0.0
    %5406 = vmatpush.msra.mxu0 0.0
    %5407 = vmatpush.msra.mxu0 0.0
    %5408 = vmatpush.msra.mxu0 0.0
    %5409 = vmatpush.msra.mxu0 0.0
    %5410 = vmatpush.msra.mxu0 0.0
    %5411 = vmatpush.msra.mxu0 0.0
    %5412 = vmatpush.msra.mxu0 0.0
    %5413 = vmatpush.msra.mxu0 0.0
    %5414 = vmatpush.msra.mxu0 0.0
    %5415 = vmatpush.msra.mxu0 0.0
    %v5416 = vand.u32 %v5149, 4294901760
    %5417 = vmatpush.msra.mxu0 %v5416
    %v5418 = vand.u32 %v5148, 4294901760
    %5419 = vmatpush.msra.mxu0 %v5418
    %v5420 = vand.u32 %v5147, 4294901760
    %5421 = vmatpush.msra.mxu0 %v5420
    %v5422 = vand.u32 %v5146, 4294901760
    %5423 = vmatpush.msra.mxu0 %v5422
    %v5424 = vand.u32 %v5152, 4294901760
    %5425 = vmatmul.f32.gmra.mxu0 %v5424
    %v5426 = vpop.f32.mrf.mxu0
    %v5427 = vadd.f32 %v5390, %v5426
    %v5428 = vand.u32 %v5155, 4294901760
    %5429 = vmatmul.f32.gmra.mxu0 %v5428
    %v5430 = vpop.f32.mrf.mxu0
    %v5431 = vadd.f32 %v5394, %v5430
    %v5432 = vand.u32 %v5158, 4294901760
    %5433 = vmatmul.f32.gmra.mxu0 %v5432
    %v5434 = vpop.f32.mrf.mxu0
    %v5435 = vadd.f32 %v5398, %v5434
    %v5436 = vand.u32 %v5161, 4294901760
    %5437 = vmatmul.f32.gmra.mxu0 %v5436
    %v5438 = vpop.f32.mrf.mxu0
    %v5439 = vadd.f32 %v5402, %v5438
    %5440 = vdwg.mxu0
    %v5441 = vxor.u32 %v5427, 2147483648
    %v5442 = vxor.u32 %v5431, 2147483648
    %v5443 = vxor.u32 %v5435, 2147483648
    %v5444 = vxor.u32 %v5439, 2147483648
    %v5445 = vmul.f32 %v5441, 1.442695
    %v5446 = vpow.pop %v5445
    %v5447 = vmul.f32 %v5442, 1.442695
    %v5448 = vpow.pop %v5447
    %v5449 = vmul.f32 %v5443, 1.442695
    %v5450 = vpow.pop %v5449
    %v5451 = vmul.f32 %v5444, 1.442695
    %v5452 = vpow.pop %v5451
    %v5453 = vadd.f32 %v5446, 1.0
    %v5454 = vadd.f32 %v5448, 1.0
    %v5455 = vadd.f32 %v5450, 1.0
    %v5456 = vadd.f32 %v5452, 1.0
    %v5457 = vrcp.pop %v5453
    %v5458 = vmul.f32 %v5453, %v5457
    %v5459 = vsub.f32 1.0, %v5458
    %v5460 = vmul.f32 %v5457, %v5459
    %v5461 = vadd.f32 %v5457, %v5460
    %vm5462 = vweird.f32 %v5453
    %vm5463 = vweird.f32 %v5457
    %vm5464 = vmor %vm5462, %vm5463
    %v5465 = vsel %vm5464, %v5457, %v5461
    %v5466 = vand.u32 2147483647, %v5453
    %vm5467 = vcmp.eq.f32.partialorder %v5466, 8.507059e+37
    %v5468 = vand.u32 %v5453, 2147483648
    %v5469 = vor.u32 1.1754944e-38, %v5468
    %v5470 = vsel %vm5467, %v5469, %v5465
    %v5471 = vmul.f32 1.0, %v5470
    %v5472 = vrcp.pop %v5454
    %v5473 = vmul.f32 %v5454, %v5472
    %v5474 = vsub.f32 1.0, %v5473
    %v5475 = vmul.f32 %v5472, %v5474
    %v5476 = vadd.f32 %v5472, %v5475
    %vm5477 = vweird.f32 %v5454
    %vm5478 = vweird.f32 %v5472
    %vm5479 = vmor %vm5477, %vm5478
    %v5480 = vsel %vm5479, %v5472, %v5476
    %v5481 = vand.u32 2147483647, %v5454
    %vm5482 = vcmp.eq.f32.partialorder %v5481, 8.507059e+37
    %v5483 = vand.u32 %v5454, 2147483648
    %v5484 = vor.u32 1.1754944e-38, %v5483
    %v5485 = vsel %vm5482, %v5484, %v5480
    %v5486 = vmul.f32 1.0, %v5485
    %v5487 = vrcp.pop %v5455
    %v5488 = vmul.f32 %v5455, %v5487
    %v5489 = vsub.f32 1.0, %v5488
    %v5490 = vmul.f32 %v5487, %v5489
    %v5491 = vadd.f32 %v5487, %v5490
    %vm5492 = vweird.f32 %v5455
    %vm5493 = vweird.f32 %v5487
    %vm5494 = vmor %vm5492, %vm5493
    %v5495 = vsel %vm5494, %v5487, %v5491
    %v5496 = vand.u32 2147483647, %v5455
    %vm5497 = vcmp.eq.f32.partialorder %v5496, 8.507059e+37
    %v5498 = vand.u32 %v5455, 2147483648
    %v5499 = vor.u32 1.1754944e-38, %v5498
    %v5500 = vsel %vm5497, %v5499, %v5495
    %v5501 = vmul.f32 1.0, %v5500
    %v5502 = vrcp.pop %v5456
    %v5503 = vmul.f32 %v5456, %v5502
    %v5504 = vsub.f32 1.0, %v5503
    %v5505 = vmul.f32 %v5502, %v5504
    %v5506 = vadd.f32 %v5502, %v5505
    %vm5507 = vweird.f32 %v5456
    %vm5508 = vweird.f32 %v5502
    %vm5509 = vmor %vm5507, %vm5508
    %v5510 = vsel %vm5509, %v5502, %v5506
    %v5511 = vand.u32 2147483647, %v5456
    %vm5512 = vcmp.eq.f32.partialorder %v5511, 8.507059e+37
    %v5513 = vand.u32 %v5456, 2147483648
    %v5514 = vor.u32 1.1754944e-38, %v5513
    %v5515 = vsel %vm5512, %v5514, %v5510
    %v5516 = vmul.f32 1.0, %v5515
    %5521 = vrot.lane.b32.xlu0 %v5471, 96
    %v5522 = vpop.permute.xlu0 %5521
    %5523 = vrot.lane.b32.xlu0 %v5486, 96
    %v5524 = vpop.permute.xlu0 %5523
    %5525 = vrot.lane.b32.xlu0 %v5501, 96
    %v5526 = vpop.permute.xlu0 %5525
    %5527 = vrot.lane.b32.xlu0 %v5516, 96
    %v5528 = vpop.permute.xlu0 %5527
    %v5533 = vmul.f32 %v5427, %v5522
    %v5534 = vmul.f32 %v5431, %v5524
    %v5535 = vmul.f32 %v5435, %v5526
    %v5536 = vmul.f32 %v5439, %v5528
    %v5537 = vlaneseq
    %v5538 = vshrl.u32 %v5537, 7
    %v5539 = vadd.s32 %v5538, 8
    %v5541 = vrot.slane %v5536, 4
    %vm5546 = vcmask 1043456
    %v5547 = vrot.slane %v5533, 4
    %v5548 = vrot.slane %v5534, 4
    %v5549 = vsel %vm5546, %v5547, %v5548
    %v5550 = vrot.slane %v5535, 4
    %v5551 = vsel %vm5546, %v5548, %v5550
    %v5552 = vsel %vm5546, %v5550, %v5541
    %v5557 = vsel %vm5546, %v5541, %v5547
    %v5558 = vadd.s32 %v5538, 4294967292
    %v5559 = vadd.s32 %v5539, 4294967292
    %vm5560 = vcmp.ge.s32.totalorder %v5558, 0
    %vm5561 = vcmp.ge.s32.totalorder %v5559, 0
    %vm5562 = vcmp.lt.s32.totalorder %v5558, 16
    %vm5563 = vcmp.lt.s32.totalorder %v5559, 16
    %vm5564 = vmand %vm5560, %vm5562
    %vm5565 = vmand %vm5561, %vm5563
    %v5566 = vsel %vm5564, %v5557, 0.0
    %v5567 = vsel %vm5565, %v5549, 0.0
    %v5568 = vsel %vm5564, %v5551, 0.0
    %v5569 = vsel %vm5565, %v5552, 0.0
    %v5570 = vperm.slane %v25, 3
    %v5571 = vmul.f32 %v5566, %v5570
    %v5572 = vmul.f32 %v5567, %v5570
    %v5573 = vmul.f32 %v5568, %v5570
    %v5574 = vmul.f32 %v5569, %v5570
    %v5575 = vadd.f32 %v5571, 0.0
    %v5576 = vadd.f32 %v5572, 0.0
    %v5577 = vadd.f32 %v5573, 0.0
    %v5578 = vadd.f32 %v5574, 0.0
    %v5579 = vrot.slane %v5536, 5
    %vm5581 = vcmask 1042432
    %v5582 = vrot.slane %v5533, 5
    %v5583 = vrot.slane %v5534, 5
    %v5584 = vsel %vm5581, %v5582, %v5583
    %v5585 = vrot.slane %v5535, 5
    %v5586 = vsel %vm5581, %v5583, %v5585
    %v5587 = vsel %vm5581, %v5585, %v5579
    %v5592 = vsel %vm5581, %v5579, %v5582
    %v5593 = vadd.s32 %v5538, 4294967293
    %v5594 = vadd.s32 %v5539, 4294967293
    %vm5595 = vcmp.ge.s32.totalorder %v5593, 0
    %vm5596 = vcmp.ge.s32.totalorder %v5594, 0
    %vm5597 = vcmp.lt.s32.totalorder %v5593, 16
    %vm5598 = vcmp.lt.s32.totalorder %v5594, 16
    %vm5599 = vmand %vm5595, %vm5597
    %vm5600 = vmand %vm5596, %vm5598
    %v5601 = vsel %vm5599, %v5592, 0.0
    %v5602 = vsel %vm5600, %v5584, 0.0
    %v5603 = vsel %vm5599, %v5586, 0.0
    %v5604 = vsel %vm5600, %v5587, 0.0
    %v5605 = vperm.slane %v25, 4
    %v5606 = vmul.f32 %v5601, %v5605
    %v5607 = vmul.f32 %v5602, %v5605
    %v5608 = vmul.f32 %v5603, %v5605
    %v5609 = vmul.f32 %v5604, %v5605
    %v5610 = vadd.f32 %v5575, %v5606
    %v5611 = vadd.f32 %v5576, %v5607
    %v5612 = vadd.f32 %v5577, %v5608
    %v5613 = vadd.f32 %v5578, %v5609
    %v5614 = vrot.slane %v5536, 6
    %vm5616 = vcmask 1041408
    %v5617 = vrot.slane %v5533, 6
    %v5618 = vrot.slane %v5534, 6
    %v5619 = vsel %vm5616, %v5617, %v5618
    %v5620 = vrot.slane %v5535, 6
    %v5621 = vsel %vm5616, %v5618, %v5620
    %v5622 = vsel %vm5616, %v5620, %v5614
    %v5627 = vsel %vm5616, %v5614, %v5617
    %v5628 = vadd.s32 %v5538, 4294967294
    %v5629 = vadd.s32 %v5539, 4294967294
    %vm5630 = vcmp.ge.s32.totalorder %v5628, 0
    %vm5631 = vcmp.ge.s32.totalorder %v5629, 0
    %vm5632 = vcmp.lt.s32.totalorder %v5628, 16
    %vm5633 = vcmp.lt.s32.totalorder %v5629, 16
    %vm5634 = vmand %vm5630, %vm5632
    %vm5635 = vmand %vm5631, %vm5633
    %v5636 = vsel %vm5634, %v5627, 0.0
    %v5637 = vsel %vm5635, %v5619, 0.0
    %v5638 = vsel %vm5634, %v5621, 0.0
    %v5639 = vsel %vm5635, %v5622, 0.0
    %v5640 = vperm.slane %v25, 5
    %v5641 = vmul.f32 %v5636, %v5640
    %v5642 = vmul.f32 %v5637, %v5640
    %v5643 = vmul.f32 %v5638, %v5640
    %v5644 = vmul.f32 %v5639, %v5640
    %v5645 = vadd.f32 %v5610, %v5641
    %v5646 = vadd.f32 %v5611, %v5642
    %v5647 = vadd.f32 %v5612, %v5643
    %v5648 = vadd.f32 %v5613, %v5644
    %v5649 = vrot.slane %v5536, 7
    %vm5651 = vcmask 1040384
    %v5652 = vrot.slane %v5533, 7
    %v5653 = vrot.slane %v5534, 7
    %v5654 = vsel %vm5651, %v5652, %v5653
    %v5655 = vrot.slane %v5535, 7
    %v5656 = vsel %vm5651, %v5653, %v5655
    %v5657 = vsel %vm5651, %v5655, %v5649
    %v5662 = vsel %vm5651, %v5649, %v5652
    %v5663 = vadd.s32 %v5538, 4294967295
    %v5664 = vadd.s32 %v5539, 4294967295
    %vm5665 = vcmp.ge.s32.totalorder %v5663, 0
    %vm5666 = vcmp.ge.s32.totalorder %v5664, 0
    %vm5667 = vcmp.lt.s32.totalorder %v5663, 16
    %vm5668 = vcmp.lt.s32.totalorder %v5664, 16
    %vm5669 = vmand %vm5665, %vm5667
    %vm5670 = vmand %vm5666, %vm5668
    %v5671 = vsel %vm5669, %v5662, 0.0
    %v5672 = vsel %vm5670, %v5654, 0.0
    %v5673 = vsel %vm5669, %v5656, 0.0
    %v5674 = vsel %vm5670, %v5657, 0.0
    %v5675 = vperm.slane %v25, 6
    %v5676 = vmul.f32 %v5671, %v5675
    %v5677 = vmul.f32 %v5672, %v5675
    %v5678 = vmul.f32 %v5673, %v5675
    %v5679 = vmul.f32 %v5674, %v5675
    %v5680 = vadd.f32 %v5645, %v5676
    %v5681 = vadd.f32 %v5646, %v5677
    %v5682 = vadd.f32 %v5647, %v5678
    %v5683 = vadd.f32 %v5648, %v5679
    %vm5684 = vcmp.ge.s32.totalorder %v5538, 0
    %vm5685 = vcmp.ge.s32.totalorder %v5539, 0
    %vm5686 = vcmp.lt.s32.totalorder %v5538, 16
    %vm5687 = vcmp.lt.s32.totalorder %v5539, 16
    %vm5688 = vmand %vm5684, %vm5686
    %vm5689 = vmand %vm5685, %vm5687
    %v5690 = vsel %vm5688, %v5533, 0.0
    %v5691 = vsel %vm5689, %v5534, 0.0
    %v5692 = vsel %vm5688, %v5535, 0.0
    %v5693 = vsel %vm5689, %v5536, 0.0
    %v5694 = vperm.slane %v25, 7
    %v5695 = vmul.f32 %v5690, %v5694
    %v5696 = vmul.f32 %v5691, %v5694
    %v5697 = vmul.f32 %v5692, %v5694
    %v5698 = vmul.f32 %v5693, %v5694
    %v5699 = vadd.f32 %v5680, %v5695
    %v5700 = vadd.f32 %v5681, %v5696
    %v5701 = vadd.f32 %v5682, %v5697
    %v5702 = vadd.f32 %v5683, %v5698
    %vm5703 = vcmask 1046528
    %v5704 = vrot.slane %v5533, 1
    %v5705 = vrot.slane %v5534, 1
    %v5706 = vsel %vm5703, %v5704, %v5705
    %v5707 = vrot.slane %v5535, 1
    %v5708 = vsel %vm5703, %v5705, %v5707
    %v5709 = vrot.slane %v5536, 1
    %v5710 = vsel %vm5703, %v5707, %v5709
    %v5716 = vsel %vm5703, %v5709, %v5704
    %v5717 = vadd.s32 %v5538, 1
    %v5718 = vadd.s32 %v5539, 1
    %vm5719 = vcmp.ge.s32.totalorder %v5717, 0
    %vm5720 = vcmp.ge.s32.totalorder %v5718, 0
    %vm5721 = vcmp.lt.s32.totalorder %v5717, 16
    %vm5722 = vcmp.lt.s32.totalorder %v5718, 16
    %vm5723 = vmand %vm5719, %vm5721
    %vm5724 = vmand %vm5720, %vm5722
    %v5725 = vsel %vm5723, %v5706, 0.0
    %v5726 = vsel %vm5724, %v5708, 0.0
    %v5727 = vsel %vm5723, %v5710, 0.0
    %v5728 = vsel %vm5724, %v5716, 0.0
    %v5729 = vperm.slane %v26, 0
    %v5730 = vmul.f32 %v5725, %v5729
    %v5731 = vmul.f32 %v5726, %v5729
    %v5732 = vmul.f32 %v5727, %v5729
    %v5733 = vmul.f32 %v5728, %v5729
    %v5734 = vadd.f32 %v5699, %v5730
    %v5735 = vadd.f32 %v5700, %v5731
    %v5736 = vadd.f32 %v5701, %v5732
    %v5737 = vadd.f32 %v5702, %v5733
    %vm5738 = vcmask 1045504
    %v5739 = vrot.slane %v5533, 2
    %v5740 = vrot.slane %v5534, 2
    %v5741 = vsel %vm5738, %v5739, %v5740
    %v5742 = vrot.slane %v5535, 2
    %v5743 = vsel %vm5738, %v5740, %v5742
    %v5744 = vrot.slane %v5536, 2
    %v5745 = vsel %vm5738, %v5742, %v5744
    %v5751 = vsel %vm5738, %v5744, %v5739
    %v5752 = vadd.s32 %v5538, 2
    %v5753 = vadd.s32 %v5539, 2
    %vm5754 = vcmp.ge.s32.totalorder %v5752, 0
    %vm5755 = vcmp.ge.s32.totalorder %v5753, 0
    %vm5756 = vcmp.lt.s32.totalorder %v5752, 16
    %vm5757 = vcmp.lt.s32.totalorder %v5753, 16
    %vm5758 = vmand %vm5754, %vm5756
    %vm5759 = vmand %vm5755, %vm5757
    %v5760 = vsel %vm5758, %v5741, 0.0
    %v5761 = vsel %vm5759, %v5743, 0.0
    %v5762 = vsel %vm5758, %v5745, 0.0
    %v5763 = vsel %vm5759, %v5751, 0.0
    %v5764 = vperm.slane %v26, 1
    %v5765 = vmul.f32 %v5760, %v5764
    %v5766 = vmul.f32 %v5761, %v5764
    %v5767 = vmul.f32 %v5762, %v5764
    %v5768 = vmul.f32 %v5763, %v5764
    %v5769 = vadd.f32 %v5734, %v5765
    %v5770 = vadd.f32 %v5735, %v5766
    %v5771 = vadd.f32 %v5736, %v5767
    %v5772 = vadd.f32 %v5737, %v5768
    %vm5773 = vcmask 1044480
    %v5774 = vrot.slane %v5533, 3
    %v5775 = vrot.slane %v5534, 3
    %v5776 = vsel %vm5773, %v5774, %v5775
    %v5777 = vrot.slane %v5535, 3
    %v5778 = vsel %vm5773, %v5775, %v5777
    %v5779 = vrot.slane %v5536, 3
    %v5780 = vsel %vm5773, %v5777, %v5779
    %v5786 = vsel %vm5773, %v5779, %v5774
    %v5787 = vadd.s32 %v5538, 3
    %v5788 = vadd.s32 %v5539, 3
    %vm5789 = vcmp.ge.s32.totalorder %v5787, 0
    %vm5790 = vcmp.ge.s32.totalorder %v5788, 0
    %vm5791 = vcmp.lt.s32.totalorder %v5787, 16
    %vm5792 = vcmp.lt.s32.totalorder %v5788, 16
    %vm5793 = vmand %vm5789, %vm5791
    %vm5794 = vmand %vm5790, %vm5792
    %v5795 = vsel %vm5793, %v5776, 0.0
    %v5796 = vsel %vm5794, %v5778, 0.0
    %v5797 = vsel %vm5793, %v5780, 0.0
    %v5798 = vsel %vm5794, %v5786, 0.0
    %v5799 = vperm.slane %v26, 2
    %v5800 = vmul.f32 %v5795, %v5799
    %v5801 = vmul.f32 %v5796, %v5799
    %v5802 = vmul.f32 %v5797, %v5799
    %v5803 = vmul.f32 %v5798, %v5799
    %v5804 = vadd.f32 %v5769, %v5800
    %v5805 = vadd.f32 %v5770, %v5801
    %v5806 = vadd.f32 %v5771, %v5802
    %v5807 = vadd.f32 %v5772, %v5803
    %v5808 = vadd.s32 %v5538, 4
    %v5809 = vadd.s32 %v5539, 4
    %vm5810 = vcmp.ge.s32.totalorder %v5808, 0
    %vm5811 = vcmp.ge.s32.totalorder %v5809, 0
    %vm5812 = vcmp.lt.s32.totalorder %v5808, 16
    %vm5813 = vcmp.lt.s32.totalorder %v5809, 16
    %vm5814 = vmand %vm5810, %vm5812
    %vm5815 = vmand %vm5811, %vm5813
    %v5816 = vsel %vm5814, %v5549, 0.0
    %v5817 = vsel %vm5815, %v5551, 0.0
    %v5818 = vsel %vm5814, %v5552, 0.0
    %v5819 = vsel %vm5815, %v5557, 0.0
    %v5820 = vperm.slane %v26, 3
    %v5821 = vmul.f32 %v5816, %v5820
    %v5822 = vmul.f32 %v5817, %v5820
    %v5823 = vmul.f32 %v5818, %v5820
    %v5824 = vmul.f32 %v5819, %v5820
    %v5825 = vadd.f32 %v5804, %v5821
    %v5826 = vadd.f32 %v5805, %v5822
    %v5827 = vadd.f32 %v5806, %v5823
    %v5828 = vadd.f32 %v5807, %v5824
    %v5829 = vperm.slane %v24, 5
    %v5830 = vadd.f32 %v5825, %v5829
    %v5831 = vadd.f32 %v5826, %v5829
    %v5832 = vadd.f32 %v5827, %v5829
    %v5833 = vadd.f32 %v5828, %v5829
    %v5834 = vxor.u32 %v5830, 2147483648
    %v5835 = vxor.u32 %v5831, 2147483648
    %v5836 = vxor.u32 %v5832, 2147483648
    %v5837 = vxor.u32 %v5833, 2147483648
    %v5838 = vmul.f32 %v5834, 1.442695
    %v5839 = vpow.pop %v5838
    %v5840 = vmul.f32 %v5835, 1.442695
    %v5841 = vpow.pop %v5840
    %v5842 = vmul.f32 %v5836, 1.442695
    %v5843 = vpow.pop %v5842
    %v5844 = vmul.f32 %v5837, 1.442695
    %v5845 = vpow.pop %v5844
    %v5846 = vadd.f32 %v5839, 1.0
    %v5847 = vadd.f32 %v5841, 1.0
    %v5848 = vadd.f32 %v5843, 1.0
    %v5849 = vadd.f32 %v5845, 1.0
    %v5850 = vrcp.pop %v5846
    %v5851 = vmul.f32 %v5846, %v5850
    %v5852 = vsub.f32 1.0, %v5851
    %v5853 = vmul.f32 %v5850, %v5852
    %v5854 = vadd.f32 %v5850, %v5853
    %vm5855 = vweird.f32 %v5846
    %vm5856 = vweird.f32 %v5850
    %vm5857 = vmor %vm5855, %vm5856
    %v5858 = vsel %vm5857, %v5850, %v5854
    %v5859 = vand.u32 2147483647, %v5846
    %vm5860 = vcmp.eq.f32.partialorder %v5859, 8.507059e+37
    %v5861 = vand.u32 %v5846, 2147483648
    %v5862 = vor.u32 1.1754944e-38, %v5861
    %v5863 = vsel %vm5860, %v5862, %v5858
    %v5864 = vmul.f32 1.0, %v5863
    %v5865 = vrcp.pop %v5847
    %v5866 = vmul.f32 %v5847, %v5865
    %v5867 = vsub.f32 1.0, %v5866
    %v5868 = vmul.f32 %v5865, %v5867
    %v5869 = vadd.f32 %v5865, %v5868
    %vm5870 = vweird.f32 %v5847
    %vm5871 = vweird.f32 %v5865
    %vm5872 = vmor %vm5870, %vm5871
    %v5873 = vsel %vm5872, %v5865, %v5869
    %v5874 = vand.u32 2147483647, %v5847
    %vm5875 = vcmp.eq.f32.partialorder %v5874, 8.507059e+37
    %v5876 = vand.u32 %v5847, 2147483648
    %v5877 = vor.u32 1.1754944e-38, %v5876
    %v5878 = vsel %vm5875, %v5877, %v5873
    %v5879 = vmul.f32 1.0, %v5878
    %v5880 = vrcp.pop %v5848
    %v5881 = vmul.f32 %v5848, %v5880
    %v5882 = vsub.f32 1.0, %v5881
    %v5883 = vmul.f32 %v5880, %v5882
    %v5884 = vadd.f32 %v5880, %v5883
    %vm5885 = vweird.f32 %v5848
    %vm5886 = vweird.f32 %v5880
    %vm5887 = vmor %vm5885, %vm5886
    %v5888 = vsel %vm5887, %v5880, %v5884
    %v5889 = vand.u32 2147483647, %v5848
    %vm5890 = vcmp.eq.f32.partialorder %v5889, 8.507059e+37
    %v5891 = vand.u32 %v5848, 2147483648
    %v5892 = vor.u32 1.1754944e-38, %v5891
    %v5893 = vsel %vm5890, %v5892, %v5888
    %v5894 = vmul.f32 1.0, %v5893
    %v5895 = vrcp.pop %v5849
    %v5896 = vmul.f32 %v5849, %v5895
    %v5897 = vsub.f32 1.0, %v5896
    %v5898 = vmul.f32 %v5895, %v5897
    %v5899 = vadd.f32 %v5895, %v5898
    %vm5900 = vweird.f32 %v5849
    %vm5901 = vweird.f32 %v5895
    %vm5902 = vmor %vm5900, %vm5901
    %v5903 = vsel %vm5902, %v5895, %v5899
    %v5904 = vand.u32 2147483647, %v5849
    %vm5905 = vcmp.eq.f32.partialorder %v5904, 8.507059e+37
    %v5906 = vand.u32 %v5849, 2147483648
    %v5907 = vor.u32 1.1754944e-38, %v5906
    %v5908 = vsel %vm5905, %v5907, %v5903
    %v5909 = vmul.f32 1.0, %v5908
    %v5910 = vmul.f32 %v5830, %v5864
    %v5911 = vmul.f32 %v5831, %v5879
    %v5912 = vmul.f32 %v5832, %v5894
    %v5913 = vmul.f32 %v5833, %v5909
    %v5914 = vld [vmem:[%s1 + $0x28] sm:$0xff]
    %v5915 = vld [vmem:[%s1 + $0x58] sm:$0xff]
    %v5916 = vld [vmem:[%s1 + $0x88] sm:$0xff]
    %v5917 = vld [vmem:[%s1 + $0xb8] sm:$0xff]
    %v5918 = vperm.slane %v24, 6
    %v5920 = vsel %vm27, %v5910, 0
    %v5923 = vsel %vm27, %v5911, 0
    %v5926 = vsel %vm27, %v5912, 0
    %v5929 = vsel %vm27, %v5913, 0
    %5931 = vmatpush.msra.mxu0 0.0
    %5932 = vmatpush.msra.mxu0 0.0
    %5933 = vmatpush.msra.mxu0 0.0
    %5934 = vmatpush.msra.mxu0 0.0
    %5935 = vmatpush.msra.mxu0 0.0
    %5936 = vmatpush.msra.mxu0 0.0
    %5937 = vmatpush.msra.mxu0 0.0
    %5938 = vmatpush.msra.mxu0 0.0
    %5939 = vmatpush.msra.mxu0 0.0
    %5940 = vmatpush.msra.mxu0 0.0
    %5941 = vmatpush.msra.mxu0 0.0
    %5942 = vmatpush.msra.mxu0 0.0
    %v5943 = vand.u32 %v5917, 4294901760
    %5944 = vmatpush.msra.mxu0 %v5943
    %v5945 = vand.u32 %v5916, 4294901760
    %5946 = vmatpush.msra.mxu0 %v5945
    %v5947 = vand.u32 %v5915, 4294901760
    %5948 = vmatpush.msra.mxu0 %v5947
    %v5949 = vand.u32 %v5914, 4294901760
    %5950 = vmatpush.msra.mxu0 %v5949
    %v5951 = vand.u32 %v5920, 4294901760
    %v5952 = vsub.f32 %v5920, %v5951
    %v5953 = vand.u32 %v5952, 4294901760
    %v5954 = vsub.f32 %v5952, %v5953
    %v5955 = vand.u32 %v5954, 4294901760
    %5956 = vmatmul.f32.gmra.mxu0 %v5955
    %v5957 = vpop.f32.mrf.mxu0
    %v5958 = vadd.f32 %v5918, %v5957
    %v5959 = vand.u32 %v5923, 4294901760
    %v5960 = vsub.f32 %v5923, %v5959
    %v5961 = vand.u32 %v5960, 4294901760
    %v5962 = vsub.f32 %v5960, %v5961
    %v5963 = vand.u32 %v5962, 4294901760
    %5964 = vmatmul.f32.gmra.mxu0 %v5963
    %v5965 = vpop.f32.mrf.mxu0
    %v5966 = vadd.f32 %v5918, %v5965
    %v5967 = vand.u32 %v5926, 4294901760
    %v5968 = vsub.f32 %v5926, %v5967
    %v5969 = vand.u32 %v5968, 4294901760
    %v5970 = vsub.f32 %v5968, %v5969
    %v5971 = vand.u32 %v5970, 4294901760
    %5972 = vmatmul.f32.gmra.mxu0 %v5971
    %v5973 = vpop.f32.mrf.mxu0
    %v5974 = vadd.f32 %v5918, %v5973
    %v5975 = vand.u32 %v5929, 4294901760
    %v5976 = vsub.f32 %v5929, %v5975
    %v5977 = vand.u32 %v5976, 4294901760
    %v5978 = vsub.f32 %v5976, %v5977
    %v5979 = vand.u32 %v5978, 4294901760
    %5980 = vmatmul.f32.gmra.mxu0 %v5979
    %v5981 = vpop.f32.mrf.mxu0
    %v5982 = vadd.f32 %v5918, %v5981
    %5983 = vdwg.mxu0
    %5984 = vmatpush.msra.mxu0 0.0
    %5985 = vmatpush.msra.mxu0 0.0
    %5986 = vmatpush.msra.mxu0 0.0
    %5987 = vmatpush.msra.mxu0 0.0
    %5988 = vmatpush.msra.mxu0 0.0
    %5989 = vmatpush.msra.mxu0 0.0
    %5990 = vmatpush.msra.mxu0 0.0
    %5991 = vmatpush.msra.mxu0 0.0
    %5992 = vmatpush.msra.mxu0 0.0
    %5993 = vmatpush.msra.mxu0 0.0
    %5994 = vmatpush.msra.mxu0 0.0
    %5995 = vmatpush.msra.mxu0 0.0
    %v5996 = vand.u32 %v5917, 4294901760
    %v5997 = vsub.f32 %v5917, %v5996
    %v5998 = vand.u32 %v5997, 4294901760
    %v5999 = vsub.f32 %v5997, %v5998
    %v6000 = vand.u32 %v5999, 4294901760
    %6001 = vmatpush.msra.mxu0 %v6000
    %v6002 = vand.u32 %v5916, 4294901760
    %v6003 = vsub.f32 %v5916, %v6002
    %v6004 = vand.u32 %v6003, 4294901760
    %v6005 = vsub.f32 %v6003, %v6004
    %v6006 = vand.u32 %v6005, 4294901760
    %6007 = vmatpush.msra.mxu0 %v6006
    %v6008 = vand.u32 %v5915, 4294901760
    %v6009 = vsub.f32 %v5915, %v6008
    %v6010 = vand.u32 %v6009, 4294901760
    %v6011 = vsub.f32 %v6009, %v6010
    %v6012 = vand.u32 %v6011, 4294901760
    %6013 = vmatpush.msra.mxu0 %v6012
    %v6014 = vand.u32 %v5914, 4294901760
    %v6015 = vsub.f32 %v5914, %v6014
    %v6016 = vand.u32 %v6015, 4294901760
    %v6017 = vsub.f32 %v6015, %v6016
    %v6018 = vand.u32 %v6017, 4294901760
    %6019 = vmatpush.msra.mxu0 %v6018
    %v6020 = vand.u32 %v5920, 4294901760
    %6021 = vmatmul.f32.gmra.mxu0 %v6020
    %v6022 = vpop.f32.mrf.mxu0
    %v6023 = vadd.f32 %v5958, %v6022
    %v6024 = vand.u32 %v5923, 4294901760
    %6025 = vmatmul.f32.gmra.mxu0 %v6024
    %v6026 = vpop.f32.mrf.mxu0
    %v6027 = vadd.f32 %v5966, %v6026
    %v6028 = vand.u32 %v5926, 4294901760
    %6029 = vmatmul.f32.gmra.mxu0 %v6028
    %v6030 = vpop.f32.mrf.mxu0
    %v6031 = vadd.f32 %v5974, %v6030
    %v6032 = vand.u32 %v5929, 4294901760
    %6033 = vmatmul.f32.gmra.mxu0 %v6032
    %v6034 = vpop.f32.mrf.mxu0
    %v6035 = vadd.f32 %v5982, %v6034
    %6036 = vdwg.mxu0
    %6037 = vmatpush.msra.mxu0 0.0
    %6038 = vmatpush.msra.mxu0 0.0
    %6039 = vmatpush.msra.mxu0 0.0
    %6040 = vmatpush.msra.mxu0 0.0
    %6041 = vmatpush.msra.mxu0 0.0
    %6042 = vmatpush.msra.mxu0 0.0
    %6043 = vmatpush.msra.mxu0 0.0
    %6044 = vmatpush.msra.mxu0 0.0
    %6045 = vmatpush.msra.mxu0 0.0
    %6046 = vmatpush.msra.mxu0 0.0
    %6047 = vmatpush.msra.mxu0 0.0
    %6048 = vmatpush.msra.mxu0 0.0
    %v6049 = vand.u32 %v5917, 4294901760
    %v6050 = vsub.f32 %v5917, %v6049
    %6051 = vmatpush.msra.mxu0 %v6050
    %v6052 = vand.u32 %v5916, 4294901760
    %v6053 = vsub.f32 %v5916, %v6052
    %6054 = vmatpush.msra.mxu0 %v6053
    %v6055 = vand.u32 %v5915, 4294901760
    %v6056 = vsub.f32 %v5915, %v6055
    %6057 = vmatpush.msra.mxu0 %v6056
    %v6058 = vand.u32 %v5914, 4294901760
    %v6059 = vsub.f32 %v5914, %v6058
    %6060 = vmatpush.msra.mxu0 %v6059
    %v6061 = vand.u32 %v5920, 4294901760
    %v6062 = vsub.f32 %v5920, %v6061
    %6063 = vmatmul.f32.gmra.mxu0 %v6062
    %v6064 = vpop.f32.mrf.mxu0
    %v6065 = vadd.f32 %v6023, %v6064
    %v6066 = vand.u32 %v5923, 4294901760
    %v6067 = vsub.f32 %v5923, %v6066
    %6068 = vmatmul.f32.gmra.mxu0 %v6067
    %v6069 = vpop.f32.mrf.mxu0
    %v6070 = vadd.f32 %v6027, %v6069
    %v6071 = vand.u32 %v5926, 4294901760
    %v6072 = vsub.f32 %v5926, %v6071
    %6073 = vmatmul.f32.gmra.mxu0 %v6072
    %v6074 = vpop.f32.mrf.mxu0
    %v6075 = vadd.f32 %v6031, %v6074
    %v6076 = vand.u32 %v5929, 4294901760
    %v6077 = vsub.f32 %v5929, %v6076
    %6078 = vmatmul.f32.gmra.mxu0 %v6077
    %v6079 = vpop.f32.mrf.mxu0
    %v6080 = vadd.f32 %v6035, %v6079
    %6081 = vdwg.mxu0
    %6082 = vmatpush.msra.mxu0 0.0
    %6083 = vmatpush.msra.mxu0 0.0
    %6084 = vmatpush.msra.mxu0 0.0
    %6085 = vmatpush.msra.mxu0 0.0
    %6086 = vmatpush.msra.mxu0 0.0
    %6087 = vmatpush.msra.mxu0 0.0
    %6088 = vmatpush.msra.mxu0 0.0
    %6089 = vmatpush.msra.mxu0 0.0
    %6090 = vmatpush.msra.mxu0 0.0
    %6091 = vmatpush.msra.mxu0 0.0
    %6092 = vmatpush.msra.mxu0 0.0
    %6093 = vmatpush.msra.mxu0 0.0
    %v6094 = vand.u32 %v5917, 4294901760
    %6095 = vmatpush.msra.mxu0 %v6094
    %v6096 = vand.u32 %v5916, 4294901760
    %6097 = vmatpush.msra.mxu0 %v6096
    %v6098 = vand.u32 %v5915, 4294901760
    %6099 = vmatpush.msra.mxu0 %v6098
    %v6100 = vand.u32 %v5914, 4294901760
    %6101 = vmatpush.msra.mxu0 %v6100
    %v6102 = vand.u32 %v5920, 4294901760
    %v6103 = vsub.f32 %v5920, %v6102
    %v6104 = vand.u32 %v6103, 4294901760
    %6105 = vmatmul.f32.gmra.mxu0 %v6104
    %v6106 = vpop.f32.mrf.mxu0
    %v6107 = vadd.f32 %v6065, %v6106
    %v6108 = vand.u32 %v5923, 4294901760
    %v6109 = vsub.f32 %v5923, %v6108
    %v6110 = vand.u32 %v6109, 4294901760
    %6111 = vmatmul.f32.gmra.mxu0 %v6110
    %v6112 = vpop.f32.mrf.mxu0
    %v6113 = vadd.f32 %v6070, %v6112
    %v6114 = vand.u32 %v5926, 4294901760
    %v6115 = vsub.f32 %v5926, %v6114
    %v6116 = vand.u32 %v6115, 4294901760
    %6117 = vmatmul.f32.gmra.mxu0 %v6116
    %v6118 = vpop.f32.mrf.mxu0
    %v6119 = vadd.f32 %v6075, %v6118
    %v6120 = vand.u32 %v5929, 4294901760
    %v6121 = vsub.f32 %v5929, %v6120
    %v6122 = vand.u32 %v6121, 4294901760
    %6123 = vmatmul.f32.gmra.mxu0 %v6122
    %v6124 = vpop.f32.mrf.mxu0
    %v6125 = vadd.f32 %v6080, %v6124
    %6126 = vdwg.mxu0
    %6127 = vmatpush.msra.mxu0 0.0
    %6128 = vmatpush.msra.mxu0 0.0
    %6129 = vmatpush.msra.mxu0 0.0
    %6130 = vmatpush.msra.mxu0 0.0
    %6131 = vmatpush.msra.mxu0 0.0
    %6132 = vmatpush.msra.mxu0 0.0
    %6133 = vmatpush.msra.mxu0 0.0
    %6134 = vmatpush.msra.mxu0 0.0
    %6135 = vmatpush.msra.mxu0 0.0
    %6136 = vmatpush.msra.mxu0 0.0
    %6137 = vmatpush.msra.mxu0 0.0
    %6138 = vmatpush.msra.mxu0 0.0
    %v6139 = vand.u32 %v5917, 4294901760
    %v6140 = vsub.f32 %v5917, %v6139
    %v6141 = vand.u32 %v6140, 4294901760
    %6142 = vmatpush.msra.mxu0 %v6141
    %v6143 = vand.u32 %v5916, 4294901760
    %v6144 = vsub.f32 %v5916, %v6143
    %v6145 = vand.u32 %v6144, 4294901760
    %6146 = vmatpush.msra.mxu0 %v6145
    %v6147 = vand.u32 %v5915, 4294901760
    %v6148 = vsub.f32 %v5915, %v6147
    %v6149 = vand.u32 %v6148, 4294901760
    %6150 = vmatpush.msra.mxu0 %v6149
    %v6151 = vand.u32 %v5914, 4294901760
    %v6152 = vsub.f32 %v5914, %v6151
    %v6153 = vand.u32 %v6152, 4294901760
    %6154 = vmatpush.msra.mxu0 %v6153
    %v6155 = vand.u32 %v5920, 4294901760
    %6156 = vmatmul.f32.gmra.mxu0 %v6155
    %v6157 = vpop.f32.mrf.mxu0
    %v6158 = vadd.f32 %v6107, %v6157
    %v6159 = vand.u32 %v5923, 4294901760
    %6160 = vmatmul.f32.gmra.mxu0 %v6159
    %v6161 = vpop.f32.mrf.mxu0
    %v6162 = vadd.f32 %v6113, %v6161
    %v6163 = vand.u32 %v5926, 4294901760
    %6164 = vmatmul.f32.gmra.mxu0 %v6163
    %v6165 = vpop.f32.mrf.mxu0
    %v6166 = vadd.f32 %v6119, %v6165
    %v6167 = vand.u32 %v5929, 4294901760
    %6168 = vmatmul.f32.gmra.mxu0 %v6167
    %v6169 = vpop.f32.mrf.mxu0
    %v6170 = vadd.f32 %v6125, %v6169
    %6171 = vdwg.mxu0
    %6172 = vmatpush.msra.mxu0 0.0
    %6173 = vmatpush.msra.mxu0 0.0
    %6174 = vmatpush.msra.mxu0 0.0
    %6175 = vmatpush.msra.mxu0 0.0
    %6176 = vmatpush.msra.mxu0 0.0
    %6177 = vmatpush.msra.mxu0 0.0
    %6178 = vmatpush.msra.mxu0 0.0
    %6179 = vmatpush.msra.mxu0 0.0
    %6180 = vmatpush.msra.mxu0 0.0
    %6181 = vmatpush.msra.mxu0 0.0
    %6182 = vmatpush.msra.mxu0 0.0
    %6183 = vmatpush.msra.mxu0 0.0
    %v6184 = vand.u32 %v5917, 4294901760
    %6185 = vmatpush.msra.mxu0 %v6184
    %v6186 = vand.u32 %v5916, 4294901760
    %6187 = vmatpush.msra.mxu0 %v6186
    %v6188 = vand.u32 %v5915, 4294901760
    %6189 = vmatpush.msra.mxu0 %v6188
    %v6190 = vand.u32 %v5914, 4294901760
    %6191 = vmatpush.msra.mxu0 %v6190
    %v6192 = vand.u32 %v5920, 4294901760
    %6193 = vmatmul.f32.gmra.mxu0 %v6192
    %v6194 = vpop.f32.mrf.mxu0
    %v6195 = vadd.f32 %v6158, %v6194
    %v6196 = vand.u32 %v5923, 4294901760
    %6197 = vmatmul.f32.gmra.mxu0 %v6196
    %v6198 = vpop.f32.mrf.mxu0
    %v6199 = vadd.f32 %v6162, %v6198
    %v6200 = vand.u32 %v5926, 4294901760
    %6201 = vmatmul.f32.gmra.mxu0 %v6200
    %v6202 = vpop.f32.mrf.mxu0
    %v6203 = vadd.f32 %v6166, %v6202
    %v6204 = vand.u32 %v5929, 4294901760
    %6205 = vmatmul.f32.gmra.mxu0 %v6204
    %v6206 = vpop.f32.mrf.mxu0
    %v6207 = vadd.f32 %v6170, %v6206
    %6208 = vdwg.mxu0
    %v6209 = vadd.f32 %v5054, %v6195
    %v6210 = vadd.f32 %v5055, %v6199
    %v6211 = vadd.f32 %v5056, %v6203
    %v6212 = vadd.f32 %v5057, %v6207
    %v6213 = vsel %vm27, %v6209, 0.0
    %6214 = vadd.xlane.f32.xlu0 %v6213
    %v6215 = vpop.xlane.xlu0 %6214
    %v6216 = vsel %vm27, %v6210, 0.0
    %6217 = vadd.xlane.f32.xlu0 %v6216
    %v6218 = vpop.xlane.xlu0 %6217
    %v6219 = vsel %vm27, %v6211, 0.0
    %6220 = vadd.xlane.f32.xlu0 %v6219
    %v6221 = vpop.xlane.xlu0 %6220
    %v6222 = vsel %vm27, %v6212, 0.0
    %6223 = vadd.xlane.f32.xlu0 %v6222
    %v6224 = vpop.xlane.xlu0 %6223
    %v6225 = vmul.f32 %v6215, %v46
    %v6226 = vmul.f32 %v6218, %v46
    %v6227 = vmul.f32 %v6221, %v46
    %v6228 = vmul.f32 %v6224, %v46
    %v6229 = vsub.f32 %v6209, %v6225
    %v6230 = vsub.f32 %v6210, %v6226
    %v6231 = vsub.f32 %v6211, %v6227
    %v6232 = vsub.f32 %v6212, %v6228
    %v6233 = vmul.f32 %v6229, %v6229
    %v6234 = vmul.f32 %v6230, %v6230
    %v6235 = vmul.f32 %v6231, %v6231
    %v6236 = vmul.f32 %v6232, %v6232
    %v6237 = vsel %vm27, %v6233, 0.0
    %6238 = vadd.xlane.f32.xlu0 %v6237
    %v6239 = vpop.xlane.xlu0 %6238
    %v6240 = vsel %vm27, %v6234, 0.0
    %6241 = vadd.xlane.f32.xlu0 %v6240
    %v6242 = vpop.xlane.xlu0 %6241
    %v6243 = vsel %vm27, %v6235, 0.0
    %6244 = vadd.xlane.f32.xlu0 %v6243
    %v6245 = vpop.xlane.xlu0 %6244
    %v6246 = vsel %vm27, %v6236, 0.0
    %6247 = vadd.xlane.f32.xlu0 %v6246
    %v6248 = vpop.xlane.xlu0 %6247
    %v6249 = vmul.f32 %v6239, %v46
    %v6250 = vmul.f32 %v6242, %v46
    %v6251 = vmul.f32 %v6245, %v46
    %v6252 = vmul.f32 %v6248, %v46
    %v6253 = vadd.f32 %v6249, 1e-05
    %v6254 = vadd.f32 %v6250, 1e-05
    %v6255 = vadd.f32 %v6251, 1e-05
    %v6256 = vadd.f32 %v6252, 1e-05
    %v6257 = vrsqrt.pop %v6253
    %v6258 = vmul.f32 %v6257, %v6253
    %v6259 = vmul.f32 %v6258, %v6257
    %v6260 = vmul.f32 0.5, %v6259
    %v6261 = vsub.f32 1.5, %v6260
    %v6262 = vmul.f32 %v6257, %v6261
    %vm6263 = vweird.f32 %v6253
    %vm6264 = vweird.f32 %v6257
    %vm6265 = vmor %vm6263, %vm6264
    %v6266 = vsel %vm6265, %v6257, %v6262
    %v6267 = vrsqrt.pop %v6254
    %v6268 = vmul.f32 %v6267, %v6254
    %v6269 = vmul.f32 %v6268, %v6267
    %v6270 = vmul.f32 0.5, %v6269
    %v6271 = vsub.f32 1.5, %v6270
    %v6272 = vmul.f32 %v6267, %v6271
    %vm6273 = vweird.f32 %v6254
    %vm6274 = vweird.f32 %v6267
    %vm6275 = vmor %vm6273, %vm6274
    %v6276 = vsel %vm6275, %v6267, %v6272
    %v6277 = vrsqrt.pop %v6255
    %v6278 = vmul.f32 %v6277, %v6255
    %v6279 = vmul.f32 %v6278, %v6277
    %v6280 = vmul.f32 0.5, %v6279
    %v6281 = vsub.f32 1.5, %v6280
    %v6282 = vmul.f32 %v6277, %v6281
    %vm6283 = vweird.f32 %v6255
    %vm6284 = vweird.f32 %v6277
    %vm6285 = vmor %vm6283, %vm6284
    %v6286 = vsel %vm6285, %v6277, %v6282
    %v6287 = vrsqrt.pop %v6256
    %v6288 = vmul.f32 %v6287, %v6256
    %v6289 = vmul.f32 %v6288, %v6287
    %v6290 = vmul.f32 0.5, %v6289
    %v6291 = vsub.f32 1.5, %v6290
    %v6292 = vmul.f32 %v6287, %v6291
    %vm6293 = vweird.f32 %v6256
    %vm6294 = vweird.f32 %v6287
    %vm6295 = vmor %vm6293, %vm6294
    %v6296 = vsel %vm6295, %v6287, %v6292
    %v6297 = vmul.f32 %v6229, %v6266
    %v6298 = vmul.f32 %v6230, %v6276
    %v6299 = vmul.f32 %v6231, %v6286
    %v6300 = vmul.f32 %v6232, %v6296
    %v6301 = vld [vmem:[%s1 + $0x10] sm:$0xff]
    %v6302 = vld [vmem:[%s1 + $0x40] sm:$0xff]
    %v6303 = vld [vmem:[%s1 + $0x70] sm:$0xff]
    %v6304 = vld [vmem:[%s1 + $0xa0] sm:$0xff]
    %v6305 = vperm.slane %v24, 7
    %v6307 = vsel %vm27, %v6297, 0
    %v6310 = vsel %vm27, %v6298, 0
    %v6313 = vsel %vm27, %v6299, 0
    %v6316 = vsel %vm27, %v6300, 0
    %6318 = vmatpush.msra.mxu0 0.0
    %6319 = vmatpush.msra.mxu0 0.0
    %6320 = vmatpush.msra.mxu0 0.0
    %6321 = vmatpush.msra.mxu0 0.0
    %6322 = vmatpush.msra.mxu0 0.0
    %6323 = vmatpush.msra.mxu0 0.0
    %6324 = vmatpush.msra.mxu0 0.0
    %6325 = vmatpush.msra.mxu0 0.0
    %6326 = vmatpush.msra.mxu0 0.0
    %6327 = vmatpush.msra.mxu0 0.0
    %6328 = vmatpush.msra.mxu0 0.0
    %6329 = vmatpush.msra.mxu0 0.0
    %v6330 = vand.u32 %v6304, 4294901760
    %6331 = vmatpush.msra.mxu0 %v6330
    %v6332 = vand.u32 %v6303, 4294901760
    %6333 = vmatpush.msra.mxu0 %v6332
    %v6334 = vand.u32 %v6302, 4294901760
    %6335 = vmatpush.msra.mxu0 %v6334
    %v6336 = vand.u32 %v6301, 4294901760
    %6337 = vmatpush.msra.mxu0 %v6336
    %v6338 = vand.u32 %v6307, 4294901760
    %v6339 = vsub.f32 %v6307, %v6338
    %v6340 = vand.u32 %v6339, 4294901760
    %v6341 = vsub.f32 %v6339, %v6340
    %v6342 = vand.u32 %v6341, 4294901760
    %6343 = vmatmul.f32.gmra.mxu0 %v6342
    %v6344 = vpop.f32.mrf.mxu0
    %v6345 = vadd.f32 %v6305, %v6344
    %v6346 = vand.u32 %v6310, 4294901760
    %v6347 = vsub.f32 %v6310, %v6346
    %v6348 = vand.u32 %v6347, 4294901760
    %v6349 = vsub.f32 %v6347, %v6348
    %v6350 = vand.u32 %v6349, 4294901760
    %6351 = vmatmul.f32.gmra.mxu0 %v6350
    %v6352 = vpop.f32.mrf.mxu0
    %v6353 = vadd.f32 %v6305, %v6352
    %v6354 = vand.u32 %v6313, 4294901760
    %v6355 = vsub.f32 %v6313, %v6354
    %v6356 = vand.u32 %v6355, 4294901760
    %v6357 = vsub.f32 %v6355, %v6356
    %v6358 = vand.u32 %v6357, 4294901760
    %6359 = vmatmul.f32.gmra.mxu0 %v6358
    %v6360 = vpop.f32.mrf.mxu0
    %v6361 = vadd.f32 %v6305, %v6360
    %v6362 = vand.u32 %v6316, 4294901760
    %v6363 = vsub.f32 %v6316, %v6362
    %v6364 = vand.u32 %v6363, 4294901760
    %v6365 = vsub.f32 %v6363, %v6364
    %v6366 = vand.u32 %v6365, 4294901760
    %6367 = vmatmul.f32.gmra.mxu0 %v6366
    %v6368 = vpop.f32.mrf.mxu0
    %v6369 = vadd.f32 %v6305, %v6368
    %6370 = vdwg.mxu0
    %6371 = vmatpush.msra.mxu0 0.0
    %6372 = vmatpush.msra.mxu0 0.0
    %6373 = vmatpush.msra.mxu0 0.0
    %6374 = vmatpush.msra.mxu0 0.0
    %6375 = vmatpush.msra.mxu0 0.0
    %6376 = vmatpush.msra.mxu0 0.0
    %6377 = vmatpush.msra.mxu0 0.0
    %6378 = vmatpush.msra.mxu0 0.0
    %6379 = vmatpush.msra.mxu0 0.0
    %6380 = vmatpush.msra.mxu0 0.0
    %6381 = vmatpush.msra.mxu0 0.0
    %6382 = vmatpush.msra.mxu0 0.0
    %v6383 = vand.u32 %v6304, 4294901760
    %v6384 = vsub.f32 %v6304, %v6383
    %v6385 = vand.u32 %v6384, 4294901760
    %v6386 = vsub.f32 %v6384, %v6385
    %v6387 = vand.u32 %v6386, 4294901760
    %6388 = vmatpush.msra.mxu0 %v6387
    %v6389 = vand.u32 %v6303, 4294901760
    %v6390 = vsub.f32 %v6303, %v6389
    %v6391 = vand.u32 %v6390, 4294901760
    %v6392 = vsub.f32 %v6390, %v6391
    %v6393 = vand.u32 %v6392, 4294901760
    %6394 = vmatpush.msra.mxu0 %v6393
    %v6395 = vand.u32 %v6302, 4294901760
    %v6396 = vsub.f32 %v6302, %v6395
    %v6397 = vand.u32 %v6396, 4294901760
    %v6398 = vsub.f32 %v6396, %v6397
    %v6399 = vand.u32 %v6398, 4294901760
    %6400 = vmatpush.msra.mxu0 %v6399
    %v6401 = vand.u32 %v6301, 4294901760
    %v6402 = vsub.f32 %v6301, %v6401
    %v6403 = vand.u32 %v6402, 4294901760
    %v6404 = vsub.f32 %v6402, %v6403
    %v6405 = vand.u32 %v6404, 4294901760
    %6406 = vmatpush.msra.mxu0 %v6405
    %v6407 = vand.u32 %v6307, 4294901760
    %6408 = vmatmul.f32.gmra.mxu0 %v6407
    %v6409 = vpop.f32.mrf.mxu0
    %v6410 = vadd.f32 %v6345, %v6409
    %v6411 = vand.u32 %v6310, 4294901760
    %6412 = vmatmul.f32.gmra.mxu0 %v6411
    %v6413 = vpop.f32.mrf.mxu0
    %v6414 = vadd.f32 %v6353, %v6413
    %v6415 = vand.u32 %v6313, 4294901760
    %6416 = vmatmul.f32.gmra.mxu0 %v6415
    %v6417 = vpop.f32.mrf.mxu0
    %v6418 = vadd.f32 %v6361, %v6417
    %v6419 = vand.u32 %v6316, 4294901760
    %6420 = vmatmul.f32.gmra.mxu0 %v6419
    %v6421 = vpop.f32.mrf.mxu0
    %v6422 = vadd.f32 %v6369, %v6421
    %6423 = vdwg.mxu0
    %6424 = vmatpush.msra.mxu0 0.0
    %6425 = vmatpush.msra.mxu0 0.0
    %6426 = vmatpush.msra.mxu0 0.0
    %6427 = vmatpush.msra.mxu0 0.0
    %6428 = vmatpush.msra.mxu0 0.0
    %6429 = vmatpush.msra.mxu0 0.0
    %6430 = vmatpush.msra.mxu0 0.0
    %6431 = vmatpush.msra.mxu0 0.0
    %6432 = vmatpush.msra.mxu0 0.0
    %6433 = vmatpush.msra.mxu0 0.0
    %6434 = vmatpush.msra.mxu0 0.0
    %6435 = vmatpush.msra.mxu0 0.0
    %v6436 = vand.u32 %v6304, 4294901760
    %v6437 = vsub.f32 %v6304, %v6436
    %6438 = vmatpush.msra.mxu0 %v6437
    %v6439 = vand.u32 %v6303, 4294901760
    %v6440 = vsub.f32 %v6303, %v6439
    %6441 = vmatpush.msra.mxu0 %v6440
    %v6442 = vand.u32 %v6302, 4294901760
    %v6443 = vsub.f32 %v6302, %v6442
    %6444 = vmatpush.msra.mxu0 %v6443
    %v6445 = vand.u32 %v6301, 4294901760
    %v6446 = vsub.f32 %v6301, %v6445
    %6447 = vmatpush.msra.mxu0 %v6446
    %v6448 = vand.u32 %v6307, 4294901760
    %v6449 = vsub.f32 %v6307, %v6448
    %6450 = vmatmul.f32.gmra.mxu0 %v6449
    %v6451 = vpop.f32.mrf.mxu0
    %v6452 = vadd.f32 %v6410, %v6451
    %v6453 = vand.u32 %v6310, 4294901760
    %v6454 = vsub.f32 %v6310, %v6453
    %6455 = vmatmul.f32.gmra.mxu0 %v6454
    %v6456 = vpop.f32.mrf.mxu0
    %v6457 = vadd.f32 %v6414, %v6456
    %v6458 = vand.u32 %v6313, 4294901760
    %v6459 = vsub.f32 %v6313, %v6458
    %6460 = vmatmul.f32.gmra.mxu0 %v6459
    %v6461 = vpop.f32.mrf.mxu0
    %v6462 = vadd.f32 %v6418, %v6461
    %v6463 = vand.u32 %v6316, 4294901760
    %v6464 = vsub.f32 %v6316, %v6463
    %6465 = vmatmul.f32.gmra.mxu0 %v6464
    %v6466 = vpop.f32.mrf.mxu0
    %v6467 = vadd.f32 %v6422, %v6466
    %6468 = vdwg.mxu0
    %6469 = vmatpush.msra.mxu0 0.0
    %6470 = vmatpush.msra.mxu0 0.0
    %6471 = vmatpush.msra.mxu0 0.0
    %6472 = vmatpush.msra.mxu0 0.0
    %6473 = vmatpush.msra.mxu0 0.0
    %6474 = vmatpush.msra.mxu0 0.0
    %6475 = vmatpush.msra.mxu0 0.0
    %6476 = vmatpush.msra.mxu0 0.0
    %6477 = vmatpush.msra.mxu0 0.0
    %6478 = vmatpush.msra.mxu0 0.0
    %6479 = vmatpush.msra.mxu0 0.0
    %6480 = vmatpush.msra.mxu0 0.0
    %v6481 = vand.u32 %v6304, 4294901760
    %6482 = vmatpush.msra.mxu0 %v6481
    %v6483 = vand.u32 %v6303, 4294901760
    %6484 = vmatpush.msra.mxu0 %v6483
    %v6485 = vand.u32 %v6302, 4294901760
    %6486 = vmatpush.msra.mxu0 %v6485
    %v6487 = vand.u32 %v6301, 4294901760
    %6488 = vmatpush.msra.mxu0 %v6487
    %v6489 = vand.u32 %v6307, 4294901760
    %v6490 = vsub.f32 %v6307, %v6489
    %v6491 = vand.u32 %v6490, 4294901760
    %6492 = vmatmul.f32.gmra.mxu0 %v6491
    %v6493 = vpop.f32.mrf.mxu0
    %v6494 = vadd.f32 %v6452, %v6493
    %v6495 = vand.u32 %v6310, 4294901760
    %v6496 = vsub.f32 %v6310, %v6495
    %v6497 = vand.u32 %v6496, 4294901760
    %6498 = vmatmul.f32.gmra.mxu0 %v6497
    %v6499 = vpop.f32.mrf.mxu0
    %v6500 = vadd.f32 %v6457, %v6499
    %v6501 = vand.u32 %v6313, 4294901760
    %v6502 = vsub.f32 %v6313, %v6501
    %v6503 = vand.u32 %v6502, 4294901760
    %6504 = vmatmul.f32.gmra.mxu0 %v6503
    %v6505 = vpop.f32.mrf.mxu0
    %v6506 = vadd.f32 %v6462, %v6505
    %v6507 = vand.u32 %v6316, 4294901760
    %v6508 = vsub.f32 %v6316, %v6507
    %v6509 = vand.u32 %v6508, 4294901760
    %6510 = vmatmul.f32.gmra.mxu0 %v6509
    %v6511 = vpop.f32.mrf.mxu0
    %v6512 = vadd.f32 %v6467, %v6511
    %6513 = vdwg.mxu0
    %6514 = vmatpush.msra.mxu0 0.0
    %6515 = vmatpush.msra.mxu0 0.0
    %6516 = vmatpush.msra.mxu0 0.0
    %6517 = vmatpush.msra.mxu0 0.0
    %6518 = vmatpush.msra.mxu0 0.0
    %6519 = vmatpush.msra.mxu0 0.0
    %6520 = vmatpush.msra.mxu0 0.0
    %6521 = vmatpush.msra.mxu0 0.0
    %6522 = vmatpush.msra.mxu0 0.0
    %6523 = vmatpush.msra.mxu0 0.0
    %6524 = vmatpush.msra.mxu0 0.0
    %6525 = vmatpush.msra.mxu0 0.0
    %v6526 = vand.u32 %v6304, 4294901760
    %v6527 = vsub.f32 %v6304, %v6526
    %v6528 = vand.u32 %v6527, 4294901760
    %6529 = vmatpush.msra.mxu0 %v6528
    %v6530 = vand.u32 %v6303, 4294901760
    %v6531 = vsub.f32 %v6303, %v6530
    %v6532 = vand.u32 %v6531, 4294901760
    %6533 = vmatpush.msra.mxu0 %v6532
    %v6534 = vand.u32 %v6302, 4294901760
    %v6535 = vsub.f32 %v6302, %v6534
    %v6536 = vand.u32 %v6535, 4294901760
    %6537 = vmatpush.msra.mxu0 %v6536
    %v6538 = vand.u32 %v6301, 4294901760
    %v6539 = vsub.f32 %v6301, %v6538
    %v6540 = vand.u32 %v6539, 4294901760
    %6541 = vmatpush.msra.mxu0 %v6540
    %v6542 = vand.u32 %v6307, 4294901760
    %6543 = vmatmul.f32.gmra.mxu0 %v6542
    %v6544 = vpop.f32.mrf.mxu0
    %v6545 = vadd.f32 %v6494, %v6544
    %v6546 = vand.u32 %v6310, 4294901760
    %6547 = vmatmul.f32.gmra.mxu0 %v6546
    %v6548 = vpop.f32.mrf.mxu0
    %v6549 = vadd.f32 %v6500, %v6548
    %v6550 = vand.u32 %v6313, 4294901760
    %6551 = vmatmul.f32.gmra.mxu0 %v6550
    %v6552 = vpop.f32.mrf.mxu0
    %v6553 = vadd.f32 %v6506, %v6552
    %v6554 = vand.u32 %v6316, 4294901760
    %6555 = vmatmul.f32.gmra.mxu0 %v6554
    %v6556 = vpop.f32.mrf.mxu0
    %v6557 = vadd.f32 %v6512, %v6556
    %6558 = vdwg.mxu0
    %6559 = vmatpush.msra.mxu0 0.0
    %6560 = vmatpush.msra.mxu0 0.0
    %6561 = vmatpush.msra.mxu0 0.0
    %6562 = vmatpush.msra.mxu0 0.0
    %6563 = vmatpush.msra.mxu0 0.0
    %6564 = vmatpush.msra.mxu0 0.0
    %6565 = vmatpush.msra.mxu0 0.0
    %6566 = vmatpush.msra.mxu0 0.0
    %6567 = vmatpush.msra.mxu0 0.0
    %6568 = vmatpush.msra.mxu0 0.0
    %6569 = vmatpush.msra.mxu0 0.0
    %6570 = vmatpush.msra.mxu0 0.0
    %v6571 = vand.u32 %v6304, 4294901760
    %6572 = vmatpush.msra.mxu0 %v6571
    %v6573 = vand.u32 %v6303, 4294901760
    %6574 = vmatpush.msra.mxu0 %v6573
    %v6575 = vand.u32 %v6302, 4294901760
    %6576 = vmatpush.msra.mxu0 %v6575
    %v6577 = vand.u32 %v6301, 4294901760
    %6578 = vmatpush.msra.mxu0 %v6577
    %v6579 = vand.u32 %v6307, 4294901760
    %6580 = vmatmul.f32.gmra.mxu0 %v6579
    %v6581 = vpop.f32.mrf.mxu0
    %v6582 = vadd.f32 %v6545, %v6581
    %v6583 = vand.u32 %v6310, 4294901760
    %6584 = vmatmul.f32.gmra.mxu0 %v6583
    %v6585 = vpop.f32.mrf.mxu0
    %v6586 = vadd.f32 %v6549, %v6585
    %v6587 = vand.u32 %v6313, 4294901760
    %6588 = vmatmul.f32.gmra.mxu0 %v6587
    %v6589 = vpop.f32.mrf.mxu0
    %v6590 = vadd.f32 %v6553, %v6589
    %v6591 = vand.u32 %v6316, 4294901760
    %6592 = vmatmul.f32.gmra.mxu0 %v6591
    %v6593 = vpop.f32.mrf.mxu0
    %v6594 = vadd.f32 %v6557, %v6593
    %6595 = vdwg.mxu0
    %v6596 = vmul.f32 %v6582, %v6582
    %v6597 = vmul.f32 %v6586, %v6586
    %v6598 = vmul.f32 %v6590, %v6590
    %v6599 = vmul.f32 %v6594, %v6594
    %v6600 = vmul.f32 %v6582, %v6596
    %v6601 = vmul.f32 %v6586, %v6597
    %v6602 = vmul.f32 %v6590, %v6598
    %v6603 = vmul.f32 %v6594, %v6599
    %v6604 = vmul.f32 %v6600, 0.044715
    %v6605 = vmul.f32 %v6601, 0.044715
    %v6606 = vmul.f32 %v6602, 0.044715
    %v6607 = vmul.f32 %v6603, 0.044715
    %v6608 = vadd.f32 %v6582, %v6604
    %v6609 = vadd.f32 %v6586, %v6605
    %v6610 = vadd.f32 %v6590, %v6606
    %v6611 = vadd.f32 %v6594, %v6607
    %v6612 = vmul.f32 %v6608, 0.7978846
    %v6613 = vmul.f32 %v6609, 0.7978846
    %v6614 = vmul.f32 %v6610, 0.7978846
    %v6615 = vmul.f32 %v6611, 0.7978846
    %v6616 = vtanh.pop %v6612
    %v6617 = vtanh.pop %v6613
    %v6618 = vtanh.pop %v6614
    %v6619 = vtanh.pop %v6615
    %v6620 = vadd.f32 %v6616, 1.0
    %v6621 = vadd.f32 %v6617, 1.0
    %v6622 = vadd.f32 %v6618, 1.0
    %v6623 = vadd.f32 %v6619, 1.0
    %v6624 = vmul.f32 %v6620, 0.5
    %v6625 = vmul.f32 %v6621, 0.5
    %v6626 = vmul.f32 %v6622, 0.5
    %v6627 = vmul.f32 %v6623, 0.5
    %v6628 = vmul.f32 %v6582, %v6624
    %v6629 = vmul.f32 %v6586, %v6625
    %v6630 = vmul.f32 %v6590, %v6626
    %v6631 = vmul.f32 %v6594, %v6627
    %v6632 = vld [vmem:[%s2 + $0x80] sm:$0xff]
    %v6633 = vld [vmem:[%s2 + $0x88] sm:$0xff]
    %v6634 = vld [vmem:[%s2 + $0x90] sm:$0xff]
    %v6635 = vld [vmem:[%s2 + $0x98] sm:$0xff]
    %v6636 = vld [vmem:[%s2 + $0xa0] sm:$0xff]
    %v6637 = vld [vmem:[%s2 + $0xa8] sm:$0xff]
    %v6638 = vld [vmem:[%s2 + $0xb0] sm:$0xff]
    %v6639 = vld [vmem:[%s2 + $0xb8] sm:$0xff]
    %v6640 = vld [vmem:[%s2 + $0xc0] sm:$0xff]
    %v6641 = vld [vmem:[%s2 + $0xc8] sm:$0xff]
    %v6642 = vld [vmem:[%s2 + $0xd0] sm:$0xff]
    %v6643 = vld [vmem:[%s2 + $0xd8] sm:$0xff]
    %v6644 = vld [vmem:[%s2 + $0xe0] sm:$0xff]
    %v6645 = vld [vmem:[%s2 + $0xe8] sm:$0xff]
    %v6646 = vld [vmem:[%s2 + $0xf0] sm:$0xff]
    %v6647 = vld [vmem:[%s2 + $0xf8] sm:$0xff]
    %v6648 = vperm.slane %v25, 0
    %v6649 = vand.u32 %v6647, 4294901760
    %6650 = vmatpush.msra.mxu0 %v6649
    %v6651 = vand.u32 %v6646, 4294901760
    %6652 = vmatpush.msra.mxu0 %v6651
    %v6653 = vand.u32 %v6645, 4294901760
    %6654 = vmatpush.msra.mxu0 %v6653
    %v6655 = vand.u32 %v6644, 4294901760
    %6656 = vmatpush.msra.mxu0 %v6655
    %v6657 = vand.u32 %v6643, 4294901760
    %6658 = vmatpush.msra.mxu0 %v6657
    %v6659 = vand.u32 %v6642, 4294901760
    %6660 = vmatpush.msra.mxu0 %v6659
    %v6661 = vand.u32 %v6641, 4294901760
    %6662 = vmatpush.msra.mxu0 %v6661
    %v6663 = vand.u32 %v6640, 4294901760
    %6664 = vmatpush.msra.mxu0 %v6663
    %v6665 = vand.u32 %v6639, 4294901760
    %6666 = vmatpush.msra.mxu0 %v6665
    %v6667 = vand.u32 %v6638, 4294901760
    %6668 = vmatpush.msra.mxu0 %v6667
    %v6669 = vand.u32 %v6637, 4294901760
    %6670 = vmatpush.msra.mxu0 %v6669
    %v6671 = vand.u32 %v6636, 4294901760
    %6672 = vmatpush.msra.mxu0 %v6671
    %v6673 = vand.u32 %v6635, 4294901760
    %6674 = vmatpush.msra.mxu0 %v6673
    %v6675 = vand.u32 %v6634, 4294901760
    %6676 = vmatpush.msra.mxu0 %v6675
    %v6677 = vand.u32 %v6633, 4294901760
    %6678 = vmatpush.msra.mxu0 %v6677
    %v6679 = vand.u32 %v6632, 4294901760
    %6680 = vmatpush.msra.mxu0 %v6679
    %v6681 = vand.u32 %v6628, 4294901760
    %v6682 = vsub.f32 %v6628, %v6681
    %v6683 = vand.u32 %v6682, 4294901760
    %v6684 = vsub.f32 %v6682, %v6683
    %v6685 = vand.u32 %v6684, 4294901760
    %6686 = vmatmul.f32.gmra.mxu0 %v6685
    %v6687 = vpop.f32.mrf.mxu0
    %v6688 = vadd.f32 %v6648, %v6687
    %v6689 = vand.u32 %v6629, 4294901760
    %v6690 = vsub.f32 %v6629, %v6689
    %v6691 = vand.u32 %v6690, 4294901760
    %v6692 = vsub.f32 %v6690, %v6691
    %v6693 = vand.u32 %v6692, 4294901760
    %6694 = vmatmul.f32.gmra.mxu0 %v6693
    %v6695 = vpop.f32.mrf.mxu0
    %v6696 = vadd.f32 %v6648, %v6695
    %v6697 = vand.u32 %v6630, 4294901760
    %v6698 = vsub.f32 %v6630, %v6697
    %v6699 = vand.u32 %v6698, 4294901760
    %v6700 = vsub.f32 %v6698, %v6699
    %v6701 = vand.u32 %v6700, 4294901760
    %6702 = vmatmul.f32.gmra.mxu0 %v6701
    %v6703 = vpop.f32.mrf.mxu0
    %v6704 = vadd.f32 %v6648, %v6703
    %v6705 = vand.u32 %v6631, 4294901760
    %v6706 = vsub.f32 %v6631, %v6705
    %v6707 = vand.u32 %v6706, 4294901760
    %v6708 = vsub.f32 %v6706, %v6707
    %v6709 = vand.u32 %v6708, 4294901760
    %6710 = vmatmul.f32.gmra.mxu0 %v6709
    %v6711 = vpop.f32.mrf.mxu0
    %v6712 = vadd.f32 %v6648, %v6711
    %6713 = vdwg.mxu0
    %v6714 = vand.u32 %v6647, 4294901760
    %v6715 = vsub.f32 %v6647, %v6714
    %v6716 = vand.u32 %v6715, 4294901760
    %v6717 = vsub.f32 %v6715, %v6716
    %v6718 = vand.u32 %v6717, 4294901760
    %6719 = vmatpush.msra.mxu0 %v6718
    %v6720 = vand.u32 %v6646, 4294901760
    %v6721 = vsub.f32 %v6646, %v6720
    %v6722 = vand.u32 %v6721, 4294901760
    %v6723 = vsub.f32 %v6721, %v6722
    %v6724 = vand.u32 %v6723, 4294901760
    %6725 = vmatpush.msra.mxu0 %v6724
    %v6726 = vand.u32 %v6645, 4294901760
    %v6727 = vsub.f32 %v6645, %v6726
    %v6728 = vand.u32 %v6727, 4294901760
    %v6729 = vsub.f32 %v6727, %v6728
    %v6730 = vand.u32 %v6729, 4294901760
    %6731 = vmatpush.msra.mxu0 %v6730
    %v6732 = vand.u32 %v6644, 4294901760
    %v6733 = vsub.f32 %v6644, %v6732
    %v6734 = vand.u32 %v6733, 4294901760
    %v6735 = vsub.f32 %v6733, %v6734
    %v6736 = vand.u32 %v6735, 4294901760
    %6737 = vmatpush.msra.mxu0 %v6736
    %v6738 = vand.u32 %v6643, 4294901760
    %v6739 = vsub.f32 %v6643, %v6738
    %v6740 = vand.u32 %v6739, 4294901760
    %v6741 = vsub.f32 %v6739, %v6740
    %v6742 = vand.u32 %v6741, 4294901760
    %6743 = vmatpush.msra.mxu0 %v6742
    %v6744 = vand.u32 %v6642, 4294901760
    %v6745 = vsub.f32 %v6642, %v6744
    %v6746 = vand.u32 %v6745, 4294901760
    %v6747 = vsub.f32 %v6745, %v6746
    %v6748 = vand.u32 %v6747, 4294901760
    %6749 = vmatpush.msra.mxu0 %v6748
    %v6750 = vand.u32 %v6641, 4294901760
    %v6751 = vsub.f32 %v6641, %v6750
    %v6752 = vand.u32 %v6751, 4294901760
    %v6753 = vsub.f32 %v6751, %v6752
    %v6754 = vand.u32 %v6753, 4294901760
    %6755 = vmatpush.msra.mxu0 %v6754
    %v6756 = vand.u32 %v6640, 4294901760
    %v6757 = vsub.f32 %v6640, %v6756
    %v6758 = vand.u32 %v6757, 4294901760
    %v6759 = vsub.f32 %v6757, %v6758
    %v6760 = vand.u32 %v6759, 4294901760
    %6761 = vmatpush.msra.mxu0 %v6760
    %v6762 = vand.u32 %v6639, 4294901760
    %v6763 = vsub.f32 %v6639, %v6762
    %v6764 = vand.u32 %v6763, 4294901760
    %v6765 = vsub.f32 %v6763, %v6764
    %v6766 = vand.u32 %v6765, 4294901760
    %6767 = vmatpush.msra.mxu0 %v6766
    %v6768 = vand.u32 %v6638, 4294901760
    %v6769 = vsub.f32 %v6638, %v6768
    %v6770 = vand.u32 %v6769, 4294901760
    %v6771 = vsub.f32 %v6769, %v6770
    %v6772 = vand.u32 %v6771, 4294901760
    %6773 = vmatpush.msra.mxu0 %v6772
    %v6774 = vand.u32 %v6637, 4294901760
    %v6775 = vsub.f32 %v6637, %v6774
    %v6776 = vand.u32 %v6775, 4294901760
    %v6777 = vsub.f32 %v6775, %v6776
    %v6778 = vand.u32 %v6777, 4294901760
    %6779 = vmatpush.msra.mxu0 %v6778
    %v6780 = vand.u32 %v6636, 4294901760
    %v6781 = vsub.f32 %v6636, %v6780
    %v6782 = vand.u32 %v6781, 4294901760
    %v6783 = vsub.f32 %v6781, %v6782
    %v6784 = vand.u32 %v6783, 4294901760
    %6785 = vmatpush.msra.mxu0 %v6784
    %v6786 = vand.u32 %v6635, 4294901760
    %v6787 = vsub.f32 %v6635, %v6786
    %v6788 = vand.u32 %v6787, 4294901760
    %v6789 = vsub.f32 %v6787, %v6788
    %v6790 = vand.u32 %v6789, 4294901760
    %6791 = vmatpush.msra.mxu0 %v6790
    %v6792 = vand.u32 %v6634, 4294901760
    %v6793 = vsub.f32 %v6634, %v6792
    %v6794 = vand.u32 %v6793, 4294901760
    %v6795 = vsub.f32 %v6793, %v6794
    %v6796 = vand.u32 %v6795, 4294901760
    %6797 = vmatpush.msra.mxu0 %v6796
    %v6798 = vand.u32 %v6633, 4294901760
    %v6799 = vsub.f32 %v6633, %v6798
    %v6800 = vand.u32 %v6799, 4294901760
    %v6801 = vsub.f32 %v6799, %v6800
    %v6802 = vand.u32 %v6801, 4294901760
    %6803 = vmatpush.msra.mxu0 %v6802
    %v6804 = vand.u32 %v6632, 4294901760
    %v6805 = vsub.f32 %v6632, %v6804
    %v6806 = vand.u32 %v6805, 4294901760
    %v6807 = vsub.f32 %v6805, %v6806
    %v6808 = vand.u32 %v6807, 4294901760
    %6809 = vmatpush.msra.mxu0 %v6808
    %v6810 = vand.u32 %v6628, 4294901760
    %6811 = vmatmul.f32.gmra.mxu0 %v6810
    %v6812 = vpop.f32.mrf.mxu0
    %v6813 = vadd.f32 %v6688, %v6812
    %v6814 = vand.u32 %v6629, 4294901760
    %6815 = vmatmul.f32.gmra.mxu0 %v6814
    %v6816 = vpop.f32.mrf.mxu0
    %v6817 = vadd.f32 %v6696, %v6816
    %v6818 = vand.u32 %v6630, 4294901760
    %6819 = vmatmul.f32.gmra.mxu0 %v6818
    %v6820 = vpop.f32.mrf.mxu0
    %v6821 = vadd.f32 %v6704, %v6820
    %v6822 = vand.u32 %v6631, 4294901760
    %6823 = vmatmul.f32.gmra.mxu0 %v6822
    %v6824 = vpop.f32.mrf.mxu0
    %v6825 = vadd.f32 %v6712, %v6824
    %6826 = vdwg.mxu0
    %v6827 = vand.u32 %v6647, 4294901760
    %v6828 = vsub.f32 %v6647, %v6827
    %6829 = vmatpush.msra.mxu0 %v6828
    %v6830 = vand.u32 %v6646, 4294901760
    %v6831 = vsub.f32 %v6646, %v6830
    %6832 = vmatpush.msra.mxu0 %v6831
    %v6833 = vand.u32 %v6645, 4294901760
    %v6834 = vsub.f32 %v6645, %v6833
    %6835 = vmatpush.msra.mxu0 %v6834
    %v6836 = vand.u32 %v6644, 4294901760
    %v6837 = vsub.f32 %v6644, %v6836
    %6838 = vmatpush.msra.mxu0 %v6837
    %v6839 = vand.u32 %v6643, 4294901760
    %v6840 = vsub.f32 %v6643, %v6839
    %6841 = vmatpush.msra.mxu0 %v6840
    %v6842 = vand.u32 %v6642, 4294901760
    %v6843 = vsub.f32 %v6642, %v6842
    %6844 = vmatpush.msra.mxu0 %v6843
    %v6845 = vand.u32 %v6641, 4294901760
    %v6846 = vsub.f32 %v6641, %v6845
    %6847 = vmatpush.msra.mxu0 %v6846
    %v6848 = vand.u32 %v6640, 4294901760
    %v6849 = vsub.f32 %v6640, %v6848
    %6850 = vmatpush.msra.mxu0 %v6849
    %v6851 = vand.u32 %v6639, 4294901760
    %v6852 = vsub.f32 %v6639, %v6851
    %6853 = vmatpush.msra.mxu0 %v6852
    %v6854 = vand.u32 %v6638, 4294901760
    %v6855 = vsub.f32 %v6638, %v6854
    %6856 = vmatpush.msra.mxu0 %v6855
    %v6857 = vand.u32 %v6637, 4294901760
    %v6858 = vsub.f32 %v6637, %v6857
    %6859 = vmatpush.msra.mxu0 %v6858
    %v6860 = vand.u32 %v6636, 4294901760
    %v6861 = vsub.f32 %v6636, %v6860
    %6862 = vmatpush.msra.mxu0 %v6861
    %v6863 = vand.u32 %v6635, 4294901760
    %v6864 = vsub.f32 %v6635, %v6863
    %6865 = vmatpush.msra.mxu0 %v6864
    %v6866 = vand.u32 %v6634, 4294901760
    %v6867 = vsub.f32 %v6634, %v6866
    %6868 = vmatpush.msra.mxu0 %v6867
    %v6869 = vand.u32 %v6633, 4294901760
    %v6870 = vsub.f32 %v6633, %v6869
    %6871 = vmatpush.msra.mxu0 %v6870
    %v6872 = vand.u32 %v6632, 4294901760
    %v6873 = vsub.f32 %v6632, %v6872
    %6874 = vmatpush.msra.mxu0 %v6873
    %v6875 = vand.u32 %v6628, 4294901760
    %v6876 = vsub.f32 %v6628, %v6875
    %6877 = vmatmul.f32.gmra.mxu0 %v6876
    %v6878 = vpop.f32.mrf.mxu0
    %v6879 = vadd.f32 %v6813, %v6878
    %v6880 = vand.u32 %v6629, 4294901760
    %v6881 = vsub.f32 %v6629, %v6880
    %6882 = vmatmul.f32.gmra.mxu0 %v6881
    %v6883 = vpop.f32.mrf.mxu0
    %v6884 = vadd.f32 %v6817, %v6883
    %v6885 = vand.u32 %v6630, 4294901760
    %v6886 = vsub.f32 %v6630, %v6885
    %6887 = vmatmul.f32.gmra.mxu0 %v6886
    %v6888 = vpop.f32.mrf.mxu0
    %v6889 = vadd.f32 %v6821, %v6888
    %v6890 = vand.u32 %v6631, 4294901760
    %v6891 = vsub.f32 %v6631, %v6890
    %6892 = vmatmul.f32.gmra.mxu0 %v6891
    %v6893 = vpop.f32.mrf.mxu0
    %v6894 = vadd.f32 %v6825, %v6893
    %6895 = vdwg.mxu0
    %v6896 = vand.u32 %v6647, 4294901760
    %6897 = vmatpush.msra.mxu0 %v6896
    %v6898 = vand.u32 %v6646, 4294901760
    %6899 = vmatpush.msra.mxu0 %v6898
    %v6900 = vand.u32 %v6645, 4294901760
    %6901 = vmatpush.msra.mxu0 %v6900
    %v6902 = vand.u32 %v6644, 4294901760
    %6903 = vmatpush.msra.mxu0 %v6902
    %v6904 = vand.u32 %v6643, 4294901760
    %6905 = vmatpush.msra.mxu0 %v6904
    %v6906 = vand.u32 %v6642, 4294901760
    %6907 = vmatpush.msra.mxu0 %v6906
    %v6908 = vand.u32 %v6641, 4294901760
    %6909 = vmatpush.msra.mxu0 %v6908
    %v6910 = vand.u32 %v6640, 4294901760
    %6911 = vmatpush.msra.mxu0 %v6910
    %v6912 = vand.u32 %v6639, 4294901760
    %6913 = vmatpush.msra.mxu0 %v6912
    %v6914 = vand.u32 %v6638, 4294901760
    %6915 = vmatpush.msra.mxu0 %v6914
    %v6916 = vand.u32 %v6637, 4294901760
    %6917 = vmatpush.msra.mxu0 %v6916
    %v6918 = vand.u32 %v6636, 4294901760
    %6919 = vmatpush.msra.mxu0 %v6918
    %v6920 = vand.u32 %v6635, 4294901760
    %6921 = vmatpush.msra.mxu0 %v6920
    %v6922 = vand.u32 %v6634, 4294901760
    %6923 = vmatpush.msra.mxu0 %v6922
    %v6924 = vand.u32 %v6633, 4294901760
    %6925 = vmatpush.msra.mxu0 %v6924
    %v6926 = vand.u32 %v6632, 4294901760
    %6927 = vmatpush.msra.mxu0 %v6926
    %v6928 = vand.u32 %v6628, 4294901760
    %v6929 = vsub.f32 %v6628, %v6928
    %v6930 = vand.u32 %v6929, 4294901760
    %6931 = vmatmul.f32.gmra.mxu0 %v6930
    %v6932 = vpop.f32.mrf.mxu0
    %v6933 = vadd.f32 %v6879, %v6932
    %v6934 = vand.u32 %v6629, 4294901760
    %v6935 = vsub.f32 %v6629, %v6934
    %v6936 = vand.u32 %v6935, 4294901760
    %6937 = vmatmul.f32.gmra.mxu0 %v6936
    %v6938 = vpop.f32.mrf.mxu0
    %v6939 = vadd.f32 %v6884, %v6938
    %v6940 = vand.u32 %v6630, 4294901760
    %v6941 = vsub.f32 %v6630, %v6940
    %v6942 = vand.u32 %v6941, 4294901760
    %6943 = vmatmul.f32.gmra.mxu0 %v6942
    %v6944 = vpop.f32.mrf.mxu0
    %v6945 = vadd.f32 %v6889, %v6944
    %v6946 = vand.u32 %v6631, 4294901760
    %v6947 = vsub.f32 %v6631, %v6946
    %v6948 = vand.u32 %v6947, 4294901760
    %6949 = vmatmul.f32.gmra.mxu0 %v6948
    %v6950 = vpop.f32.mrf.mxu0
    %v6951 = vadd.f32 %v6894, %v6950
    %6952 = vdwg.mxu0
    %v6953 = vand.u32 %v6647, 4294901760
    %v6954 = vsub.f32 %v6647, %v6953
    %v6955 = vand.u32 %v6954, 4294901760
    %6956 = vmatpush.msra.mxu0 %v6955
    %v6957 = vand.u32 %v6646, 4294901760
    %v6958 = vsub.f32 %v6646, %v6957
    %v6959 = vand.u32 %v6958, 4294901760
    %6960 = vmatpush.msra.mxu0 %v6959
    %v6961 = vand.u32 %v6645, 4294901760
    %v6962 = vsub.f32 %v6645, %v6961
    %v6963 = vand.u32 %v6962, 4294901760
    %6964 = vmatpush.msra.mxu0 %v6963
    %v6965 = vand.u32 %v6644, 4294901760
    %v6966 = vsub.f32 %v6644, %v6965
    %v6967 = vand.u32 %v6966, 4294901760
    %6968 = vmatpush.msra.mxu0 %v6967
    %v6969 = vand.u32 %v6643, 4294901760
    %v6970 = vsub.f32 %v6643, %v6969
    %v6971 = vand.u32 %v6970, 4294901760
    %6972 = vmatpush.msra.mxu0 %v6971
    %v6973 = vand.u32 %v6642, 4294901760
    %v6974 = vsub.f32 %v6642, %v6973
    %v6975 = vand.u32 %v6974, 4294901760
    %6976 = vmatpush.msra.mxu0 %v6975
    %v6977 = vand.u32 %v6641, 4294901760
    %v6978 = vsub.f32 %v6641, %v6977
    %v6979 = vand.u32 %v6978, 4294901760
    %6980 = vmatpush.msra.mxu0 %v6979
    %v6981 = vand.u32 %v6640, 4294901760
    %v6982 = vsub.f32 %v6640, %v6981
    %v6983 = vand.u32 %v6982, 4294901760
    %6984 = vmatpush.msra.mxu0 %v6983
    %v6985 = vand.u32 %v6639, 4294901760
    %v6986 = vsub.f32 %v6639, %v6985
    %v6987 = vand.u32 %v6986, 4294901760
    %6988 = vmatpush.msra.mxu0 %v6987
    %v6989 = vand.u32 %v6638, 4294901760
    %v6990 = vsub.f32 %v6638, %v6989
    %v6991 = vand.u32 %v6990, 4294901760
    %6992 = vmatpush.msra.mxu0 %v6991
    %v6993 = vand.u32 %v6637, 4294901760
    %v6994 = vsub.f32 %v6637, %v6993
    %v6995 = vand.u32 %v6994, 4294901760
    %6996 = vmatpush.msra.mxu0 %v6995
    %v6997 = vand.u32 %v6636, 4294901760
    %v6998 = vsub.f32 %v6636, %v6997
    %v6999 = vand.u32 %v6998, 4294901760
    %7000 = vmatpush.msra.mxu0 %v6999
    %v7001 = vand.u32 %v6635, 4294901760
    %v7002 = vsub.f32 %v6635, %v7001
    %v7003 = vand.u32 %v7002, 4294901760
    %7004 = vmatpush.msra.mxu0 %v7003
    %v7005 = vand.u32 %v6634, 4294901760
    %v7006 = vsub.f32 %v6634, %v7005
    %v7007 = vand.u32 %v7006, 4294901760
    %7008 = vmatpush.msra.mxu0 %v7007
    %v7009 = vand.u32 %v6633, 4294901760
    %v7010 = vsub.f32 %v6633, %v7009
    %v7011 = vand.u32 %v7010, 4294901760
    %7012 = vmatpush.msra.mxu0 %v7011
    %v7013 = vand.u32 %v6632, 4294901760
    %v7014 = vsub.f32 %v6632, %v7013
    %v7015 = vand.u32 %v7014, 4294901760
    %7016 = vmatpush.msra.mxu0 %v7015
    %v7017 = vand.u32 %v6628, 4294901760
    %7018 = vmatmul.f32.gmra.mxu0 %v7017
    %v7019 = vpop.f32.mrf.mxu0
    %v7020 = vadd.f32 %v6933, %v7019
    %v7021 = vand.u32 %v6629, 4294901760
    %7022 = vmatmul.f32.gmra.mxu0 %v7021
    %v7023 = vpop.f32.mrf.mxu0
    %v7024 = vadd.f32 %v6939, %v7023
    %v7025 = vand.u32 %v6630, 4294901760
    %7026 = vmatmul.f32.gmra.mxu0 %v7025
    %v7027 = vpop.f32.mrf.mxu0
    %v7028 = vadd.f32 %v6945, %v7027
    %v7029 = vand.u32 %v6631, 4294901760
    %7030 = vmatmul.f32.gmra.mxu0 %v7029
    %v7031 = vpop.f32.mrf.mxu0
    %v7032 = vadd.f32 %v6951, %v7031
    %7033 = vdwg.mxu0
    %v7034 = vand.u32 %v6647, 4294901760
    %7035 = vmatpush.msra.mxu0 %v7034
    %v7036 = vand.u32 %v6646, 4294901760
    %7037 = vmatpush.msra.mxu0 %v7036
    %v7038 = vand.u32 %v6645, 4294901760
    %7039 = vmatpush.msra.mxu0 %v7038
    %v7040 = vand.u32 %v6644, 4294901760
    %7041 = vmatpush.msra.mxu0 %v7040
    %v7042 = vand.u32 %v6643, 4294901760
    %7043 = vmatpush.msra.mxu0 %v7042
    %v7044 = vand.u32 %v6642, 4294901760
    %7045 = vmatpush.msra.mxu0 %v7044
    %v7046 = vand.u32 %v6641, 4294901760
    %7047 = vmatpush.msra.mxu0 %v7046
    %v7048 = vand.u32 %v6640, 4294901760
    %7049 = vmatpush.msra.mxu0 %v7048
    %v7050 = vand.u32 %v6639, 4294901760
    %7051 = vmatpush.msra.mxu0 %v7050
    %v7052 = vand.u32 %v6638, 4294901760
    %7053 = vmatpush.msra.mxu0 %v7052
    %v7054 = vand.u32 %v6637, 4294901760
    %7055 = vmatpush.msra.mxu0 %v7054
    %v7056 = vand.u32 %v6636, 4294901760
    %7057 = vmatpush.msra.mxu0 %v7056
    %v7058 = vand.u32 %v6635, 4294901760
    %7059 = vmatpush.msra.mxu0 %v7058
    %v7060 = vand.u32 %v6634, 4294901760
    %7061 = vmatpush.msra.mxu0 %v7060
    %v7062 = vand.u32 %v6633, 4294901760
    %7063 = vmatpush.msra.mxu0 %v7062
    %v7064 = vand.u32 %v6632, 4294901760
    %7065 = vmatpush.msra.mxu0 %v7064
    %v7066 = vand.u32 %v6628, 4294901760
    %7067 = vmatmul.f32.gmra.mxu0 %v7066
    %v7068 = vpop.f32.mrf.mxu0
    %v7069 = vadd.f32 %v7020, %v7068
    %v7070 = vand.u32 %v6629, 4294901760
    %7071 = vmatmul.f32.gmra.mxu0 %v7070
    %v7072 = vpop.f32.mrf.mxu0
    %v7073 = vadd.f32 %v7024, %v7072
    %v7074 = vand.u32 %v6630, 4294901760
    %7075 = vmatmul.f32.gmra.mxu0 %v7074
    %v7076 = vpop.f32.mrf.mxu0
    %v7077 = vadd.f32 %v7028, %v7076
    %v7078 = vand.u32 %v6631, 4294901760
    %7079 = vmatmul.f32.gmra.mxu0 %v7078
    %v7080 = vpop.f32.mrf.mxu0
    %v7081 = vadd.f32 %v7032, %v7080
    %7082 = vdwg.mxu0
    %v7083 = vadd.f32 %v6209, %v7069
    %v7084 = vadd.f32 %v6210, %v7073
    %v7085 = vadd.f32 %v6211, %v7077
    %v7086 = vadd.f32 %v6212, %v7081
    %v7087 = vsel %vm27, %v7083, 0.0
    %7088 = vadd.xlane.f32.xlu0 %v7087
    %v7089 = vpop.xlane.xlu0 %7088
    %v7090 = vsel %vm27, %v7084, 0.0
    %7091 = vadd.xlane.f32.xlu0 %v7090
    %v7092 = vpop.xlane.xlu0 %7091
    %v7093 = vsel %vm27, %v7085, 0.0
    %7094 = vadd.xlane.f32.xlu0 %v7093
    %v7095 = vpop.xlane.xlu0 %7094
    %v7096 = vsel %vm27, %v7086, 0.0
    %7097 = vadd.xlane.f32.xlu0 %v7096
    %v7098 = vpop.xlane.xlu0 %7097
    %v7099 = vmul.f32 %v7089, %v46
    %v7100 = vmul.f32 %v7092, %v46
    %v7101 = vmul.f32 %v7095, %v46
    %v7102 = vmul.f32 %v7098, %v46
    %v7103 = vsub.f32 %v7083, %v7099
    %v7104 = vsub.f32 %v7084, %v7100
    %v7105 = vsub.f32 %v7085, %v7101
    %v7106 = vsub.f32 %v7086, %v7102
    %v7107 = vmul.f32 %v7103, %v7103
    %v7108 = vmul.f32 %v7104, %v7104
    %v7109 = vmul.f32 %v7105, %v7105
    %v7110 = vmul.f32 %v7106, %v7106
    %v7111 = vsel %vm27, %v7107, 0.0
    %7112 = vadd.xlane.f32.xlu0 %v7111
    %v7113 = vpop.xlane.xlu0 %7112
    %v7114 = vsel %vm27, %v7108, 0.0
    %7115 = vadd.xlane.f32.xlu0 %v7114
    %v7116 = vpop.xlane.xlu0 %7115
    %v7117 = vsel %vm27, %v7109, 0.0
    %7118 = vadd.xlane.f32.xlu0 %v7117
    %v7119 = vpop.xlane.xlu0 %7118
    %v7120 = vsel %vm27, %v7110, 0.0
    %7121 = vadd.xlane.f32.xlu0 %v7120
    %v7122 = vpop.xlane.xlu0 %7121
    %v7123 = vmul.f32 %v7113, %v46
    %v7124 = vmul.f32 %v7116, %v46
    %v7125 = vmul.f32 %v7119, %v46
    %v7126 = vmul.f32 %v7122, %v46
    %v7127 = vadd.f32 %v7123, 1e-05
    %v7128 = vadd.f32 %v7124, 1e-05
    %v7129 = vadd.f32 %v7125, 1e-05
    %v7130 = vadd.f32 %v7126, 1e-05
    %v7131 = vrsqrt.pop %v7127
    %v7132 = vmul.f32 %v7131, %v7127
    %v7133 = vmul.f32 %v7132, %v7131
    %v7134 = vmul.f32 0.5, %v7133
    %v7135 = vsub.f32 1.5, %v7134
    %v7136 = vmul.f32 %v7131, %v7135
    %vm7137 = vweird.f32 %v7127
    %vm7138 = vweird.f32 %v7131
    %vm7139 = vmor %vm7137, %vm7138
    %v7140 = vsel %vm7139, %v7131, %v7136
    %v7141 = vrsqrt.pop %v7128
    %v7142 = vmul.f32 %v7141, %v7128
    %v7143 = vmul.f32 %v7142, %v7141
    %v7144 = vmul.f32 0.5, %v7143
    %v7145 = vsub.f32 1.5, %v7144
    %v7146 = vmul.f32 %v7141, %v7145
    %vm7147 = vweird.f32 %v7128
    %vm7148 = vweird.f32 %v7141
    %vm7149 = vmor %vm7147, %vm7148
    %v7150 = vsel %vm7149, %v7141, %v7146
    %v7151 = vrsqrt.pop %v7129
    %v7152 = vmul.f32 %v7151, %v7129
    %v7153 = vmul.f32 %v7152, %v7151
    %v7154 = vmul.f32 0.5, %v7153
    %v7155 = vsub.f32 1.5, %v7154
    %v7156 = vmul.f32 %v7151, %v7155
    %vm7157 = vweird.f32 %v7129
    %vm7158 = vweird.f32 %v7151
    %vm7159 = vmor %vm7157, %vm7158
    %v7160 = vsel %vm7159, %v7151, %v7156
    %v7161 = vrsqrt.pop %v7130
    %v7162 = vmul.f32 %v7161, %v7130
    %v7163 = vmul.f32 %v7162, %v7161
    %v7164 = vmul.f32 0.5, %v7163
    %v7165 = vsub.f32 1.5, %v7164
    %v7166 = vmul.f32 %v7161, %v7165
    %vm7167 = vweird.f32 %v7130
    %vm7168 = vweird.f32 %v7161
    %vm7169 = vmor %vm7167, %vm7168
    %v7170 = vsel %vm7169, %v7161, %v7166
    %v7171 = vmul.f32 %v7103, %v7140
    %v7172 = vmul.f32 %v7104, %v7150
    %v7173 = vmul.f32 %v7105, %v7160
    %v7174 = vmul.f32 %v7106, %v7170
    %v7175 = vperm.slane %v25, 1
    %v7176 = vmul.f32 %v7171, %v7175
    %v7177 = vmul.f32 %v7172, %v7175
    %v7178 = vmul.f32 %v7173, %v7175
    %v7179 = vmul.f32 %v7174, %v7175
    %v7180 = vperm.slane %v25, 2
    %v7181 = vadd.f32 %v7176, %v7180
    %v7182 = vadd.f32 %v7177, %v7180
    %v7183 = vadd.f32 %v7178, %v7180
    %v7184 = vadd.f32 %v7179, %v7180
    %7185 = vst.msk [vmem:[#allocation2] sm:$0xff] %vm27, %v7181
    %7186 = vst.msk [vmem:[#allocation2 + $0x8] sm:$0xff] %vm27, %v7182
    %7187 = vst.msk [vmem:[#allocation2 + $0x10] sm:$0xff] %vm27, %v7183
    %7188 = vst.msk [vmem:[#allocation2 + $0x18] sm:$0xff] %vm27, %v7184
    // Predicated region
    $region18: #{conformer_layer_forward.1} parent=1 // pred_check
      _
    $region19: #{conformer_layer_forward.1} parent=1 // pred_check_branch
      %7190 = sbr.rel (0) target = $region21
    $region20: #{conformer_layer_forward.1} parent=1 // pred_region
      %7192 = vsyncadd [#allocation3], 0
      %s7193 = sshll.u32 [#allocation2], 4
      %s7194 = int_to_ptr.vmem [resolvable:$true] %s7193
      %s7195 = sshll.u32 %s4, 4
      %s7196 = int_to_ptr.hbm [resolvable:$true] %s7195
      %7201 = dma.vmem_to_hbm [thread:$0]  %s7194, 512, %s7196, [#allocation3], 128, 128, 8
    $region21: #{conformer_layer_forward.1} parent=1 // pred_fallthru
      _
    // Predicated region
    $region22: #{conformer_layer_forward.1} parent=1 // pred_check
      _
    $region23: #{conformer_layer_forward.1} parent=1 // pred_check_branch
      %7203 = sbr.rel (0) target = $region25
    $region24: #{conformer_layer_forward.1} parent=1 // pred_region
      _
    $region25: #{conformer_layer_forward.1} parent=1 // pred_fallthru
      _
    // Predicated region
    $region26: #{conformer_layer_forward.1} parent=1 // pred_check
      _
    $region27: #{conformer_layer_forward.1} parent=1 // pred_check_branch
      %7205 = sbr.rel (0) target = $region29
    $region28: #{conformer_layer_forward.1} parent=1 // pred_region
      %7207 = dma.done [#allocation3], 512
    $region29: #{conformer_layer_forward.1} parent=1 // pred_fallthru
      _
    // Predicated region
    $region30: #{conformer_layer_forward.1} parent=1 // pred_check
      _
    $region31: #{conformer_layer_forward.1} parent=1 // pred_check_branch
      %7209 = sbr.rel (0) target = $region33
    $region32: #{conformer_layer_forward.1} parent=1 // pred_region
      _
    $region33: #{conformer_layer_forward.1} parent=1 // pred_fallthru
      _
    %7210 = vsyncpa [#allocation3], 1

</llo_original>
